<compile_context>
chip_gen: v7x
topology: tpu7x:2x2x1
jax: 0.10.0
libtpu: 0.0.40
codegen_flags: <defaults>
</compile_context>

<pallas_src>
import functools
import math

import jax
import jax.numpy as jnp
from jax.experimental import pallas as pl
from jax.experimental.pallas import tpu as pltpu

NEG_INF = -1e30          # Python float: becomes a jaxpr literal, never a const
LN_EPS = 1e-5


# ----------------------------- Pallas kernels -----------------------------

def _layernorm(z, w, b, eps):
    mean = jnp.mean(z, axis=-1, keepdims=True)
    cen = z - mean
    var = jnp.mean(cen * cen, axis=-1, keepdims=True)
    return cen * jax.lax.rsqrt(var + eps) * w + b


def _decoder_layer_kernel(x_ref, mem_ref, tkpad_ref, mkpad_ref,
                          sa_wq, sa_bq, sa_wkv, sa_bkv, sa_wo, sa_bo,
                          ln1w, ln1b,
                          ca_wq, ca_bq, ca_wkv, ca_bkv, ca_wo, ca_bo,
                          ln2w, ln2b,
                          w1, b1, w2, b2,
                          ln3w, ln3b,
                          o_ref, attn_scr, *, nhead, eps):
    """One full TransformerDecoderLayer (post-LN) for one batch element."""
    x_bf = x_ref[...]                       # (S, D) bf16
    x = x_bf.astype(jnp.float32)            # residual path in f32
    S, D = x.shape
    mem_bf = mem_ref[...]                   # (Sm, D) bf16
    Sm = mem_bf.shape[0]
    Dh = D // nhead
    scale = 1.0 / math.sqrt(Dh)

    def mha(q_in_bf, kv_in_bf, mask, wq, bq, wkv, bkv, wo, bo):
        # Projections: bf16 operands on the MXU, f32 accumulation; KV fused.
        q = (jnp.dot(q_in_bf, wq[...], preferred_element_type=jnp.float32)
             + bq[...]).astype(jnp.bfloat16)                       # (S, D)
        kv = jnp.dot(kv_in_bf, wkv[...],
                     preferred_element_type=jnp.float32) + bkv[...]  # (Sk, 2D)
        k = kv[:, :D].astype(jnp.bfloat16)
        v = kv[:, D:].astype(jnp.bfloat16)

        # Per-head attention with static lane slices.  Each head's PV result
        # goes straight to a VMEM scratch at its lane offset (vst slot), so
        # nothing is concatenated in vregs.
        # TODO(synk): pack >=2 heads per MXU call / use lax.fori_loop when
        #   nhead*S gets large (Dh-sized contractions underfill a 256-wide MXU).
        for h in range(nhead):
            qh = q[:, h * Dh:(h + 1) * Dh]
            kh = k[:, h * Dh:(h + 1) * Dh]
            vh = v[:, h * Dh:(h + 1) * Dh]
            s = jax.lax.dot_general(qh, kh, (((1,), (1,)), ((), ())),
                                    preferred_element_type=jnp.float32)
            # NOTE: padding + causal terms can stack to ~-2e30: keep in f32.
            s = s * scale + mask
            s = s - jnp.max(s, axis=-1, keepdims=True)
            p = jnp.exp(s)
            p = p * pl.reciprocal(jnp.sum(p, axis=-1, keepdims=True),
                                  approx=True)
            attn_scr[:, h * Dh:(h + 1) * Dh] = jnp.dot(
                p.astype(jnp.bfloat16), vh, preferred_element_type=jnp.float32)

        return jnp.dot(attn_scr[...].astype(jnp.bfloat16), wo[...],
                       preferred_element_type=jnp.float32) + bo[...]

    # ---- self-attention (causal + tgt key padding) + residual + LN1 ----
    tmask = jnp.broadcast_to(tkpad_ref[...], (S, S))
    row = jax.lax.broadcasted_iota(jnp.int32, (S, S), 0)
    col = jax.lax.broadcasted_iota(jnp.int32, (S, S), 1)
    tmask = tmask + jnp.where(col > row, NEG_INF, 0.0).astype(jnp.float32)
    y = _layernorm(x + mha(x_bf, x_bf, tmask,
                           sa_wq, sa_bq, sa_wkv, sa_bkv, sa_wo, sa_bo),
                   ln1w[...], ln1b[...], eps)

    # ---- cross-attention (memory key padding) + residual + LN2 ----
    cmask = jnp.broadcast_to(mkpad_ref[...], (S, Sm))
    y = _layernorm(y + mha(y.astype(jnp.bfloat16), mem_bf, cmask,
                           ca_wq, ca_bq, ca_wkv, ca_bkv, ca_wo, ca_bo),
                   ln2w[...], ln2b[...], eps)

    # ---- FFN + residual + LN3 (the (S, dff) hidden never leaves VMEM) ----
    h = jnp.dot(y.astype(jnp.bfloat16), w1[...],
                preferred_element_type=jnp.float32) + b1[...]
    h = jnp.maximum(h, 0.0)
    f = jnp.dot(h.astype(jnp.bfloat16), w2[...],
                preferred_element_type=jnp.float32) + b2[...]
    o_ref[...] = _layernorm(y + f, ln3w[...], ln3b[...], eps).astype(o_ref.dtype)


def pallas_decoder_layer(x, memory, tkpad_add, mkpad_add, lp, *, nhead,
                         eps=LN_EPS):
    """x: (B, S, D) bf16, memory: (B, Sm, D) bf16, masks: (B, 1, S*) f32."""
    B, S, D = x.shape
    Sm = memory.shape[1]
    F = lp["ff1_w"].shape[1]
    sa, ca = lp["self_attn"], lp["cross_attn"]

    def w(shape):
        return pl.BlockSpec(shape, lambda b, _s=shape: (0,) * len(_s))

    kernel = functools.partial(_decoder_layer_kernel, nhead=nhead, eps=eps)
    return pl.pallas_call(
        kernel,
        out_shape=jax.ShapeDtypeStruct((B, S, D), jnp.bfloat16),
        grid=(B,),
        in_specs=[
            pl.BlockSpec((None, S, D), lambda b: (b, 0, 0)),      # x
            pl.BlockSpec((None, Sm, D), lambda b: (b, 0, 0)),     # memory
            pl.BlockSpec((None, 1, S), lambda b: (b, 0, 0)),      # tgt kpad add
            pl.BlockSpec((None, 1, Sm), lambda b: (b, 0, 0)),     # mem kpad add
            # self-attention params
            w((D, D)), w((1, D)), w((D, 2 * D)), w((1, 2 * D)), w((D, D)), w((1, D)),
            w((1, D)), w((1, D)),                                 # ln1
            # cross-attention params
            w((D, D)), w((1, D)), w((D, 2 * D)), w((1, 2 * D)), w((D, D)), w((1, D)),
            w((1, D)), w((1, D)),                                 # ln2
            # FFN params
            w((D, F)), w((1, F)), w((F, D)), w((1, D)),
            w((1, D)), w((1, D)),                                 # ln3
        ],
        out_specs=pl.BlockSpec((None, S, D), lambda b: (b, 0, 0)),
        scratch_shapes=[pltpu.VMEM((S, D), jnp.float32)],         # head outputs
        compiler_params=pltpu.CompilerParams(dimension_semantics=("parallel",)),
    )(x, memory, tkpad_add, mkpad_add,
      sa["wq"], sa["bq"], sa["wkv"], sa["bkv"], sa["wo"], sa["bo"],
      lp["ln1_w"], lp["ln1_b"],
      ca["wq"], ca["bq"], ca["wkv"], ca["bkv"], ca["wo"], ca["bo"],
      lp["ln2_w"], lp["ln2_b"],
      lp["ff1_w"], lp["ff1_b"], lp["ff2_w"], lp["ff2_b"],
      lp["ln3_w"], lp["ln3_b"])


def _final_linear_kernel(x_ref, w_ref, b_ref, o_ref):
    o_ref[...] = (jnp.dot(x_ref[...], w_ref[...],
                          preferred_element_type=jnp.float32) + b_ref[...]
                  ).astype(o_ref.dtype)


def pallas_final_linear(x, w_pad, b_pad):
    """x: (B, S, D) bf16, w_pad: (D, Npad) bf16 with Npad % 128 == 0."""
    B, S, D = x.shape
    Npad = w_pad.shape[1]
    return pl.pallas_call(
        _final_linear_kernel,
        out_shape=jax.ShapeDtypeStruct((B, S, Npad), jnp.float32),
        grid=(B,),
        in_specs=[
            pl.BlockSpec((None, S, D), lambda b: (b, 0, 0)),
            pl.BlockSpec((D, Npad), lambda b: (0, 0)),
            pl.BlockSpec((1, Npad), lambda b: (0, 0)),
        ],
        out_specs=pl.BlockSpec((None, S, Npad), lambda b: (b, 0, 0)),
        compiler_params=pltpu.CompilerParams(dimension_semantics=("parallel",)),
    )(x, w_pad, b_pad)


# ----------------------------- model (glue + kernels) -----------------------------

def float_encoder(x, d_model, min_wavelength=0.001, max_wavelength=10000.0):
    """depthcharge FloatEncoder. x: (B, S) -> (B, S, d_model)."""
    n_sin = d_model // 2
    n_cos = d_model - n_sin
    base = min_wavelength / (2 * math.pi)
    scale = max_wavelength / min_wavelength
    sin_term = base * scale ** (jnp.arange(n_sin, dtype=jnp.float32) / (n_sin - 1))
    cos_term = base * scale ** (jnp.arange(n_cos, dtype=jnp.float32) / (n_cos - 1))
    sin_mz = jnp.sin(x[:, :, None] / sin_term)
    cos_mz = jnp.cos(x[:, :, None] / cos_term)
    return jnp.concatenate([sin_mz, cos_mz], axis=-1)


def positional_encoder(x, min_wavelength=1.0, max_wavelength=1e5):
    """depthcharge PositionalEncoder: adds sinusoidal positions to x (B, S, D)."""
    d_model = x.shape[2]
    n_sin = d_model // 2
    n_cos = d_model - n_sin
    base = min_wavelength / (2 * math.pi)
    scale = max_wavelength / min_wavelength
    sin_term = base * scale ** (jnp.arange(n_sin, dtype=jnp.float32) / (n_sin - 1))
    cos_term = base * scale ** (jnp.arange(n_cos, dtype=jnp.float32) / (n_cos - 1))
    pos = jnp.arange(x.shape[1], dtype=jnp.float32)[None, :, None]
    enc = jnp.concatenate([jnp.sin(pos / sin_term), jnp.cos(pos / cos_term)], axis=2)
    return x + enc


def peptide_decoder_forward(tokens, precursors, memory, memory_key_padding_mask,
                            params, nhead, n_tokens):
    D = params["aa_emb"].shape[1]

    # aa_encoder (padding_idx=0 -> row 0 of table is zero)
    tok_emb = params["aa_emb"][tokens]                                   # (B, S_tok, D)
    # mass_encoder(precursors[:, None, 0])
    masses = float_encoder(precursors[:, None, 0], D)                    # (B, 1, D)
    # charge_encoder(precursors[:, 1].int() - 1)
    charges = params["charge_emb"][precursors[:, 1].astype(jnp.int32) - 1]   # (B, D)
    prec = masses + charges[:, None, :]                                  # (B, 1, D)

    tgt = jnp.concatenate([prec, tok_emb], axis=1)                       # (B, S, D)
    tgt_key_padding_mask = jnp.sum(tgt, axis=2) == 0                     # (B, S)
    tgt = positional_encoder(tgt)

    # Tiny additive key-padding vectors (B, 1, Sk); the causal part of the
    # self-attention mask is built inside the kernel with iota.
    # NOTE: fully-masked key rows give a uniform (not NaN) distribution since
    # -1e30 is finite; deliberate deviation from PyTorch's -inf behaviour.
    tgt_kpad_add = jnp.where(tgt_key_padding_mask, NEG_INF,
                             0.0).astype(jnp.float32)[:, None, :]
    mem_kpad_add = jnp.where(memory_key_padding_mask, NEG_INF,
                             0.0).astype(jnp.float32)[:, None, :]

    # bf16 activation carry between kernels (halves activation HBM traffic);
    # softmax / LayerNorm / residual math stays in f32 inside the kernels.
    x = tgt.astype(jnp.bfloat16)
    mem_bf = memory.astype(jnp.bfloat16)
    for lp in params["layers"]:
        x = pallas_decoder_layer(x, mem_bf, tgt_kpad_add, mem_kpad_add, lp,
                                 nhead=nhead)

    logits_pad = pallas_final_linear(x, params["final_w"], params["final_b"])
    # NOTE: consumers that can take the 128-padded, lane-dense logits should
    # skip this slice; kept only for API parity with the PyTorch module.
    return logits_pad[:, :, :n_tokens]


# ----------------------------- deterministic params -----------------------------

def make_params(key, n_tokens, d_model, nhead, dff, n_layers, max_charge):
    counter = [0]
    keys = jax.random.split(key, 256)

    def nxt():
        k = keys[counter[0]]
        counter[0] += 1
        return k

    def dense(shape, scale=0.05):
        return jax.random.normal(nxt(), shape, jnp.float32) * scale

    def attn_params(d):
        return {
            "wq": dense((d, d)), "bq": dense((d,)),
            "wk": dense((d, d)), "bk": dense((d,)),
            "wv": dense((d, d)), "bv": dense((d,)),
            "wo": dense((d, d)), "bo": dense((d,)),
        }

    aa_emb = dense((n_tokens + 1, d_model), scale=0.1)
    aa_emb = aa_emb.at[0].set(0.0)                      # padding_idx=0
    params = {
        "aa_emb": aa_emb,
        "charge_emb": dense((max_charge + 1, d_model), scale=0.1),
        "final_w": dense((d_model, n_tokens)),          # num_embeddings - 1 outputs
        "final_b": dense((n_tokens,)),
        "layers": [],
    }
    for _ in range(n_layers):
        params["layers"].append({
            "self_attn": attn_params(d_model),
            "cross_attn": attn_params(d_model),
            "ln1_w": jnp.ones((d_model,), jnp.float32), "ln1_b": jnp.zeros((d_model,), jnp.float32),
            "ln2_w": jnp.ones((d_model,), jnp.float32), "ln2_b": jnp.zeros((d_model,), jnp.float32),
            "ln3_w": jnp.ones((d_model,), jnp.float32), "ln3_b": jnp.zeros((d_model,), jnp.float32),
            "ff1_w": dense((d_model, dff)), "ff1_b": dense((dff,)),
            "ff2_w": dense((dff, d_model)), "ff2_b": dense((d_model,)),
        })
    return params


def prepare_params(params, n_tokens):
    """Fuse KV weights, cast matmul weights to bf16 (f32 biases/LN), pad the
    final projection to a lane-dense (multiple of 128) output width."""
    d = params["aa_emb"].shape[1]
    npad = ((n_tokens + 127) // 128) * 128

    def attn(ap):
        return {
            "wq": ap["wq"].astype(jnp.bfloat16),
            "bq": ap["bq"].reshape(1, -1),
            "wkv": jnp.concatenate([ap["wk"], ap["wv"]], axis=1).astype(jnp.bfloat16),
            "bkv": jnp.concatenate([ap["bk"], ap["bv"]]).reshape(1, -1),
            "wo": ap["wo"].astype(jnp.bfloat16),
            "bo": ap["bo"].reshape(1, -1),
        }

    out = {
        "aa_emb": params["aa_emb"],
        "charge_emb": params["charge_emb"],
        "final_w": jnp.zeros((d, npad), jnp.bfloat16)
                      .at[:, :n_tokens].set(params["final_w"].astype(jnp.bfloat16)),
        "final_b": jnp.zeros((1, npad), jnp.float32)
                      .at[:, :n_tokens].set(params["final_b"].reshape(1, -1)),
        "layers": [],
    }
    for lp in params["layers"]:
        out["layers"].append({
            "self_attn": attn(lp["self_attn"]),
            "cross_attn": attn(lp["cross_attn"]),
            "ln1_w": lp["ln1_w"].reshape(1, -1), "ln1_b": lp["ln1_b"].reshape(1, -1),
            "ln2_w": lp["ln2_w"].reshape(1, -1), "ln2_b": lp["ln2_b"].reshape(1, -1),
            "ln3_w": lp["ln3_w"].reshape(1, -1), "ln3_b": lp["ln3_b"].reshape(1, -1),
            "ff1_w": lp["ff1_w"].astype(jnp.bfloat16), "ff1_b": lp["ff1_b"].reshape(1, -1),
            "ff2_w": lp["ff2_w"].astype(jnp.bfloat16), "ff2_b": lp["ff2_b"].reshape(1, -1),
        })
    return out


# ----------------------------- main -----------------------------

if __name__ == "__main__":
    B, S_tok, S_mem = 2, 7, 8
    d_model, nhead, dff, n_layers = 32, 4, 64, 2
    n_tokens, max_charge = 10, 5

    key = jax.random.PRNGKey(0)
    k_param, k_tok, k_mass, k_charge, k_mem = jax.random.split(key, 5)

    raw_params = make_params(k_param, n_tokens, d_model, nhead, dff, n_layers,
                             max_charge)
    params = prepare_params(raw_params, n_tokens)

    tokens = jax.random.randint(k_tok, (B, S_tok), 1, n_tokens + 1, dtype=jnp.int32)
    mass = jax.random.uniform(k_mass, (B,), jnp.float32, 200.0, 2000.0)
    charge = jax.random.randint(k_charge, (B,), 1, max_charge + 1).astype(jnp.float32)
    precursors = jnp.stack([mass, charge], axis=1)                       # (B, 2)
    memory = jax.random.normal(k_mem, (B, S_mem, d_model), jnp.float32)
    memory_key_padding_mask = jnp.zeros((B, S_mem), dtype=bool).at[1, -2:].set(True)

    fwd = jax.jit(functools.partial(peptide_decoder_forward,
                                    nhead=nhead, n_tokens=n_tokens))
    logits = fwd(tokens, precursors, memory, memory_key_padding_mask, params)
    logits = jax.block_until_ready(logits)

    assert logits.shape == (B, S_tok + 1, n_tokens), logits.shape
    assert bool(jnp.all(jnp.isfinite(logits)))
    print("KERNEL_OK")
</pallas_src>

<mosaic_0001>
module attributes {stable_mosaic.version = 11 : i64} {
  func.func @_final_linear_kernel(%arg0: i32, %arg1: memref<1x8x32xbf16, #tpu.memory_space<vmem>>, %arg2: memref<32x128xbf16, #tpu.memory_space<vmem>>, %arg3: memref<1x128xf32, #tpu.memory_space<vmem>>, %arg4: memref<1x8x128xf32, #tpu.memory_space<vmem>>) attributes {dimension_semantics = [#tpu.dimension_semantics<parallel>], iteration_bounds = array<i64: 2>, scalar_prefetch = 0 : i64, scratch_operands = 0 : i64, tpu.core_type = #tpu.core_type<tc>, window_params = [{transform_indices = @transform_0, window_bounds = array<i64: 1, 8, 32>}, {pipeline_mode = #tpu.pipeline_mode<synchronous>, transform_indices = @transform_1, window_bounds = array<i64: 32, 128>}, {pipeline_mode = #tpu.pipeline_mode<synchronous>, transform_indices = @transform_2, window_bounds = array<i64: 1, 128>}, {transform_indices = @transform_3, window_bounds = array<i64: 1, 8, 128>}]} {
    %c0 = arith.constant 0 : index
    %c0_0 = arith.constant 0 : index
    %c0_1 = arith.constant 0 : index
    %0 = vector.load %arg1[%c0, %c0_0, %c0_1] : memref<1x8x32xbf16, #tpu.memory_space<vmem>>, vector<1x8x32xbf16>
    %1 = vector.shape_cast %0 : vector<1x8x32xbf16> to vector<8x32xbf16>
    %c0_2 = arith.constant 0 : index
    %c0_3 = arith.constant 0 : index
    %2 = vector.load %arg2[%c0_2, %c0_3] : memref<32x128xbf16, #tpu.memory_space<vmem>>, vector<32x128xbf16>
    %cst = arith.constant dense<0.000000e+00> : vector<8x128xf32>
    %3 = tpu.matmul %1, %2, %cst {dimension_numbers = #tpu.dot_dimension_numbers<[1], [0], [0], [1], [0, 0, 1, 1], [], []>} : vector<8x32xbf16>, vector<32x128xbf16>, vector<8x128xf32> -> vector<8x128xf32>
    %c0_4 = arith.constant 0 : index
    %c0_5 = arith.constant 0 : index
    %4 = vector.load %arg3[%c0_4, %c0_5] : memref<1x128xf32, #tpu.memory_space<vmem>>, vector<1x128xf32>
    %5 = vector.broadcast %4 : vector<1x128xf32> to vector<8x128xf32>
    %6 = arith.addf %3, %5 : vector<8x128xf32>
    %c0_6 = arith.constant 0 : index
    %c0_7 = arith.constant 0 : index
    %c0_8 = arith.constant 0 : index
    %7 = vector.load %arg4[%c0_6, %c0_7, %c0_8] : memref<1x8x128xf32, #tpu.memory_space<vmem>>, vector<1x8x128xf32>
    %8 = vector.shape_cast %7 : vector<1x8x128xf32> to vector<8x128xf32>
    %9 = vector.shape_cast %6 : vector<8x128xf32> to vector<1x8x128xf32>
    tpu.vector_store %arg4[%c0_6, %c0_7, %c0_8], %9 {strides = array<i32>} : memref<1x8x128xf32, #tpu.memory_space<vmem>>, vector<1x8x128xf32>,
    return
  }
  func.func @transform_0(%arg0: i32) -> (i32, i32, i32) {
    %c0_i32 = arith.constant 0 : i32
    %c0_i32_0 = arith.constant 0 : i32
    %c0_i32_1 = arith.constant 0 : i32
    return %arg0, %c0_i32, %c0_i32_0 : i32, i32, i32
  }
  func.func @transform_1(%arg0: i32) -> (i32, i32) {
    %c0_i32 = arith.constant 0 : i32
    %c0_i32_0 = arith.constant 0 : i32
    %c0_i32_1 = arith.constant 0 : i32
    return %c0_i32, %c0_i32_0 : i32, i32
  }
  func.func @transform_2(%arg0: i32) -> (i32, i32) {
    %c0_i32 = arith.constant 0 : i32
    %c0_i32_0 = arith.constant 0 : i32
    %c0_i32_1 = arith.constant 0 : i32
    return %c0_i32, %c0_i32_0 : i32, i32
  }
  func.func @transform_3(%arg0: i32) -> (i32, i32, i32) {
    %c0_i32 = arith.constant 0 : i32
    %c0_i32_0 = arith.constant 0 : i32
    %c0_i32_1 = arith.constant 0 : i32
    return %arg0, %c0_i32, %c0_i32_0 : i32, i32, i32
  }
}

module attributes {stable_mosaic.version = 11 : i64} {
  func.func @_decoder_layer_kernel(%arg0: i32, %arg1: memref<1x8x32xbf16, #tpu.memory_space<vmem>>, %arg2: memref<1x8x32xbf16, #tpu.memory_space<vmem>>, %arg3: memref<1x1x8xf32, #tpu.memory_space<vmem>>, %arg4: memref<1x1x8xf32, #tpu.memory_space<vmem>>, %arg5: memref<32x32xbf16, #tpu.memory_space<vmem>>, %arg6: memref<1x32xf32, #tpu.memory_space<vmem>>, %arg7: memref<32x64xbf16, #tpu.memory_space<vmem>>, %arg8: memref<1x64xf32, #tpu.memory_space<vmem>>, %arg9: memref<32x32xbf16, #tpu.memory_space<vmem>>, %arg10: memref<1x32xf32, #tpu.memory_space<vmem>>, %arg11: memref<1x32xf32, #tpu.memory_space<vmem>>, %arg12: memref<1x32xf32, #tpu.memory_space<vmem>>, %arg13: memref<32x32xbf16, #tpu.memory_space<vmem>>, %arg14: memref<1x32xf32, #tpu.memory_space<vmem>>, %arg15: memref<32x64xbf16, #tpu.memory_space<vmem>>, %arg16: memref<1x64xf32, #tpu.memory_space<vmem>>, %arg17: memref<32x32xbf16, #tpu.memory_space<vmem>>, %arg18: memref<1x32xf32, #tpu.memory_space<vmem>>, %arg19: memref<1x32xf32, #tpu.memory_space<vmem>>, %arg20: memref<1x32xf32, #tpu.memory_space<vmem>>, %arg21: memref<32x64xbf16, #tpu.memory_space<vmem>>, %arg22: memref<1x64xf32, #tpu.memory_space<vmem>>, %arg23: memref<64x32xbf16, #tpu.memory_space<vmem>>, %arg24: memref<1x32xf32, #tpu.memory_space<vmem>>, %arg25: memref<1x32xf32, #tpu.memory_space<vmem>>, %arg26: memref<1x32xf32, #tpu.memory_space<vmem>>, %arg27: memref<1x8x32xbf16, #tpu.memory_space<vmem>>, %arg28: memref<8x32xf32, #tpu.memory_space<vmem>>) attributes {dimension_semantics = [#tpu.dimension_semantics<parallel>], iteration_bounds = array<i64: 2>, scalar_prefetch = 0 : i64, scratch_operands = 1 : i64, tpu.core_type = #tpu.core_type<tc>, window_params = [{transform_indices = @transform_0, window_bounds = array<i64: 1, 8, 32>}, {transform_indices = @transform_1, window_bounds = array<i64: 1, 8, 32>}, {transform_indices = @transform_2, window_bounds = array<i64: 1, 1, 8>}, {transform_indices = @transform_3, window_bounds = array<i64: 1, 1, 8>}, {pipeline_mode = #tpu.pipeline_mode<synchronous>, transform_indices = @transform_4, window_bounds = array<i64: 32, 32>}, {pipeline_mode = #tpu.pipeline_mode<synchronous>, transform_indices = @transform_5, window_bounds = array<i64: 1, 32>}, {pipeline_mode = #tpu.pipeline_mode<synchronous>, transform_indices = @transform_6, window_bounds = array<i64: 32, 64>}, {pipeline_mode = #tpu.pipeline_mode<synchronous>, transform_indices = @transform_7, window_bounds = array<i64: 1, 64>}, {pipeline_mode = #tpu.pipeline_mode<synchronous>, transform_indices = @transform_8, window_bounds = array<i64: 32, 32>}, {pipeline_mode = #tpu.pipeline_mode<synchronous>, transform_indices = @transform_9, window_bounds = array<i64: 1, 32>}, {pipeline_mode = #tpu.pipeline_mode<synchronous>, transform_indices = @transform_10, window_bounds = array<i64: 1, 32>}, {pipeline_mode = #tpu.pipeline_mode<synchronous>, transform_indices = @transform_11, window_bounds = array<i64: 1, 32>}, {pipeline_mode = #tpu.pipeline_mode<synchronous>, transform_indices = @transform_12, window_bounds = array<i64: 32, 32>}, {pipeline_mode = #tpu.pipeline_mode<synchronous>, transform_indices = @transform_13, window_bounds = array<i64: 1, 32>}, {pipeline_mode = #tpu.pipeline_mode<synchronous>, transform_indices = @transform_14, window_bounds = array<i64: 32, 64>}, {pipeline_mode = #tpu.pipeline_mode<synchronous>, transform_indices = @transform_15, window_bounds = array<i64: 1, 64>}, {pipeline_mode = #tpu.pipeline_mode<synchronous>, transform_indices = @transform_16, window_bounds = array<i64: 32, 32>}, {pipeline_mode = #tpu.pipeline_mode<synchronous>, transform_indices = @transform_17, window_bounds = array<i64: 1, 32>}, {pipeline_mode = #tpu.pipeline_mode<synchronous>, transform_indices = @transform_18, window_bounds = array<i64: 1, 32>}, {pipeline_mode = #tpu.pipeline_mode<synchronous>, transform_indices = @transform_19, window_bounds = array<i64: 1, 32>}, {pipeline_mode = #tpu.pipeline_mode<synchronous>, transform_indices = @transform_20, window_bounds = array<i64: 32, 64>}, {pipeline_mode = #tpu.pipeline_mode<synchronous>, transform_indices = @transform_21, window_bounds = array<i64: 1, 64>}, {pipeline_mode = #tpu.pipeline_mode<synchronous>, transform_indices = @transform_22, window_bounds = array<i64: 64, 32>}, {pipeline_mode = #tpu.pipeline_mode<synchronous>, transform_indices = @transform_23, window_bounds = array<i64: 1, 32>}, {pipeline_mode = #tpu.pipeline_mode<synchronous>, transform_indices = @transform_24, window_bounds = array<i64: 1, 32>}, {pipeline_mode = #tpu.pipeline_mode<synchronous>, transform_indices = @transform_25, window_bounds = array<i64: 1, 32>}, {transform_indices = @transform_26, window_bounds = array<i64: 1, 8, 32>}]} {
    %c0 = arith.constant 0 : index
    %c0_0 = arith.constant 0 : index
    %c0_1 = arith.constant 0 : index
    %0 = vector.load %arg1[%c0, %c0_0, %c0_1] : memref<1x8x32xbf16, #tpu.memory_space<vmem>>, vector<1x8x32xbf16>
    %1 = vector.shape_cast %0 : vector<1x8x32xbf16> to vector<8x32xbf16>
    %2 = arith.extf %1 : vector<8x32xbf16> to vector<8x32xf32>
    %c0_2 = arith.constant 0 : index
    %c0_3 = arith.constant 0 : index
    %c0_4 = arith.constant 0 : index
    %3 = vector.load %arg2[%c0_2, %c0_3, %c0_4] : memref<1x8x32xbf16, #tpu.memory_space<vmem>>, vector<1x8x32xbf16>
    %4 = vector.shape_cast %3 : vector<1x8x32xbf16> to vector<8x32xbf16>
    %c0_5 = arith.constant 0 : index
    %c0_6 = arith.constant 0 : index
    %c0_7 = arith.constant 0 : index
    %5 = vector.load %arg3[%c0_5, %c0_6, %c0_7] : memref<1x1x8xf32, #tpu.memory_space<vmem>>, vector<1x1x8xf32>
    %6 = vector.shape_cast %5 : vector<1x1x8xf32> to vector<1x8xf32>
    %7 = vector.shape_cast %6 : vector<1x8xf32> to vector<1x8xf32>
    %8 = vector.broadcast %7 : vector<1x8xf32> to vector<8x8xf32>
    %9 = tpu.iota {dimensions = array<i32: 0>} : vector<8x8xi32>
    %10 = tpu.iota {dimensions = array<i32: 1>} : vector<8x8xi32>
    %11 = arith.cmpi sgt, %10, %9 : vector<8x8xi32>
    %cst = arith.constant -1.000000e+30 : f32
    %cst_8 = arith.constant 0.000000e+00 : f32
    %12 = vector.broadcast %cst : f32 to vector<8x8xf32>
    %13 = vector.broadcast %cst_8 : f32 to vector<8x8xf32>
    %14 = arith.select %11, %12, %13 : vector<8x8xi1>, vector<8x8xf32>
    %15 = arith.addf %8, %14 : vector<8x8xf32>
    %c0_9 = arith.constant 0 : index
    %c0_10 = arith.constant 0 : index
    %16 = vector.load %arg5[%c0_9, %c0_10] : memref<32x32xbf16, #tpu.memory_space<vmem>>, vector<32x32xbf16>
    %cst_11 = arith.constant dense<0.000000e+00> : vector<8x32xf32>
    %17 = tpu.matmul %1, %16, %cst_11 {dimension_numbers = #tpu.dot_dimension_numbers<[1], [0], [0], [1], [0, 0, 1, 1], [], []>} : vector<8x32xbf16>, vector<32x32xbf16>, vector<8x32xf32> -> vector<8x32xf32>
    %c0_12 = arith.constant 0 : index
    %c0_13 = arith.constant 0 : index
    %18 = vector.load %arg6[%c0_12, %c0_13] : memref<1x32xf32, #tpu.memory_space<vmem>>, vector<1x32xf32>
    %19 = vector.broadcast %18 : vector<1x32xf32> to vector<8x32xf32>
    %20 = arith.addf %17, %19 : vector<8x32xf32>
    %21 = arith.truncf %20 : vector<8x32xf32> to vector<8x32xbf16>
    %c0_14 = arith.constant 0 : index
    %c0_15 = arith.constant 0 : index
    %22 = vector.load %arg7[%c0_14, %c0_15] : memref<32x64xbf16, #tpu.memory_space<vmem>>, vector<32x64xbf16>
    %cst_16 = arith.constant dense<0.000000e+00> : vector<8x64xf32>
    %23 = tpu.matmul %1, %22, %cst_16 {dimension_numbers = #tpu.dot_dimension_numbers<[1], [0], [0], [1], [0, 0, 1, 1], [], []>} : vector<8x32xbf16>, vector<32x64xbf16>, vector<8x64xf32> -> vector<8x64xf32>
    %c0_17 = arith.constant 0 : index
    %c0_18 = arith.constant 0 : index
    %24 = vector.load %arg8[%c0_17, %c0_18] : memref<1x64xf32, #tpu.memory_space<vmem>>, vector<1x64xf32>
    %25 = vector.broadcast %24 : vector<1x64xf32> to vector<8x64xf32>
    %26 = arith.addf %23, %25 : vector<8x64xf32>
    %27 = vector.extract_strided_slice %26 {offsets = [0, 0], sizes = [8, 32], strides = [1, 1]} : vector<8x64xf32> to vector<8x32xf32>
    %28 = arith.truncf %27 : vector<8x32xf32> to vector<8x32xbf16>
    %29 = vector.extract_strided_slice %26 {offsets = [0, 32], sizes = [8, 32], strides = [1, 1]} : vector<8x64xf32> to vector<8x32xf32>
    %30 = arith.truncf %29 : vector<8x32xf32> to vector<8x32xbf16>
    %31 = vector.extract_strided_slice %21 {offsets = [0, 0], sizes = [8, 8], strides = [1, 1]} : vector<8x32xbf16> to vector<8x8xbf16>
    %32 = vector.extract_strided_slice %28 {offsets = [0, 0], sizes = [8, 8], strides = [1, 1]} : vector<8x32xbf16> to vector<8x8xbf16>
    %33 = vector.extract_strided_slice %30 {offsets = [0, 0], sizes = [8, 8], strides = [1, 1]} : vector<8x32xbf16> to vector<8x8xbf16>
    %cst_19 = arith.constant dense<0.000000e+00> : vector<8x8xf32>
    %34 = tpu.matmul %31, %32, %cst_19 {dimension_numbers = #tpu.dot_dimension_numbers<[1], [1], [0], [0], [0, 0, 1, 0], [], []>} : vector<8x8xbf16>, vector<8x8xbf16>, vector<8x8xf32> -> vector<8x8xf32>
    %cst_20 = arith.constant 0.353553385 : f32
    %35 = vector.broadcast %cst_20 : f32 to vector<8x8xf32>
    %36 = arith.mulf %34, %35 : vector<8x8xf32>
    %37 = arith.addf %36, %15 : vector<8x8xf32>
    %cst_21 = arith.constant dense<0xFF800000> : vector<8xf32>
    %38 = vector.multi_reduction <maximumf>, %37, %cst_21 [1] : vector<8x8xf32> to vector<8xf32>
    %39 = vector.shape_cast %38 : vector<8xf32> to vector<8x1xf32>
    %40 = vector.broadcast %39 : vector<8x1xf32> to vector<8x8xf32>
    %41 = arith.subf %37, %40 : vector<8x8xf32>
    %42 = math.exp %41 : vector<8x8xf32>
    %cst_22 = arith.constant dense<0.000000e+00> : vector<8xf32>
    %43 = vector.multi_reduction <add>, %42, %cst_22 [1] : vector<8x8xf32> to vector<8xf32>
    %44 = vector.shape_cast %43 : vector<8xf32> to vector<8x1xf32>
    %45 = tpu.reciprocal %44 {approx = true} : vector<8x1xf32> -> vector<8x1xf32>
    %46 = vector.broadcast %45 : vector<8x1xf32> to vector<8x8xf32>
    %47 = arith.mulf %42, %46 : vector<8x8xf32>
    %48 = arith.truncf %47 : vector<8x8xf32> to vector<8x8xbf16>
    %cst_23 = arith.constant dense<0.000000e+00> : vector<8x8xf32>
    %49 = tpu.matmul %48, %33, %cst_23 {dimension_numbers = #tpu.dot_dimension_numbers<[1], [0], [0], [1], [0, 0, 1, 1], [], []>} : vector<8x8xbf16>, vector<8x8xbf16>, vector<8x8xf32> -> vector<8x8xf32>
    %c0_24 = arith.constant 0 : index
    %c0_25 = arith.constant 0 : index
    %50 = vector.load %arg28[%c0_24, %c0_25] : memref<8x32xf32, #tpu.memory_space<vmem>>, vector<8x8xf32>
    tpu.vector_store %arg28[%c0_24, %c0_25], %49 {strides = array<i32>} : memref<8x32xf32, #tpu.memory_space<vmem>>, vector<8x8xf32>,
    %51 = vector.extract_strided_slice %21 {offsets = [0, 8], sizes = [8, 8], strides = [1, 1]} : vector<8x32xbf16> to vector<8x8xbf16>
    %52 = vector.extract_strided_slice %28 {offsets = [0, 8], sizes = [8, 8], strides = [1, 1]} : vector<8x32xbf16> to vector<8x8xbf16>
    %53 = vector.extract_strided_slice %30 {offsets = [0, 8], sizes = [8, 8], strides = [1, 1]} : vector<8x32xbf16> to vector<8x8xbf16>
    %cst_26 = arith.constant dense<0.000000e+00> : vector<8x8xf32>
    %54 = tpu.matmul %51, %52, %cst_26 {dimension_numbers = #tpu.dot_dimension_numbers<[1], [1], [0], [0], [0, 0, 1, 0], [], []>} : vector<8x8xbf16>, vector<8x8xbf16>, vector<8x8xf32> -> vector<8x8xf32>
    %cst_27 = arith.constant 0.353553385 : f32
    %55 = vector.broadcast %cst_27 : f32 to vector<8x8xf32>
    %56 = arith.mulf %54, %55 : vector<8x8xf32>
    %57 = arith.addf %56, %15 : vector<8x8xf32>
    %cst_28 = arith.constant dense<0xFF800000> : vector<8xf32>
    %58 = vector.multi_reduction <maximumf>, %57, %cst_28 [1] : vector<8x8xf32> to vector<8xf32>
    %59 = vector.shape_cast %58 : vector<8xf32> to vector<8x1xf32>
    %60 = vector.broadcast %59 : vector<8x1xf32> to vector<8x8xf32>
    %61 = arith.subf %57, %60 : vector<8x8xf32>
    %62 = math.exp %61 : vector<8x8xf32>
    %cst_29 = arith.constant dense<0.000000e+00> : vector<8xf32>
    %63 = vector.multi_reduction <add>, %62, %cst_29 [1] : vector<8x8xf32> to vector<8xf32>
    %64 = vector.shape_cast %63 : vector<8xf32> to vector<8x1xf32>
    %65 = tpu.reciprocal %64 {approx = true} : vector<8x1xf32> -> vector<8x1xf32>
    %66 = vector.broadcast %65 : vector<8x1xf32> to vector<8x8xf32>
    %67 = arith.mulf %62, %66 : vector<8x8xf32>
    %68 = arith.truncf %67 : vector<8x8xf32> to vector<8x8xbf16>
    %cst_30 = arith.constant dense<0.000000e+00> : vector<8x8xf32>
    %69 = tpu.matmul %68, %53, %cst_30 {dimension_numbers = #tpu.dot_dimension_numbers<[1], [0], [0], [1], [0, 0, 1, 1], [], []>} : vector<8x8xbf16>, vector<8x8xbf16>, vector<8x8xf32> -> vector<8x8xf32>
    %c0_31 = arith.constant 0 : index
    %c8 = arith.constant 8 : index
    %70 = vector.load %arg28[%c0_31, %c8] : memref<8x32xf32, #tpu.memory_space<vmem>>, vector<8x8xf32>
    tpu.vector_store %arg28[%c0_31, %c8], %69 {strides = array<i32>} : memref<8x32xf32, #tpu.memory_space<vmem>>, vector<8x8xf32>,
    %71 = vector.extract_strided_slice %21 {offsets = [0, 16], sizes = [8, 8], strides = [1, 1]} : vector<8x32xbf16> to vector<8x8xbf16>
    %72 = vector.extract_strided_slice %28 {offsets = [0, 16], sizes = [8, 8], strides = [1, 1]} : vector<8x32xbf16> to vector<8x8xbf16>
    %73 = vector.extract_strided_slice %30 {offsets = [0, 16], sizes = [8, 8], strides = [1, 1]} : vector<8x32xbf16> to vector<8x8xbf16>
    %cst_32 = arith.constant dense<0.000000e+00> : vector<8x8xf32>
    %74 = tpu.matmul %71, %72, %cst_32 {dimension_numbers = #tpu.dot_dimension_numbers<[1], [1], [0], [0], [0, 0, 1, 0], [], []>} : vector<8x8xbf16>, vector<8x8xbf16>, vector<8x8xf32> -> vector<8x8xf32>
    %cst_33 = arith.constant 0.353553385 : f32
    %75 = vector.broadcast %cst_33 : f32 to vector<8x8xf32>
    %76 = arith.mulf %74, %75 : vector<8x8xf32>
    %77 = arith.addf %76, %15 : vector<8x8xf32>
    %cst_34 = arith.constant dense<0xFF800000> : vector<8xf32>
    %78 = vector.multi_reduction <maximumf>, %77, %cst_34 [1] : vector<8x8xf32> to vector<8xf32>
    %79 = vector.shape_cast %78 : vector<8xf32> to vector<8x1xf32>
    %80 = vector.broadcast %79 : vector<8x1xf32> to vector<8x8xf32>
    %81 = arith.subf %77, %80 : vector<8x8xf32>
    %82 = math.exp %81 : vector<8x8xf32>
    %cst_35 = arith.constant dense<0.000000e+00> : vector<8xf32>
    %83 = vector.multi_reduction <add>, %82, %cst_35 [1] : vector<8x8xf32> to vector<8xf32>
    %84 = vector.shape_cast %83 : vector<8xf32> to vector<8x1xf32>
    %85 = tpu.reciprocal %84 {approx = true} : vector<8x1xf32> -> vector<8x1xf32>
    %86 = vector.broadcast %85 : vector<8x1xf32> to vector<8x8xf32>
    %87 = arith.mulf %82, %86 : vector<8x8xf32>
    %88 = arith.truncf %87 : vector<8x8xf32> to vector<8x8xbf16>
    %cst_36 = arith.constant dense<0.000000e+00> : vector<8x8xf32>
    %89 = tpu.matmul %88, %73, %cst_36 {dimension_numbers = #tpu.dot_dimension_numbers<[1], [0], [0], [1], [0, 0, 1, 1], [], []>} : vector<8x8xbf16>, vector<8x8xbf16>, vector<8x8xf32> -> vector<8x8xf32>
    %c0_37 = arith.constant 0 : index
    %c16 = arith.constant 16 : index
    %90 = vector.load %arg28[%c0_37, %c16] : memref<8x32xf32, #tpu.memory_space<vmem>>, vector<8x8xf32>
    tpu.vector_store %arg28[%c0_37, %c16], %89 {strides = array<i32>} : memref<8x32xf32, #tpu.memory_space<vmem>>, vector<8x8xf32>,
    %91 = vector.extract_strided_slice %21 {offsets = [0, 24], sizes = [8, 8], strides = [1, 1]} : vector<8x32xbf16> to vector<8x8xbf16>
    %92 = vector.extract_strided_slice %28 {offsets = [0, 24], sizes = [8, 8], strides = [1, 1]} : vector<8x32xbf16> to vector<8x8xbf16>
    %93 = vector.extract_strided_slice %30 {offsets = [0, 24], sizes = [8, 8], strides = [1, 1]} : vector<8x32xbf16> to vector<8x8xbf16>
    %cst_38 = arith.constant dense<0.000000e+00> : vector<8x8xf32>
    %94 = tpu.matmul %91, %92, %cst_38 {dimension_numbers = #tpu.dot_dimension_numbers<[1], [1], [0], [0], [0, 0, 1, 0], [], []>} : vector<8x8xbf16>, vector<8x8xbf16>, vector<8x8xf32> -> vector<8x8xf32>
    %cst_39 = arith.constant 0.353553385 : f32
    %95 = vector.broadcast %cst_39 : f32 to vector<8x8xf32>
    %96 = arith.mulf %94, %95 : vector<8x8xf32>
    %97 = arith.addf %96, %15 : vector<8x8xf32>
    %cst_40 = arith.constant dense<0xFF800000> : vector<8xf32>
    %98 = vector.multi_reduction <maximumf>, %97, %cst_40 [1] : vector<8x8xf32> to vector<8xf32>
    %99 = vector.shape_cast %98 : vector<8xf32> to vector<8x1xf32>
    %100 = vector.broadcast %99 : vector<8x1xf32> to vector<8x8xf32>
    %101 = arith.subf %97, %100 : vector<8x8xf32>
    %102 = math.exp %101 : vector<8x8xf32>
    %cst_41 = arith.constant dense<0.000000e+00> : vector<8xf32>
    %103 = vector.multi_reduction <add>, %102, %cst_41 [1] : vector<8x8xf32> to vector<8xf32>
    %104 = vector.shape_cast %103 : vector<8xf32> to vector<8x1xf32>
    %105 = tpu.reciprocal %104 {approx = true} : vector<8x1xf32> -> vector<8x1xf32>
    %106 = vector.broadcast %105 : vector<8x1xf32> to vector<8x8xf32>
    %107 = arith.mulf %102, %106 : vector<8x8xf32>
    %108 = arith.truncf %107 : vector<8x8xf32> to vector<8x8xbf16>
    %cst_42 = arith.constant dense<0.000000e+00> : vector<8x8xf32>
    %109 = tpu.matmul %108, %93, %cst_42 {dimension_numbers = #tpu.dot_dimension_numbers<[1], [0], [0], [1], [0, 0, 1, 1], [], []>} : vector<8x8xbf16>, vector<8x8xbf16>, vector<8x8xf32> -> vector<8x8xf32>
    %c0_43 = arith.constant 0 : index
    %c24 = arith.constant 24 : index
    %110 = vector.load %arg28[%c0_43, %c24] : memref<8x32xf32, #tpu.memory_space<vmem>>, vector<8x8xf32>
    tpu.vector_store %arg28[%c0_43, %c24], %109 {strides = array<i32>} : memref<8x32xf32, #tpu.memory_space<vmem>>, vector<8x8xf32>,
    %c0_44 = arith.constant 0 : index
    %c0_45 = arith.constant 0 : index
    %111 = vector.load %arg28[%c0_44, %c0_45] : memref<8x32xf32, #tpu.memory_space<vmem>>, vector<8x32xf32>
    %112 = arith.truncf %111 : vector<8x32xf32> to vector<8x32xbf16>
    %c0_46 = arith.constant 0 : index
    %c0_47 = arith.constant 0 : index
    %113 = vector.load %arg9[%c0_46, %c0_47] : memref<32x32xbf16, #tpu.memory_space<vmem>>, vector<32x32xbf16>
    %cst_48 = arith.constant dense<0.000000e+00> : vector<8x32xf32>
    %114 = tpu.matmul %112, %113, %cst_48 {dimension_numbers = #tpu.dot_dimension_numbers<[1], [0], [0], [1], [0, 0, 1, 1], [], []>} : vector<8x32xbf16>, vector<32x32xbf16>, vector<8x32xf32> -> vector<8x32xf32>
    %c0_49 = arith.constant 0 : index
    %c0_50 = arith.constant 0 : index
    %115 = vector.load %arg10[%c0_49, %c0_50] : memref<1x32xf32, #tpu.memory_space<vmem>>, vector<1x32xf32>
    %116 = vector.broadcast %115 : vector<1x32xf32> to vector<8x32xf32>
    %117 = arith.addf %114, %116 : vector<8x32xf32>
    %118 = arith.addf %2, %117 : vector<8x32xf32>
    %c0_51 = arith.constant 0 : index
    %c0_52 = arith.constant 0 : index
    %119 = vector.load %arg11[%c0_51, %c0_52] : memref<1x32xf32, #tpu.memory_space<vmem>>, vector<1x32xf32>
    %c0_53 = arith.constant 0 : index
    %c0_54 = arith.constant 0 : index
    %120 = vector.load %arg12[%c0_53, %c0_54] : memref<1x32xf32, #tpu.memory_space<vmem>>, vector<1x32xf32>
    %cst_55 = arith.constant dense<0.000000e+00> : vector<8xf32>
    %121 = vector.multi_reduction <add>, %118, %cst_55 [1] : vector<8x32xf32> to vector<8xf32>
    %122 = vector.shape_cast %121 : vector<8xf32> to vector<8x1xf32>
    %cst_56 = arith.constant 3.200000e+01 : f32
    %123 = vector.broadcast %cst_56 : f32 to vector<8x1xf32>
    %124 = arith.divf %122, %123 : vector<8x1xf32>
    %125 = vector.broadcast %124 : vector<8x1xf32> to vector<8x32xf32>
    %126 = arith.subf %118, %125 : vector<8x32xf32>
    %127 = arith.mulf %126, %126 : vector<8x32xf32>
    %cst_57 = arith.constant dense<0.000000e+00> : vector<8xf32>
    %128 = vector.multi_reduction <add>, %127, %cst_57 [1] : vector<8x32xf32> to vector<8xf32>
    %129 = vector.shape_cast %128 : vector<8xf32> to vector<8x1xf32>
    %cst_58 = arith.constant 3.200000e+01 : f32
    %130 = vector.broadcast %cst_58 : f32 to vector<8x1xf32>
    %131 = arith.divf %129, %130 : vector<8x1xf32>
    %cst_59 = arith.constant 9.99999974E-6 : f32
    %132 = vector.broadcast %cst_59 : f32 to vector<8x1xf32>
    %133 = arith.addf %131, %132 : vector<8x1xf32>
    %134 = math.rsqrt %133 : vector<8x1xf32>
    %135 = vector.broadcast %134 : vector<8x1xf32> to vector<8x32xf32>
    %136 = arith.mulf %126, %135 : vector<8x32xf32>
    %137 = vector.broadcast %119 : vector<1x32xf32> to vector<8x32xf32>
    %138 = arith.mulf %136, %137 : vector<8x32xf32>
    %139 = vector.broadcast %120 : vector<1x32xf32> to vector<8x32xf32>
    %140 = arith.addf %138, %139 : vector<8x32xf32>
    %c0_60 = arith.constant 0 : index
    %c0_61 = arith.constant 0 : index
    %c0_62 = arith.constant 0 : index
    %141 = vector.load %arg4[%c0_60, %c0_61, %c0_62] : memref<1x1x8xf32, #tpu.memory_space<vmem>>, vector<1x1x8xf32>
    %142 = vector.shape_cast %141 : vector<1x1x8xf32> to vector<1x8xf32>
    %143 = vector.shape_cast %142 : vector<1x8xf32> to vector<1x8xf32>
    %144 = vector.broadcast %143 : vector<1x8xf32> to vector<8x8xf32>
    %145 = arith.truncf %140 : vector<8x32xf32> to vector<8x32xbf16>
    %c0_63 = arith.constant 0 : index
    %c0_64 = arith.constant 0 : index
    %146 = vector.load %arg13[%c0_63, %c0_64] : memref<32x32xbf16, #tpu.memory_space<vmem>>, vector<32x32xbf16>
    %cst_65 = arith.constant dense<0.000000e+00> : vector<8x32xf32>
    %147 = tpu.matmul %145, %146, %cst_65 {dimension_numbers = #tpu.dot_dimension_numbers<[1], [0], [0], [1], [0, 0, 1, 1], [], []>} : vector<8x32xbf16>, vector<32x32xbf16>, vector<8x32xf32> -> vector<8x32xf32>
    %c0_66 = arith.constant 0 : index
    %c0_67 = arith.constant 0 : index
    %148 = vector.load %arg14[%c0_66, %c0_67] : memref<1x32xf32, #tpu.memory_space<vmem>>, vector<1x32xf32>
    %149 = vector.broadcast %148 : vector<1x32xf32> to vector<8x32xf32>
    %150 = arith.addf %147, %149 : vector<8x32xf32>
    %151 = arith.truncf %150 : vector<8x32xf32> to vector<8x32xbf16>
    %c0_68 = arith.constant 0 : index
    %c0_69 = arith.constant 0 : index
    %152 = vector.load %arg15[%c0_68, %c0_69] : memref<32x64xbf16, #tpu.memory_space<vmem>>, vector<32x64xbf16>
    %cst_70 = arith.constant dense<0.000000e+00> : vector<8x64xf32>
    %153 = tpu.matmul %4, %152, %cst_70 {dimension_numbers = #tpu.dot_dimension_numbers<[1], [0], [0], [1], [0, 0, 1, 1], [], []>} : vector<8x32xbf16>, vector<32x64xbf16>, vector<8x64xf32> -> vector<8x64xf32>
    %c0_71 = arith.constant 0 : index
    %c0_72 = arith.constant 0 : index
    %154 = vector.load %arg16[%c0_71, %c0_72] : memref<1x64xf32, #tpu.memory_space<vmem>>, vector<1x64xf32>
    %155 = vector.broadcast %154 : vector<1x64xf32> to vector<8x64xf32>
    %156 = arith.addf %153, %155 : vector<8x64xf32>
    %157 = vector.extract_strided_slice %156 {offsets = [0, 0], sizes = [8, 32], strides = [1, 1]} : vector<8x64xf32> to vector<8x32xf32>
    %158 = arith.truncf %157 : vector<8x32xf32> to vector<8x32xbf16>
    %159 = vector.extract_strided_slice %156 {offsets = [0, 32], sizes = [8, 32], strides = [1, 1]} : vector<8x64xf32> to vector<8x32xf32>
    %160 = arith.truncf %159 : vector<8x32xf32> to vector<8x32xbf16>
    %161 = vector.extract_strided_slice %151 {offsets = [0, 0], sizes = [8, 8], strides = [1, 1]} : vector<8x32xbf16> to vector<8x8xbf16>
    %162 = vector.extract_strided_slice %158 {offsets = [0, 0], sizes = [8, 8], strides = [1, 1]} : vector<8x32xbf16> to vector<8x8xbf16>
    %163 = vector.extract_strided_slice %160 {offsets = [0, 0], sizes = [8, 8], strides = [1, 1]} : vector<8x32xbf16> to vector<8x8xbf16>
    %cst_73 = arith.constant dense<0.000000e+00> : vector<8x8xf32>
    %164 = tpu.matmul %161, %162, %cst_73 {dimension_numbers = #tpu.dot_dimension_numbers<[1], [1], [0], [0], [0, 0, 1, 0], [], []>} : vector<8x8xbf16>, vector<8x8xbf16>, vector<8x8xf32> -> vector<8x8xf32>
    %cst_74 = arith.constant 0.353553385 : f32
    %165 = vector.broadcast %cst_74 : f32 to vector<8x8xf32>
    %166 = arith.mulf %164, %165 : vector<8x8xf32>
    %167 = arith.addf %166, %144 : vector<8x8xf32>
    %cst_75 = arith.constant dense<0xFF800000> : vector<8xf32>
    %168 = vector.multi_reduction <maximumf>, %167, %cst_75 [1] : vector<8x8xf32> to vector<8xf32>
    %169 = vector.shape_cast %168 : vector<8xf32> to vector<8x1xf32>
    %170 = vector.broadcast %169 : vector<8x1xf32> to vector<8x8xf32>
    %171 = arith.subf %167, %170 : vector<8x8xf32>
    %172 = math.exp %171 : vector<8x8xf32>
    %cst_76 = arith.constant dense<0.000000e+00> : vector<8xf32>
    %173 = vector.multi_reduction <add>, %172, %cst_76 [1] : vector<8x8xf32> to vector<8xf32>
    %174 = vector.shape_cast %173 : vector<8xf32> to vector<8x1xf32>
    %175 = tpu.reciprocal %174 {approx = true} : vector<8x1xf32> -> vector<8x1xf32>
    %176 = vector.broadcast %175 : vector<8x1xf32> to vector<8x8xf32>
    %177 = arith.mulf %172, %176 : vector<8x8xf32>
    %178 = arith.truncf %177 : vector<8x8xf32> to vector<8x8xbf16>
    %cst_77 = arith.constant dense<0.000000e+00> : vector<8x8xf32>
    %179 = tpu.matmul %178, %163, %cst_77 {dimension_numbers = #tpu.dot_dimension_numbers<[1], [0], [0], [1], [0, 0, 1, 1], [], []>} : vector<8x8xbf16>, vector<8x8xbf16>, vector<8x8xf32> -> vector<8x8xf32>
    %c0_78 = arith.constant 0 : index
    %c0_79 = arith.constant 0 : index
    %180 = vector.load %arg28[%c0_78, %c0_79] : memref<8x32xf32, #tpu.memory_space<vmem>>, vector<8x8xf32>
    tpu.vector_store %arg28[%c0_78, %c0_79], %179 {strides = array<i32>} : memref<8x32xf32, #tpu.memory_space<vmem>>, vector<8x8xf32>,
    %181 = vector.extract_strided_slice %151 {offsets = [0, 8], sizes = [8, 8], strides = [1, 1]} : vector<8x32xbf16> to vector<8x8xbf16>
    %182 = vector.extract_strided_slice %158 {offsets = [0, 8], sizes = [8, 8], strides = [1, 1]} : vector<8x32xbf16> to vector<8x8xbf16>
    %183 = vector.extract_strided_slice %160 {offsets = [0, 8], sizes = [8, 8], strides = [1, 1]} : vector<8x32xbf16> to vector<8x8xbf16>
    %cst_80 = arith.constant dense<0.000000e+00> : vector<8x8xf32>
    %184 = tpu.matmul %181, %182, %cst_80 {dimension_numbers = #tpu.dot_dimension_numbers<[1], [1], [0], [0], [0, 0, 1, 0], [], []>} : vector<8x8xbf16>, vector<8x8xbf16>, vector<8x8xf32> -> vector<8x8xf32>
    %cst_81 = arith.constant 0.353553385 : f32
    %185 = vector.broadcast %cst_81 : f32 to vector<8x8xf32>
    %186 = arith.mulf %184, %185 : vector<8x8xf32>
    %187 = arith.addf %186, %144 : vector<8x8xf32>
    %cst_82 = arith.constant dense<0xFF800000> : vector<8xf32>
    %188 = vector.multi_reduction <maximumf>, %187, %cst_82 [1] : vector<8x8xf32> to vector<8xf32>
    %189 = vector.shape_cast %188 : vector<8xf32> to vector<8x1xf32>
    %190 = vector.broadcast %189 : vector<8x1xf32> to vector<8x8xf32>
    %191 = arith.subf %187, %190 : vector<8x8xf32>
    %192 = math.exp %191 : vector<8x8xf32>
    %cst_83 = arith.constant dense<0.000000e+00> : vector<8xf32>
    %193 = vector.multi_reduction <add>, %192, %cst_83 [1] : vector<8x8xf32> to vector<8xf32>
    %194 = vector.shape_cast %193 : vector<8xf32> to vector<8x1xf32>
    %195 = tpu.reciprocal %194 {approx = true} : vector<8x1xf32> -> vector<8x1xf32>
    %196 = vector.broadcast %195 : vector<8x1xf32> to vector<8x8xf32>
    %197 = arith.mulf %192, %196 : vector<8x8xf32>
    %198 = arith.truncf %197 : vector<8x8xf32> to vector<8x8xbf16>
    %cst_84 = arith.constant dense<0.000000e+00> : vector<8x8xf32>
    %199 = tpu.matmul %198, %183, %cst_84 {dimension_numbers = #tpu.dot_dimension_numbers<[1], [0], [0], [1], [0, 0, 1, 1], [], []>} : vector<8x8xbf16>, vector<8x8xbf16>, vector<8x8xf32> -> vector<8x8xf32>
    %c0_85 = arith.constant 0 : index
    %c8_86 = arith.constant 8 : index
    %200 = vector.load %arg28[%c0_85, %c8_86] : memref<8x32xf32, #tpu.memory_space<vmem>>, vector<8x8xf32>
    tpu.vector_store %arg28[%c0_85, %c8_86], %199 {strides = array<i32>} : memref<8x32xf32, #tpu.memory_space<vmem>>, vector<8x8xf32>,
    %201 = vector.extract_strided_slice %151 {offsets = [0, 16], sizes = [8, 8], strides = [1, 1]} : vector<8x32xbf16> to vector<8x8xbf16>
    %202 = vector.extract_strided_slice %158 {offsets = [0, 16], sizes = [8, 8], strides = [1, 1]} : vector<8x32xbf16> to vector<8x8xbf16>
    %203 = vector.extract_strided_slice %160 {offsets = [0, 16], sizes = [8, 8], strides = [1, 1]} : vector<8x32xbf16> to vector<8x8xbf16>
    %cst_87 = arith.constant dense<0.000000e+00> : vector<8x8xf32>
    %204 = tpu.matmul %201, %202, %cst_87 {dimension_numbers = #tpu.dot_dimension_numbers<[1], [1], [0], [0], [0, 0, 1, 0], [], []>} : vector<8x8xbf16>, vector<8x8xbf16>, vector<8x8xf32> -> vector<8x8xf32>
    %cst_88 = arith.constant 0.353553385 : f32
    %205 = vector.broadcast %cst_88 : f32 to vector<8x8xf32>
    %206 = arith.mulf %204, %205 : vector<8x8xf32>
    %207 = arith.addf %206, %144 : vector<8x8xf32>
    %cst_89 = arith.constant dense<0xFF800000> : vector<8xf32>
    %208 = vector.multi_reduction <maximumf>, %207, %cst_89 [1] : vector<8x8xf32> to vector<8xf32>
    %209 = vector.shape_cast %208 : vector<8xf32> to vector<8x1xf32>
    %210 = vector.broadcast %209 : vector<8x1xf32> to vector<8x8xf32>
    %211 = arith.subf %207, %210 : vector<8x8xf32>
    %212 = math.exp %211 : vector<8x8xf32>
    %cst_90 = arith.constant dense<0.000000e+00> : vector<8xf32>
    %213 = vector.multi_reduction <add>, %212, %cst_90 [1] : vector<8x8xf32> to vector<8xf32>
    %214 = vector.shape_cast %213 : vector<8xf32> to vector<8x1xf32>
    %215 = tpu.reciprocal %214 {approx = true} : vector<8x1xf32> -> vector<8x1xf32>
    %216 = vector.broadcast %215 : vector<8x1xf32> to vector<8x8xf32>
    %217 = arith.mulf %212, %216 : vector<8x8xf32>
    %218 = arith.truncf %217 : vector<8x8xf32> to vector<8x8xbf16>
    %cst_91 = arith.constant dense<0.000000e+00> : vector<8x8xf32>
    %219 = tpu.matmul %218, %203, %cst_91 {dimension_numbers = #tpu.dot_dimension_numbers<[1], [0], [0], [1], [0, 0, 1, 1], [], []>} : vector<8x8xbf16>, vector<8x8xbf16>, vector<8x8xf32> -> vector<8x8xf32>
    %c0_92 = arith.constant 0 : index
    %c16_93 = arith.constant 16 : index
    %220 = vector.load %arg28[%c0_92, %c16_93] : memref<8x32xf32, #tpu.memory_space<vmem>>, vector<8x8xf32>
    tpu.vector_store %arg28[%c0_92, %c16_93], %219 {strides = array<i32>} : memref<8x32xf32, #tpu.memory_space<vmem>>, vector<8x8xf32>,
    %221 = vector.extract_strided_slice %151 {offsets = [0, 24], sizes = [8, 8], strides = [1, 1]} : vector<8x32xbf16> to vector<8x8xbf16>
    %222 = vector.extract_strided_slice %158 {offsets = [0, 24], sizes = [8, 8], strides = [1, 1]} : vector<8x32xbf16> to vector<8x8xbf16>
    %223 = vector.extract_strided_slice %160 {offsets = [0, 24], sizes = [8, 8], strides = [1, 1]} : vector<8x32xbf16> to vector<8x8xbf16>
    %cst_94 = arith.constant dense<0.000000e+00> : vector<8x8xf32>
    %224 = tpu.matmul %221, %222, %cst_94 {dimension_numbers = #tpu.dot_dimension_numbers<[1], [1], [0], [0], [0, 0, 1, 0], [], []>} : vector<8x8xbf16>, vector<8x8xbf16>, vector<8x8xf32> -> vector<8x8xf32>
    %cst_95 = arith.constant 0.353553385 : f32
    %225 = vector.broadcast %cst_95 : f32 to vector<8x8xf32>
    %226 = arith.mulf %224, %225 : vector<8x8xf32>
    %227 = arith.addf %226, %144 : vector<8x8xf32>
    %cst_96 = arith.constant dense<0xFF800000> : vector<8xf32>
    %228 = vector.multi_reduction <maximumf>, %227, %cst_96 [1] : vector<8x8xf32> to vector<8xf32>
    %229 = vector.shape_cast %228 : vector<8xf32> to vector<8x1xf32>
    %230 = vector.broadcast %229 : vector<8x1xf32> to vector<8x8xf32>
    %231 = arith.subf %227, %230 : vector<8x8xf32>
    %232 = math.exp %231 : vector<8x8xf32>
    %cst_97 = arith.constant dense<0.000000e+00> : vector<8xf32>
    %233 = vector.multi_reduction <add>, %232, %cst_97 [1] : vector<8x8xf32> to vector<8xf32>
    %234 = vector.shape_cast %233 : vector<8xf32> to vector<8x1xf32>
    %235 = tpu.reciprocal %234 {approx = true} : vector<8x1xf32> -> vector<8x1xf32>
    %236 = vector.broadcast %235 : vector<8x1xf32> to vector<8x8xf32>
    %237 = arith.mulf %232, %236 : vector<8x8xf32>
    %238 = arith.truncf %237 : vector<8x8xf32> to vector<8x8xbf16>
    %cst_98 = arith.constant dense<0.000000e+00> : vector<8x8xf32>
    %239 = tpu.matmul %238, %223, %cst_98 {dimension_numbers = #tpu.dot_dimension_numbers<[1], [0], [0], [1], [0, 0, 1, 1], [], []>} : vector<8x8xbf16>, vector<8x8xbf16>, vector<8x8xf32> -> vector<8x8xf32>
    %c0_99 = arith.constant 0 : index
    %c24_100 = arith.constant 24 : index
    %240 = vector.load %arg28[%c0_99, %c24_100] : memref<8x32xf32, #tpu.memory_space<vmem>>, vector<8x8xf32>
    tpu.vector_store %arg28[%c0_99, %c24_100], %239 {strides = array<i32>} : memref<8x32xf32, #tpu.memory_space<vmem>>, vector<8x8xf32>,
    %c0_101 = arith.constant 0 : index
    %c0_102 = arith.constant 0 : index
    %241 = vector.load %arg28[%c0_101, %c0_102] : memref<8x32xf32, #tpu.memory_space<vmem>>, vector<8x32xf32>
    %242 = arith.truncf %241 : vector<8x32xf32> to vector<8x32xbf16>
    %c0_103 = arith.constant 0 : index
    %c0_104 = arith.constant 0 : index
    %243 = vector.load %arg17[%c0_103, %c0_104] : memref<32x32xbf16, #tpu.memory_space<vmem>>, vector<32x32xbf16>
    %cst_105 = arith.constant dense<0.000000e+00> : vector<8x32xf32>
    %244 = tpu.matmul %242, %243, %cst_105 {dimension_numbers = #tpu.dot_dimension_numbers<[1], [0], [0], [1], [0, 0, 1, 1], [], []>} : vector<8x32xbf16>, vector<32x32xbf16>, vector<8x32xf32> -> vector<8x32xf32>
    %c0_106 = arith.constant 0 : index
    %c0_107 = arith.constant 0 : index
    %245 = vector.load %arg18[%c0_106, %c0_107] : memref<1x32xf32, #tpu.memory_space<vmem>>, vector<1x32xf32>
    %246 = vector.broadcast %245 : vector<1x32xf32> to vector<8x32xf32>
    %247 = arith.addf %244, %246 : vector<8x32xf32>
    %248 = arith.addf %140, %247 : vector<8x32xf32>
    %c0_108 = arith.constant 0 : index
    %c0_109 = arith.constant 0 : index
    %249 = vector.load %arg19[%c0_108, %c0_109] : memref<1x32xf32, #tpu.memory_space<vmem>>, vector<1x32xf32>
    %c0_110 = arith.constant 0 : index
    %c0_111 = arith.constant 0 : index
    %250 = vector.load %arg20[%c0_110, %c0_111] : memref<1x32xf32, #tpu.memory_space<vmem>>, vector<1x32xf32>
    %cst_112 = arith.constant dense<0.000000e+00> : vector<8xf32>
    %251 = vector.multi_reduction <add>, %248, %cst_112 [1] : vector<8x32xf32> to vector<8xf32>
    %252 = vector.shape_cast %251 : vector<8xf32> to vector<8x1xf32>
    %cst_113 = arith.constant 3.200000e+01 : f32
    %253 = vector.broadcast %cst_113 : f32 to vector<8x1xf32>
    %254 = arith.divf %252, %253 : vector<8x1xf32>
    %255 = vector.broadcast %254 : vector<8x1xf32> to vector<8x32xf32>
    %256 = arith.subf %248, %255 : vector<8x32xf32>
    %257 = arith.mulf %256, %256 : vector<8x32xf32>
    %cst_114 = arith.constant dense<0.000000e+00> : vector<8xf32>
    %258 = vector.multi_reduction <add>, %257, %cst_114 [1] : vector<8x32xf32> to vector<8xf32>
    %259 = vector.shape_cast %258 : vector<8xf32> to vector<8x1xf32>
    %cst_115 = arith.constant 3.200000e+01 : f32
    %260 = vector.broadcast %cst_115 : f32 to vector<8x1xf32>
    %261 = arith.divf %259, %260 : vector<8x1xf32>
    %cst_116 = arith.constant 9.99999974E-6 : f32
    %262 = vector.broadcast %cst_116 : f32 to vector<8x1xf32>
    %263 = arith.addf %261, %262 : vector<8x1xf32>
    %264 = math.rsqrt %263 : vector<8x1xf32>
    %265 = vector.broadcast %264 : vector<8x1xf32> to vector<8x32xf32>
    %266 = arith.mulf %256, %265 : vector<8x32xf32>
    %267 = vector.broadcast %249 : vector<1x32xf32> to vector<8x32xf32>
    %268 = arith.mulf %266, %267 : vector<8x32xf32>
    %269 = vector.broadcast %250 : vector<1x32xf32> to vector<8x32xf32>
    %270 = arith.addf %268, %269 : vector<8x32xf32>
    %271 = arith.truncf %270 : vector<8x32xf32> to vector<8x32xbf16>
    %c0_117 = arith.constant 0 : index
    %c0_118 = arith.constant 0 : index
    %272 = vector.load %arg21[%c0_117, %c0_118] : memref<32x64xbf16, #tpu.memory_space<vmem>>, vector<32x64xbf16>
    %cst_119 = arith.constant dense<0.000000e+00> : vector<8x64xf32>
    %273 = tpu.matmul %271, %272, %cst_119 {dimension_numbers = #tpu.dot_dimension_numbers<[1], [0], [0], [1], [0, 0, 1, 1], [], []>} : vector<8x32xbf16>, vector<32x64xbf16>, vector<8x64xf32> -> vector<8x64xf32>
    %c0_120 = arith.constant 0 : index
    %c0_121 = arith.constant 0 : index
    %274 = vector.load %arg22[%c0_120, %c0_121] : memref<1x64xf32, #tpu.memory_space<vmem>>, vector<1x64xf32>
    %275 = vector.broadcast %274 : vector<1x64xf32> to vector<8x64xf32>
    %276 = arith.addf %273, %275 : vector<8x64xf32>
    %cst_122 = arith.constant 0.000000e+00 : f32
    %277 = vector.broadcast %cst_122 : f32 to vector<8x64xf32>
    %278 = arith.maximumf %276, %277 : vector<8x64xf32>
    %279 = arith.truncf %278 : vector<8x64xf32> to vector<8x64xbf16>
    %c0_123 = arith.constant 0 : index
    %c0_124 = arith.constant 0 : index
    %280 = vector.load %arg23[%c0_123, %c0_124] : memref<64x32xbf16, #tpu.memory_space<vmem>>, vector<64x32xbf16>
    %cst_125 = arith.constant dense<0.000000e+00> : vector<8x32xf32>
    %281 = tpu.matmul %279, %280, %cst_125 {dimension_numbers = #tpu.dot_dimension_numbers<[1], [0], [0], [1], [0, 0, 1, 1], [], []>} : vector<8x64xbf16>, vector<64x32xbf16>, vector<8x32xf32> -> vector<8x32xf32>
    %c0_126 = arith.constant 0 : index
    %c0_127 = arith.constant 0 : index
    %282 = vector.load %arg24[%c0_126, %c0_127] : memref<1x32xf32, #tpu.memory_space<vmem>>, vector<1x32xf32>
    %283 = vector.broadcast %282 : vector<1x32xf32> to vector<8x32xf32>
    %284 = arith.addf %281, %283 : vector<8x32xf32>
    %285 = arith.addf %270, %284 : vector<8x32xf32>
    %c0_128 = arith.constant 0 : index
    %c0_129 = arith.constant 0 : index
    %286 = vector.load %arg25[%c0_128, %c0_129] : memref<1x32xf32, #tpu.memory_space<vmem>>, vector<1x32xf32>
    %c0_130 = arith.constant 0 : index
    %c0_131 = arith.constant 0 : index
    %287 = vector.load %arg26[%c0_130, %c0_131] : memref<1x32xf32, #tpu.memory_space<vmem>>, vector<1x32xf32>
    %cst_132 = arith.constant dense<0.000000e+00> : vector<8xf32>
    %288 = vector.multi_reduction <add>, %285, %cst_132 [1] : vector<8x32xf32> to vector<8xf32>
    %289 = vector.shape_cast %288 : vector<8xf32> to vector<8x1xf32>
    %cst_133 = arith.constant 3.200000e+01 : f32
    %290 = vector.broadcast %cst_133 : f32 to vector<8x1xf32>
    %291 = arith.divf %289, %290 : vector<8x1xf32>
    %292 = vector.broadcast %291 : vector<8x1xf32> to vector<8x32xf32>
    %293 = arith.subf %285, %292 : vector<8x32xf32>
    %294 = arith.mulf %293, %293 : vector<8x32xf32>
    %cst_134 = arith.constant dense<0.000000e+00> : vector<8xf32>
    %295 = vector.multi_reduction <add>, %294, %cst_134 [1] : vector<8x32xf32> to vector<8xf32>
    %296 = vector.shape_cast %295 : vector<8xf32> to vector<8x1xf32>
    %cst_135 = arith.constant 3.200000e+01 : f32
    %297 = vector.broadcast %cst_135 : f32 to vector<8x1xf32>
    %298 = arith.divf %296, %297 : vector<8x1xf32>
    %cst_136 = arith.constant 9.99999974E-6 : f32
    %299 = vector.broadcast %cst_136 : f32 to vector<8x1xf32>
    %300 = arith.addf %298, %299 : vector<8x1xf32>
    %301 = math.rsqrt %300 : vector<8x1xf32>
    %302 = vector.broadcast %301 : vector<8x1xf32> to vector<8x32xf32>
    %303 = arith.mulf %293, %302 : vector<8x32xf32>
    %304 = vector.broadcast %286 : vector<1x32xf32> to vector<8x32xf32>
    %305 = arith.mulf %303, %304 : vector<8x32xf32>
    %306 = vector.broadcast %287 : vector<1x32xf32> to vector<8x32xf32>
    %307 = arith.addf %305, %306 : vector<8x32xf32>
    %308 = arith.truncf %307 : vector<8x32xf32> to vector<8x32xbf16>
    %c0_137 = arith.constant 0 : index
    %c0_138 = arith.constant 0 : index
    %c0_139 = arith.constant 0 : index
    %309 = vector.load %arg27[%c0_137, %c0_138, %c0_139] : memref<1x8x32xbf16, #tpu.memory_space<vmem>>, vector<1x8x32xbf16>
    %310 = vector.shape_cast %309 : vector<1x8x32xbf16> to vector<8x32xbf16>
    %311 = vector.shape_cast %308 : vector<8x32xbf16> to vector<1x8x32xbf16>
    tpu.vector_store %arg27[%c0_137, %c0_138, %c0_139], %311 {strides = array<i32>} : memref<1x8x32xbf16, #tpu.memory_space<vmem>>, vector<1x8x32xbf16>,
    return
  }
  func.func @transform_0(%arg0: i32) -> (i32, i32, i32) {
    %c0_i32 = arith.constant 0 : i32
    %c0_i32_0 = arith.constant 0 : i32
    %c0_i32_1 = arith.constant 0 : i32
    return %arg0, %c0_i32, %c0_i32_0 : i32, i32, i32
  }
  func.func @transform_1(%arg0: i32) -> (i32, i32, i32) {
    %c0_i32 = arith.constant 0 : i32
    %c0_i32_0 = arith.constant 0 : i32
    %c0_i32_1 = arith.constant 0 : i32
    return %arg0, %c0_i32, %c0_i32_0 : i32, i32, i32
  }
  func.func @transform_2(%arg0: i32) -> (i32, i32, i32) {
    %c0_i32 = arith.constant 0 : i32
    %c0_i32_0 = arith.constant 0 : i32
    %c0_i32_1 = arith.constant 0 : i32
    return %arg0, %c0_i32, %c0_i32_0 : i32, i32, i32
  }
  func.func @transform_3(%arg0: i32) -> (i32, i32, i32) {
    %c0_i32 = arith.constant 0 : i32
    %c0_i32_0 = arith.constant 0 : i32
    %c0_i32_1 = arith.constant 0 : i32
    return %arg0, %c0_i32, %c0_i32_0 : i32, i32, i32
  }
  func.func @transform_4(%arg0: i32) -> (i32, i32) {
    %c0_i32 = arith.constant 0 : i32
    %c0_i32_0 = arith.constant 0 : i32
    %c0_i32_1 = arith.constant 0 : i32
    return %c0_i32, %c0_i32_0 : i32, i32
  }
  func.func @transform_5(%arg0: i32) -> (i32, i32) {
    %c0_i32 = arith.constant 0 : i32
    %c0_i32_0 = arith.constant 0 : i32
    %c0_i32_1 = arith.constant 0 : i32
    return %c0_i32, %c0_i32_0 : i32, i32
  }
  func.func @transform_6(%arg0: i32) -> (i32, i32) {
    %c0_i32 = arith.constant 0 : i32
    %c0_i32_0 = arith.constant 0 : i32
    %c0_i32_1 = arith.constant 0 : i32
    return %c0_i32, %c0_i32_0 : i32, i32
  }
  func.func @transform_7(%arg0: i32) -> (i32, i32) {
    %c0_i32 = arith.constant 0 : i32
    %c0_i32_0 = arith.constant 0 : i32
    %c0_i32_1 = arith.constant 0 : i32
    return %c0_i32, %c0_i32_0 : i32, i32
  }
  func.func @transform_8(%arg0: i32) -> (i32, i32) {
    %c0_i32 = arith.constant 0 : i32
    %c0_i32_0 = arith.constant 0 : i32
    %c0_i32_1 = arith.constant 0 : i32
    return %c0_i32, %c0_i32_0 : i32, i32
  }
  func.func @transform_9(%arg0: i32) -> (i32, i32) {
    %c0_i32 = arith.constant 0 : i32
    %c0_i32_0 = arith.constant 0 : i32
    %c0_i32_1 = arith.constant 0 : i32
    return %c0_i32, %c0_i32_0 : i32, i32
  }
  func.func @transform_10(%arg0: i32) -> (i32, i32) {
    %c0_i32 = arith.constant 0 : i32
    %c0_i32_0 = arith.constant 0 : i32
    %c0_i32_1 = arith.constant 0 : i32
    return %c0_i32, %c0_i32_0 : i32, i32
  }
  func.func @transform_11(%arg0: i32) -> (i32, i32) {
    %c0_i32 = arith.constant 0 : i32
    %c0_i32_0 = arith.constant 0 : i32
    %c0_i32_1 = arith.constant 0 : i32
    return %c0_i32, %c0_i32_0 : i32, i32
  }
  func.func @transform_12(%arg0: i32) -> (i32, i32) {
    %c0_i32 = arith.constant 0 : i32
    %c0_i32_0 = arith.constant 0 : i32
    %c0_i32_1 = arith.constant 0 : i32
    return %c0_i32, %c0_i32_0 : i32, i32
  }
  func.func @transform_13(%arg0: i32) -> (i32, i32) {
    %c0_i32 = arith.constant 0 : i32
    %c0_i32_0 = arith.constant 0 : i32
    %c0_i32_1 = arith.constant 0 : i32
    return %c0_i32, %c0_i32_0 : i32, i32
  }
  func.func @transform_14(%arg0: i32) -> (i32, i32) {
    %c0_i32 = arith.constant 0 : i32
    %c0_i32_0 = arith.constant 0 : i32
    %c0_i32_1 = arith.constant 0 : i32
    return %c0_i32, %c0_i32_0 : i32, i32
  }
  func.func @transform_15(%arg0: i32) -> (i32, i32) {
    %c0_i32 = arith.constant 0 : i32
    %c0_i32_0 = arith.constant 0 : i32
    %c0_i32_1 = arith.constant 0 : i32
    return %c0_i32, %c0_i32_0 : i32, i32
  }
  func.func @transform_16(%arg0: i32) -> (i32, i32) {
    %c0_i32 = arith.constant 0 : i32
    %c0_i32_0 = arith.constant 0 : i32
    %c0_i32_1 = arith.constant 0 : i32
    return %c0_i32, %c0_i32_0 : i32, i32
  }
  func.func @transform_17(%arg0: i32) -> (i32, i32) {
    %c0_i32 = arith.constant 0 : i32
    %c0_i32_0 = arith.constant 0 : i32
    %c0_i32_1 = arith.constant 0 : i32
    return %c0_i32, %c0_i32_0 : i32, i32
  }
  func.func @transform_18(%arg0: i32) -> (i32, i32) {
    %c0_i32 = arith.constant 0 : i32
    %c0_i32_0 = arith.constant 0 : i32
    %c0_i32_1 = arith.constant 0 : i32
    return %c0_i32, %c0_i32_0 : i32, i32
  }
  func.func @transform_19(%arg0: i32) -> (i32, i32) {
    %c0_i32 = arith.constant 0 : i32
    %c0_i32_0 = arith.constant 0 : i32
    %c0_i32_1 = arith.constant 0 : i32
    return %c0_i32, %c0_i32_0 : i32, i32
  }
  func.func @transform_20(%arg0: i32) -> (i32, i32) {
    %c0_i32 = arith.constant 0 : i32
    %c0_i32_0 = arith.constant 0 : i32
    %c0_i32_1 = arith.constant 0 : i32
    return %c0_i32, %c0_i32_0 : i32, i32
  }
  func.func @transform_21(%arg0: i32) -> (i32, i32) {
    %c0_i32 = arith.constant 0 : i32
    %c0_i32_0 = arith.constant 0 : i32
    %c0_i32_1 = arith.constant 0 : i32
    return %c0_i32, %c0_i32_0 : i32, i32
  }
  func.func @transform_22(%arg0: i32) -> (i32, i32) {
    %c0_i32 = arith.constant 0 : i32
    %c0_i32_0 = arith.constant 0 : i32
    %c0_i32_1 = arith.constant 0 : i32
    return %c0_i32, %c0_i32_0 : i32, i32
  }
  func.func @transform_23(%arg0: i32) -> (i32, i32) {
    %c0_i32 = arith.constant 0 : i32
    %c0_i32_0 = arith.constant 0 : i32
    %c0_i32_1 = arith.constant 0 : i32
    return %c0_i32, %c0_i32_0 : i32, i32
  }
  func.func @transform_24(%arg0: i32) -> (i32, i32) {
    %c0_i32 = arith.constant 0 : i32
    %c0_i32_0 = arith.constant 0 : i32
    %c0_i32_1 = arith.constant 0 : i32
    return %c0_i32, %c0_i32_0 : i32, i32
  }
  func.func @transform_25(%arg0: i32) -> (i32, i32) {
    %c0_i32 = arith.constant 0 : i32
    %c0_i32_0 = arith.constant 0 : i32
    %c0_i32_1 = arith.constant 0 : i32
    return %c0_i32, %c0_i32_0 : i32, i32
  }
  func.func @transform_26(%arg0: i32) -> (i32, i32, i32) {
    %c0_i32 = arith.constant 0 : i32
    %c0_i32_0 = arith.constant 0 : i32
    %c0_i32_1 = arith.constant 0 : i32
    return %arg0, %c0_i32, %c0_i32_0 : i32, i32, i32
  }
}

module attributes {stable_mosaic.version = 11 : i64} {
  func.func @_decoder_layer_kernel(%arg0: i32, %arg1: memref<1x8x32xbf16, #tpu.memory_space<vmem>>, %arg2: memref<1x8x32xbf16, #tpu.memory_space<vmem>>, %arg3: memref<1x1x8xf32, #tpu.memory_space<vmem>>, %arg4: memref<1x1x8xf32, #tpu.memory_space<vmem>>, %arg5: memref<32x32xbf16, #tpu.memory_space<vmem>>, %arg6: memref<1x32xf32, #tpu.memory_space<vmem>>, %arg7: memref<32x64xbf16, #tpu.memory_space<vmem>>, %arg8: memref<1x64xf32, #tpu.memory_space<vmem>>, %arg9: memref<32x32xbf16, #tpu.memory_space<vmem>>, %arg10: memref<1x32xf32, #tpu.memory_space<vmem>>, %arg11: memref<1x32xf32, #tpu.memory_space<vmem>>, %arg12: memref<1x32xf32, #tpu.memory_space<vmem>>, %arg13: memref<32x32xbf16, #tpu.memory_space<vmem>>, %arg14: memref<1x32xf32, #tpu.memory_space<vmem>>, %arg15: memref<32x64xbf16, #tpu.memory_space<vmem>>, %arg16: memref<1x64xf32, #tpu.memory_space<vmem>>, %arg17: memref<32x32xbf16, #tpu.memory_space<vmem>>, %arg18: memref<1x32xf32, #tpu.memory_space<vmem>>, %arg19: memref<1x32xf32, #tpu.memory_space<vmem>>, %arg20: memref<1x32xf32, #tpu.memory_space<vmem>>, %arg21: memref<32x64xbf16, #tpu.memory_space<vmem>>, %arg22: memref<1x64xf32, #tpu.memory_space<vmem>>, %arg23: memref<64x32xbf16, #tpu.memory_space<vmem>>, %arg24: memref<1x32xf32, #tpu.memory_space<vmem>>, %arg25: memref<1x32xf32, #tpu.memory_space<vmem>>, %arg26: memref<1x32xf32, #tpu.memory_space<vmem>>, %arg27: memref<1x8x32xbf16, #tpu.memory_space<vmem>>, %arg28: memref<8x32xf32, #tpu.memory_space<vmem>>) attributes {dimension_semantics = [#tpu.dimension_semantics<parallel>], iteration_bounds = array<i64: 2>, scalar_prefetch = 0 : i64, scratch_operands = 1 : i64, tpu.core_type = #tpu.core_type<tc>, window_params = [{transform_indices = @transform_0, window_bounds = array<i64: 1, 8, 32>}, {transform_indices = @transform_1, window_bounds = array<i64: 1, 8, 32>}, {transform_indices = @transform_2, window_bounds = array<i64: 1, 1, 8>}, {transform_indices = @transform_3, window_bounds = array<i64: 1, 1, 8>}, {pipeline_mode = #tpu.pipeline_mode<synchronous>, transform_indices = @transform_4, window_bounds = array<i64: 32, 32>}, {pipeline_mode = #tpu.pipeline_mode<synchronous>, transform_indices = @transform_5, window_bounds = array<i64: 1, 32>}, {pipeline_mode = #tpu.pipeline_mode<synchronous>, transform_indices = @transform_6, window_bounds = array<i64: 32, 64>}, {pipeline_mode = #tpu.pipeline_mode<synchronous>, transform_indices = @transform_7, window_bounds = array<i64: 1, 64>}, {pipeline_mode = #tpu.pipeline_mode<synchronous>, transform_indices = @transform_8, window_bounds = array<i64: 32, 32>}, {pipeline_mode = #tpu.pipeline_mode<synchronous>, transform_indices = @transform_9, window_bounds = array<i64: 1, 32>}, {pipeline_mode = #tpu.pipeline_mode<synchronous>, transform_indices = @transform_10, window_bounds = array<i64: 1, 32>}, {pipeline_mode = #tpu.pipeline_mode<synchronous>, transform_indices = @transform_11, window_bounds = array<i64: 1, 32>}, {pipeline_mode = #tpu.pipeline_mode<synchronous>, transform_indices = @transform_12, window_bounds = array<i64: 32, 32>}, {pipeline_mode = #tpu.pipeline_mode<synchronous>, transform_indices = @transform_13, window_bounds = array<i64: 1, 32>}, {pipeline_mode = #tpu.pipeline_mode<synchronous>, transform_indices = @transform_14, window_bounds = array<i64: 32, 64>}, {pipeline_mode = #tpu.pipeline_mode<synchronous>, transform_indices = @transform_15, window_bounds = array<i64: 1, 64>}, {pipeline_mode = #tpu.pipeline_mode<synchronous>, transform_indices = @transform_16, window_bounds = array<i64: 32, 32>}, {pipeline_mode = #tpu.pipeline_mode<synchronous>, transform_indices = @transform_17, window_bounds = array<i64: 1, 32>}, {pipeline_mode = #tpu.pipeline_mode<synchronous>, transform_indices = @transform_18, window_bounds = array<i64: 1, 32>}, {pipeline_mode = #tpu.pipeline_mode<synchronous>, transform_indices = @transform_19, window_bounds = array<i64: 1, 32>}, {pipeline_mode = #tpu.pipeline_mode<synchronous>, transform_indices = @transform_20, window_bounds = array<i64: 32, 64>}, {pipeline_mode = #tpu.pipeline_mode<synchronous>, transform_indices = @transform_21, window_bounds = array<i64: 1, 64>}, {pipeline_mode = #tpu.pipeline_mode<synchronous>, transform_indices = @transform_22, window_bounds = array<i64: 64, 32>}, {pipeline_mode = #tpu.pipeline_mode<synchronous>, transform_indices = @transform_23, window_bounds = array<i64: 1, 32>}, {pipeline_mode = #tpu.pipeline_mode<synchronous>, transform_indices = @transform_24, window_bounds = array<i64: 1, 32>}, {pipeline_mode = #tpu.pipeline_mode<synchronous>, transform_indices = @transform_25, window_bounds = array<i64: 1, 32>}, {transform_indices = @transform_26, window_bounds = array<i64: 1, 8, 32>}]} {
    %c0 = arith.constant 0 : index
    %c0_0 = arith.constant 0 : index
    %c0_1 = arith.constant 0 : index
    %0 = vector.load %arg1[%c0, %c0_0, %c0_1] : memref<1x8x32xbf16, #tpu.memory_space<vmem>>, vector<1x8x32xbf16>
    %1 = vector.shape_cast %0 : vector<1x8x32xbf16> to vector<8x32xbf16>
    %2 = arith.extf %1 : vector<8x32xbf16> to vector<8x32xf32>
    %c0_2 = arith.constant 0 : index
    %c0_3 = arith.constant 0 : index
    %c0_4 = arith.constant 0 : index
    %3 = vector.load %arg2[%c0_2, %c0_3, %c0_4] : memref<1x8x32xbf16, #tpu.memory_space<vmem>>, vector<1x8x32xbf16>
    %4 = vector.shape_cast %3 : vector<1x8x32xbf16> to vector<8x32xbf16>
    %c0_5 = arith.constant 0 : index
    %c0_6 = arith.constant 0 : index
    %c0_7 = arith.constant 0 : index
    %5 = vector.load %arg3[%c0_5, %c0_6, %c0_7] : memref<1x1x8xf32, #tpu.memory_space<vmem>>, vector<1x1x8xf32>
    %6 = vector.shape_cast %5 : vector<1x1x8xf32> to vector<1x8xf32>
    %7 = vector.shape_cast %6 : vector<1x8xf32> to vector<1x8xf32>
    %8 = vector.broadcast %7 : vector<1x8xf32> to vector<8x8xf32>
    %9 = tpu.iota {dimensions = array<i32: 0>} : vector<8x8xi32>
    %10 = tpu.iota {dimensions = array<i32: 1>} : vector<8x8xi32>
    %11 = arith.cmpi sgt, %10, %9 : vector<8x8xi32>
    %cst = arith.constant -1.000000e+30 : f32
    %cst_8 = arith.constant 0.000000e+00 : f32
    %12 = vector.broadcast %cst : f32 to vector<8x8xf32>
    %13 = vector.broadcast %cst_8 : f32 to vector<8x8xf32>
    %14 = arith.select %11, %12, %13 : vector<8x8xi1>, vector<8x8xf32>
    %15 = arith.addf %8, %14 : vector<8x8xf32>
    %c0_9 = arith.constant 0 : index
    %c0_10 = arith.constant 0 : index
    %16 = vector.load %arg5[%c0_9, %c0_10] : memref<32x32xbf16, #tpu.memory_space<vmem>>, vector<32x32xbf16>
    %cst_11 = arith.constant dense<0.000000e+00> : vector<8x32xf32>
    %17 = tpu.matmul %1, %16, %cst_11 {dimension_numbers = #tpu.dot_dimension_numbers<[1], [0], [0], [1], [0, 0, 1, 1], [], []>} : vector<8x32xbf16>, vector<32x32xbf16>, vector<8x32xf32> -> vector<8x32xf32>
    %c0_12 = arith.constant 0 : index
    %c0_13 = arith.constant 0 : index
    %18 = vector.load %arg6[%c0_12, %c0_13] : memref<1x32xf32, #tpu.memory_space<vmem>>, vector<1x32xf32>
    %19 = vector.broadcast %18 : vector<1x32xf32> to vector<8x32xf32>
    %20 = arith.addf %17, %19 : vector<8x32xf32>
    %21 = arith.truncf %20 : vector<8x32xf32> to vector<8x32xbf16>
    %c0_14 = arith.constant 0 : index
    %c0_15 = arith.constant 0 : index
    %22 = vector.load %arg7[%c0_14, %c0_15] : memref<32x64xbf16, #tpu.memory_space<vmem>>, vector<32x64xbf16>
    %cst_16 = arith.constant dense<0.000000e+00> : vector<8x64xf32>
    %23 = tpu.matmul %1, %22, %cst_16 {dimension_numbers = #tpu.dot_dimension_numbers<[1], [0], [0], [1], [0, 0, 1, 1], [], []>} : vector<8x32xbf16>, vector<32x64xbf16>, vector<8x64xf32> -> vector<8x64xf32>
    %c0_17 = arith.constant 0 : index
    %c0_18 = arith.constant 0 : index
    %24 = vector.load %arg8[%c0_17, %c0_18] : memref<1x64xf32, #tpu.memory_space<vmem>>, vector<1x64xf32>
    %25 = vector.broadcast %24 : vector<1x64xf32> to vector<8x64xf32>
    %26 = arith.addf %23, %25 : vector<8x64xf32>
    %27 = vector.extract_strided_slice %26 {offsets = [0, 0], sizes = [8, 32], strides = [1, 1]} : vector<8x64xf32> to vector<8x32xf32>
    %28 = arith.truncf %27 : vector<8x32xf32> to vector<8x32xbf16>
    %29 = vector.extract_strided_slice %26 {offsets = [0, 32], sizes = [8, 32], strides = [1, 1]} : vector<8x64xf32> to vector<8x32xf32>
    %30 = arith.truncf %29 : vector<8x32xf32> to vector<8x32xbf16>
    %31 = vector.extract_strided_slice %21 {offsets = [0, 0], sizes = [8, 8], strides = [1, 1]} : vector<8x32xbf16> to vector<8x8xbf16>
    %32 = vector.extract_strided_slice %28 {offsets = [0, 0], sizes = [8, 8], strides = [1, 1]} : vector<8x32xbf16> to vector<8x8xbf16>
    %33 = vector.extract_strided_slice %30 {offsets = [0, 0], sizes = [8, 8], strides = [1, 1]} : vector<8x32xbf16> to vector<8x8xbf16>
    %cst_19 = arith.constant dense<0.000000e+00> : vector<8x8xf32>
    %34 = tpu.matmul %31, %32, %cst_19 {dimension_numbers = #tpu.dot_dimension_numbers<[1], [1], [0], [0], [0, 0, 1, 0], [], []>} : vector<8x8xbf16>, vector<8x8xbf16>, vector<8x8xf32> -> vector<8x8xf32>
    %cst_20 = arith.constant 0.353553385 : f32
    %35 = vector.broadcast %cst_20 : f32 to vector<8x8xf32>
    %36 = arith.mulf %34, %35 : vector<8x8xf32>
    %37 = arith.addf %36, %15 : vector<8x8xf32>
    %cst_21 = arith.constant dense<0xFF800000> : vector<8xf32>
    %38 = vector.multi_reduction <maximumf>, %37, %cst_21 [1] : vector<8x8xf32> to vector<8xf32>
    %39 = vector.shape_cast %38 : vector<8xf32> to vector<8x1xf32>
    %40 = vector.broadcast %39 : vector<8x1xf32> to vector<8x8xf32>
    %41 = arith.subf %37, %40 : vector<8x8xf32>
    %42 = math.exp %41 : vector<8x8xf32>
    %cst_22 = arith.constant dense<0.000000e+00> : vector<8xf32>
    %43 = vector.multi_reduction <add>, %42, %cst_22 [1] : vector<8x8xf32> to vector<8xf32>
    %44 = vector.shape_cast %43 : vector<8xf32> to vector<8x1xf32>
    %45 = tpu.reciprocal %44 {approx = true} : vector<8x1xf32> -> vector<8x1xf32>
    %46 = vector.broadcast %45 : vector<8x1xf32> to vector<8x8xf32>
    %47 = arith.mulf %42, %46 : vector<8x8xf32>
    %48 = arith.truncf %47 : vector<8x8xf32> to vector<8x8xbf16>
    %cst_23 = arith.constant dense<0.000000e+00> : vector<8x8xf32>
    %49 = tpu.matmul %48, %33, %cst_23 {dimension_numbers = #tpu.dot_dimension_numbers<[1], [0], [0], [1], [0, 0, 1, 1], [], []>} : vector<8x8xbf16>, vector<8x8xbf16>, vector<8x8xf32> -> vector<8x8xf32>
    %c0_24 = arith.constant 0 : index
    %c0_25 = arith.constant 0 : index
    %50 = vector.load %arg28[%c0_24, %c0_25] : memref<8x32xf32, #tpu.memory_space<vmem>>, vector<8x8xf32>
    tpu.vector_store %arg28[%c0_24, %c0_25], %49 {strides = array<i32>} : memref<8x32xf32, #tpu.memory_space<vmem>>, vector<8x8xf32>,
    %51 = vector.extract_strided_slice %21 {offsets = [0, 8], sizes = [8, 8], strides = [1, 1]} : vector<8x32xbf16> to vector<8x8xbf16>
    %52 = vector.extract_strided_slice %28 {offsets = [0, 8], sizes = [8, 8], strides = [1, 1]} : vector<8x32xbf16> to vector<8x8xbf16>
    %53 = vector.extract_strided_slice %30 {offsets = [0, 8], sizes = [8, 8], strides = [1, 1]} : vector<8x32xbf16> to vector<8x8xbf16>
    %cst_26 = arith.constant dense<0.000000e+00> : vector<8x8xf32>
    %54 = tpu.matmul %51, %52, %cst_26 {dimension_numbers = #tpu.dot_dimension_numbers<[1], [1], [0], [0], [0, 0, 1, 0], [], []>} : vector<8x8xbf16>, vector<8x8xbf16>, vector<8x8xf32> -> vector<8x8xf32>
    %cst_27 = arith.constant 0.353553385 : f32
    %55 = vector.broadcast %cst_27 : f32 to vector<8x8xf32>
    %56 = arith.mulf %54, %55 : vector<8x8xf32>
    %57 = arith.addf %56, %15 : vector<8x8xf32>
    %cst_28 = arith.constant dense<0xFF800000> : vector<8xf32>
    %58 = vector.multi_reduction <maximumf>, %57, %cst_28 [1] : vector<8x8xf32> to vector<8xf32>
    %59 = vector.shape_cast %58 : vector<8xf32> to vector<8x1xf32>
    %60 = vector.broadcast %59 : vector<8x1xf32> to vector<8x8xf32>
    %61 = arith.subf %57, %60 : vector<8x8xf32>
    %62 = math.exp %61 : vector<8x8xf32>
    %cst_29 = arith.constant dense<0.000000e+00> : vector<8xf32>
    %63 = vector.multi_reduction <add>, %62, %cst_29 [1] : vector<8x8xf32> to vector<8xf32>
    %64 = vector.shape_cast %63 : vector<8xf32> to vector<8x1xf32>
    %65 = tpu.reciprocal %64 {approx = true} : vector<8x1xf32> -> vector<8x1xf32>
    %66 = vector.broadcast %65 : vector<8x1xf32> to vector<8x8xf32>
    %67 = arith.mulf %62, %66 : vector<8x8xf32>
    %68 = arith.truncf %67 : vector<8x8xf32> to vector<8x8xbf16>
    %cst_30 = arith.constant dense<0.000000e+00> : vector<8x8xf32>
    %69 = tpu.matmul %68, %53, %cst_30 {dimension_numbers = #tpu.dot_dimension_numbers<[1], [0], [0], [1], [0, 0, 1, 1], [], []>} : vector<8x8xbf16>, vector<8x8xbf16>, vector<8x8xf32> -> vector<8x8xf32>
    %c0_31 = arith.constant 0 : index
    %c8 = arith.constant 8 : index
    %70 = vector.load %arg28[%c0_31, %c8] : memref<8x32xf32, #tpu.memory_space<vmem>>, vector<8x8xf32>
    tpu.vector_store %arg28[%c0_31, %c8], %69 {strides = array<i32>} : memref<8x32xf32, #tpu.memory_space<vmem>>, vector<8x8xf32>,
    %71 = vector.extract_strided_slice %21 {offsets = [0, 16], sizes = [8, 8], strides = [1, 1]} : vector<8x32xbf16> to vector<8x8xbf16>
    %72 = vector.extract_strided_slice %28 {offsets = [0, 16], sizes = [8, 8], strides = [1, 1]} : vector<8x32xbf16> to vector<8x8xbf16>
    %73 = vector.extract_strided_slice %30 {offsets = [0, 16], sizes = [8, 8], strides = [1, 1]} : vector<8x32xbf16> to vector<8x8xbf16>
    %cst_32 = arith.constant dense<0.000000e+00> : vector<8x8xf32>
    %74 = tpu.matmul %71, %72, %cst_32 {dimension_numbers = #tpu.dot_dimension_numbers<[1], [1], [0], [0], [0, 0, 1, 0], [], []>} : vector<8x8xbf16>, vector<8x8xbf16>, vector<8x8xf32> -> vector<8x8xf32>
    %cst_33 = arith.constant 0.353553385 : f32
    %75 = vector.broadcast %cst_33 : f32 to vector<8x8xf32>
    %76 = arith.mulf %74, %75 : vector<8x8xf32>
    %77 = arith.addf %76, %15 : vector<8x8xf32>
    %cst_34 = arith.constant dense<0xFF800000> : vector<8xf32>
    %78 = vector.multi_reduction <maximumf>, %77, %cst_34 [1] : vector<8x8xf32> to vector<8xf32>
    %79 = vector.shape_cast %78 : vector<8xf32> to vector<8x1xf32>
    %80 = vector.broadcast %79 : vector<8x1xf32> to vector<8x8xf32>
    %81 = arith.subf %77, %80 : vector<8x8xf32>
    %82 = math.exp %81 : vector<8x8xf32>
    %cst_35 = arith.constant dense<0.000000e+00> : vector<8xf32>
    %83 = vector.multi_reduction <add>, %82, %cst_35 [1] : vector<8x8xf32> to vector<8xf32>
    %84 = vector.shape_cast %83 : vector<8xf32> to vector<8x1xf32>
    %85 = tpu.reciprocal %84 {approx = true} : vector<8x1xf32> -> vector<8x1xf32>
    %86 = vector.broadcast %85 : vector<8x1xf32> to vector<8x8xf32>
    %87 = arith.mulf %82, %86 : vector<8x8xf32>
    %88 = arith.truncf %87 : vector<8x8xf32> to vector<8x8xbf16>
    %cst_36 = arith.constant dense<0.000000e+00> : vector<8x8xf32>
    %89 = tpu.matmul %88, %73, %cst_36 {dimension_numbers = #tpu.dot_dimension_numbers<[1], [0], [0], [1], [0, 0, 1, 1], [], []>} : vector<8x8xbf16>, vector<8x8xbf16>, vector<8x8xf32> -> vector<8x8xf32>
    %c0_37 = arith.constant 0 : index
    %c16 = arith.constant 16 : index
    %90 = vector.load %arg28[%c0_37, %c16] : memref<8x32xf32, #tpu.memory_space<vmem>>, vector<8x8xf32>
    tpu.vector_store %arg28[%c0_37, %c16], %89 {strides = array<i32>} : memref<8x32xf32, #tpu.memory_space<vmem>>, vector<8x8xf32>,
    %91 = vector.extract_strided_slice %21 {offsets = [0, 24], sizes = [8, 8], strides = [1, 1]} : vector<8x32xbf16> to vector<8x8xbf16>
    %92 = vector.extract_strided_slice %28 {offsets = [0, 24], sizes = [8, 8], strides = [1, 1]} : vector<8x32xbf16> to vector<8x8xbf16>
    %93 = vector.extract_strided_slice %30 {offsets = [0, 24], sizes = [8, 8], strides = [1, 1]} : vector<8x32xbf16> to vector<8x8xbf16>
    %cst_38 = arith.constant dense<0.000000e+00> : vector<8x8xf32>
    %94 = tpu.matmul %91, %92, %cst_38 {dimension_numbers = #tpu.dot_dimension_numbers<[1], [1], [0], [0], [0, 0, 1, 0], [], []>} : vector<8x8xbf16>, vector<8x8xbf16>, vector<8x8xf32> -> vector<8x8xf32>
    %cst_39 = arith.constant 0.353553385 : f32
    %95 = vector.broadcast %cst_39 : f32 to vector<8x8xf32>
    %96 = arith.mulf %94, %95 : vector<8x8xf32>
    %97 = arith.addf %96, %15 : vector<8x8xf32>
    %cst_40 = arith.constant dense<0xFF800000> : vector<8xf32>
    %98 = vector.multi_reduction <maximumf>, %97, %cst_40 [1] : vector<8x8xf32> to vector<8xf32>
    %99 = vector.shape_cast %98 : vector<8xf32> to vector<8x1xf32>
    %100 = vector.broadcast %99 : vector<8x1xf32> to vector<8x8xf32>
    %101 = arith.subf %97, %100 : vector<8x8xf32>
    %102 = math.exp %101 : vector<8x8xf32>
    %cst_41 = arith.constant dense<0.000000e+00> : vector<8xf32>
    %103 = vector.multi_reduction <add>, %102, %cst_41 [1] : vector<8x8xf32> to vector<8xf32>
    %104 = vector.shape_cast %103 : vector<8xf32> to vector<8x1xf32>
    %105 = tpu.reciprocal %104 {approx = true} : vector<8x1xf32> -> vector<8x1xf32>
    %106 = vector.broadcast %105 : vector<8x1xf32> to vector<8x8xf32>
    %107 = arith.mulf %102, %106 : vector<8x8xf32>
    %108 = arith.truncf %107 : vector<8x8xf32> to vector<8x8xbf16>
    %cst_42 = arith.constant dense<0.000000e+00> : vector<8x8xf32>
    %109 = tpu.matmul %108, %93, %cst_42 {dimension_numbers = #tpu.dot_dimension_numbers<[1], [0], [0], [1], [0, 0, 1, 1], [], []>} : vector<8x8xbf16>, vector<8x8xbf16>, vector<8x8xf32> -> vector<8x8xf32>
    %c0_43 = arith.constant 0 : index
    %c24 = arith.constant 24 : index
    %110 = vector.load %arg28[%c0_43, %c24] : memref<8x32xf32, #tpu.memory_space<vmem>>, vector<8x8xf32>
    tpu.vector_store %arg28[%c0_43, %c24], %109 {strides = array<i32>} : memref<8x32xf32, #tpu.memory_space<vmem>>, vector<8x8xf32>,
    %c0_44 = arith.constant 0 : index
    %c0_45 = arith.constant 0 : index
    %111 = vector.load %arg28[%c0_44, %c0_45] : memref<8x32xf32, #tpu.memory_space<vmem>>, vector<8x32xf32>
    %112 = arith.truncf %111 : vector<8x32xf32> to vector<8x32xbf16>
    %c0_46 = arith.constant 0 : index
    %c0_47 = arith.constant 0 : index
    %113 = vector.load %arg9[%c0_46, %c0_47] : memref<32x32xbf16, #tpu.memory_space<vmem>>, vector<32x32xbf16>
    %cst_48 = arith.constant dense<0.000000e+00> : vector<8x32xf32>
    %114 = tpu.matmul %112, %113, %cst_48 {dimension_numbers = #tpu.dot_dimension_numbers<[1], [0], [0], [1], [0, 0, 1, 1], [], []>} : vector<8x32xbf16>, vector<32x32xbf16>, vector<8x32xf32> -> vector<8x32xf32>
    %c0_49 = arith.constant 0 : index
    %c0_50 = arith.constant 0 : index
    %115 = vector.load %arg10[%c0_49, %c0_50] : memref<1x32xf32, #tpu.memory_space<vmem>>, vector<1x32xf32>
    %116 = vector.broadcast %115 : vector<1x32xf32> to vector<8x32xf32>
    %117 = arith.addf %114, %116 : vector<8x32xf32>
    %118 = arith.addf %2, %117 : vector<8x32xf32>
    %c0_51 = arith.constant 0 : index
    %c0_52 = arith.constant 0 : index
    %119 = vector.load %arg11[%c0_51, %c0_52] : memref<1x32xf32, #tpu.memory_space<vmem>>, vector<1x32xf32>
    %c0_53 = arith.constant 0 : index
    %c0_54 = arith.constant 0 : index
    %120 = vector.load %arg12[%c0_53, %c0_54] : memref<1x32xf32, #tpu.memory_space<vmem>>, vector<1x32xf32>
    %cst_55 = arith.constant dense<0.000000e+00> : vector<8xf32>
    %121 = vector.multi_reduction <add>, %118, %cst_55 [1] : vector<8x32xf32> to vector<8xf32>
    %122 = vector.shape_cast %121 : vector<8xf32> to vector<8x1xf32>
    %cst_56 = arith.constant 3.200000e+01 : f32
    %123 = vector.broadcast %cst_56 : f32 to vector<8x1xf32>
    %124 = arith.divf %122, %123 : vector<8x1xf32>
    %125 = vector.broadcast %124 : vector<8x1xf32> to vector<8x32xf32>
    %126 = arith.subf %118, %125 : vector<8x32xf32>
    %127 = arith.mulf %126, %126 : vector<8x32xf32>
    %cst_57 = arith.constant dense<0.000000e+00> : vector<8xf32>
    %128 = vector.multi_reduction <add>, %127, %cst_57 [1] : vector<8x32xf32> to vector<8xf32>
    %129 = vector.shape_cast %128 : vector<8xf32> to vector<8x1xf32>
    %cst_58 = arith.constant 3.200000e+01 : f32
    %130 = vector.broadcast %cst_58 : f32 to vector<8x1xf32>
    %131 = arith.divf %129, %130 : vector<8x1xf32>
    %cst_59 = arith.constant 9.99999974E-6 : f32
    %132 = vector.broadcast %cst_59 : f32 to vector<8x1xf32>
    %133 = arith.addf %131, %132 : vector<8x1xf32>
    %134 = math.rsqrt %133 : vector<8x1xf32>
    %135 = vector.broadcast %134 : vector<8x1xf32> to vector<8x32xf32>
    %136 = arith.mulf %126, %135 : vector<8x32xf32>
    %137 = vector.broadcast %119 : vector<1x32xf32> to vector<8x32xf32>
    %138 = arith.mulf %136, %137 : vector<8x32xf32>
    %139 = vector.broadcast %120 : vector<1x32xf32> to vector<8x32xf32>
    %140 = arith.addf %138, %139 : vector<8x32xf32>
    %c0_60 = arith.constant 0 : index
    %c0_61 = arith.constant 0 : index
    %c0_62 = arith.constant 0 : index
    %141 = vector.load %arg4[%c0_60, %c0_61, %c0_62] : memref<1x1x8xf32, #tpu.memory_space<vmem>>, vector<1x1x8xf32>
    %142 = vector.shape_cast %141 : vector<1x1x8xf32> to vector<1x8xf32>
    %143 = vector.shape_cast %142 : vector<1x8xf32> to vector<1x8xf32>
    %144 = vector.broadcast %143 : vector<1x8xf32> to vector<8x8xf32>
    %145 = arith.truncf %140 : vector<8x32xf32> to vector<8x32xbf16>
    %c0_63 = arith.constant 0 : index
    %c0_64 = arith.constant 0 : index
    %146 = vector.load %arg13[%c0_63, %c0_64] : memref<32x32xbf16, #tpu.memory_space<vmem>>, vector<32x32xbf16>
    %cst_65 = arith.constant dense<0.000000e+00> : vector<8x32xf32>
    %147 = tpu.matmul %145, %146, %cst_65 {dimension_numbers = #tpu.dot_dimension_numbers<[1], [0], [0], [1], [0, 0, 1, 1], [], []>} : vector<8x32xbf16>, vector<32x32xbf16>, vector<8x32xf32> -> vector<8x32xf32>
    %c0_66 = arith.constant 0 : index
    %c0_67 = arith.constant 0 : index
    %148 = vector.load %arg14[%c0_66, %c0_67] : memref<1x32xf32, #tpu.memory_space<vmem>>, vector<1x32xf32>
    %149 = vector.broadcast %148 : vector<1x32xf32> to vector<8x32xf32>
    %150 = arith.addf %147, %149 : vector<8x32xf32>
    %151 = arith.truncf %150 : vector<8x32xf32> to vector<8x32xbf16>
    %c0_68 = arith.constant 0 : index
    %c0_69 = arith.constant 0 : index
    %152 = vector.load %arg15[%c0_68, %c0_69] : memref<32x64xbf16, #tpu.memory_space<vmem>>, vector<32x64xbf16>
    %cst_70 = arith.constant dense<0.000000e+00> : vector<8x64xf32>
    %153 = tpu.matmul %4, %152, %cst_70 {dimension_numbers = #tpu.dot_dimension_numbers<[1], [0], [0], [1], [0, 0, 1, 1], [], []>} : vector<8x32xbf16>, vector<32x64xbf16>, vector<8x64xf32> -> vector<8x64xf32>
    %c0_71 = arith.constant 0 : index
    %c0_72 = arith.constant 0 : index
    %154 = vector.load %arg16[%c0_71, %c0_72] : memref<1x64xf32, #tpu.memory_space<vmem>>, vector<1x64xf32>
    %155 = vector.broadcast %154 : vector<1x64xf32> to vector<8x64xf32>
    %156 = arith.addf %153, %155 : vector<8x64xf32>
    %157 = vector.extract_strided_slice %156 {offsets = [0, 0], sizes = [8, 32], strides = [1, 1]} : vector<8x64xf32> to vector<8x32xf32>
    %158 = arith.truncf %157 : vector<8x32xf32> to vector<8x32xbf16>
    %159 = vector.extract_strided_slice %156 {offsets = [0, 32], sizes = [8, 32], strides = [1, 1]} : vector<8x64xf32> to vector<8x32xf32>
    %160 = arith.truncf %159 : vector<8x32xf32> to vector<8x32xbf16>
    %161 = vector.extract_strided_slice %151 {offsets = [0, 0], sizes = [8, 8], strides = [1, 1]} : vector<8x32xbf16> to vector<8x8xbf16>
    %162 = vector.extract_strided_slice %158 {offsets = [0, 0], sizes = [8, 8], strides = [1, 1]} : vector<8x32xbf16> to vector<8x8xbf16>
    %163 = vector.extract_strided_slice %160 {offsets = [0, 0], sizes = [8, 8], strides = [1, 1]} : vector<8x32xbf16> to vector<8x8xbf16>
    %cst_73 = arith.constant dense<0.000000e+00> : vector<8x8xf32>
    %164 = tpu.matmul %161, %162, %cst_73 {dimension_numbers = #tpu.dot_dimension_numbers<[1], [1], [0], [0], [0, 0, 1, 0], [], []>} : vector<8x8xbf16>, vector<8x8xbf16>, vector<8x8xf32> -> vector<8x8xf32>
    %cst_74 = arith.constant 0.353553385 : f32
    %165 = vector.broadcast %cst_74 : f32 to vector<8x8xf32>
    %166 = arith.mulf %164, %165 : vector<8x8xf32>
    %167 = arith.addf %166, %144 : vector<8x8xf32>
    %cst_75 = arith.constant dense<0xFF800000> : vector<8xf32>
    %168 = vector.multi_reduction <maximumf>, %167, %cst_75 [1] : vector<8x8xf32> to vector<8xf32>
    %169 = vector.shape_cast %168 : vector<8xf32> to vector<8x1xf32>
    %170 = vector.broadcast %169 : vector<8x1xf32> to vector<8x8xf32>
    %171 = arith.subf %167, %170 : vector<8x8xf32>
    %172 = math.exp %171 : vector<8x8xf32>
    %cst_76 = arith.constant dense<0.000000e+00> : vector<8xf32>
    %173 = vector.multi_reduction <add>, %172, %cst_76 [1] : vector<8x8xf32> to vector<8xf32>
    %174 = vector.shape_cast %173 : vector<8xf32> to vector<8x1xf32>
    %175 = tpu.reciprocal %174 {approx = true} : vector<8x1xf32> -> vector<8x1xf32>
    %176 = vector.broadcast %175 : vector<8x1xf32> to vector<8x8xf32>
    %177 = arith.mulf %172, %176 : vector<8x8xf32>
    %178 = arith.truncf %177 : vector<8x8xf32> to vector<8x8xbf16>
    %cst_77 = arith.constant dense<0.000000e+00> : vector<8x8xf32>
    %179 = tpu.matmul %178, %163, %cst_77 {dimension_numbers = #tpu.dot_dimension_numbers<[1], [0], [0], [1], [0, 0, 1, 1], [], []>} : vector<8x8xbf16>, vector<8x8xbf16>, vector<8x8xf32> -> vector<8x8xf32>
    %c0_78 = arith.constant 0 : index
    %c0_79 = arith.constant 0 : index
    %180 = vector.load %arg28[%c0_78, %c0_79] : memref<8x32xf32, #tpu.memory_space<vmem>>, vector<8x8xf32>
    tpu.vector_store %arg28[%c0_78, %c0_79], %179 {strides = array<i32>} : memref<8x32xf32, #tpu.memory_space<vmem>>, vector<8x8xf32>,
    %181 = vector.extract_strided_slice %151 {offsets = [0, 8], sizes = [8, 8], strides = [1, 1]} : vector<8x32xbf16> to vector<8x8xbf16>
    %182 = vector.extract_strided_slice %158 {offsets = [0, 8], sizes = [8, 8], strides = [1, 1]} : vector<8x32xbf16> to vector<8x8xbf16>
    %183 = vector.extract_strided_slice %160 {offsets = [0, 8], sizes = [8, 8], strides = [1, 1]} : vector<8x32xbf16> to vector<8x8xbf16>
    %cst_80 = arith.constant dense<0.000000e+00> : vector<8x8xf32>
    %184 = tpu.matmul %181, %182, %cst_80 {dimension_numbers = #tpu.dot_dimension_numbers<[1], [1], [0], [0], [0, 0, 1, 0], [], []>} : vector<8x8xbf16>, vector<8x8xbf16>, vector<8x8xf32> -> vector<8x8xf32>
    %cst_81 = arith.constant 0.353553385 : f32
    %185 = vector.broadcast %cst_81 : f32 to vector<8x8xf32>
    %186 = arith.mulf %184, %185 : vector<8x8xf32>
    %187 = arith.addf %186, %144 : vector<8x8xf32>
    %cst_82 = arith.constant dense<0xFF800000> : vector<8xf32>
    %188 = vector.multi_reduction <maximumf>, %187, %cst_82 [1] : vector<8x8xf32> to vector<8xf32>
    %189 = vector.shape_cast %188 : vector<8xf32> to vector<8x1xf32>
    %190 = vector.broadcast %189 : vector<8x1xf32> to vector<8x8xf32>
    %191 = arith.subf %187, %190 : vector<8x8xf32>
    %192 = math.exp %191 : vector<8x8xf32>
    %cst_83 = arith.constant dense<0.000000e+00> : vector<8xf32>
    %193 = vector.multi_reduction <add>, %192, %cst_83 [1] : vector<8x8xf32> to vector<8xf32>
    %194 = vector.shape_cast %193 : vector<8xf32> to vector<8x1xf32>
    %195 = tpu.reciprocal %194 {approx = true} : vector<8x1xf32> -> vector<8x1xf32>
    %196 = vector.broadcast %195 : vector<8x1xf32> to vector<8x8xf32>
    %197 = arith.mulf %192, %196 : vector<8x8xf32>
    %198 = arith.truncf %197 : vector<8x8xf32> to vector<8x8xbf16>
    %cst_84 = arith.constant dense<0.000000e+00> : vector<8x8xf32>
    %199 = tpu.matmul %198, %183, %cst_84 {dimension_numbers = #tpu.dot_dimension_numbers<[1], [0], [0], [1], [0, 0, 1, 1], [], []>} : vector<8x8xbf16>, vector<8x8xbf16>, vector<8x8xf32> -> vector<8x8xf32>
    %c0_85 = arith.constant 0 : index
    %c8_86 = arith.constant 8 : index
    %200 = vector.load %arg28[%c0_85, %c8_86] : memref<8x32xf32, #tpu.memory_space<vmem>>, vector<8x8xf32>
    tpu.vector_store %arg28[%c0_85, %c8_86], %199 {strides = array<i32>} : memref<8x32xf32, #tpu.memory_space<vmem>>, vector<8x8xf32>,
    %201 = vector.extract_strided_slice %151 {offsets = [0, 16], sizes = [8, 8], strides = [1, 1]} : vector<8x32xbf16> to vector<8x8xbf16>
    %202 = vector.extract_strided_slice %158 {offsets = [0, 16], sizes = [8, 8], strides = [1, 1]} : vector<8x32xbf16> to vector<8x8xbf16>
    %203 = vector.extract_strided_slice %160 {offsets = [0, 16], sizes = [8, 8], strides = [1, 1]} : vector<8x32xbf16> to vector<8x8xbf16>
    %cst_87 = arith.constant dense<0.000000e+00> : vector<8x8xf32>
    %204 = tpu.matmul %201, %202, %cst_87 {dimension_numbers = #tpu.dot_dimension_numbers<[1], [1], [0], [0], [0, 0, 1, 0], [], []>} : vector<8x8xbf16>, vector<8x8xbf16>, vector<8x8xf32> -> vector<8x8xf32>
    %cst_88 = arith.constant 0.353553385 : f32
    %205 = vector.broadcast %cst_88 : f32 to vector<8x8xf32>
    %206 = arith.mulf %204, %205 : vector<8x8xf32>
    %207 = arith.addf %206, %144 : vector<8x8xf32>
    %cst_89 = arith.constant dense<0xFF800000> : vector<8xf32>
    %208 = vector.multi_reduction <maximumf>, %207, %cst_89 [1] : vector<8x8xf32> to vector<8xf32>
    %209 = vector.shape_cast %208 : vector<8xf32> to vector<8x1xf32>
    %210 = vector.broadcast %209 : vector<8x1xf32> to vector<8x8xf32>
    %211 = arith.subf %207, %210 : vector<8x8xf32>
    %212 = math.exp %211 : vector<8x8xf32>
    %cst_90 = arith.constant dense<0.000000e+00> : vector<8xf32>
    %213 = vector.multi_reduction <add>, %212, %cst_90 [1] : vector<8x8xf32> to vector<8xf32>
    %214 = vector.shape_cast %213 : vector<8xf32> to vector<8x1xf32>
    %215 = tpu.reciprocal %214 {approx = true} : vector<8x1xf32> -> vector<8x1xf32>
    %216 = vector.broadcast %215 : vector<8x1xf32> to vector<8x8xf32>
    %217 = arith.mulf %212, %216 : vector<8x8xf32>
    %218 = arith.truncf %217 : vector<8x8xf32> to vector<8x8xbf16>
    %cst_91 = arith.constant dense<0.000000e+00> : vector<8x8xf32>
    %219 = tpu.matmul %218, %203, %cst_91 {dimension_numbers = #tpu.dot_dimension_numbers<[1], [0], [0], [1], [0, 0, 1, 1], [], []>} : vector<8x8xbf16>, vector<8x8xbf16>, vector<8x8xf32> -> vector<8x8xf32>
    %c0_92 = arith.constant 0 : index
    %c16_93 = arith.constant 16 : index
    %220 = vector.load %arg28[%c0_92, %c16_93] : memref<8x32xf32, #tpu.memory_space<vmem>>, vector<8x8xf32>
    tpu.vector_store %arg28[%c0_92, %c16_93], %219 {strides = array<i32>} : memref<8x32xf32, #tpu.memory_space<vmem>>, vector<8x8xf32>,
    %221 = vector.extract_strided_slice %151 {offsets = [0, 24], sizes = [8, 8], strides = [1, 1]} : vector<8x32xbf16> to vector<8x8xbf16>
    %222 = vector.extract_strided_slice %158 {offsets = [0, 24], sizes = [8, 8], strides = [1, 1]} : vector<8x32xbf16> to vector<8x8xbf16>
    %223 = vector.extract_strided_slice %160 {offsets = [0, 24], sizes = [8, 8], strides = [1, 1]} : vector<8x32xbf16> to vector<8x8xbf16>
    %cst_94 = arith.constant dense<0.000000e+00> : vector<8x8xf32>
    %224 = tpu.matmul %221, %222, %cst_94 {dimension_numbers = #tpu.dot_dimension_numbers<[1], [1], [0], [0], [0, 0, 1, 0], [], []>} : vector<8x8xbf16>, vector<8x8xbf16>, vector<8x8xf32> -> vector<8x8xf32>
    %cst_95 = arith.constant 0.353553385 : f32
    %225 = vector.broadcast %cst_95 : f32 to vector<8x8xf32>
    %226 = arith.mulf %224, %225 : vector<8x8xf32>
    %227 = arith.addf %226, %144 : vector<8x8xf32>
    %cst_96 = arith.constant dense<0xFF800000> : vector<8xf32>
    %228 = vector.multi_reduction <maximumf>, %227, %cst_96 [1] : vector<8x8xf32> to vector<8xf32>
    %229 = vector.shape_cast %228 : vector<8xf32> to vector<8x1xf32>
    %230 = vector.broadcast %229 : vector<8x1xf32> to vector<8x8xf32>
    %231 = arith.subf %227, %230 : vector<8x8xf32>
    %232 = math.exp %231 : vector<8x8xf32>
    %cst_97 = arith.constant dense<0.000000e+00> : vector<8xf32>
    %233 = vector.multi_reduction <add>, %232, %cst_97 [1] : vector<8x8xf32> to vector<8xf32>
    %234 = vector.shape_cast %233 : vector<8xf32> to vector<8x1xf32>
    %235 = tpu.reciprocal %234 {approx = true} : vector<8x1xf32> -> vector<8x1xf32>
    %236 = vector.broadcast %235 : vector<8x1xf32> to vector<8x8xf32>
    %237 = arith.mulf %232, %236 : vector<8x8xf32>
    %238 = arith.truncf %237 : vector<8x8xf32> to vector<8x8xbf16>
    %cst_98 = arith.constant dense<0.000000e+00> : vector<8x8xf32>
    %239 = tpu.matmul %238, %223, %cst_98 {dimension_numbers = #tpu.dot_dimension_numbers<[1], [0], [0], [1], [0, 0, 1, 1], [], []>} : vector<8x8xbf16>, vector<8x8xbf16>, vector<8x8xf32> -> vector<8x8xf32>
    %c0_99 = arith.constant 0 : index
    %c24_100 = arith.constant 24 : index
    %240 = vector.load %arg28[%c0_99, %c24_100] : memref<8x32xf32, #tpu.memory_space<vmem>>, vector<8x8xf32>
    tpu.vector_store %arg28[%c0_99, %c24_100], %239 {strides = array<i32>} : memref<8x32xf32, #tpu.memory_space<vmem>>, vector<8x8xf32>,
    %c0_101 = arith.constant 0 : index
    %c0_102 = arith.constant 0 : index
    %241 = vector.load %arg28[%c0_101, %c0_102] : memref<8x32xf32, #tpu.memory_space<vmem>>, vector<8x32xf32>
    %242 = arith.truncf %241 : vector<8x32xf32> to vector<8x32xbf16>
    %c0_103 = arith.constant 0 : index
    %c0_104 = arith.constant 0 : index
    %243 = vector.load %arg17[%c0_103, %c0_104] : memref<32x32xbf16, #tpu.memory_space<vmem>>, vector<32x32xbf16>
    %cst_105 = arith.constant dense<0.000000e+00> : vector<8x32xf32>
    %244 = tpu.matmul %242, %243, %cst_105 {dimension_numbers = #tpu.dot_dimension_numbers<[1], [0], [0], [1], [0, 0, 1, 1], [], []>} : vector<8x32xbf16>, vector<32x32xbf16>, vector<8x32xf32> -> vector<8x32xf32>
    %c0_106 = arith.constant 0 : index
    %c0_107 = arith.constant 0 : index
    %245 = vector.load %arg18[%c0_106, %c0_107] : memref<1x32xf32, #tpu.memory_space<vmem>>, vector<1x32xf32>
    %246 = vector.broadcast %245 : vector<1x32xf32> to vector<8x32xf32>
    %247 = arith.addf %244, %246 : vector<8x32xf32>
    %248 = arith.addf %140, %247 : vector<8x32xf32>
    %c0_108 = arith.constant 0 : index
    %c0_109 = arith.constant 0 : index
    %249 = vector.load %arg19[%c0_108, %c0_109] : memref<1x32xf32, #tpu.memory_space<vmem>>, vector<1x32xf32>
    %c0_110 = arith.constant 0 : index
    %c0_111 = arith.constant 0 : index
    %250 = vector.load %arg20[%c0_110, %c0_111] : memref<1x32xf32, #tpu.memory_space<vmem>>, vector<1x32xf32>
    %cst_112 = arith.constant dense<0.000000e+00> : vector<8xf32>
    %251 = vector.multi_reduction <add>, %248, %cst_112 [1] : vector<8x32xf32> to vector<8xf32>
    %252 = vector.shape_cast %251 : vector<8xf32> to vector<8x1xf32>
    %cst_113 = arith.constant 3.200000e+01 : f32
    %253 = vector.broadcast %cst_113 : f32 to vector<8x1xf32>
    %254 = arith.divf %252, %253 : vector<8x1xf32>
    %255 = vector.broadcast %254 : vector<8x1xf32> to vector<8x32xf32>
    %256 = arith.subf %248, %255 : vector<8x32xf32>
    %257 = arith.mulf %256, %256 : vector<8x32xf32>
    %cst_114 = arith.constant dense<0.000000e+00> : vector<8xf32>
    %258 = vector.multi_reduction <add>, %257, %cst_114 [1] : vector<8x32xf32> to vector<8xf32>
    %259 = vector.shape_cast %258 : vector<8xf32> to vector<8x1xf32>
    %cst_115 = arith.constant 3.200000e+01 : f32
    %260 = vector.broadcast %cst_115 : f32 to vector<8x1xf32>
    %261 = arith.divf %259, %260 : vector<8x1xf32>
    %cst_116 = arith.constant 9.99999974E-6 : f32
    %262 = vector.broadcast %cst_116 : f32 to vector<8x1xf32>
    %263 = arith.addf %261, %262 : vector<8x1xf32>
    %264 = math.rsqrt %263 : vector<8x1xf32>
    %265 = vector.broadcast %264 : vector<8x1xf32> to vector<8x32xf32>
    %266 = arith.mulf %256, %265 : vector<8x32xf32>
    %267 = vector.broadcast %249 : vector<1x32xf32> to vector<8x32xf32>
    %268 = arith.mulf %266, %267 : vector<8x32xf32>
    %269 = vector.broadcast %250 : vector<1x32xf32> to vector<8x32xf32>
    %270 = arith.addf %268, %269 : vector<8x32xf32>
    %271 = arith.truncf %270 : vector<8x32xf32> to vector<8x32xbf16>
    %c0_117 = arith.constant 0 : index
    %c0_118 = arith.constant 0 : index
    %272 = vector.load %arg21[%c0_117, %c0_118] : memref<32x64xbf16, #tpu.memory_space<vmem>>, vector<32x64xbf16>
    %cst_119 = arith.constant dense<0.000000e+00> : vector<8x64xf32>
    %273 = tpu.matmul %271, %272, %cst_119 {dimension_numbers = #tpu.dot_dimension_numbers<[1], [0], [0], [1], [0, 0, 1, 1], [], []>} : vector<8x32xbf16>, vector<32x64xbf16>, vector<8x64xf32> -> vector<8x64xf32>
    %c0_120 = arith.constant 0 : index
    %c0_121 = arith.constant 0 : index
    %274 = vector.load %arg22[%c0_120, %c0_121] : memref<1x64xf32, #tpu.memory_space<vmem>>, vector<1x64xf32>
    %275 = vector.broadcast %274 : vector<1x64xf32> to vector<8x64xf32>
    %276 = arith.addf %273, %275 : vector<8x64xf32>
    %cst_122 = arith.constant 0.000000e+00 : f32
    %277 = vector.broadcast %cst_122 : f32 to vector<8x64xf32>
    %278 = arith.maximumf %276, %277 : vector<8x64xf32>
    %279 = arith.truncf %278 : vector<8x64xf32> to vector<8x64xbf16>
    %c0_123 = arith.constant 0 : index
    %c0_124 = arith.constant 0 : index
    %280 = vector.load %arg23[%c0_123, %c0_124] : memref<64x32xbf16, #tpu.memory_space<vmem>>, vector<64x32xbf16>
    %cst_125 = arith.constant dense<0.000000e+00> : vector<8x32xf32>
    %281 = tpu.matmul %279, %280, %cst_125 {dimension_numbers = #tpu.dot_dimension_numbers<[1], [0], [0], [1], [0, 0, 1, 1], [], []>} : vector<8x64xbf16>, vector<64x32xbf16>, vector<8x32xf32> -> vector<8x32xf32>
    %c0_126 = arith.constant 0 : index
    %c0_127 = arith.constant 0 : index
    %282 = vector.load %arg24[%c0_126, %c0_127] : memref<1x32xf32, #tpu.memory_space<vmem>>, vector<1x32xf32>
    %283 = vector.broadcast %282 : vector<1x32xf32> to vector<8x32xf32>
    %284 = arith.addf %281, %283 : vector<8x32xf32>
    %285 = arith.addf %270, %284 : vector<8x32xf32>
    %c0_128 = arith.constant 0 : index
    %c0_129 = arith.constant 0 : index
    %286 = vector.load %arg25[%c0_128, %c0_129] : memref<1x32xf32, #tpu.memory_space<vmem>>, vector<1x32xf32>
    %c0_130 = arith.constant 0 : index
    %c0_131 = arith.constant 0 : index
    %287 = vector.load %arg26[%c0_130, %c0_131] : memref<1x32xf32, #tpu.memory_space<vmem>>, vector<1x32xf32>
    %cst_132 = arith.constant dense<0.000000e+00> : vector<8xf32>
    %288 = vector.multi_reduction <add>, %285, %cst_132 [1] : vector<8x32xf32> to vector<8xf32>
    %289 = vector.shape_cast %288 : vector<8xf32> to vector<8x1xf32>
    %cst_133 = arith.constant 3.200000e+01 : f32
    %290 = vector.broadcast %cst_133 : f32 to vector<8x1xf32>
    %291 = arith.divf %289, %290 : vector<8x1xf32>
    %292 = vector.broadcast %291 : vector<8x1xf32> to vector<8x32xf32>
    %293 = arith.subf %285, %292 : vector<8x32xf32>
    %294 = arith.mulf %293, %293 : vector<8x32xf32>
    %cst_134 = arith.constant dense<0.000000e+00> : vector<8xf32>
    %295 = vector.multi_reduction <add>, %294, %cst_134 [1] : vector<8x32xf32> to vector<8xf32>
    %296 = vector.shape_cast %295 : vector<8xf32> to vector<8x1xf32>
    %cst_135 = arith.constant 3.200000e+01 : f32
    %297 = vector.broadcast %cst_135 : f32 to vector<8x1xf32>
    %298 = arith.divf %296, %297 : vector<8x1xf32>
    %cst_136 = arith.constant 9.99999974E-6 : f32
    %299 = vector.broadcast %cst_136 : f32 to vector<8x1xf32>
    %300 = arith.addf %298, %299 : vector<8x1xf32>
    %301 = math.rsqrt %300 : vector<8x1xf32>
    %302 = vector.broadcast %301 : vector<8x1xf32> to vector<8x32xf32>
    %303 = arith.mulf %293, %302 : vector<8x32xf32>
    %304 = vector.broadcast %286 : vector<1x32xf32> to vector<8x32xf32>
    %305 = arith.mulf %303, %304 : vector<8x32xf32>
    %306 = vector.broadcast %287 : vector<1x32xf32> to vector<8x32xf32>
    %307 = arith.addf %305, %306 : vector<8x32xf32>
    %308 = arith.truncf %307 : vector<8x32xf32> to vector<8x32xbf16>
    %c0_137 = arith.constant 0 : index
    %c0_138 = arith.constant 0 : index
    %c0_139 = arith.constant 0 : index
    %309 = vector.load %arg27[%c0_137, %c0_138, %c0_139] : memref<1x8x32xbf16, #tpu.memory_space<vmem>>, vector<1x8x32xbf16>
    %310 = vector.shape_cast %309 : vector<1x8x32xbf16> to vector<8x32xbf16>
    %311 = vector.shape_cast %308 : vector<8x32xbf16> to vector<1x8x32xbf16>
    tpu.vector_store %arg27[%c0_137, %c0_138, %c0_139], %311 {strides = array<i32>} : memref<1x8x32xbf16, #tpu.memory_space<vmem>>, vector<1x8x32xbf16>,
    return
  }
  func.func @transform_0(%arg0: i32) -> (i32, i32, i32) {
    %c0_i32 = arith.constant 0 : i32
    %c0_i32_0 = arith.constant 0 : i32
    %c0_i32_1 = arith.constant 0 : i32
    return %arg0, %c0_i32, %c0_i32_0 : i32, i32, i32
  }
  func.func @transform_1(%arg0: i32) -> (i32, i32, i32) {
    %c0_i32 = arith.constant 0 : i32
    %c0_i32_0 = arith.constant 0 : i32
    %c0_i32_1 = arith.constant 0 : i32
    return %arg0, %c0_i32, %c0_i32_0 : i32, i32, i32
  }
  func.func @transform_2(%arg0: i32) -> (i32, i32, i32) {
    %c0_i32 = arith.constant 0 : i32
    %c0_i32_0 = arith.constant 0 : i32
    %c0_i32_1 = arith.constant 0 : i32
    return %arg0, %c0_i32, %c0_i32_0 : i32, i32, i32
  }
  func.func @transform_3(%arg0: i32) -> (i32, i32, i32) {
    %c0_i32 = arith.constant 0 : i32
    %c0_i32_0 = arith.constant 0 : i32
    %c0_i32_1 = arith.constant 0 : i32
    return %arg0, %c0_i32, %c0_i32_0 : i32, i32, i32
  }
  func.func @transform_4(%arg0: i32) -> (i32, i32) {
    %c0_i32 = arith.constant 0 : i32
    %c0_i32_0 = arith.constant 0 : i32
    %c0_i32_1 = arith.constant 0 : i32
    return %c0_i32, %c0_i32_0 : i32, i32
  }
  func.func @transform_5(%arg0: i32) -> (i32, i32) {
    %c0_i32 = arith.constant 0 : i32
    %c0_i32_0 = arith.constant 0 : i32
    %c0_i32_1 = arith.constant 0 : i32
    return %c0_i32, %c0_i32_0 : i32, i32
  }
  func.func @transform_6(%arg0: i32) -> (i32, i32) {
    %c0_i32 = arith.constant 0 : i32
    %c0_i32_0 = arith.constant 0 : i32
    %c0_i32_1 = arith.constant 0 : i32
    return %c0_i32, %c0_i32_0 : i32, i32
  }
  func.func @transform_7(%arg0: i32) -> (i32, i32) {
    %c0_i32 = arith.constant 0 : i32
    %c0_i32_0 = arith.constant 0 : i32
    %c0_i32_1 = arith.constant 0 : i32
    return %c0_i32, %c0_i32_0 : i32, i32
  }
  func.func @transform_8(%arg0: i32) -> (i32, i32) {
    %c0_i32 = arith.constant 0 : i32
    %c0_i32_0 = arith.constant 0 : i32
    %c0_i32_1 = arith.constant 0 : i32
    return %c0_i32, %c0_i32_0 : i32, i32
  }
  func.func @transform_9(%arg0: i32) -> (i32, i32) {
    %c0_i32 = arith.constant 0 : i32
    %c0_i32_0 = arith.constant 0 : i32
    %c0_i32_1 = arith.constant 0 : i32
    return %c0_i32, %c0_i32_0 : i32, i32
  }
  func.func @transform_10(%arg0: i32) -> (i32, i32) {
    %c0_i32 = arith.constant 0 : i32
    %c0_i32_0 = arith.constant 0 : i32
    %c0_i32_1 = arith.constant 0 : i32
    return %c0_i32, %c0_i32_0 : i32, i32
  }
  func.func @transform_11(%arg0: i32) -> (i32, i32) {
    %c0_i32 = arith.constant 0 : i32
    %c0_i32_0 = arith.constant 0 : i32
    %c0_i32_1 = arith.constant 0 : i32
    return %c0_i32, %c0_i32_0 : i32, i32
  }
  func.func @transform_12(%arg0: i32) -> (i32, i32) {
    %c0_i32 = arith.constant 0 : i32
    %c0_i32_0 = arith.constant 0 : i32
    %c0_i32_1 = arith.constant 0 : i32
    return %c0_i32, %c0_i32_0 : i32, i32
  }
  func.func @transform_13(%arg0: i32) -> (i32, i32) {
    %c0_i32 = arith.constant 0 : i32
    %c0_i32_0 = arith.constant 0 : i32
    %c0_i32_1 = arith.constant 0 : i32
    return %c0_i32, %c0_i32_0 : i32, i32
  }
  func.func @transform_14(%arg0: i32) -> (i32, i32) {
    %c0_i32 = arith.constant 0 : i32
    %c0_i32_0 = arith.constant 0 : i32
    %c0_i32_1 = arith.constant 0 : i32
    return %c0_i32, %c0_i32_0 : i32, i32
  }
  func.func @transform_15(%arg0: i32) -> (i32, i32) {
    %c0_i32 = arith.constant 0 : i32
    %c0_i32_0 = arith.constant 0 : i32
    %c0_i32_1 = arith.constant 0 : i32
    return %c0_i32, %c0_i32_0 : i32, i32
  }
  func.func @transform_16(%arg0: i32) -> (i32, i32) {
    %c0_i32 = arith.constant 0 : i32
    %c0_i32_0 = arith.constant 0 : i32
    %c0_i32_1 = arith.constant 0 : i32
    return %c0_i32, %c0_i32_0 : i32, i32
  }
  func.func @transform_17(%arg0: i32) -> (i32, i32) {
    %c0_i32 = arith.constant 0 : i32
    %c0_i32_0 = arith.constant 0 : i32
    %c0_i32_1 = arith.constant 0 : i32
    return %c0_i32, %c0_i32_0 : i32, i32
  }
  func.func @transform_18(%arg0: i32) -> (i32, i32) {
    %c0_i32 = arith.constant 0 : i32
    %c0_i32_0 = arith.constant 0 : i32
    %c0_i32_1 = arith.constant 0 : i32
    return %c0_i32, %c0_i32_0 : i32, i32
  }
  func.func @transform_19(%arg0: i32) -> (i32, i32) {
    %c0_i32 = arith.constant 0 : i32
    %c0_i32_0 = arith.constant 0 : i32
    %c0_i32_1 = arith.constant 0 : i32
    return %c0_i32, %c0_i32_0 : i32, i32
  }
  func.func @transform_20(%arg0: i32) -> (i32, i32) {
    %c0_i32 = arith.constant 0 : i32
    %c0_i32_0 = arith.constant 0 : i32
    %c0_i32_1 = arith.constant 0 : i32
    return %c0_i32, %c0_i32_0 : i32, i32
  }
  func.func @transform_21(%arg0: i32) -> (i32, i32) {
    %c0_i32 = arith.constant 0 : i32
    %c0_i32_0 = arith.constant 0 : i32
    %c0_i32_1 = arith.constant 0 : i32
    return %c0_i32, %c0_i32_0 : i32, i32
  }
  func.func @transform_22(%arg0: i32) -> (i32, i32) {
    %c0_i32 = arith.constant 0 : i32
    %c0_i32_0 = arith.constant 0 : i32
    %c0_i32_1 = arith.constant 0 : i32
    return %c0_i32, %c0_i32_0 : i32, i32
  }
  func.func @transform_23(%arg0: i32) -> (i32, i32) {
    %c0_i32 = arith.constant 0 : i32
    %c0_i32_0 = arith.constant 0 : i32
    %c0_i32_1 = arith.constant 0 : i32
    return %c0_i32, %c0_i32_0 : i32, i32
  }
  func.func @transform_24(%arg0: i32) -> (i32, i32) {
    %c0_i32 = arith.constant 0 : i32
    %c0_i32_0 = arith.constant 0 : i32
    %c0_i32_1 = arith.constant 0 : i32
    return %c0_i32, %c0_i32_0 : i32, i32
  }
  func.func @transform_25(%arg0: i32) -> (i32, i32) {
    %c0_i32 = arith.constant 0 : i32
    %c0_i32_0 = arith.constant 0 : i32
    %c0_i32_1 = arith.constant 0 : i32
    return %c0_i32, %c0_i32_0 : i32, i32
  }
  func.func @transform_26(%arg0: i32) -> (i32, i32, i32) {
    %c0_i32 = arith.constant 0 : i32
    %c0_i32_0 = arith.constant 0 : i32
    %c0_i32_1 = arith.constant 0 : i32
    return %arg0, %c0_i32, %c0_i32_0 : i32, i32, i32
  }
}

</mosaic_0001>

<llo_original>
// kernel: peptide_decoder_forward.5
$region0: #{peptide_decoder_forward.5}
  #allocation0 [shape = 'u32[]', space=smem, size = 0x4, offset = 0x4, fixed_abs, tag = 'smem constant byte address 0x4 - core index']
  #allocation1 [shape = 'u32[144,128]{1,0:T(1,128)}', space=vmem, size = 0x12000, scoped, tag = 'internal scratch']
  %s0 = inlined_call_operand.vmem [shape: bf16[2,8,32], index: 0, kind: input, shape index: {}]
  %s1 = inlined_call_operand.vmem [shape: bf16[32,128], index: 1, kind: input, shape index: {}]
  %s2 = inlined_call_operand.vmem [shape: f32[1,128], index: 2, kind: input, shape index: {}]
  %s3 = inlined_call_operand.hbm [shape: f32[2,8,128], index: 3, kind: output, shape index: {}]
  %s4 = sld [smem:[#allocation0]]
  $region45: #{peptide_decoder_forward.5} parent=0
    _
  %s6 = ssub.s32 1, %s4
  %s7 = scalar_select 0, %s6, %s4
  $region1: #{peptide_decoder_forward.5} parent=0
    #allocation2 [shape = 'u8[8192]{0}', space=vmem, size = 0x2000, scoped, tag = 'output window, operand 0']
    #allocation3 [shape = 's32[2]{0}', space=sflag, size = 0x8, scoped, tag = 'scoped memory for peptide_decoder_forward.5']
    %8 = vsyncpa [#allocation3], 0
    %s9 = scalar_lea.sflag [#allocation3], 1
    %10 = vsyncpa %s9, 0
    loop: start=0, step=1, limit=4
    $region2: #{peptide_decoder_forward.5} parent=1 // loop_pre_header
      _
    $region3: #{peptide_decoder_forward.5} parent=1 // loop_header
      %s12 = sphi 0, %s16
      %p13 = scmp.ge.s32.totalorder %s12, 4
      %s22 = sphi 0, %s24
      %s25 = sphi 0, %s22
      %s26 = sphi 0, %s25
      %s42 = sphi 0, %s26
      %s46 = sphi 0, %s46
      %s48 = sphi 0, %s46
      %s49 = sphi 0, %s48
      %s63 = sphi 0, %s49
      %s67 = sphi 0, %s67
      %s69 = sphi 0, %s67
      %s70 = sphi 0, %s69
      %s84 = sphi 0, %s70
      %s90 = sphi 0, %s92
      %s93 = sphi 0, %s90
      %s94 = sphi 0, %s93
      %s110 = sphi 0, %s94
    $region4: #{peptide_decoder_forward.5} parent=1 // loop_header_branch
      %15 = sbr.rel (%p13) target = $region8
    $region5: #{peptide_decoder_forward.5} parent=1 // loop_body
      %s17 = ssub.s32 %s12, 1
      %s18 = ssub.s32 %s12, 2
      %s19 = sadd.s32 %s12, 1
      %s20 = ssub.s32 %s12, %s19
      %p21 = scmp.eq.s32.totalorder %s20, 0
      %s23 = sadd.s32 %s22, 1
      %s24 = scalar_select %p21, %s22, %s23
      %p27 = pneg %p21
      %p28 = scmp.eq.s32.totalorder %s12, 1
      %p29 = por %p27, %p28
      %p30 = scmp.ne.s32.totalorder %s22, %s25
      %p31 = scmp.eq.s32.totalorder %s12, 0
      %p32 = por %p30, %p31
      %p33 = scmp.ne.s32.totalorder %s22, %s25
      %p34 = scmp.eq.s32.totalorder %s17, 1
      %p35 = por %p33, %p34
      %p36 = scmp.ne.s32.totalorder %s25, %s26
      %p37 = scmp.eq.s32.totalorder %s17, 0
      %p38 = por %p36, %p37
      %p39 = scmp.ne.s32.totalorder %s25, %s26
      %p40 = scmp.eq.s32.totalorder %s18, 1
      %p41 = por %p39, %p40
      %p43 = scmp.ne.s32.totalorder %s26, %s42
      %p44 = scmp.eq.s32.totalorder %s18, 0
      %p45 = por %p43, %p44
      %s47 = sadd.s32 %s46, 1
      %p50 = scmp.eq.s32.totalorder %s12, 1
      %p51 = scmp.ne.s32.totalorder %s46, %s48
      %p52 = scmp.eq.s32.totalorder %s12, 0
      %p53 = por %p51, %p52
      %p54 = scmp.ne.s32.totalorder %s46, %s48
      %p55 = scmp.eq.s32.totalorder %s17, 1
      %p56 = por %p54, %p55
      %p57 = scmp.ne.s32.totalorder %s48, %s49
      %p58 = scmp.eq.s32.totalorder %s17, 0
      %p59 = por %p57, %p58
      %p60 = scmp.ne.s32.totalorder %s48, %s49
      %p61 = scmp.eq.s32.totalorder %s18, 1
      %p62 = por %p60, %p61
      %p64 = scmp.ne.s32.totalorder %s49, %s63
      %p65 = scmp.eq.s32.totalorder %s18, 0
      %p66 = por %p64, %p65
      %s68 = sadd.s32 %s67, 1
      %p71 = scmp.eq.s32.totalorder %s12, 1
      %p72 = scmp.ne.s32.totalorder %s67, %s69
      %p73 = scmp.eq.s32.totalorder %s12, 0
      %p74 = por %p72, %p73
      %p75 = scmp.ne.s32.totalorder %s67, %s69
      %p76 = scmp.eq.s32.totalorder %s17, 1
      %p77 = por %p75, %p76
      %p78 = scmp.ne.s32.totalorder %s69, %s70
      %p79 = scmp.eq.s32.totalorder %s17, 0
      %p80 = por %p78, %p79
      %p81 = scmp.ne.s32.totalorder %s69, %s70
      %p82 = scmp.eq.s32.totalorder %s18, 1
      %p83 = por %p81, %p82
      %p85 = scmp.ne.s32.totalorder %s70, %s84
      %p86 = scmp.eq.s32.totalorder %s18, 0
      %p87 = por %p85, %p86
      %s88 = ssub.s32 %s12, %s19
      %p89 = scmp.eq.s32.totalorder %s88, 0
      %s91 = sadd.s32 %s90, 1
      %s92 = scalar_select %p89, %s90, %s91
      %p95 = pneg %p89
      %p96 = scmp.eq.s32.totalorder %s12, 1
      %p97 = por %p95, %p96
      %p98 = scmp.ne.s32.totalorder %s90, %s93
      %p99 = scmp.eq.s32.totalorder %s12, 0
      %p100 = por %p98, %p99
      %p101 = scmp.ne.s32.totalorder %s90, %s93
      %p102 = scmp.eq.s32.totalorder %s17, 1
      %p103 = por %p101, %p102
      %p104 = scmp.ne.s32.totalorder %s93, %s94
      %p105 = scmp.eq.s32.totalorder %s17, 0
      %p106 = por %p104, %p105
      %p107 = scmp.ne.s32.totalorder %s93, %s94
      %p108 = scmp.eq.s32.totalorder %s18, 1
      %p109 = por %p107, %p108
      %p111 = scmp.ne.s32.totalorder %s94, %s110
      %p112 = scmp.eq.s32.totalorder %s18, 0
      %p113 = por %p111, %p112
      %p114 = scmp.le.s32.totalorder 1, %s12
      %p115 = scmp.lt.s32.totalorder %s12, 3
      %p116 = pnand %p114, %p115
      %p117 = pneg %p116
      // Predicated region
      $region9: #{peptide_decoder_forward.5} parent=5 // pred_check
        _
      $region10: #{peptide_decoder_forward.5} parent=5 // pred_check_branch
        %119 = sbr.rel (%p116) target = $region12
      $region11: #{peptide_decoder_forward.5} parent=5 // pred_region
        %s120 = ssub.s32 %s12, 1
        // Predicated region
        $region13: #{peptide_decoder_forward.5} parent=11 // pred_check
          %p121 = pneg %p59
        $region14: #{peptide_decoder_forward.5} parent=11 // pred_check_branch
          %123 = sbr.rel (%p121) target = $region16
        $region15: #{peptide_decoder_forward.5} parent=11 // pred_region
          _
        $region16: #{peptide_decoder_forward.5} parent=11 // pred_fallthru
          _
        // Predicated region
        $region17: #{peptide_decoder_forward.5} parent=11 // pred_check
          %p124 = pneg %p80
        $region18: #{peptide_decoder_forward.5} parent=11 // pred_check_branch
          %126 = sbr.rel (%p124) target = $region20
        $region19: #{peptide_decoder_forward.5} parent=11 // pred_region
          _
        $region20: #{peptide_decoder_forward.5} parent=11 // pred_fallthru
          _
      $region12: #{peptide_decoder_forward.5} parent=5 // pred_fallthru
        _
      %p127 = scmp.lt.s32.totalorder %s12, 2
      // Predicated region
      $region21: #{peptide_decoder_forward.5} parent=5 // pred_check
        %p128 = pneg %p127
      $region22: #{peptide_decoder_forward.5} parent=5 // pred_check_branch
        %130 = sbr.rel (%p128) target = $region24
      $region23: #{peptide_decoder_forward.5} parent=5 // pred_region
        // Predicated region
        $region25: #{peptide_decoder_forward.5} parent=23 // pred_check
          %p131 = pneg %p32
        $region26: #{peptide_decoder_forward.5} parent=23 // pred_check_branch
          %133 = sbr.rel (%p131) target = $region28
        $region27: #{peptide_decoder_forward.5} parent=23 // pred_region
          %p134 = scmp.lt.s32.totalorder %s12, 1
          %s135 = scalar_select %p134, %s12, 1
          %s136 = smul.addr %s135, 4
          %s137 = scalar_lea.vmem %s0, %s136
        $region28: #{peptide_decoder_forward.5} parent=23 // pred_fallthru
          _
      $region24: #{peptide_decoder_forward.5} parent=5 // pred_fallthru
        _
      %p138 = scmp.le.s32.totalorder 1, %s12
      %p139 = scmp.lt.s32.totalorder %s12, 3
      %p140 = pnand %p138, %p139
      %p141 = pneg %p140
      // Predicated region
      $region29: #{peptide_decoder_forward.5} parent=5 // pred_check
        _
      $region30: #{peptide_decoder_forward.5} parent=5 // pred_check_branch
        %143 = sbr.rel (%p140) target = $region32
      $region31: #{peptide_decoder_forward.5} parent=5 // pred_region
        %s144 = ssub.s32 %s12, 1
        %p145 = scmp.lt.s32.totalorder %s17, 1
        %s146 = scalar_select %p145, %s17, 1
        %s147 = smul.addr %s146, 4
        %s148 = scalar_lea.vmem %s0, %s147
        %p149 = pneg %p38
        %p150 = pneg %p35
        %p151 = pneg %p59
        %p152 = pneg %p56
        %p153 = pneg %p80
        %p154 = pneg %p77
        %p155 = pneg %p106
        %p156 = pneg %p103
        %s157 = sand.u32 %s93, 1
        %s158 = scalar_lea.sflag [#allocation3], %s157
        %s159 = sand.u32 %s93, 1
        %s160 = smul.addr %s159, 8
        %s161 = scalar_lea.vmem [#allocation2], %s160
        %p162 = scmp.lt.s32.totalorder %s17, 1
        %s163 = scalar_select %p162, %s17, 1
        %s164 = smul.addr %s163, 4
        %s165 = scalar_lea.vmem %s0, %s164
        %v167 = vld [vmem:[%s165] sm:$0xf]
        %v168 = vld [vmem:[%s1] sm:$0xf]
        %v169 = vld [vmem:[%s1 + $0x4] sm:$0xf]
        %v170 = vld [vmem:[%s1 + $0x8] sm:$0xf]
        %v171 = vld [vmem:[%s1 + $0xc] sm:$0xf]
        %v172 = vld [vmem:[%s2] sm:$0x1]
        %v174 = vlaneseq
        %v175 = vshrl.u32 %v174, 7
        %v176 = vsub.s32 0, %v175
        %v177 = vrot.slane %v172, %v176
        %v183 = vunpack.c.l.b16 %v168
        %v184 = vunpack.c.l.b16 %v169
        %v185 = vunpack.c.l.b16 %v170
        %v186 = vunpack.c.l.b16 %v171
        %v187 = vpack.c.b16 %v184, %v183
        %v188 = vpack.c.b16 %v186, %v185
        %vm191 = vcmask 261120
        %v193 = vsel %vm191, %v167, 0
        %195 = vmatprep.subr.bf16.mxu0 0
        %196 = vmatpush1.bf16.msra.mxu0 %v187
        %197 = vmatprep.subr.bf16.mxu0 0
        %198 = vmatpush1.bf16.msra.mxu0 %v188
        %199 = vmatprep.subr.bf16.mxu0 0
        %200 = vmatpush1.bf16.msra.mxu0 0
        %201 = vmatprep.subr.bf16.mxu0 0
        %202 = vmatpush1.bf16.msra.mxu0 0
        %203 = vmatprep.subr.bf16.mxu0 0
        %204 = vmatpush1.bf16.msra.mxu0 0
        %205 = vmatprep.subr.bf16.mxu0 0
        %206 = vmatpush1.bf16.msra.mxu0 0
        %207 = vmatprep.subr.bf16.mxu0 0
        %208 = vmatpush1.bf16.msra.mxu0 0
        %209 = vmatprep.subr.bf16.mxu0 0
        %210 = vmatpush1.bf16.msra.mxu0 0
        %211 = vmatprep.subr.bf16.mxu0 0
        %212 = vmatpush1.bf16.msra.mxu0 0
        %213 = vmatprep.subr.bf16.mxu0 0
        %214 = vmatpush1.bf16.msra.mxu0 0
        %215 = vmatprep.subr.bf16.mxu0 0
        %216 = vmatpush1.bf16.msra.mxu0 0
        %217 = vmatprep.subr.bf16.mxu0 0
        %218 = vmatpush1.bf16.msra.mxu0 0
        %219 = vmatprep.subr.bf16.mxu0 0
        %220 = vmatpush1.bf16.msra.mxu0 0
        %221 = vmatprep.subr.bf16.mxu0 0
        %222 = vmatpush1.bf16.msra.mxu0 0
        %223 = vmatprep.subr.bf16.mxu0 0
        %224 = vmatpush1.bf16.msra.mxu0 0
        %225 = vmatprep.subr.bf16.mxu0 0
        %226 = vmatpush1.bf16.msra.mxu0 0
        %227 = vmatprep.mubr.bf16.mxu0 0
        %228 = vmatmul.mubr.bf16.gmra.mrb[0].mxu0 %v193
        %v229 = vpop.f32.mrb[0].mxu0
        %v230 = vadd.f32 %v177, %v229
        %v231 = vpop.f32.mrb[0].mxu0
        %v232 = vpop.f32.mrb[0].mxu0
        %v233 = vpop.f32.mrb[0].mxu0
        %234 = vdwg.mxu0
        %235 = vst [vmem:[%s161] sm:$0xff] %v230
        %s236 = sand.u32 %s93, 1
        %s237 = scalar_lea.sflag [#allocation3], %s236
        %s238 = sand.u32 %s93, 1
        %s239 = smul.addr %s238, 8
        %s240 = scalar_lea.vmem [#allocation2], %s239
        // Predicated region
        $region33: #{peptide_decoder_forward.5} parent=31 // pred_check
          %p241 = pneg %p103
        $region34: #{peptide_decoder_forward.5} parent=31 // pred_check_branch
          %243 = sbr.rel (%p241) target = $region36
        $region35: #{peptide_decoder_forward.5} parent=31 // pred_region
          %s245 = ssub.s32 128, 128
          %246 = vsyncadd %s237, %s245
          %s247 = smul.addr %s17, 128
          %s248 = scalar_lea.hbm %s3, %s247
          %s250 = sshll.u32 %s240, 4
          %s251 = int_to_ptr.vmem [resolvable:$true] %s250
          %253 = dma.vmem_to_hbm [thread:$0]  %s251, 128, %s248, %s237
        $region36: #{peptide_decoder_forward.5} parent=31 // pred_fallthru
          _
      $region32: #{peptide_decoder_forward.5} parent=5 // pred_fallthru
        _
      %p254 = scmp.le.s32.totalorder 2, %s12
      // Predicated region
      $region37: #{peptide_decoder_forward.5} parent=5 // pred_check
        %p255 = pneg %p254
      $region38: #{peptide_decoder_forward.5} parent=5 // pred_check_branch
        %257 = sbr.rel (%p255) target = $region40
      $region39: #{peptide_decoder_forward.5} parent=5 // pred_region
        %s258 = ssub.s32 %s12, 2
        // Predicated region
        $region41: #{peptide_decoder_forward.5} parent=39 // pred_check
          %p259 = pneg %p109
        $region42: #{peptide_decoder_forward.5} parent=39 // pred_check_branch
          %261 = sbr.rel (%p259) target = $region44
        $region43: #{peptide_decoder_forward.5} parent=39 // pred_region
          %s262 = sand.u32 %s94, 1
          %s263 = scalar_lea.sflag [#allocation3], %s262
          %s264 = sand.u32 %s94, 1
          %s265 = smul.addr %s264, 8
          %s266 = scalar_lea.vmem [#allocation2], %s265
          %267 = dma.done %s263, 128
        $region44: #{peptide_decoder_forward.5} parent=39 // pred_fallthru
          _
      $region40: #{peptide_decoder_forward.5} parent=5 // pred_fallthru
        _
    $region6: #{peptide_decoder_forward.5} parent=1 // loop_footer
      %s16 = sadd.s32 1, %s12
    $region7: #{peptide_decoder_forward.5} parent=1 // loop_footer_branch
      %11 = sbr.rel target = $region3
    $region8: #{peptide_decoder_forward.5} parent=1 // loop_exit
      _
    %268 = vsyncpa [#allocation3], 1
    %s269 = scalar_lea.sflag [#allocation3], 1
    %270 = vsyncpa %s269, 1

// kernel: peptide_decoder_forward.4
$region0: #{peptide_decoder_forward.4}
  #allocation0 [shape = 'u32[]', space=smem, size = 0x4, offset = 0x4, fixed_abs, tag = 'smem constant byte address 0x4 - core index']
  #allocation1 [shape = 'u32[144,128]{1,0:T(1,128)}', space=vmem, size = 0x12000, scoped, tag = 'internal scratch']
  #allocation2 [shape = 'f32[8,32]{1,0:T(8,128)}', space=vmem, size = 0x1000, scoped, tag = 'scratch operand']
  %s0 = inlined_call_operand.vmem [shape: bf16[2,8,32], index: 0, kind: input, shape index: {}]
  %s1 = inlined_call_operand.vmem [shape: bf16[2,8,32], index: 1, kind: input, shape index: {}]
  %s2 = inlined_call_operand.vmem [shape: f32[2,1,8], index: 2, kind: input, shape index: {}]
  %s3 = inlined_call_operand.vmem [shape: f32[2,1,8], index: 3, kind: input, shape index: {}]
  %s4 = inlined_call_operand.vmem [shape: bf16[32,32], index: 4, kind: input, shape index: {}]
  %s5 = inlined_call_operand.vmem [shape: f32[1,32], index: 5, kind: input, shape index: {}]
  %s6 = inlined_call_operand.vmem [shape: bf16[32,64], index: 6, kind: input, shape index: {}]
  %s7 = inlined_call_operand.vmem [shape: f32[1,64], index: 7, kind: input, shape index: {}]
  %s8 = inlined_call_operand.vmem [shape: bf16[32,32], index: 8, kind: input, shape index: {}]
  %s9 = inlined_call_operand.vmem [shape: f32[1,32], index: 9, kind: input, shape index: {}]
  %s10 = inlined_call_operand.vmem [shape: f32[1,32], index: 10, kind: input, shape index: {}]
  %s11 = inlined_call_operand.vmem [shape: f32[1,32], index: 11, kind: input, shape index: {}]
  %s12 = inlined_call_operand.vmem [shape: bf16[32,32], index: 12, kind: input, shape index: {}]
  %s13 = inlined_call_operand.vmem [shape: f32[1,32], index: 13, kind: input, shape index: {}]
  %s14 = inlined_call_operand.vmem [shape: bf16[32,64], index: 14, kind: input, shape index: {}]
  %s15 = inlined_call_operand.vmem [shape: f32[1,64], index: 15, kind: input, shape index: {}]
  %s16 = inlined_call_operand.vmem [shape: bf16[32,32], index: 16, kind: input, shape index: {}]
  %s17 = inlined_call_operand.vmem [shape: f32[1,32], index: 17, kind: input, shape index: {}]
  %s18 = inlined_call_operand.vmem [shape: f32[1,32], index: 18, kind: input, shape index: {}]
  %s19 = inlined_call_operand.hbm [shape: f32[1,32], index: 19, kind: input, shape index: {}]
  %s20 = inlined_call_operand.vmem [shape: bf16[32,64], index: 20, kind: input, shape index: {}]
  %s21 = inlined_call_operand.hbm [shape: f32[1,64], index: 21, kind: input, shape index: {}]
  %s22 = inlined_call_operand.vmem [shape: bf16[64,32], index: 22, kind: input, shape index: {}]
  %s23 = inlined_call_operand.hbm [shape: f32[1,32], index: 23, kind: input, shape index: {}]
  %s24 = inlined_call_operand.hbm [shape: f32[1,32], index: 24, kind: input, shape index: {}]
  %s25 = inlined_call_operand.hbm [shape: f32[1,32], index: 25, kind: input, shape index: {}]
  %s26 = inlined_call_operand.vmem [shape: bf16[2,8,32], index: 26, kind: output, shape index: {}]
  %s27 = sld [smem:[#allocation0]]
  $region157: #{peptide_decoder_forward.4} parent=0
    _
  %s29 = ssub.s32 1, %s27
  %s30 = scalar_select 0, %s29, %s27
  $region1: #{peptide_decoder_forward.4} parent=0
    #allocation3 [shape = 'u8[512]{0}', space=vmem, size = 0x400, scoped, tag = 'input window, operand 19, single buffered']
    #allocation4 [shape = 's32[2]{0}', space=sflag, size = 0x8, scoped, tag = 'scoped memory for peptide_decoder_forward.4']
    #allocation5 [shape = 'u8[512]{0}', space=vmem, size = 0x400, scoped, tag = 'input window, operand 21, single buffered']
    #allocation6 [shape = 's32[1]{0}', space=sflag, size = 0x4, scoped, tag = 'scoped memory for peptide_decoder_forward.4']
    #allocation7 [shape = 'u8[512]{0}', space=vmem, size = 0x400, scoped, tag = 'input window, operand 23, single buffered']
    #allocation8 [shape = 'u8[512]{0}', space=vmem, size = 0x400, scoped, tag = 'input window, operand 24, single buffered']
    #allocation9 [shape = 's32[1]{0}', space=sflag, size = 0x4, scoped, tag = 'scoped memory for peptide_decoder_forward.4']
    #allocation10 [shape = 'u8[512]{0}', space=vmem, size = 0x400, scoped, tag = 'input window, operand 25, single buffered']
    %31 = vsyncpa [#allocation4], 0
    %32 = vsyncpa [#allocation6], 0
    %33 = vsyncpa [#allocation9], 0
    loop: start=0, step=1, limit=4
    $region2: #{peptide_decoder_forward.4} parent=1 // loop_pre_header
      _
    $region3: #{peptide_decoder_forward.4} parent=1 // loop_header
      %s35 = sphi 0, %s39
      %p36 = scmp.ge.s32.totalorder %s35, 4
      %s45 = sphi 0, %s47
      %s48 = sphi 0, %s45
      %s49 = sphi 0, %s48
      %s65 = sphi 0, %s49
      %s71 = sphi 0, %s73
      %s74 = sphi 0, %s71
      %s75 = sphi 0, %s74
      %s91 = sphi 0, %s75
      %s97 = sphi 0, %s99
      %s100 = sphi 0, %s97
      %s101 = sphi 0, %s100
      %s117 = sphi 0, %s101
      %s123 = sphi 0, %s125
      %s126 = sphi 0, %s123
      %s127 = sphi 0, %s126
      %s143 = sphi 0, %s127
      %s147 = sphi 0, %s147
      %s149 = sphi 0, %s147
      %s150 = sphi 0, %s149
      %s164 = sphi 0, %s150
      %s168 = sphi 0, %s168
      %s170 = sphi 0, %s168
      %s171 = sphi 0, %s170
      %s185 = sphi 0, %s171
      %s189 = sphi 0, %s189
      %s191 = sphi 0, %s189
      %s192 = sphi 0, %s191
      %s206 = sphi 0, %s192
      %s210 = sphi 0, %s210
      %s212 = sphi 0, %s210
      %s213 = sphi 0, %s212
      %s227 = sphi 0, %s213
      %s231 = sphi 0, %s231
      %s233 = sphi 0, %s231
      %s234 = sphi 0, %s233
      %s248 = sphi 0, %s234
      %s252 = sphi 0, %s252
      %s254 = sphi 0, %s252
      %s255 = sphi 0, %s254
      %s269 = sphi 0, %s255
      %s273 = sphi 0, %s273
      %s275 = sphi 0, %s273
      %s276 = sphi 0, %s275
      %s290 = sphi 0, %s276
      %s294 = sphi 0, %s294
      %s296 = sphi 0, %s294
      %s297 = sphi 0, %s296
      %s311 = sphi 0, %s297
      %s315 = sphi 0, %s315
      %s317 = sphi 0, %s315
      %s318 = sphi 0, %s317
      %s332 = sphi 0, %s318
      %s336 = sphi 0, %s336
      %s338 = sphi 0, %s336
      %s339 = sphi 0, %s338
      %s353 = sphi 0, %s339
      %s357 = sphi 0, %s357
      %s359 = sphi 0, %s357
      %s360 = sphi 0, %s359
      %s374 = sphi 0, %s360
      %s378 = sphi 0, %s378
      %s380 = sphi 0, %s378
      %s381 = sphi 0, %s380
      %s395 = sphi 0, %s381
      %s399 = sphi 0, %s399
      %s401 = sphi 0, %s399
      %s402 = sphi 0, %s401
      %s416 = sphi 0, %s402
      %s420 = sphi 0, %s420
      %s422 = sphi 0, %s420
      %s423 = sphi 0, %s422
      %s437 = sphi 0, %s423
      %s441 = sphi 0, %s441
      %s443 = sphi 0, %s441
      %s444 = sphi 0, %s443
      %s458 = sphi 0, %s444
      %s462 = sphi 0, %s462
      %s464 = sphi 0, %s462
      %s465 = sphi 0, %s464
      %s479 = sphi 0, %s465
      %s483 = sphi 0, %s483
      %s485 = sphi 0, %s483
      %s486 = sphi 0, %s485
      %s500 = sphi 0, %s486
      %s504 = sphi 0, %s504
      %s506 = sphi 0, %s504
      %s507 = sphi 0, %s506
      %s521 = sphi 0, %s507
      %s525 = sphi 0, %s525
      %s527 = sphi 0, %s525
      %s528 = sphi 0, %s527
      %s542 = sphi 0, %s528
      %s546 = sphi 0, %s546
      %s548 = sphi 0, %s546
      %s549 = sphi 0, %s548
      %s563 = sphi 0, %s549
      %s567 = sphi 0, %s567
      %s569 = sphi 0, %s567
      %s570 = sphi 0, %s569
      %s584 = sphi 0, %s570
      %s588 = sphi 0, %s588
      %s590 = sphi 0, %s588
      %s591 = sphi 0, %s590
      %s605 = sphi 0, %s591
      %s611 = sphi 0, %s613
      %s614 = sphi 0, %s611
      %s615 = sphi 0, %s614
      %s631 = sphi 0, %s615
    $region4: #{peptide_decoder_forward.4} parent=1 // loop_header_branch
      %38 = sbr.rel (%p36) target = $region8
    $region5: #{peptide_decoder_forward.4} parent=1 // loop_body
      %s40 = ssub.s32 %s35, 1
      %s41 = ssub.s32 %s35, 2
      %s42 = sadd.s32 %s35, 1
      %s43 = ssub.s32 %s35, %s42
      %p44 = scmp.eq.s32.totalorder %s43, 0
      %s46 = sadd.s32 %s45, 1
      %s47 = scalar_select %p44, %s45, %s46
      %p50 = pneg %p44
      %p51 = scmp.eq.s32.totalorder %s35, 1
      %p52 = por %p50, %p51
      %p53 = scmp.ne.s32.totalorder %s45, %s48
      %p54 = scmp.eq.s32.totalorder %s35, 0
      %p55 = por %p53, %p54
      %p56 = scmp.ne.s32.totalorder %s45, %s48
      %p57 = scmp.eq.s32.totalorder %s40, 1
      %p58 = por %p56, %p57
      %p59 = scmp.ne.s32.totalorder %s48, %s49
      %p60 = scmp.eq.s32.totalorder %s40, 0
      %p61 = por %p59, %p60
      %p62 = scmp.ne.s32.totalorder %s48, %s49
      %p63 = scmp.eq.s32.totalorder %s41, 1
      %p64 = por %p62, %p63
      %p66 = scmp.ne.s32.totalorder %s49, %s65
      %p67 = scmp.eq.s32.totalorder %s41, 0
      %p68 = por %p66, %p67
      %s69 = ssub.s32 %s35, %s42
      %p70 = scmp.eq.s32.totalorder %s69, 0
      %s72 = sadd.s32 %s71, 1
      %s73 = scalar_select %p70, %s71, %s72
      %p76 = pneg %p70
      %p77 = scmp.eq.s32.totalorder %s35, 1
      %p78 = por %p76, %p77
      %p79 = scmp.ne.s32.totalorder %s71, %s74
      %p80 = scmp.eq.s32.totalorder %s35, 0
      %p81 = por %p79, %p80
      %p82 = scmp.ne.s32.totalorder %s71, %s74
      %p83 = scmp.eq.s32.totalorder %s40, 1
      %p84 = por %p82, %p83
      %p85 = scmp.ne.s32.totalorder %s74, %s75
      %p86 = scmp.eq.s32.totalorder %s40, 0
      %p87 = por %p85, %p86
      %p88 = scmp.ne.s32.totalorder %s74, %s75
      %p89 = scmp.eq.s32.totalorder %s41, 1
      %p90 = por %p88, %p89
      %p92 = scmp.ne.s32.totalorder %s75, %s91
      %p93 = scmp.eq.s32.totalorder %s41, 0
      %p94 = por %p92, %p93
      %s95 = ssub.s32 %s35, %s42
      %p96 = scmp.eq.s32.totalorder %s95, 0
      %s98 = sadd.s32 %s97, 1
      %s99 = scalar_select %p96, %s97, %s98
      %p102 = pneg %p96
      %p103 = scmp.eq.s32.totalorder %s35, 1
      %p104 = por %p102, %p103
      %p105 = scmp.ne.s32.totalorder %s97, %s100
      %p106 = scmp.eq.s32.totalorder %s35, 0
      %p107 = por %p105, %p106
      %p108 = scmp.ne.s32.totalorder %s97, %s100
      %p109 = scmp.eq.s32.totalorder %s40, 1
      %p110 = por %p108, %p109
      %p111 = scmp.ne.s32.totalorder %s100, %s101
      %p112 = scmp.eq.s32.totalorder %s40, 0
      %p113 = por %p111, %p112
      %p114 = scmp.ne.s32.totalorder %s100, %s101
      %p115 = scmp.eq.s32.totalorder %s41, 1
      %p116 = por %p114, %p115
      %p118 = scmp.ne.s32.totalorder %s101, %s117
      %p119 = scmp.eq.s32.totalorder %s41, 0
      %p120 = por %p118, %p119
      %s121 = ssub.s32 %s35, %s42
      %p122 = scmp.eq.s32.totalorder %s121, 0
      %s124 = sadd.s32 %s123, 1
      %s125 = scalar_select %p122, %s123, %s124
      %p128 = pneg %p122
      %p129 = scmp.eq.s32.totalorder %s35, 1
      %p130 = por %p128, %p129
      %p131 = scmp.ne.s32.totalorder %s123, %s126
      %p132 = scmp.eq.s32.totalorder %s35, 0
      %p133 = por %p131, %p132
      %p134 = scmp.ne.s32.totalorder %s123, %s126
      %p135 = scmp.eq.s32.totalorder %s40, 1
      %p136 = por %p134, %p135
      %p137 = scmp.ne.s32.totalorder %s126, %s127
      %p138 = scmp.eq.s32.totalorder %s40, 0
      %p139 = por %p137, %p138
      %p140 = scmp.ne.s32.totalorder %s126, %s127
      %p141 = scmp.eq.s32.totalorder %s41, 1
      %p142 = por %p140, %p141
      %p144 = scmp.ne.s32.totalorder %s127, %s143
      %p145 = scmp.eq.s32.totalorder %s41, 0
      %p146 = por %p144, %p145
      %s148 = sadd.s32 %s147, 1
      %p151 = scmp.eq.s32.totalorder %s35, 1
      %p152 = scmp.ne.s32.totalorder %s147, %s149
      %p153 = scmp.eq.s32.totalorder %s35, 0
      %p154 = por %p152, %p153
      %p155 = scmp.ne.s32.totalorder %s147, %s149
      %p156 = scmp.eq.s32.totalorder %s40, 1
      %p157 = por %p155, %p156
      %p158 = scmp.ne.s32.totalorder %s149, %s150
      %p159 = scmp.eq.s32.totalorder %s40, 0
      %p160 = por %p158, %p159
      %p161 = scmp.ne.s32.totalorder %s149, %s150
      %p162 = scmp.eq.s32.totalorder %s41, 1
      %p163 = por %p161, %p162
      %p165 = scmp.ne.s32.totalorder %s150, %s164
      %p166 = scmp.eq.s32.totalorder %s41, 0
      %p167 = por %p165, %p166
      %s169 = sadd.s32 %s168, 1
      %p172 = scmp.eq.s32.totalorder %s35, 1
      %p173 = scmp.ne.s32.totalorder %s168, %s170
      %p174 = scmp.eq.s32.totalorder %s35, 0
      %p175 = por %p173, %p174
      %p176 = scmp.ne.s32.totalorder %s168, %s170
      %p177 = scmp.eq.s32.totalorder %s40, 1
      %p178 = por %p176, %p177
      %p179 = scmp.ne.s32.totalorder %s170, %s171
      %p180 = scmp.eq.s32.totalorder %s40, 0
      %p181 = por %p179, %p180
      %p182 = scmp.ne.s32.totalorder %s170, %s171
      %p183 = scmp.eq.s32.totalorder %s41, 1
      %p184 = por %p182, %p183
      %p186 = scmp.ne.s32.totalorder %s171, %s185
      %p187 = scmp.eq.s32.totalorder %s41, 0
      %p188 = por %p186, %p187
      %s190 = sadd.s32 %s189, 1
      %p193 = scmp.eq.s32.totalorder %s35, 1
      %p194 = scmp.ne.s32.totalorder %s189, %s191
      %p195 = scmp.eq.s32.totalorder %s35, 0
      %p196 = por %p194, %p195
      %p197 = scmp.ne.s32.totalorder %s189, %s191
      %p198 = scmp.eq.s32.totalorder %s40, 1
      %p199 = por %p197, %p198
      %p200 = scmp.ne.s32.totalorder %s191, %s192
      %p201 = scmp.eq.s32.totalorder %s40, 0
      %p202 = por %p200, %p201
      %p203 = scmp.ne.s32.totalorder %s191, %s192
      %p204 = scmp.eq.s32.totalorder %s41, 1
      %p205 = por %p203, %p204
      %p207 = scmp.ne.s32.totalorder %s192, %s206
      %p208 = scmp.eq.s32.totalorder %s41, 0
      %p209 = por %p207, %p208
      %s211 = sadd.s32 %s210, 1
      %p214 = scmp.eq.s32.totalorder %s35, 1
      %p215 = scmp.ne.s32.totalorder %s210, %s212
      %p216 = scmp.eq.s32.totalorder %s35, 0
      %p217 = por %p215, %p216
      %p218 = scmp.ne.s32.totalorder %s210, %s212
      %p219 = scmp.eq.s32.totalorder %s40, 1
      %p220 = por %p218, %p219
      %p221 = scmp.ne.s32.totalorder %s212, %s213
      %p222 = scmp.eq.s32.totalorder %s40, 0
      %p223 = por %p221, %p222
      %p224 = scmp.ne.s32.totalorder %s212, %s213
      %p225 = scmp.eq.s32.totalorder %s41, 1
      %p226 = por %p224, %p225
      %p228 = scmp.ne.s32.totalorder %s213, %s227
      %p229 = scmp.eq.s32.totalorder %s41, 0
      %p230 = por %p228, %p229
      %s232 = sadd.s32 %s231, 1
      %p235 = scmp.eq.s32.totalorder %s35, 1
      %p236 = scmp.ne.s32.totalorder %s231, %s233
      %p237 = scmp.eq.s32.totalorder %s35, 0
      %p238 = por %p236, %p237
      %p239 = scmp.ne.s32.totalorder %s231, %s233
      %p240 = scmp.eq.s32.totalorder %s40, 1
      %p241 = por %p239, %p240
      %p242 = scmp.ne.s32.totalorder %s233, %s234
      %p243 = scmp.eq.s32.totalorder %s40, 0
      %p244 = por %p242, %p243
      %p245 = scmp.ne.s32.totalorder %s233, %s234
      %p246 = scmp.eq.s32.totalorder %s41, 1
      %p247 = por %p245, %p246
      %p249 = scmp.ne.s32.totalorder %s234, %s248
      %p250 = scmp.eq.s32.totalorder %s41, 0
      %p251 = por %p249, %p250
      %s253 = sadd.s32 %s252, 1
      %p256 = scmp.eq.s32.totalorder %s35, 1
      %p257 = scmp.ne.s32.totalorder %s252, %s254
      %p258 = scmp.eq.s32.totalorder %s35, 0
      %p259 = por %p257, %p258
      %p260 = scmp.ne.s32.totalorder %s252, %s254
      %p261 = scmp.eq.s32.totalorder %s40, 1
      %p262 = por %p260, %p261
      %p263 = scmp.ne.s32.totalorder %s254, %s255
      %p264 = scmp.eq.s32.totalorder %s40, 0
      %p265 = por %p263, %p264
      %p266 = scmp.ne.s32.totalorder %s254, %s255
      %p267 = scmp.eq.s32.totalorder %s41, 1
      %p268 = por %p266, %p267
      %p270 = scmp.ne.s32.totalorder %s255, %s269
      %p271 = scmp.eq.s32.totalorder %s41, 0
      %p272 = por %p270, %p271
      %s274 = sadd.s32 %s273, 1
      %p277 = scmp.eq.s32.totalorder %s35, 1
      %p278 = scmp.ne.s32.totalorder %s273, %s275
      %p279 = scmp.eq.s32.totalorder %s35, 0
      %p280 = por %p278, %p279
      %p281 = scmp.ne.s32.totalorder %s273, %s275
      %p282 = scmp.eq.s32.totalorder %s40, 1
      %p283 = por %p281, %p282
      %p284 = scmp.ne.s32.totalorder %s275, %s276
      %p285 = scmp.eq.s32.totalorder %s40, 0
      %p286 = por %p284, %p285
      %p287 = scmp.ne.s32.totalorder %s275, %s276
      %p288 = scmp.eq.s32.totalorder %s41, 1
      %p289 = por %p287, %p288
      %p291 = scmp.ne.s32.totalorder %s276, %s290
      %p292 = scmp.eq.s32.totalorder %s41, 0
      %p293 = por %p291, %p292
      %s295 = sadd.s32 %s294, 1
      %p298 = scmp.eq.s32.totalorder %s35, 1
      %p299 = scmp.ne.s32.totalorder %s294, %s296
      %p300 = scmp.eq.s32.totalorder %s35, 0
      %p301 = por %p299, %p300
      %p302 = scmp.ne.s32.totalorder %s294, %s296
      %p303 = scmp.eq.s32.totalorder %s40, 1
      %p304 = por %p302, %p303
      %p305 = scmp.ne.s32.totalorder %s296, %s297
      %p306 = scmp.eq.s32.totalorder %s40, 0
      %p307 = por %p305, %p306
      %p308 = scmp.ne.s32.totalorder %s296, %s297
      %p309 = scmp.eq.s32.totalorder %s41, 1
      %p310 = por %p308, %p309
      %p312 = scmp.ne.s32.totalorder %s297, %s311
      %p313 = scmp.eq.s32.totalorder %s41, 0
      %p314 = por %p312, %p313
      %s316 = sadd.s32 %s315, 1
      %p319 = scmp.eq.s32.totalorder %s35, 1
      %p320 = scmp.ne.s32.totalorder %s315, %s317
      %p321 = scmp.eq.s32.totalorder %s35, 0
      %p322 = por %p320, %p321
      %p323 = scmp.ne.s32.totalorder %s315, %s317
      %p324 = scmp.eq.s32.totalorder %s40, 1
      %p325 = por %p323, %p324
      %p326 = scmp.ne.s32.totalorder %s317, %s318
      %p327 = scmp.eq.s32.totalorder %s40, 0
      %p328 = por %p326, %p327
      %p329 = scmp.ne.s32.totalorder %s317, %s318
      %p330 = scmp.eq.s32.totalorder %s41, 1
      %p331 = por %p329, %p330
      %p333 = scmp.ne.s32.totalorder %s318, %s332
      %p334 = scmp.eq.s32.totalorder %s41, 0
      %p335 = por %p333, %p334
      %s337 = sadd.s32 %s336, 1
      %p340 = scmp.eq.s32.totalorder %s35, 1
      %p341 = scmp.ne.s32.totalorder %s336, %s338
      %p342 = scmp.eq.s32.totalorder %s35, 0
      %p343 = por %p341, %p342
      %p344 = scmp.ne.s32.totalorder %s336, %s338
      %p345 = scmp.eq.s32.totalorder %s40, 1
      %p346 = por %p344, %p345
      %p347 = scmp.ne.s32.totalorder %s338, %s339
      %p348 = scmp.eq.s32.totalorder %s40, 0
      %p349 = por %p347, %p348
      %p350 = scmp.ne.s32.totalorder %s338, %s339
      %p351 = scmp.eq.s32.totalorder %s41, 1
      %p352 = por %p350, %p351
      %p354 = scmp.ne.s32.totalorder %s339, %s353
      %p355 = scmp.eq.s32.totalorder %s41, 0
      %p356 = por %p354, %p355
      %s358 = sadd.s32 %s357, 1
      %p361 = scmp.eq.s32.totalorder %s35, 1
      %p362 = scmp.ne.s32.totalorder %s357, %s359
      %p363 = scmp.eq.s32.totalorder %s35, 0
      %p364 = por %p362, %p363
      %p365 = scmp.ne.s32.totalorder %s357, %s359
      %p366 = scmp.eq.s32.totalorder %s40, 1
      %p367 = por %p365, %p366
      %p368 = scmp.ne.s32.totalorder %s359, %s360
      %p369 = scmp.eq.s32.totalorder %s40, 0
      %p370 = por %p368, %p369
      %p371 = scmp.ne.s32.totalorder %s359, %s360
      %p372 = scmp.eq.s32.totalorder %s41, 1
      %p373 = por %p371, %p372
      %p375 = scmp.ne.s32.totalorder %s360, %s374
      %p376 = scmp.eq.s32.totalorder %s41, 0
      %p377 = por %p375, %p376
      %s379 = sadd.s32 %s378, 1
      %p382 = scmp.eq.s32.totalorder %s35, 1
      %p383 = scmp.ne.s32.totalorder %s378, %s380
      %p384 = scmp.eq.s32.totalorder %s35, 0
      %p385 = por %p383, %p384
      %p386 = scmp.ne.s32.totalorder %s378, %s380
      %p387 = scmp.eq.s32.totalorder %s40, 1
      %p388 = por %p386, %p387
      %p389 = scmp.ne.s32.totalorder %s380, %s381
      %p390 = scmp.eq.s32.totalorder %s40, 0
      %p391 = por %p389, %p390
      %p392 = scmp.ne.s32.totalorder %s380, %s381
      %p393 = scmp.eq.s32.totalorder %s41, 1
      %p394 = por %p392, %p393
      %p396 = scmp.ne.s32.totalorder %s381, %s395
      %p397 = scmp.eq.s32.totalorder %s41, 0
      %p398 = por %p396, %p397
      %s400 = sadd.s32 %s399, 1
      %p403 = scmp.eq.s32.totalorder %s35, 1
      %p404 = scmp.ne.s32.totalorder %s399, %s401
      %p405 = scmp.eq.s32.totalorder %s35, 0
      %p406 = por %p404, %p405
      %p407 = scmp.ne.s32.totalorder %s399, %s401
      %p408 = scmp.eq.s32.totalorder %s40, 1
      %p409 = por %p407, %p408
      %p410 = scmp.ne.s32.totalorder %s401, %s402
      %p411 = scmp.eq.s32.totalorder %s40, 0
      %p412 = por %p410, %p411
      %p413 = scmp.ne.s32.totalorder %s401, %s402
      %p414 = scmp.eq.s32.totalorder %s41, 1
      %p415 = por %p413, %p414
      %p417 = scmp.ne.s32.totalorder %s402, %s416
      %p418 = scmp.eq.s32.totalorder %s41, 0
      %p419 = por %p417, %p418
      %s421 = sadd.s32 %s420, 1
      %p424 = scmp.eq.s32.totalorder %s35, 1
      %p425 = scmp.ne.s32.totalorder %s420, %s422
      %p426 = scmp.eq.s32.totalorder %s35, 0
      %p427 = por %p425, %p426
      %p428 = scmp.ne.s32.totalorder %s420, %s422
      %p429 = scmp.eq.s32.totalorder %s40, 1
      %p430 = por %p428, %p429
      %p431 = scmp.ne.s32.totalorder %s422, %s423
      %p432 = scmp.eq.s32.totalorder %s40, 0
      %p433 = por %p431, %p432
      %p434 = scmp.ne.s32.totalorder %s422, %s423
      %p435 = scmp.eq.s32.totalorder %s41, 1
      %p436 = por %p434, %p435
      %p438 = scmp.ne.s32.totalorder %s423, %s437
      %p439 = scmp.eq.s32.totalorder %s41, 0
      %p440 = por %p438, %p439
      %s442 = sadd.s32 %s441, 1
      %p445 = scmp.eq.s32.totalorder %s35, 1
      %p446 = scmp.ne.s32.totalorder %s441, %s443
      %p447 = scmp.eq.s32.totalorder %s35, 0
      %p448 = por %p446, %p447
      %p449 = scmp.ne.s32.totalorder %s441, %s443
      %p450 = scmp.eq.s32.totalorder %s40, 1
      %p451 = por %p449, %p450
      %p452 = scmp.ne.s32.totalorder %s443, %s444
      %p453 = scmp.eq.s32.totalorder %s40, 0
      %p454 = por %p452, %p453
      %p455 = scmp.ne.s32.totalorder %s443, %s444
      %p456 = scmp.eq.s32.totalorder %s41, 1
      %p457 = por %p455, %p456
      %p459 = scmp.ne.s32.totalorder %s444, %s458
      %p460 = scmp.eq.s32.totalorder %s41, 0
      %p461 = por %p459, %p460
      %s463 = sadd.s32 %s462, 1
      %p466 = scmp.eq.s32.totalorder %s35, 1
      %p467 = scmp.ne.s32.totalorder %s462, %s464
      %p468 = scmp.eq.s32.totalorder %s35, 0
      %p469 = por %p467, %p468
      %p470 = scmp.ne.s32.totalorder %s462, %s464
      %p471 = scmp.eq.s32.totalorder %s40, 1
      %p472 = por %p470, %p471
      %p473 = scmp.ne.s32.totalorder %s464, %s465
      %p474 = scmp.eq.s32.totalorder %s40, 0
      %p475 = por %p473, %p474
      %p476 = scmp.ne.s32.totalorder %s464, %s465
      %p477 = scmp.eq.s32.totalorder %s41, 1
      %p478 = por %p476, %p477
      %p480 = scmp.ne.s32.totalorder %s465, %s479
      %p481 = scmp.eq.s32.totalorder %s41, 0
      %p482 = por %p480, %p481
      %s484 = sadd.s32 %s483, 1
      %p487 = scmp.eq.s32.totalorder %s35, 1
      %p488 = scmp.ne.s32.totalorder %s483, %s485
      %p489 = scmp.eq.s32.totalorder %s35, 0
      %p490 = por %p488, %p489
      %p491 = scmp.ne.s32.totalorder %s483, %s485
      %p492 = scmp.eq.s32.totalorder %s40, 1
      %p493 = por %p491, %p492
      %p494 = scmp.ne.s32.totalorder %s485, %s486
      %p495 = scmp.eq.s32.totalorder %s40, 0
      %p496 = por %p494, %p495
      %p497 = scmp.ne.s32.totalorder %s485, %s486
      %p498 = scmp.eq.s32.totalorder %s41, 1
      %p499 = por %p497, %p498
      %p501 = scmp.ne.s32.totalorder %s486, %s500
      %p502 = scmp.eq.s32.totalorder %s41, 0
      %p503 = por %p501, %p502
      %s505 = sadd.s32 %s504, 1
      %p508 = scmp.eq.s32.totalorder %s35, 1
      %p509 = scmp.ne.s32.totalorder %s504, %s506
      %p510 = scmp.eq.s32.totalorder %s35, 0
      %p511 = por %p509, %p510
      %p512 = scmp.ne.s32.totalorder %s504, %s506
      %p513 = scmp.eq.s32.totalorder %s40, 1
      %p514 = por %p512, %p513
      %p515 = scmp.ne.s32.totalorder %s506, %s507
      %p516 = scmp.eq.s32.totalorder %s40, 0
      %p517 = por %p515, %p516
      %p518 = scmp.ne.s32.totalorder %s506, %s507
      %p519 = scmp.eq.s32.totalorder %s41, 1
      %p520 = por %p518, %p519
      %p522 = scmp.ne.s32.totalorder %s507, %s521
      %p523 = scmp.eq.s32.totalorder %s41, 0
      %p524 = por %p522, %p523
      %s526 = sadd.s32 %s525, 1
      %p529 = scmp.eq.s32.totalorder %s35, 1
      %p530 = scmp.ne.s32.totalorder %s525, %s527
      %p531 = scmp.eq.s32.totalorder %s35, 0
      %p532 = por %p530, %p531
      %p533 = scmp.ne.s32.totalorder %s525, %s527
      %p534 = scmp.eq.s32.totalorder %s40, 1
      %p535 = por %p533, %p534
      %p536 = scmp.ne.s32.totalorder %s527, %s528
      %p537 = scmp.eq.s32.totalorder %s40, 0
      %p538 = por %p536, %p537
      %p539 = scmp.ne.s32.totalorder %s527, %s528
      %p540 = scmp.eq.s32.totalorder %s41, 1
      %p541 = por %p539, %p540
      %p543 = scmp.ne.s32.totalorder %s528, %s542
      %p544 = scmp.eq.s32.totalorder %s41, 0
      %p545 = por %p543, %p544
      %s547 = sadd.s32 %s546, 1
      %p550 = scmp.eq.s32.totalorder %s35, 1
      %p551 = scmp.ne.s32.totalorder %s546, %s548
      %p552 = scmp.eq.s32.totalorder %s35, 0
      %p553 = por %p551, %p552
      %p554 = scmp.ne.s32.totalorder %s546, %s548
      %p555 = scmp.eq.s32.totalorder %s40, 1
      %p556 = por %p554, %p555
      %p557 = scmp.ne.s32.totalorder %s548, %s549
      %p558 = scmp.eq.s32.totalorder %s40, 0
      %p559 = por %p557, %p558
      %p560 = scmp.ne.s32.totalorder %s548, %s549
      %p561 = scmp.eq.s32.totalorder %s41, 1
      %p562 = por %p560, %p561
      %p564 = scmp.ne.s32.totalorder %s549, %s563
      %p565 = scmp.eq.s32.totalorder %s41, 0
      %p566 = por %p564, %p565
      %s568 = sadd.s32 %s567, 1
      %p571 = scmp.eq.s32.totalorder %s35, 1
      %p572 = scmp.ne.s32.totalorder %s567, %s569
      %p573 = scmp.eq.s32.totalorder %s35, 0
      %p574 = por %p572, %p573
      %p575 = scmp.ne.s32.totalorder %s567, %s569
      %p576 = scmp.eq.s32.totalorder %s40, 1
      %p577 = por %p575, %p576
      %p578 = scmp.ne.s32.totalorder %s569, %s570
      %p579 = scmp.eq.s32.totalorder %s40, 0
      %p580 = por %p578, %p579
      %p581 = scmp.ne.s32.totalorder %s569, %s570
      %p582 = scmp.eq.s32.totalorder %s41, 1
      %p583 = por %p581, %p582
      %p585 = scmp.ne.s32.totalorder %s570, %s584
      %p586 = scmp.eq.s32.totalorder %s41, 0
      %p587 = por %p585, %p586
      %s589 = sadd.s32 %s588, 1
      %p592 = scmp.eq.s32.totalorder %s35, 1
      %p593 = scmp.ne.s32.totalorder %s588, %s590
      %p594 = scmp.eq.s32.totalorder %s35, 0
      %p595 = por %p593, %p594
      %p596 = scmp.ne.s32.totalorder %s588, %s590
      %p597 = scmp.eq.s32.totalorder %s40, 1
      %p598 = por %p596, %p597
      %p599 = scmp.ne.s32.totalorder %s590, %s591
      %p600 = scmp.eq.s32.totalorder %s40, 0
      %p601 = por %p599, %p600
      %p602 = scmp.ne.s32.totalorder %s590, %s591
      %p603 = scmp.eq.s32.totalorder %s41, 1
      %p604 = por %p602, %p603
      %p606 = scmp.ne.s32.totalorder %s591, %s605
      %p607 = scmp.eq.s32.totalorder %s41, 0
      %p608 = por %p606, %p607
      %s609 = ssub.s32 %s35, %s42
      %p610 = scmp.eq.s32.totalorder %s609, 0
      %s612 = sadd.s32 %s611, 1
      %s613 = scalar_select %p610, %s611, %s612
      %p616 = pneg %p610
      %p617 = scmp.eq.s32.totalorder %s35, 1
      %p618 = por %p616, %p617
      %p619 = scmp.ne.s32.totalorder %s611, %s614
      %p620 = scmp.eq.s32.totalorder %s35, 0
      %p621 = por %p619, %p620
      %p622 = scmp.ne.s32.totalorder %s611, %s614
      %p623 = scmp.eq.s32.totalorder %s40, 1
      %p624 = por %p622, %p623
      %p625 = scmp.ne.s32.totalorder %s614, %s615
      %p626 = scmp.eq.s32.totalorder %s40, 0
      %p627 = por %p625, %p626
      %p628 = scmp.ne.s32.totalorder %s614, %s615
      %p629 = scmp.eq.s32.totalorder %s41, 1
      %p630 = por %p628, %p629
      %p632 = scmp.ne.s32.totalorder %s615, %s631
      %p633 = scmp.eq.s32.totalorder %s41, 0
      %p634 = por %p632, %p633
      %p635 = scmp.le.s32.totalorder 1, %s35
      %p636 = scmp.lt.s32.totalorder %s35, 3
      %p637 = pnand %p635, %p636
      %p638 = pneg %p637
      // Predicated region
      $region9: #{peptide_decoder_forward.4} parent=5 // pred_check
        _
      $region10: #{peptide_decoder_forward.4} parent=5 // pred_check_branch
        %640 = sbr.rel (%p637) target = $region12
      $region11: #{peptide_decoder_forward.4} parent=5 // pred_region
        %s641 = ssub.s32 %s35, 1
        // Predicated region
        $region13: #{peptide_decoder_forward.4} parent=11 // pred_check
          %p642 = pneg %p160
        $region14: #{peptide_decoder_forward.4} parent=11 // pred_check_branch
          %644 = sbr.rel (%p642) target = $region16
        $region15: #{peptide_decoder_forward.4} parent=11 // pred_region
          _
        $region16: #{peptide_decoder_forward.4} parent=11 // pred_fallthru
          _
        // Predicated region
        $region17: #{peptide_decoder_forward.4} parent=11 // pred_check
          %p645 = pneg %p181
        $region18: #{peptide_decoder_forward.4} parent=11 // pred_check_branch
          %647 = sbr.rel (%p645) target = $region20
        $region19: #{peptide_decoder_forward.4} parent=11 // pred_region
          _
        $region20: #{peptide_decoder_forward.4} parent=11 // pred_fallthru
          _
        // Predicated region
        $region21: #{peptide_decoder_forward.4} parent=11 // pred_check
          %p648 = pneg %p202
        $region22: #{peptide_decoder_forward.4} parent=11 // pred_check_branch
          %650 = sbr.rel (%p648) target = $region24
        $region23: #{peptide_decoder_forward.4} parent=11 // pred_region
          _
        $region24: #{peptide_decoder_forward.4} parent=11 // pred_fallthru
          _
        // Predicated region
        $region25: #{peptide_decoder_forward.4} parent=11 // pred_check
          %p651 = pneg %p223
        $region26: #{peptide_decoder_forward.4} parent=11 // pred_check_branch
          %653 = sbr.rel (%p651) target = $region28
        $region27: #{peptide_decoder_forward.4} parent=11 // pred_region
          _
        $region28: #{peptide_decoder_forward.4} parent=11 // pred_fallthru
          _
        // Predicated region
        $region29: #{peptide_decoder_forward.4} parent=11 // pred_check
          %p654 = pneg %p244
        $region30: #{peptide_decoder_forward.4} parent=11 // pred_check_branch
          %656 = sbr.rel (%p654) target = $region32
        $region31: #{peptide_decoder_forward.4} parent=11 // pred_region
          _
        $region32: #{peptide_decoder_forward.4} parent=11 // pred_fallthru
          _
        // Predicated region
        $region33: #{peptide_decoder_forward.4} parent=11 // pred_check
          %p657 = pneg %p265
        $region34: #{peptide_decoder_forward.4} parent=11 // pred_check_branch
          %659 = sbr.rel (%p657) target = $region36
        $region35: #{peptide_decoder_forward.4} parent=11 // pred_region
          _
        $region36: #{peptide_decoder_forward.4} parent=11 // pred_fallthru
          _
        // Predicated region
        $region37: #{peptide_decoder_forward.4} parent=11 // pred_check
          %p660 = pneg %p286
        $region38: #{peptide_decoder_forward.4} parent=11 // pred_check_branch
          %662 = sbr.rel (%p660) target = $region40
        $region39: #{peptide_decoder_forward.4} parent=11 // pred_region
          _
        $region40: #{peptide_decoder_forward.4} parent=11 // pred_fallthru
          _
        // Predicated region
        $region41: #{peptide_decoder_forward.4} parent=11 // pred_check
          %p663 = pneg %p307
        $region42: #{peptide_decoder_forward.4} parent=11 // pred_check_branch
          %665 = sbr.rel (%p663) target = $region44
        $region43: #{peptide_decoder_forward.4} parent=11 // pred_region
          _
        $region44: #{peptide_decoder_forward.4} parent=11 // pred_fallthru
          _
        // Predicated region
        $region45: #{peptide_decoder_forward.4} parent=11 // pred_check
          %p666 = pneg %p328
        $region46: #{peptide_decoder_forward.4} parent=11 // pred_check_branch
          %668 = sbr.rel (%p666) target = $region48
        $region47: #{peptide_decoder_forward.4} parent=11 // pred_region
          _
        $region48: #{peptide_decoder_forward.4} parent=11 // pred_fallthru
          _
        // Predicated region
        $region49: #{peptide_decoder_forward.4} parent=11 // pred_check
          %p669 = pneg %p349
        $region50: #{peptide_decoder_forward.4} parent=11 // pred_check_branch
          %671 = sbr.rel (%p669) target = $region52
        $region51: #{peptide_decoder_forward.4} parent=11 // pred_region
          _
        $region52: #{peptide_decoder_forward.4} parent=11 // pred_fallthru
          _
        // Predicated region
        $region53: #{peptide_decoder_forward.4} parent=11 // pred_check
          %p672 = pneg %p370
        $region54: #{peptide_decoder_forward.4} parent=11 // pred_check_branch
          %674 = sbr.rel (%p672) target = $region56
        $region55: #{peptide_decoder_forward.4} parent=11 // pred_region
          _
        $region56: #{peptide_decoder_forward.4} parent=11 // pred_fallthru
          _
        // Predicated region
        $region57: #{peptide_decoder_forward.4} parent=11 // pred_check
          %p675 = pneg %p391
        $region58: #{peptide_decoder_forward.4} parent=11 // pred_check_branch
          %677 = sbr.rel (%p675) target = $region60
        $region59: #{peptide_decoder_forward.4} parent=11 // pred_region
          _
        $region60: #{peptide_decoder_forward.4} parent=11 // pred_fallthru
          _
        // Predicated region
        $region61: #{peptide_decoder_forward.4} parent=11 // pred_check
          %p678 = pneg %p412
        $region62: #{peptide_decoder_forward.4} parent=11 // pred_check_branch
          %680 = sbr.rel (%p678) target = $region64
        $region63: #{peptide_decoder_forward.4} parent=11 // pred_region
          _
        $region64: #{peptide_decoder_forward.4} parent=11 // pred_fallthru
          _
        // Predicated region
        $region65: #{peptide_decoder_forward.4} parent=11 // pred_check
          %p681 = pneg %p433
        $region66: #{peptide_decoder_forward.4} parent=11 // pred_check_branch
          %683 = sbr.rel (%p681) target = $region68
        $region67: #{peptide_decoder_forward.4} parent=11 // pred_region
          _
        $region68: #{peptide_decoder_forward.4} parent=11 // pred_fallthru
          _
        // Predicated region
        $region69: #{peptide_decoder_forward.4} parent=11 // pred_check
          %p684 = pneg %p454
        $region70: #{peptide_decoder_forward.4} parent=11 // pred_check_branch
          %686 = sbr.rel (%p684) target = $region72
        $region71: #{peptide_decoder_forward.4} parent=11 // pred_region
          _
        $region72: #{peptide_decoder_forward.4} parent=11 // pred_fallthru
          _
        // Predicated region
        $region73: #{peptide_decoder_forward.4} parent=11 // pred_check
          %p687 = pneg %p475
        $region74: #{peptide_decoder_forward.4} parent=11 // pred_check_branch
          %689 = sbr.rel (%p687) target = $region76
        $region75: #{peptide_decoder_forward.4} parent=11 // pred_region
          %s691 = ssub.s32 16, 16
          %692 = vsyncadd [#allocation4], %s691
          %s694 = sshll.u32 [#allocation3], 4
          %s695 = int_to_ptr.vmem [resolvable:$true] %s694
          %697 = dma.hbm_to_vmem [thread:$0]  %s19, 16, %s695, [#allocation4]
        $region76: #{peptide_decoder_forward.4} parent=11 // pred_fallthru
          _
        // Predicated region
        $region77: #{peptide_decoder_forward.4} parent=11 // pred_check
          %p698 = pneg %p496
        $region78: #{peptide_decoder_forward.4} parent=11 // pred_check_branch
          %700 = sbr.rel (%p698) target = $region80
        $region79: #{peptide_decoder_forward.4} parent=11 // pred_region
          _
        $region80: #{peptide_decoder_forward.4} parent=11 // pred_fallthru
          _
        // Predicated region
        $region81: #{peptide_decoder_forward.4} parent=11 // pred_check
          %p701 = pneg %p517
        $region82: #{peptide_decoder_forward.4} parent=11 // pred_check_branch
          %703 = sbr.rel (%p701) target = $region84
        $region83: #{peptide_decoder_forward.4} parent=11 // pred_region
          %s705 = ssub.s32 16, 16
          %706 = vsyncadd [#allocation6], %s705
          %s708 = sshll.u32 [#allocation5], 4
          %s709 = int_to_ptr.vmem [resolvable:$true] %s708
          %711 = dma.hbm_to_vmem [thread:$0]  %s21, 16, %s709, [#allocation6]
        $region84: #{peptide_decoder_forward.4} parent=11 // pred_fallthru
          _
        // Predicated region
        $region85: #{peptide_decoder_forward.4} parent=11 // pred_check
          %p712 = pneg %p538
        $region86: #{peptide_decoder_forward.4} parent=11 // pred_check_branch
          %714 = sbr.rel (%p712) target = $region88
        $region87: #{peptide_decoder_forward.4} parent=11 // pred_region
          _
        $region88: #{peptide_decoder_forward.4} parent=11 // pred_fallthru
          _
        // Predicated region
        $region89: #{peptide_decoder_forward.4} parent=11 // pred_check
          %p715 = pneg %p559
        $region90: #{peptide_decoder_forward.4} parent=11 // pred_check_branch
          %717 = sbr.rel (%p715) target = $region92
        $region91: #{peptide_decoder_forward.4} parent=11 // pred_region
          %s719 = ssub.s32 16, 16
          %720 = vsyncadd [#allocation6], %s719
          %s722 = sshll.u32 [#allocation7], 4
          %s723 = int_to_ptr.vmem [resolvable:$true] %s722
          %725 = dma.hbm_to_vmem [thread:$0]  %s23, 16, %s723, [#allocation6]
        $region92: #{peptide_decoder_forward.4} parent=11 // pred_fallthru
          _
        // Predicated region
        $region93: #{peptide_decoder_forward.4} parent=11 // pred_check
          %p726 = pneg %p580
        $region94: #{peptide_decoder_forward.4} parent=11 // pred_check_branch
          %728 = sbr.rel (%p726) target = $region96
        $region95: #{peptide_decoder_forward.4} parent=11 // pred_region
          %s730 = ssub.s32 16, 16
          %731 = vsyncadd [#allocation9], %s730
          %s733 = sshll.u32 [#allocation8], 4
          %s734 = int_to_ptr.vmem [resolvable:$true] %s733
          %736 = dma.hbm_to_vmem [thread:$0]  %s24, 16, %s734, [#allocation9]
        $region96: #{peptide_decoder_forward.4} parent=11 // pred_fallthru
          _
        // Predicated region
        $region97: #{peptide_decoder_forward.4} parent=11 // pred_check
          %p737 = pneg %p601
        $region98: #{peptide_decoder_forward.4} parent=11 // pred_check_branch
          %739 = sbr.rel (%p737) target = $region100
        $region99: #{peptide_decoder_forward.4} parent=11 // pred_region
          %s741 = ssub.s32 16, 16
          %742 = vsyncadd [#allocation9], %s741
          %s744 = sshll.u32 [#allocation10], 4
          %s745 = int_to_ptr.vmem [resolvable:$true] %s744
          %747 = dma.hbm_to_vmem [thread:$0]  %s25, 16, %s745, [#allocation9]
        $region100: #{peptide_decoder_forward.4} parent=11 // pred_fallthru
          _
      $region12: #{peptide_decoder_forward.4} parent=5 // pred_fallthru
        _
      %p748 = scmp.lt.s32.totalorder %s35, 2
      // Predicated region
      $region101: #{peptide_decoder_forward.4} parent=5 // pred_check
        %p749 = pneg %p748
      $region102: #{peptide_decoder_forward.4} parent=5 // pred_check_branch
        %751 = sbr.rel (%p749) target = $region104
      $region103: #{peptide_decoder_forward.4} parent=5 // pred_region
        // Predicated region
        $region105: #{peptide_decoder_forward.4} parent=103 // pred_check
          %p752 = pneg %p55
        $region106: #{peptide_decoder_forward.4} parent=103 // pred_check_branch
          %754 = sbr.rel (%p752) target = $region108
        $region107: #{peptide_decoder_forward.4} parent=103 // pred_region
          %p755 = scmp.lt.s32.totalorder %s35, 1
          %s756 = scalar_select %p755, %s35, 1
          %s757 = smul.addr %s756, 4
          %s758 = scalar_lea.vmem %s0, %s757
        $region108: #{peptide_decoder_forward.4} parent=103 // pred_fallthru
          _
        // Predicated region
        $region109: #{peptide_decoder_forward.4} parent=103 // pred_check
          %p759 = pneg %p81
        $region110: #{peptide_decoder_forward.4} parent=103 // pred_check_branch
          %761 = sbr.rel (%p759) target = $region112
        $region111: #{peptide_decoder_forward.4} parent=103 // pred_region
          %p762 = scmp.lt.s32.totalorder %s35, 1
          %s763 = scalar_select %p762, %s35, 1
          %s764 = smul.addr %s763, 4
          %s765 = scalar_lea.vmem %s1, %s764
        $region112: #{peptide_decoder_forward.4} parent=103 // pred_fallthru
          _
        // Predicated region
        $region113: #{peptide_decoder_forward.4} parent=103 // pred_check
          %p766 = pneg %p107
        $region114: #{peptide_decoder_forward.4} parent=103 // pred_check_branch
          %768 = sbr.rel (%p766) target = $region116
        $region115: #{peptide_decoder_forward.4} parent=103 // pred_region
          %p769 = scmp.lt.s32.totalorder %s35, 1
          %s770 = scalar_select %p769, %s35, 1
          %s771 = scalar_lea.vmem %s2, %s770
        $region116: #{peptide_decoder_forward.4} parent=103 // pred_fallthru
          _
        // Predicated region
        $region117: #{peptide_decoder_forward.4} parent=103 // pred_check
          %p772 = pneg %p133
        $region118: #{peptide_decoder_forward.4} parent=103 // pred_check_branch
          %774 = sbr.rel (%p772) target = $region120
        $region119: #{peptide_decoder_forward.4} parent=103 // pred_region
          %p775 = scmp.lt.s32.totalorder %s35, 1
          %s776 = scalar_select %p775, %s35, 1
          %s777 = scalar_lea.vmem %s3, %s776
        $region120: #{peptide_decoder_forward.4} parent=103 // pred_fallthru
          _
      $region104: #{peptide_decoder_forward.4} parent=5 // pred_fallthru
        _
      %p778 = scmp.le.s32.totalorder 1, %s35
      %p779 = scmp.lt.s32.totalorder %s35, 3
      %p780 = pnand %p778, %p779
      %p781 = pneg %p780
      // Predicated region
      $region121: #{peptide_decoder_forward.4} parent=5 // pred_check
        _
      $region122: #{peptide_decoder_forward.4} parent=5 // pred_check_branch
        %783 = sbr.rel (%p780) target = $region124
      $region123: #{peptide_decoder_forward.4} parent=5 // pred_region
        %s784 = ssub.s32 %s35, 1
        // Predicated region
        $region125: #{peptide_decoder_forward.4} parent=123 // pred_check
          %p785 = pneg %p475
        $region126: #{peptide_decoder_forward.4} parent=123 // pred_check_branch
          %787 = sbr.rel (%p785) target = $region128
        $region127: #{peptide_decoder_forward.4} parent=123 // pred_region
          %788 = dma.done [#allocation4], 16
        $region128: #{peptide_decoder_forward.4} parent=123 // pred_fallthru
          _
        // Predicated region
        $region129: #{peptide_decoder_forward.4} parent=123 // pred_check
          %p789 = pneg %p517
        $region130: #{peptide_decoder_forward.4} parent=123 // pred_check_branch
          %791 = sbr.rel (%p789) target = $region132
        $region131: #{peptide_decoder_forward.4} parent=123 // pred_region
          %792 = dma.done [#allocation6], 16
        $region132: #{peptide_decoder_forward.4} parent=123 // pred_fallthru
          _
        // Predicated region
        $region133: #{peptide_decoder_forward.4} parent=123 // pred_check
          %p793 = pneg %p559
        $region134: #{peptide_decoder_forward.4} parent=123 // pred_check_branch
          %795 = sbr.rel (%p793) target = $region136
        $region135: #{peptide_decoder_forward.4} parent=123 // pred_region
          %796 = dma.done [#allocation6], 16
        $region136: #{peptide_decoder_forward.4} parent=123 // pred_fallthru
          _
        // Predicated region
        $region137: #{peptide_decoder_forward.4} parent=123 // pred_check
          %p797 = pneg %p580
        $region138: #{peptide_decoder_forward.4} parent=123 // pred_check_branch
          %799 = sbr.rel (%p797) target = $region140
        $region139: #{peptide_decoder_forward.4} parent=123 // pred_region
          %800 = dma.done [#allocation9], 16
        $region140: #{peptide_decoder_forward.4} parent=123 // pred_fallthru
          _
        // Predicated region
        $region141: #{peptide_decoder_forward.4} parent=123 // pred_check
          %p801 = pneg %p601
        $region142: #{peptide_decoder_forward.4} parent=123 // pred_check_branch
          %803 = sbr.rel (%p801) target = $region144
        $region143: #{peptide_decoder_forward.4} parent=123 // pred_region
          %804 = dma.done [#allocation9], 16
        $region144: #{peptide_decoder_forward.4} parent=123 // pred_fallthru
          _
        %p805 = scmp.lt.s32.totalorder %s40, 1
        %s806 = scalar_select %p805, %s40, 1
        %s807 = smul.addr %s806, 4
        %s808 = scalar_lea.vmem %s0, %s807
        %p809 = pneg %p61
        %p810 = pneg %p58
        %p811 = scmp.lt.s32.totalorder %s40, 1
        %s812 = scalar_select %p811, %s40, 1
        %s813 = smul.addr %s812, 4
        %s814 = scalar_lea.vmem %s1, %s813
        %p815 = pneg %p87
        %p816 = pneg %p84
        %p817 = scmp.lt.s32.totalorder %s40, 1
        %s818 = scalar_select %p817, %s40, 1
        %s819 = scalar_lea.vmem %s2, %s818
        %p820 = pneg %p113
        %p821 = pneg %p110
        %p822 = scmp.lt.s32.totalorder %s40, 1
        %s823 = scalar_select %p822, %s40, 1
        %s824 = scalar_lea.vmem %s3, %s823
        %p825 = pneg %p139
        %p826 = pneg %p136
        %p827 = pneg %p160
        %p828 = pneg %p157
        %p829 = pneg %p181
        %p830 = pneg %p178
        %p831 = pneg %p202
        %p832 = pneg %p199
        %p833 = pneg %p223
        %p834 = pneg %p220
        %p835 = pneg %p244
        %p836 = pneg %p241
        %p837 = pneg %p265
        %p838 = pneg %p262
        %p839 = pneg %p286
        %p840 = pneg %p283
        %p841 = pneg %p307
        %p842 = pneg %p304
        %p843 = pneg %p328
        %p844 = pneg %p325
        %p845 = pneg %p349
        %p846 = pneg %p346
        %p847 = pneg %p370
        %p848 = pneg %p367
        %p849 = pneg %p391
        %p850 = pneg %p388
        %p851 = pneg %p412
        %p852 = pneg %p409
        %p853 = pneg %p433
        %p854 = pneg %p430
        %p855 = pneg %p454
        %p856 = pneg %p451
        %p857 = pneg %p475
        %p858 = pneg %p472
        %p859 = pneg %p496
        %p860 = pneg %p493
        %p861 = pneg %p517
        %p862 = pneg %p514
        %p863 = pneg %p538
        %p864 = pneg %p535
        %p865 = pneg %p559
        %p866 = pneg %p556
        %p867 = pneg %p580
        %p868 = pneg %p577
        %p869 = pneg %p601
        %p870 = pneg %p598
        %p871 = pneg %p627
        %p872 = pneg %p624
        %p873 = scmp.lt.s32.totalorder %s40, 1
        %s874 = scalar_select %p873, %s40, 1
        %s875 = smul.addr %s874, 4
        %s876 = scalar_lea.vmem %s26, %s875
        %p877 = scmp.lt.s32.totalorder %s40, 1
        %s878 = scalar_select %p877, %s40, 1
        %s879 = smul.addr %s878, 4
        %s880 = scalar_lea.vmem %s0, %s879
        %p881 = scmp.lt.s32.totalorder %s40, 1
        %s882 = scalar_select %p881, %s40, 1
        %s883 = smul.addr %s882, 4
        %s884 = scalar_lea.vmem %s1, %s883
        %p885 = scmp.lt.s32.totalorder %s40, 1
        %s886 = scalar_select %p885, %s40, 1
        %s887 = scalar_lea.vmem %s2, %s886
        %p888 = scmp.lt.s32.totalorder %s40, 1
        %s889 = scalar_select %p888, %s40, 1
        %s890 = scalar_lea.vmem %s3, %s889
        %p891 = scmp.lt.s32.totalorder %s40, 1
        %s892 = scalar_select %p891, %s40, 1
        %s893 = smul.addr %s892, 4
        %s894 = scalar_lea.vmem %s26, %s893
        %v896 = vld [vmem:[%s880] sm:$0xf]
        %v897 = vunpack.c.l.bf16 %v896
        %v898 = vld [vmem:[%s884] sm:$0xf]
        %v899 = vld [vmem:[%s887] sm:$0x1]
        %v901 = vlaneseq
        %v902 = vshrl.u32 %v901, 7
        %v903 = vsub.s32 0, %v902
        %v904 = vrot.slane %v899, %v903
        %v906 = vlaneseq
        %v907 = vshrl.u32 %v906, 7
        %v908 = vlaneseq
        %v909 = vand.u32 %v908, 127
        %vm910 = vcmp.gt.s32.totalorder %v909, %v907
        %v911 = vsel %vm910, -1e+30, 0.0
        %v912 = vadd.f32 %v904, %v911
        %v913 = vld [vmem:[%s4] sm:$0xf]
        %v914 = vld [vmem:[%s4 + $0x4] sm:$0xf]
        %v915 = vld [vmem:[%s4 + $0x8] sm:$0xf]
        %v916 = vld [vmem:[%s4 + $0xc] sm:$0xf]
        %v917 = vld [vmem:[%s5] sm:$0x1]
        %v919 = vlaneseq
        %v920 = vshrl.u32 %v919, 7
        %v921 = vsub.s32 0, %v920
        %v922 = vrot.slane %v917, %v921
        %v928 = vunpack.c.l.b16 %v913
        %v929 = vunpack.c.l.b16 %v914
        %v930 = vunpack.c.l.b16 %v915
        %v931 = vunpack.c.l.b16 %v916
        %v932 = vpack.c.b16 %v929, %v928
        %v933 = vpack.c.b16 %v931, %v930
        %vm936 = vcmask 261120
        %v938 = vsel %vm936, %v896, 0
        %940 = vmatprep.subr.bf16.mxu0 0
        %941 = vmatpush1.bf16.msra.mxu0 %v932
        %942 = vmatprep.subr.bf16.mxu0 0
        %943 = vmatpush1.bf16.msra.mxu0 %v933
        %944 = vmatprep.subr.bf16.mxu0 0
        %945 = vmatpush1.bf16.msra.mxu0 0
        %946 = vmatprep.subr.bf16.mxu0 0
        %947 = vmatpush1.bf16.msra.mxu0 0
        %948 = vmatprep.subr.bf16.mxu0 0
        %949 = vmatpush1.bf16.msra.mxu0 0
        %950 = vmatprep.subr.bf16.mxu0 0
        %951 = vmatpush1.bf16.msra.mxu0 0
        %952 = vmatprep.subr.bf16.mxu0 0
        %953 = vmatpush1.bf16.msra.mxu0 0
        %954 = vmatprep.subr.bf16.mxu0 0
        %955 = vmatpush1.bf16.msra.mxu0 0
        %956 = vmatprep.subr.bf16.mxu0 0
        %957 = vmatpush1.bf16.msra.mxu0 0
        %958 = vmatprep.subr.bf16.mxu0 0
        %959 = vmatpush1.bf16.msra.mxu0 0
        %960 = vmatprep.subr.bf16.mxu0 0
        %961 = vmatpush1.bf16.msra.mxu0 0
        %962 = vmatprep.subr.bf16.mxu0 0
        %963 = vmatpush1.bf16.msra.mxu0 0
        %964 = vmatprep.subr.bf16.mxu0 0
        %965 = vmatpush1.bf16.msra.mxu0 0
        %966 = vmatprep.subr.bf16.mxu0 0
        %967 = vmatpush1.bf16.msra.mxu0 0
        %968 = vmatprep.subr.bf16.mxu0 0
        %969 = vmatpush1.bf16.msra.mxu0 0
        %970 = vmatprep.subr.bf16.mxu0 0
        %971 = vmatpush1.bf16.msra.mxu0 0
        %972 = vmatprep.mubr.bf16.mxu0 0
        %973 = vmatmul.mubr.bf16.gmra.mrb[0].mxu0 %v938
        %v974 = vpop.f32.mrb[0].mxu0
        %v975 = vadd.f32 %v922, %v974
        %v976 = vpop.f32.mrb[0].mxu0
        %v977 = vpop.f32.mrb[0].mxu0
        %v978 = vpop.f32.mrb[0].mxu0
        %979 = vdwg.mxu0
        %v980 = vpack.c.bf16 %v975, %v975
        %v981 = vld [vmem:[%s6] sm:$0xf]
        %v982 = vld [vmem:[%s6 + $0x4] sm:$0xf]
        %v983 = vld [vmem:[%s6 + $0x8] sm:$0xf]
        %v984 = vld [vmem:[%s6 + $0xc] sm:$0xf]
        %v985 = vld [vmem:[%s7] sm:$0x1]
        %v987 = vlaneseq
        %v988 = vshrl.u32 %v987, 7
        %v989 = vsub.s32 0, %v988
        %v990 = vrot.slane %v985, %v989
        %v996 = vunpack.c.l.b16 %v981
        %v997 = vunpack.c.l.b16 %v982
        %v998 = vunpack.c.l.b16 %v983
        %v999 = vunpack.c.l.b16 %v984
        %v1000 = vpack.c.b16 %v997, %v996
        %v1001 = vpack.c.b16 %v999, %v998
        %1004 = vmatprep.subr.bf16.mxu0 0
        %1005 = vmatpush1.bf16.msra.mxu0 %v1000
        %1006 = vmatprep.subr.bf16.mxu0 0
        %1007 = vmatpush1.bf16.msra.mxu0 %v1001
        %1008 = vmatprep.subr.bf16.mxu0 0
        %1009 = vmatpush1.bf16.msra.mxu0 0
        %1010 = vmatprep.subr.bf16.mxu0 0
        %1011 = vmatpush1.bf16.msra.mxu0 0
        %1012 = vmatprep.subr.bf16.mxu0 0
        %1013 = vmatpush1.bf16.msra.mxu0 0
        %1014 = vmatprep.subr.bf16.mxu0 0
        %1015 = vmatpush1.bf16.msra.mxu0 0
        %1016 = vmatprep.subr.bf16.mxu0 0
        %1017 = vmatpush1.bf16.msra.mxu0 0
        %1018 = vmatprep.subr.bf16.mxu0 0
        %1019 = vmatpush1.bf16.msra.mxu0 0
        %1020 = vmatprep.subr.bf16.mxu0 0
        %1021 = vmatpush1.bf16.msra.mxu0 0
        %1022 = vmatprep.subr.bf16.mxu0 0
        %1023 = vmatpush1.bf16.msra.mxu0 0
        %1024 = vmatprep.subr.bf16.mxu0 0
        %1025 = vmatpush1.bf16.msra.mxu0 0
        %1026 = vmatprep.subr.bf16.mxu0 0
        %1027 = vmatpush1.bf16.msra.mxu0 0
        %1028 = vmatprep.subr.bf16.mxu0 0
        %1029 = vmatpush1.bf16.msra.mxu0 0
        %1030 = vmatprep.subr.bf16.mxu0 0
        %1031 = vmatpush1.bf16.msra.mxu0 0
        %1032 = vmatprep.subr.bf16.mxu0 0
        %1033 = vmatpush1.bf16.msra.mxu0 0
        %1034 = vmatprep.subr.bf16.mxu0 0
        %1035 = vmatpush1.bf16.msra.mxu0 0
        %1036 = vmatprep.mubr.bf16.mxu0 0
        %1037 = vmatmul.mubr.bf16.gmra.mrb[0].mxu0 %v938
        %v1038 = vpop.f32.mrb[0].mxu0
        %v1039 = vadd.f32 %v990, %v1038
        %v1040 = vpop.f32.mrb[0].mxu0
        %v1041 = vpop.f32.mrb[0].mxu0
        %v1042 = vpop.f32.mrb[0].mxu0
        %1043 = vdwg.mxu0
        %v1044 = vpack.c.bf16 %v1039, %v1039
        %vm1045 = vcmask 64512
        %v1047 = vsel %vm1045, %v980, 0
        %v1050 = vsel %vm1045, %v1044, 0
        %1052 = vmatprep.subr.bf16.mxu0 0
        %1053 = vmatpush1.bf16.xpose.msra.mxu0 %v1050
        %1054 = vmatprep.subr.bf16.mxu0 0
        %1055 = vmatpush1.bf16.xpose.msra.mxu0 0
        %1056 = vmatprep.subr.bf16.mxu0 0
        %1057 = vmatpush1.bf16.xpose.msra.mxu0 0
        %1058 = vmatprep.subr.bf16.mxu0 0
        %1059 = vmatpush1.bf16.xpose.msra.mxu0 0
        %1060 = vmatprep.subr.bf16.mxu0 0
        %1061 = vmatpush1.bf16.xpose.msra.mxu0 0
        %1062 = vmatprep.subr.bf16.mxu0 0
        %1063 = vmatpush1.bf16.xpose.msra.mxu0 0
        %1064 = vmatprep.subr.bf16.mxu0 0
        %1065 = vmatpush1.bf16.xpose.msra.mxu0 0
        %1066 = vmatprep.subr.bf16.mxu0 0
        %1067 = vmatpush1.bf16.xpose.msra.mxu0 0
        %1068 = vmatprep.subr.bf16.mxu0 0
        %1069 = vmatpush1.bf16.xpose.msra.mxu0 0
        %1070 = vmatprep.subr.bf16.mxu0 0
        %1071 = vmatpush1.bf16.xpose.msra.mxu0 0
        %1072 = vmatprep.subr.bf16.mxu0 0
        %1073 = vmatpush1.bf16.xpose.msra.mxu0 0
        %1074 = vmatprep.subr.bf16.mxu0 0
        %1075 = vmatpush1.bf16.xpose.msra.mxu0 0
        %1076 = vmatprep.subr.bf16.mxu0 0
        %1077 = vmatpush1.bf16.xpose.msra.mxu0 0
        %1078 = vmatprep.subr.bf16.mxu0 0
        %1079 = vmatpush1.bf16.xpose.msra.mxu0 0
        %1080 = vmatprep.subr.bf16.mxu0 0
        %1081 = vmatpush1.bf16.xpose.msra.mxu0 0
        %1082 = vmatprep.subr.bf16.mxu0 0
        %1083 = vmatpush1.bf16.xpose.msra.mxu0 0
        %1084 = vmatprep.mubr.bf16.mxu0 0
        %1085 = vmatmul.mubr.bf16.gmra.mrb[0].mxu0 %v1047
        %v1086 = vpop.f32.mrb[0].mxu0
        %v1087 = vadd.f32 0.0, %v1086
        %v1088 = vpop.f32.mrb[0].mxu0
        %v1089 = vpop.f32.mrb[0].mxu0
        %v1090 = vpop.f32.mrb[0].mxu0
        %1091 = vdwg.mxu0
        %v1092 = vmul.f32 %v1087, 0.35355338
        %v1093 = vadd.f32 %v1092, %v912
        %v1094 = vsel %vm1045, %v1093, -inf
        %1095 = vmax.xlane.f32.xlu0 %v1094
        %v1096 = vpop.xlane.xlu0 %1095
        %v1097 = vsub.f32 %v1093, %v1096
        %v1098 = vmul.f32 %v1097, 1.442695
        %v1099 = vpow.pop %v1098
        %v1100 = vsel %vm1045, %v1099, 0.0
        %1101 = vadd.xlane.f32.xlu0 %v1100
        %v1102 = vpop.xlane.xlu0 %1101
        %v1103 = vrcp.pop %v1102
        %v1104 = vmul.f32 %v1099, %v1103
        %v1105 = vpack.c.bf16 %v1104, %v1104
        %1107 = vrot.lane.b32.xlu0 %v1044, 96
        %v1108 = vpop.permute.xlu0 %1107
        %v1110 = vsel %vm1045, %v1105, 0
        %vm1112 = vcmask 1043456
        %v1114 = vsel %vm1112, %v1108, 0
        %1116 = vmatprep.subr.bf16.mxu0 0
        %1117 = vmatpush1.bf16.msra.mxu0 %v1114
        %1118 = vmatprep.subr.bf16.mxu0 0
        %1119 = vmatpush1.bf16.msra.mxu0 0
        %1120 = vmatprep.subr.bf16.mxu0 0
        %1121 = vmatpush1.bf16.msra.mxu0 0
        %1122 = vmatprep.subr.bf16.mxu0 0
        %1123 = vmatpush1.bf16.msra.mxu0 0
        %1124 = vmatprep.subr.bf16.mxu0 0
        %1125 = vmatpush1.bf16.msra.mxu0 0
        %1126 = vmatprep.subr.bf16.mxu0 0
        %1127 = vmatpush1.bf16.msra.mxu0 0
        %1128 = vmatprep.subr.bf16.mxu0 0
        %1129 = vmatpush1.bf16.msra.mxu0 0
        %1130 = vmatprep.subr.bf16.mxu0 0
        %1131 = vmatpush1.bf16.msra.mxu0 0
        %1132 = vmatprep.subr.bf16.mxu0 0
        %1133 = vmatpush1.bf16.msra.mxu0 0
        %1134 = vmatprep.subr.bf16.mxu0 0
        %1135 = vmatpush1.bf16.msra.mxu0 0
        %1136 = vmatprep.subr.bf16.mxu0 0
        %1137 = vmatpush1.bf16.msra.mxu0 0
        %1138 = vmatprep.subr.bf16.mxu0 0
        %1139 = vmatpush1.bf16.msra.mxu0 0
        %1140 = vmatprep.subr.bf16.mxu0 0
        %1141 = vmatpush1.bf16.msra.mxu0 0
        %1142 = vmatprep.subr.bf16.mxu0 0
        %1143 = vmatpush1.bf16.msra.mxu0 0
        %1144 = vmatprep.subr.bf16.mxu0 0
        %1145 = vmatpush1.bf16.msra.mxu0 0
        %1146 = vmatprep.subr.bf16.mxu0 0
        %1147 = vmatpush1.bf16.msra.mxu0 0
        %1148 = vmatprep.mubr.bf16.mxu0 0
        %1149 = vmatmul.mubr.bf16.gmra.mrb[0].mxu0 %v1110
        %v1150 = vpop.f32.mrb[0].mxu0
        %v1151 = vadd.f32 0.0, %v1150
        %v1152 = vpop.f32.mrb[0].mxu0
        %v1153 = vpop.f32.mrb[0].mxu0
        %v1154 = vpop.f32.mrb[0].mxu0
        %1155 = vdwg.mxu0
        %1156 = vst.msk [vmem:[#allocation2] sm:$0xff] %vm1045, %v1151
        %1158 = vrot.lane.b32.xlu0 %v980, 120
        %v1159 = vpop.permute.xlu0 %1158
        %1160 = vrot.lane.b32.xlu0 %v1044, 120
        %v1161 = vpop.permute.xlu0 %1160
        %v1163 = vsel %vm1045, %v1159, 0
        %v1166 = vsel %vm1045, %v1161, 0
        %1168 = vmatprep.subr.bf16.mxu0 0
        %1169 = vmatpush1.bf16.xpose.msra.mxu0 %v1166
        %1170 = vmatprep.subr.bf16.mxu0 0
        %1171 = vmatpush1.bf16.xpose.msra.mxu0 0
        %1172 = vmatprep.subr.bf16.mxu0 0
        %1173 = vmatpush1.bf16.xpose.msra.mxu0 0
        %1174 = vmatprep.subr.bf16.mxu0 0
        %1175 = vmatpush1.bf16.xpose.msra.mxu0 0
        %1176 = vmatprep.subr.bf16.mxu0 0
        %1177 = vmatpush1.bf16.xpose.msra.mxu0 0
        %1178 = vmatprep.subr.bf16.mxu0 0
        %1179 = vmatpush1.bf16.xpose.msra.mxu0 0
        %1180 = vmatprep.subr.bf16.mxu0 0
        %1181 = vmatpush1.bf16.xpose.msra.mxu0 0
        %1182 = vmatprep.subr.bf16.mxu0 0
        %1183 = vmatpush1.bf16.xpose.msra.mxu0 0
        %1184 = vmatprep.subr.bf16.mxu0 0
        %1185 = vmatpush1.bf16.xpose.msra.mxu0 0
        %1186 = vmatprep.subr.bf16.mxu0 0
        %1187 = vmatpush1.bf16.xpose.msra.mxu0 0
        %1188 = vmatprep.subr.bf16.mxu0 0
        %1189 = vmatpush1.bf16.xpose.msra.mxu0 0
        %1190 = vmatprep.subr.bf16.mxu0 0
        %1191 = vmatpush1.bf16.xpose.msra.mxu0 0
        %1192 = vmatprep.subr.bf16.mxu0 0
        %1193 = vmatpush1.bf16.xpose.msra.mxu0 0
        %1194 = vmatprep.subr.bf16.mxu0 0
        %1195 = vmatpush1.bf16.xpose.msra.mxu0 0
        %1196 = vmatprep.subr.bf16.mxu0 0
        %1197 = vmatpush1.bf16.xpose.msra.mxu0 0
        %1198 = vmatprep.subr.bf16.mxu0 0
        %1199 = vmatpush1.bf16.xpose.msra.mxu0 0
        %1200 = vmatprep.mubr.bf16.mxu0 0
        %1201 = vmatmul.mubr.bf16.gmra.mrb[0].mxu0 %v1163
        %v1202 = vpop.f32.mrb[0].mxu0
        %v1203 = vadd.f32 0.0, %v1202
        %v1204 = vpop.f32.mrb[0].mxu0
        %v1205 = vpop.f32.mrb[0].mxu0
        %v1206 = vpop.f32.mrb[0].mxu0
        %1207 = vdwg.mxu0
        %v1208 = vmul.f32 %v1203, 0.35355338
        %v1209 = vadd.f32 %v1208, %v912
        %v1210 = vsel %vm1045, %v1209, -inf
        %1211 = vmax.xlane.f32.xlu0 %v1210
        %v1212 = vpop.xlane.xlu0 %1211
        %v1213 = vsub.f32 %v1209, %v1212
        %v1214 = vmul.f32 %v1213, 1.442695
        %v1215 = vpow.pop %v1214
        %v1216 = vsel %vm1045, %v1215, 0.0
        %1217 = vadd.xlane.f32.xlu0 %v1216
        %v1218 = vpop.xlane.xlu0 %1217
        %v1219 = vrcp.pop %v1218
        %v1220 = vmul.f32 %v1215, %v1219
        %v1221 = vpack.c.bf16 %v1220, %v1220
        %1222 = vrot.lane.b32.xlu0 %v1044, 88
        %v1223 = vpop.permute.xlu0 %1222
        %v1225 = vsel %vm1045, %v1221, 0
        %v1228 = vsel %vm1112, %v1223, 0
        %1230 = vmatprep.subr.bf16.mxu0 0
        %1231 = vmatpush1.bf16.msra.mxu0 %v1228
        %1232 = vmatprep.subr.bf16.mxu0 0
        %1233 = vmatpush1.bf16.msra.mxu0 0
        %1234 = vmatprep.subr.bf16.mxu0 0
        %1235 = vmatpush1.bf16.msra.mxu0 0
        %1236 = vmatprep.subr.bf16.mxu0 0
        %1237 = vmatpush1.bf16.msra.mxu0 0
        %1238 = vmatprep.subr.bf16.mxu0 0
        %1239 = vmatpush1.bf16.msra.mxu0 0
        %1240 = vmatprep.subr.bf16.mxu0 0
        %1241 = vmatpush1.bf16.msra.mxu0 0
        %1242 = vmatprep.subr.bf16.mxu0 0
        %1243 = vmatpush1.bf16.msra.mxu0 0
        %1244 = vmatprep.subr.bf16.mxu0 0
        %1245 = vmatpush1.bf16.msra.mxu0 0
        %1246 = vmatprep.subr.bf16.mxu0 0
        %1247 = vmatpush1.bf16.msra.mxu0 0
        %1248 = vmatprep.subr.bf16.mxu0 0
        %1249 = vmatpush1.bf16.msra.mxu0 0
        %1250 = vmatprep.subr.bf16.mxu0 0
        %1251 = vmatpush1.bf16.msra.mxu0 0
        %1252 = vmatprep.subr.bf16.mxu0 0
        %1253 = vmatpush1.bf16.msra.mxu0 0
        %1254 = vmatprep.subr.bf16.mxu0 0
        %1255 = vmatpush1.bf16.msra.mxu0 0
        %1256 = vmatprep.subr.bf16.mxu0 0
        %1257 = vmatpush1.bf16.msra.mxu0 0
        %1258 = vmatprep.subr.bf16.mxu0 0
        %1259 = vmatpush1.bf16.msra.mxu0 0
        %1260 = vmatprep.subr.bf16.mxu0 0
        %1261 = vmatpush1.bf16.msra.mxu0 0
        %1262 = vmatprep.mubr.bf16.mxu0 0
        %1263 = vmatmul.mubr.bf16.gmra.mrb[0].mxu0 %v1225
        %v1264 = vpop.f32.mrb[0].mxu0
        %v1265 = vadd.f32 0.0, %v1264
        %v1266 = vpop.f32.mrb[0].mxu0
        %v1267 = vpop.f32.mrb[0].mxu0
        %v1268 = vpop.f32.mrb[0].mxu0
        %1269 = vdwg.mxu0
        %1271 = vrot.lane.b32.xlu0 %v1265, 8
        %v1272 = vpop.permute.xlu0 %1271
        %vm1274 = vcmask 130112
        %1275 = vst.msk [vmem:[#allocation2] sm:$0xff] %vm1274, %v1272
        %1276 = vrot.lane.b32.xlu0 %v980, 112
        %v1277 = vpop.permute.xlu0 %1276
        %1278 = vrot.lane.b32.xlu0 %v1044, 112
        %v1279 = vpop.permute.xlu0 %1278
        %v1281 = vsel %vm1045, %v1277, 0
        %v1284 = vsel %vm1045, %v1279, 0
        %1286 = vmatprep.subr.bf16.mxu0 0
        %1287 = vmatpush1.bf16.xpose.msra.mxu0 %v1284
        %1288 = vmatprep.subr.bf16.mxu0 0
        %1289 = vmatpush1.bf16.xpose.msra.mxu0 0
        %1290 = vmatprep.subr.bf16.mxu0 0
        %1291 = vmatpush1.bf16.xpose.msra.mxu0 0
        %1292 = vmatprep.subr.bf16.mxu0 0
        %1293 = vmatpush1.bf16.xpose.msra.mxu0 0
        %1294 = vmatprep.subr.bf16.mxu0 0
        %1295 = vmatpush1.bf16.xpose.msra.mxu0 0
        %1296 = vmatprep.subr.bf16.mxu0 0
        %1297 = vmatpush1.bf16.xpose.msra.mxu0 0
        %1298 = vmatprep.subr.bf16.mxu0 0
        %1299 = vmatpush1.bf16.xpose.msra.mxu0 0
        %1300 = vmatprep.subr.bf16.mxu0 0
        %1301 = vmatpush1.bf16.xpose.msra.mxu0 0
        %1302 = vmatprep.subr.bf16.mxu0 0
        %1303 = vmatpush1.bf16.xpose.msra.mxu0 0
        %1304 = vmatprep.subr.bf16.mxu0 0
        %1305 = vmatpush1.bf16.xpose.msra.mxu0 0
        %1306 = vmatprep.subr.bf16.mxu0 0
        %1307 = vmatpush1.bf16.xpose.msra.mxu0 0
        %1308 = vmatprep.subr.bf16.mxu0 0
        %1309 = vmatpush1.bf16.xpose.msra.mxu0 0
        %1310 = vmatprep.subr.bf16.mxu0 0
        %1311 = vmatpush1.bf16.xpose.msra.mxu0 0
        %1312 = vmatprep.subr.bf16.mxu0 0
        %1313 = vmatpush1.bf16.xpose.msra.mxu0 0
        %1314 = vmatprep.subr.bf16.mxu0 0
        %1315 = vmatpush1.bf16.xpose.msra.mxu0 0
        %1316 = vmatprep.subr.bf16.mxu0 0
        %1317 = vmatpush1.bf16.xpose.msra.mxu0 0
        %1318 = vmatprep.mubr.bf16.mxu0 0
        %1319 = vmatmul.mubr.bf16.gmra.mrb[0].mxu0 %v1281
        %v1320 = vpop.f32.mrb[0].mxu0
        %v1321 = vadd.f32 0.0, %v1320
        %v1322 = vpop.f32.mrb[0].mxu0
        %v1323 = vpop.f32.mrb[0].mxu0
        %v1324 = vpop.f32.mrb[0].mxu0
        %1325 = vdwg.mxu0
        %v1326 = vmul.f32 %v1321, 0.35355338
        %v1327 = vadd.f32 %v1326, %v912
        %v1328 = vsel %vm1045, %v1327, -inf
        %1329 = vmax.xlane.f32.xlu0 %v1328
        %v1330 = vpop.xlane.xlu0 %1329
        %v1331 = vsub.f32 %v1327, %v1330
        %v1332 = vmul.f32 %v1331, 1.442695
        %v1333 = vpow.pop %v1332
        %v1334 = vsel %vm1045, %v1333, 0.0
        %1335 = vadd.xlane.f32.xlu0 %v1334
        %v1336 = vpop.xlane.xlu0 %1335
        %v1337 = vrcp.pop %v1336
        %v1338 = vmul.f32 %v1333, %v1337
        %v1339 = vpack.c.bf16 %v1338, %v1338
        %1340 = vrot.lane.b32.xlu0 %v1044, 80
        %v1341 = vpop.permute.xlu0 %1340
        %v1343 = vsel %vm1045, %v1339, 0
        %v1346 = vsel %vm1112, %v1341, 0
        %1348 = vmatprep.subr.bf16.mxu0 0
        %1349 = vmatpush1.bf16.msra.mxu0 %v1346
        %1350 = vmatprep.subr.bf16.mxu0 0
        %1351 = vmatpush1.bf16.msra.mxu0 0
        %1352 = vmatprep.subr.bf16.mxu0 0
        %1353 = vmatpush1.bf16.msra.mxu0 0
        %1354 = vmatprep.subr.bf16.mxu0 0
        %1355 = vmatpush1.bf16.msra.mxu0 0
        %1356 = vmatprep.subr.bf16.mxu0 0
        %1357 = vmatpush1.bf16.msra.mxu0 0
        %1358 = vmatprep.subr.bf16.mxu0 0
        %1359 = vmatpush1.bf16.msra.mxu0 0
        %1360 = vmatprep.subr.bf16.mxu0 0
        %1361 = vmatpush1.bf16.msra.mxu0 0
        %1362 = vmatprep.subr.bf16.mxu0 0
        %1363 = vmatpush1.bf16.msra.mxu0 0
        %1364 = vmatprep.subr.bf16.mxu0 0
        %1365 = vmatpush1.bf16.msra.mxu0 0
        %1366 = vmatprep.subr.bf16.mxu0 0
        %1367 = vmatpush1.bf16.msra.mxu0 0
        %1368 = vmatprep.subr.bf16.mxu0 0
        %1369 = vmatpush1.bf16.msra.mxu0 0
        %1370 = vmatprep.subr.bf16.mxu0 0
        %1371 = vmatpush1.bf16.msra.mxu0 0
        %1372 = vmatprep.subr.bf16.mxu0 0
        %1373 = vmatpush1.bf16.msra.mxu0 0
        %1374 = vmatprep.subr.bf16.mxu0 0
        %1375 = vmatpush1.bf16.msra.mxu0 0
        %1376 = vmatprep.subr.bf16.mxu0 0
        %1377 = vmatpush1.bf16.msra.mxu0 0
        %1378 = vmatprep.subr.bf16.mxu0 0
        %1379 = vmatpush1.bf16.msra.mxu0 0
        %1380 = vmatprep.mubr.bf16.mxu0 0
        %1381 = vmatmul.mubr.bf16.gmra.mrb[0].mxu0 %v1343
        %v1382 = vpop.f32.mrb[0].mxu0
        %v1383 = vadd.f32 0.0, %v1382
        %v1384 = vpop.f32.mrb[0].mxu0
        %v1385 = vpop.f32.mrb[0].mxu0
        %v1386 = vpop.f32.mrb[0].mxu0
        %1387 = vdwg.mxu0
        %1389 = vrot.lane.b32.xlu0 %v1383, 16
        %v1390 = vpop.permute.xlu0 %1389
        %vm1392 = vcmask 195712
        %1393 = vst.msk [vmem:[#allocation2] sm:$0xff] %vm1392, %v1390
        %1394 = vrot.lane.b32.xlu0 %v980, 104
        %v1395 = vpop.permute.xlu0 %1394
        %1396 = vrot.lane.b32.xlu0 %v1044, 104
        %v1397 = vpop.permute.xlu0 %1396
        %v1399 = vsel %vm1045, %v1395, 0
        %v1402 = vsel %vm1045, %v1397, 0
        %1404 = vmatprep.subr.bf16.mxu0 0
        %1405 = vmatpush1.bf16.xpose.msra.mxu0 %v1402
        %1406 = vmatprep.subr.bf16.mxu0 0
        %1407 = vmatpush1.bf16.xpose.msra.mxu0 0
        %1408 = vmatprep.subr.bf16.mxu0 0
        %1409 = vmatpush1.bf16.xpose.msra.mxu0 0
        %1410 = vmatprep.subr.bf16.mxu0 0
        %1411 = vmatpush1.bf16.xpose.msra.mxu0 0
        %1412 = vmatprep.subr.bf16.mxu0 0
        %1413 = vmatpush1.bf16.xpose.msra.mxu0 0
        %1414 = vmatprep.subr.bf16.mxu0 0
        %1415 = vmatpush1.bf16.xpose.msra.mxu0 0
        %1416 = vmatprep.subr.bf16.mxu0 0
        %1417 = vmatpush1.bf16.xpose.msra.mxu0 0
        %1418 = vmatprep.subr.bf16.mxu0 0
        %1419 = vmatpush1.bf16.xpose.msra.mxu0 0
        %1420 = vmatprep.subr.bf16.mxu0 0
        %1421 = vmatpush1.bf16.xpose.msra.mxu0 0
        %1422 = vmatprep.subr.bf16.mxu0 0
        %1423 = vmatpush1.bf16.xpose.msra.mxu0 0
        %1424 = vmatprep.subr.bf16.mxu0 0
        %1425 = vmatpush1.bf16.xpose.msra.mxu0 0
        %1426 = vmatprep.subr.bf16.mxu0 0
        %1427 = vmatpush1.bf16.xpose.msra.mxu0 0
        %1428 = vmatprep.subr.bf16.mxu0 0
        %1429 = vmatpush1.bf16.xpose.msra.mxu0 0
        %1430 = vmatprep.subr.bf16.mxu0 0
        %1431 = vmatpush1.bf16.xpose.msra.mxu0 0
        %1432 = vmatprep.subr.bf16.mxu0 0
        %1433 = vmatpush1.bf16.xpose.msra.mxu0 0
        %1434 = vmatprep.subr.bf16.mxu0 0
        %1435 = vmatpush1.bf16.xpose.msra.mxu0 0
        %1436 = vmatprep.mubr.bf16.mxu0 0
        %1437 = vmatmul.mubr.bf16.gmra.mrb[0].mxu0 %v1399
        %v1438 = vpop.f32.mrb[0].mxu0
        %v1439 = vadd.f32 0.0, %v1438
        %v1440 = vpop.f32.mrb[0].mxu0
        %v1441 = vpop.f32.mrb[0].mxu0
        %v1442 = vpop.f32.mrb[0].mxu0
        %1443 = vdwg.mxu0
        %v1444 = vmul.f32 %v1439, 0.35355338
        %v1445 = vadd.f32 %v1444, %v912
        %v1446 = vsel %vm1045, %v1445, -inf
        %1447 = vmax.xlane.f32.xlu0 %v1446
        %v1448 = vpop.xlane.xlu0 %1447
        %v1449 = vsub.f32 %v1445, %v1448
        %v1450 = vmul.f32 %v1449, 1.442695
        %v1451 = vpow.pop %v1450
        %v1452 = vsel %vm1045, %v1451, 0.0
        %1453 = vadd.xlane.f32.xlu0 %v1452
        %v1454 = vpop.xlane.xlu0 %1453
        %v1455 = vrcp.pop %v1454
        %v1456 = vmul.f32 %v1451, %v1455
        %v1457 = vpack.c.bf16 %v1456, %v1456
        %1458 = vrot.lane.b32.xlu0 %v1044, 72
        %v1459 = vpop.permute.xlu0 %1458
        %v1461 = vsel %vm1045, %v1457, 0
        %v1464 = vsel %vm1112, %v1459, 0
        %1466 = vmatprep.subr.bf16.mxu0 0
        %1467 = vmatpush1.bf16.msra.mxu0 %v1464
        %1468 = vmatprep.subr.bf16.mxu0 0
        %1469 = vmatpush1.bf16.msra.mxu0 0
        %1470 = vmatprep.subr.bf16.mxu0 0
        %1471 = vmatpush1.bf16.msra.mxu0 0
        %1472 = vmatprep.subr.bf16.mxu0 0
        %1473 = vmatpush1.bf16.msra.mxu0 0
        %1474 = vmatprep.subr.bf16.mxu0 0
        %1475 = vmatpush1.bf16.msra.mxu0 0
        %1476 = vmatprep.subr.bf16.mxu0 0
        %1477 = vmatpush1.bf16.msra.mxu0 0
        %1478 = vmatprep.subr.bf16.mxu0 0
        %1479 = vmatpush1.bf16.msra.mxu0 0
        %1480 = vmatprep.subr.bf16.mxu0 0
        %1481 = vmatpush1.bf16.msra.mxu0 0
        %1482 = vmatprep.subr.bf16.mxu0 0
        %1483 = vmatpush1.bf16.msra.mxu0 0
        %1484 = vmatprep.subr.bf16.mxu0 0
        %1485 = vmatpush1.bf16.msra.mxu0 0
        %1486 = vmatprep.subr.bf16.mxu0 0
        %1487 = vmatpush1.bf16.msra.mxu0 0
        %1488 = vmatprep.subr.bf16.mxu0 0
        %1489 = vmatpush1.bf16.msra.mxu0 0
        %1490 = vmatprep.subr.bf16.mxu0 0
        %1491 = vmatpush1.bf16.msra.mxu0 0
        %1492 = vmatprep.subr.bf16.mxu0 0
        %1493 = vmatpush1.bf16.msra.mxu0 0
        %1494 = vmatprep.subr.bf16.mxu0 0
        %1495 = vmatpush1.bf16.msra.mxu0 0
        %1496 = vmatprep.subr.bf16.mxu0 0
        %1497 = vmatpush1.bf16.msra.mxu0 0
        %1498 = vmatprep.mubr.bf16.mxu0 0
        %1499 = vmatmul.mubr.bf16.gmra.mrb[0].mxu0 %v1461
        %v1500 = vpop.f32.mrb[0].mxu0
        %v1501 = vadd.f32 0.0, %v1500
        %v1502 = vpop.f32.mrb[0].mxu0
        %v1503 = vpop.f32.mrb[0].mxu0
        %v1504 = vpop.f32.mrb[0].mxu0
        %1505 = vdwg.mxu0
        %1507 = vrot.lane.b32.xlu0 %v1501, 24
        %v1508 = vpop.permute.xlu0 %1507
        %vm1510 = vcmask 261312
        %1511 = vst.msk [vmem:[#allocation2] sm:$0xff] %vm1510, %v1508
        %v1512 = vld [vmem:[#allocation2] sm:$0xff]
        %v1513 = vpack.c.bf16 %v1512, %v1512
        %v1514 = vld [vmem:[%s8] sm:$0xf]
        %v1515 = vld [vmem:[%s8 + $0x4] sm:$0xf]
        %v1516 = vld [vmem:[%s8 + $0x8] sm:$0xf]
        %v1517 = vld [vmem:[%s8 + $0xc] sm:$0xf]
        %v1518 = vld [vmem:[%s9] sm:$0x1]
        %v1520 = vlaneseq
        %v1521 = vshrl.u32 %v1520, 7
        %v1522 = vsub.s32 0, %v1521
        %v1523 = vrot.slane %v1518, %v1522
        %v1529 = vunpack.c.l.b16 %v1514
        %v1530 = vunpack.c.l.b16 %v1515
        %v1531 = vunpack.c.l.b16 %v1516
        %v1532 = vunpack.c.l.b16 %v1517
        %v1533 = vpack.c.b16 %v1530, %v1529
        %v1534 = vpack.c.b16 %v1532, %v1531
        %v1538 = vsel %vm936, %v1513, 0
        %1540 = vmatprep.subr.bf16.mxu0 0
        %1541 = vmatpush1.bf16.msra.mxu0 %v1533
        %1542 = vmatprep.subr.bf16.mxu0 0
        %1543 = vmatpush1.bf16.msra.mxu0 %v1534
        %1544 = vmatprep.subr.bf16.mxu0 0
        %1545 = vmatpush1.bf16.msra.mxu0 0
        %1546 = vmatprep.subr.bf16.mxu0 0
        %1547 = vmatpush1.bf16.msra.mxu0 0
        %1548 = vmatprep.subr.bf16.mxu0 0
        %1549 = vmatpush1.bf16.msra.mxu0 0
        %1550 = vmatprep.subr.bf16.mxu0 0
        %1551 = vmatpush1.bf16.msra.mxu0 0
        %1552 = vmatprep.subr.bf16.mxu0 0
        %1553 = vmatpush1.bf16.msra.mxu0 0
        %1554 = vmatprep.subr.bf16.mxu0 0
        %1555 = vmatpush1.bf16.msra.mxu0 0
        %1556 = vmatprep.subr.bf16.mxu0 0
        %1557 = vmatpush1.bf16.msra.mxu0 0
        %1558 = vmatprep.subr.bf16.mxu0 0
        %1559 = vmatpush1.bf16.msra.mxu0 0
        %1560 = vmatprep.subr.bf16.mxu0 0
        %1561 = vmatpush1.bf16.msra.mxu0 0
        %1562 = vmatprep.subr.bf16.mxu0 0
        %1563 = vmatpush1.bf16.msra.mxu0 0
        %1564 = vmatprep.subr.bf16.mxu0 0
        %1565 = vmatpush1.bf16.msra.mxu0 0
        %1566 = vmatprep.subr.bf16.mxu0 0
        %1567 = vmatpush1.bf16.msra.mxu0 0
        %1568 = vmatprep.subr.bf16.mxu0 0
        %1569 = vmatpush1.bf16.msra.mxu0 0
        %1570 = vmatprep.subr.bf16.mxu0 0
        %1571 = vmatpush1.bf16.msra.mxu0 0
        %1572 = vmatprep.mubr.bf16.mxu0 0
        %1573 = vmatmul.mubr.bf16.gmra.mrb[0].mxu0 %v1538
        %v1574 = vpop.f32.mrb[0].mxu0
        %v1575 = vadd.f32 %v1523, %v1574
        %v1576 = vpop.f32.mrb[0].mxu0
        %v1577 = vpop.f32.mrb[0].mxu0
        %v1578 = vpop.f32.mrb[0].mxu0
        %1579 = vdwg.mxu0
        %v1580 = vadd.f32 %v897, %v1575
        %v1581 = vld [vmem:[%s10] sm:$0x1]
        %v1582 = vld [vmem:[%s11] sm:$0x1]
        %v1583 = vsel %vm936, %v1580, 0.0
        %1584 = vadd.xlane.f32.xlu0 %v1583
        %v1585 = vpop.xlane.xlu0 %1584
        %v1586 = vrcp.pop 32.0
        %v1587 = vmul.f32 %v1585, %v1586
        %v1588 = vsub.f32 %v1580, %v1587
        %v1589 = vmul.f32 %v1588, %v1588
        %v1590 = vsel %vm936, %v1589, 0.0
        %1591 = vadd.xlane.f32.xlu0 %v1590
        %v1592 = vpop.xlane.xlu0 %1591
        %v1593 = vmul.f32 %v1592, %v1586
        %v1594 = vadd.f32 %v1593, 1e-05
        %v1595 = vrsqrt.pop %v1594
        %v1596 = vmul.f32 %v1588, %v1595
        %v1598 = vlaneseq
        %v1599 = vshrl.u32 %v1598, 7
        %v1600 = vsub.s32 0, %v1599
        %v1601 = vrot.slane %v1581, %v1600
        %v1603 = vmul.f32 %v1596, %v1601
        %v1605 = vlaneseq
        %v1606 = vshrl.u32 %v1605, 7
        %v1607 = vsub.s32 0, %v1606
        %v1608 = vrot.slane %v1582, %v1607
        %v1610 = vadd.f32 %v1603, %v1608
        %v1611 = vld [vmem:[%s890] sm:$0x1]
        %v1613 = vlaneseq
        %v1614 = vshrl.u32 %v1613, 7
        %v1615 = vsub.s32 0, %v1614
        %v1616 = vrot.slane %v1611, %v1615
        %v1618 = vpack.c.bf16 %v1610, %v1610
        %v1619 = vld [vmem:[%s12] sm:$0xf]
        %v1620 = vld [vmem:[%s12 + $0x4] sm:$0xf]
        %v1621 = vld [vmem:[%s12 + $0x8] sm:$0xf]
        %v1622 = vld [vmem:[%s12 + $0xc] sm:$0xf]
        %v1623 = vld [vmem:[%s13] sm:$0x1]
        %v1625 = vlaneseq
        %v1626 = vshrl.u32 %v1625, 7
        %v1627 = vsub.s32 0, %v1626
        %v1628 = vrot.slane %v1623, %v1627
        %v1634 = vunpack.c.l.b16 %v1619
        %v1635 = vunpack.c.l.b16 %v1620
        %v1636 = vunpack.c.l.b16 %v1621
        %v1637 = vunpack.c.l.b16 %v1622
        %v1638 = vpack.c.b16 %v1635, %v1634
        %v1639 = vpack.c.b16 %v1637, %v1636
        %v1643 = vsel %vm936, %v1618, 0
        %1645 = vmatprep.subr.bf16.mxu0 0
        %1646 = vmatpush1.bf16.msra.mxu0 %v1638
        %1647 = vmatprep.subr.bf16.mxu0 0
        %1648 = vmatpush1.bf16.msra.mxu0 %v1639
        %1649 = vmatprep.subr.bf16.mxu0 0
        %1650 = vmatpush1.bf16.msra.mxu0 0
        %1651 = vmatprep.subr.bf16.mxu0 0
        %1652 = vmatpush1.bf16.msra.mxu0 0
        %1653 = vmatprep.subr.bf16.mxu0 0
        %1654 = vmatpush1.bf16.msra.mxu0 0
        %1655 = vmatprep.subr.bf16.mxu0 0
        %1656 = vmatpush1.bf16.msra.mxu0 0
        %1657 = vmatprep.subr.bf16.mxu0 0
        %1658 = vmatpush1.bf16.msra.mxu0 0
        %1659 = vmatprep.subr.bf16.mxu0 0
        %1660 = vmatpush1.bf16.msra.mxu0 0
        %1661 = vmatprep.subr.bf16.mxu0 0
        %1662 = vmatpush1.bf16.msra.mxu0 0
        %1663 = vmatprep.subr.bf16.mxu0 0
        %1664 = vmatpush1.bf16.msra.mxu0 0
        %1665 = vmatprep.subr.bf16.mxu0 0
        %1666 = vmatpush1.bf16.msra.mxu0 0
        %1667 = vmatprep.subr.bf16.mxu0 0
        %1668 = vmatpush1.bf16.msra.mxu0 0
        %1669 = vmatprep.subr.bf16.mxu0 0
        %1670 = vmatpush1.bf16.msra.mxu0 0
        %1671 = vmatprep.subr.bf16.mxu0 0
        %1672 = vmatpush1.bf16.msra.mxu0 0
        %1673 = vmatprep.subr.bf16.mxu0 0
        %1674 = vmatpush1.bf16.msra.mxu0 0
        %1675 = vmatprep.subr.bf16.mxu0 0
        %1676 = vmatpush1.bf16.msra.mxu0 0
        %1677 = vmatprep.mubr.bf16.mxu0 0
        %1678 = vmatmul.mubr.bf16.gmra.mrb[0].mxu0 %v1643
        %v1679 = vpop.f32.mrb[0].mxu0
        %v1680 = vadd.f32 %v1628, %v1679
        %v1681 = vpop.f32.mrb[0].mxu0
        %v1682 = vpop.f32.mrb[0].mxu0
        %v1683 = vpop.f32.mrb[0].mxu0
        %1684 = vdwg.mxu0
        %v1685 = vpack.c.bf16 %v1680, %v1680
        %v1686 = vld [vmem:[%s14] sm:$0xf]
        %v1687 = vld [vmem:[%s14 + $0x4] sm:$0xf]
        %v1688 = vld [vmem:[%s14 + $0x8] sm:$0xf]
        %v1689 = vld [vmem:[%s14 + $0xc] sm:$0xf]
        %v1690 = vld [vmem:[%s15] sm:$0x1]
        %v1692 = vlaneseq
        %v1693 = vshrl.u32 %v1692, 7
        %v1694 = vsub.s32 0, %v1693
        %v1695 = vrot.slane %v1690, %v1694
        %v1701 = vunpack.c.l.b16 %v1686
        %v1702 = vunpack.c.l.b16 %v1687
        %v1703 = vunpack.c.l.b16 %v1688
        %v1704 = vunpack.c.l.b16 %v1689
        %v1705 = vpack.c.b16 %v1702, %v1701
        %v1706 = vpack.c.b16 %v1704, %v1703
        %v1710 = vsel %vm936, %v898, 0
        %1712 = vmatprep.subr.bf16.mxu0 0
        %1713 = vmatpush1.bf16.msra.mxu0 %v1705
        %1714 = vmatprep.subr.bf16.mxu0 0
        %1715 = vmatpush1.bf16.msra.mxu0 %v1706
        %1716 = vmatprep.subr.bf16.mxu0 0
        %1717 = vmatpush1.bf16.msra.mxu0 0
        %1718 = vmatprep.subr.bf16.mxu0 0
        %1719 = vmatpush1.bf16.msra.mxu0 0
        %1720 = vmatprep.subr.bf16.mxu0 0
        %1721 = vmatpush1.bf16.msra.mxu0 0
        %1722 = vmatprep.subr.bf16.mxu0 0
        %1723 = vmatpush1.bf16.msra.mxu0 0
        %1724 = vmatprep.subr.bf16.mxu0 0
        %1725 = vmatpush1.bf16.msra.mxu0 0
        %1726 = vmatprep.subr.bf16.mxu0 0
        %1727 = vmatpush1.bf16.msra.mxu0 0
        %1728 = vmatprep.subr.bf16.mxu0 0
        %1729 = vmatpush1.bf16.msra.mxu0 0
        %1730 = vmatprep.subr.bf16.mxu0 0
        %1731 = vmatpush1.bf16.msra.mxu0 0
        %1732 = vmatprep.subr.bf16.mxu0 0
        %1733 = vmatpush1.bf16.msra.mxu0 0
        %1734 = vmatprep.subr.bf16.mxu0 0
        %1735 = vmatpush1.bf16.msra.mxu0 0
        %1736 = vmatprep.subr.bf16.mxu0 0
        %1737 = vmatpush1.bf16.msra.mxu0 0
        %1738 = vmatprep.subr.bf16.mxu0 0
        %1739 = vmatpush1.bf16.msra.mxu0 0
        %1740 = vmatprep.subr.bf16.mxu0 0
        %1741 = vmatpush1.bf16.msra.mxu0 0
        %1742 = vmatprep.subr.bf16.mxu0 0
        %1743 = vmatpush1.bf16.msra.mxu0 0
        %1744 = vmatprep.mubr.bf16.mxu0 0
        %1745 = vmatmul.mubr.bf16.gmra.mrb[0].mxu0 %v1710
        %v1746 = vpop.f32.mrb[0].mxu0
        %v1747 = vadd.f32 %v1695, %v1746
        %v1748 = vpop.f32.mrb[0].mxu0
        %v1749 = vpop.f32.mrb[0].mxu0
        %v1750 = vpop.f32.mrb[0].mxu0
        %1751 = vdwg.mxu0
        %v1752 = vpack.c.bf16 %v1747, %v1747
        %v1754 = vsel %vm1045, %v1685, 0
        %v1757 = vsel %vm1045, %v1752, 0
        %1759 = vmatprep.subr.bf16.mxu0 0
        %1760 = vmatpush1.bf16.xpose.msra.mxu0 %v1757
        %1761 = vmatprep.subr.bf16.mxu0 0
        %1762 = vmatpush1.bf16.xpose.msra.mxu0 0
        %1763 = vmatprep.subr.bf16.mxu0 0
        %1764 = vmatpush1.bf16.xpose.msra.mxu0 0
        %1765 = vmatprep.subr.bf16.mxu0 0
        %1766 = vmatpush1.bf16.xpose.msra.mxu0 0
        %1767 = vmatprep.subr.bf16.mxu0 0
        %1768 = vmatpush1.bf16.xpose.msra.mxu0 0
        %1769 = vmatprep.subr.bf16.mxu0 0
        %1770 = vmatpush1.bf16.xpose.msra.mxu0 0
        %1771 = vmatprep.subr.bf16.mxu0 0
        %1772 = vmatpush1.bf16.xpose.msra.mxu0 0
        %1773 = vmatprep.subr.bf16.mxu0 0
        %1774 = vmatpush1.bf16.xpose.msra.mxu0 0
        %1775 = vmatprep.subr.bf16.mxu0 0
        %1776 = vmatpush1.bf16.xpose.msra.mxu0 0
        %1777 = vmatprep.subr.bf16.mxu0 0
        %1778 = vmatpush1.bf16.xpose.msra.mxu0 0
        %1779 = vmatprep.subr.bf16.mxu0 0
        %1780 = vmatpush1.bf16.xpose.msra.mxu0 0
        %1781 = vmatprep.subr.bf16.mxu0 0
        %1782 = vmatpush1.bf16.xpose.msra.mxu0 0
        %1783 = vmatprep.subr.bf16.mxu0 0
        %1784 = vmatpush1.bf16.xpose.msra.mxu0 0
        %1785 = vmatprep.subr.bf16.mxu0 0
        %1786 = vmatpush1.bf16.xpose.msra.mxu0 0
        %1787 = vmatprep.subr.bf16.mxu0 0
        %1788 = vmatpush1.bf16.xpose.msra.mxu0 0
        %1789 = vmatprep.subr.bf16.mxu0 0
        %1790 = vmatpush1.bf16.xpose.msra.mxu0 0
        %1791 = vmatprep.mubr.bf16.mxu0 0
        %1792 = vmatmul.mubr.bf16.gmra.mrb[0].mxu0 %v1754
        %v1793 = vpop.f32.mrb[0].mxu0
        %v1794 = vadd.f32 0.0, %v1793
        %v1795 = vpop.f32.mrb[0].mxu0
        %v1796 = vpop.f32.mrb[0].mxu0
        %v1797 = vpop.f32.mrb[0].mxu0
        %1798 = vdwg.mxu0
        %v1799 = vmul.f32 %v1794, 0.35355338
        %v1800 = vadd.f32 %v1799, %v1616
        %v1801 = vsel %vm1045, %v1800, -inf
        %1802 = vmax.xlane.f32.xlu0 %v1801
        %v1803 = vpop.xlane.xlu0 %1802
        %v1804 = vsub.f32 %v1800, %v1803
        %v1805 = vmul.f32 %v1804, 1.442695
        %v1806 = vpow.pop %v1805
        %v1807 = vsel %vm1045, %v1806, 0.0
        %1808 = vadd.xlane.f32.xlu0 %v1807
        %v1809 = vpop.xlane.xlu0 %1808
        %v1810 = vrcp.pop %v1809
        %v1811 = vmul.f32 %v1806, %v1810
        %v1812 = vpack.c.bf16 %v1811, %v1811
        %1814 = vrot.lane.b32.xlu0 %v1752, 96
        %v1815 = vpop.permute.xlu0 %1814
        %v1817 = vsel %vm1045, %v1812, 0
        %v1820 = vsel %vm1112, %v1815, 0
        %1822 = vmatprep.subr.bf16.mxu0 0
        %1823 = vmatpush1.bf16.msra.mxu0 %v1820
        %1824 = vmatprep.subr.bf16.mxu0 0
        %1825 = vmatpush1.bf16.msra.mxu0 0
        %1826 = vmatprep.subr.bf16.mxu0 0
        %1827 = vmatpush1.bf16.msra.mxu0 0
        %1828 = vmatprep.subr.bf16.mxu0 0
        %1829 = vmatpush1.bf16.msra.mxu0 0
        %1830 = vmatprep.subr.bf16.mxu0 0
        %1831 = vmatpush1.bf16.msra.mxu0 0
        %1832 = vmatprep.subr.bf16.mxu0 0
        %1833 = vmatpush1.bf16.msra.mxu0 0
        %1834 = vmatprep.subr.bf16.mxu0 0
        %1835 = vmatpush1.bf16.msra.mxu0 0
        %1836 = vmatprep.subr.bf16.mxu0 0
        %1837 = vmatpush1.bf16.msra.mxu0 0
        %1838 = vmatprep.subr.bf16.mxu0 0
        %1839 = vmatpush1.bf16.msra.mxu0 0
        %1840 = vmatprep.subr.bf16.mxu0 0
        %1841 = vmatpush1.bf16.msra.mxu0 0
        %1842 = vmatprep.subr.bf16.mxu0 0
        %1843 = vmatpush1.bf16.msra.mxu0 0
        %1844 = vmatprep.subr.bf16.mxu0 0
        %1845 = vmatpush1.bf16.msra.mxu0 0
        %1846 = vmatprep.subr.bf16.mxu0 0
        %1847 = vmatpush1.bf16.msra.mxu0 0
        %1848 = vmatprep.subr.bf16.mxu0 0
        %1849 = vmatpush1.bf16.msra.mxu0 0
        %1850 = vmatprep.subr.bf16.mxu0 0
        %1851 = vmatpush1.bf16.msra.mxu0 0
        %1852 = vmatprep.subr.bf16.mxu0 0
        %1853 = vmatpush1.bf16.msra.mxu0 0
        %1854 = vmatprep.mubr.bf16.mxu0 0
        %1855 = vmatmul.mubr.bf16.gmra.mrb[0].mxu0 %v1817
        %v1856 = vpop.f32.mrb[0].mxu0
        %v1857 = vadd.f32 0.0, %v1856
        %v1858 = vpop.f32.mrb[0].mxu0
        %v1859 = vpop.f32.mrb[0].mxu0
        %v1860 = vpop.f32.mrb[0].mxu0
        %1861 = vdwg.mxu0
        %1862 = vst.msk [vmem:[#allocation2] sm:$0xff] %vm1045, %v1857
        %1864 = vrot.lane.b32.xlu0 %v1685, 120
        %v1865 = vpop.permute.xlu0 %1864
        %1866 = vrot.lane.b32.xlu0 %v1752, 120
        %v1867 = vpop.permute.xlu0 %1866
        %v1869 = vsel %vm1045, %v1865, 0
        %v1872 = vsel %vm1045, %v1867, 0
        %1874 = vmatprep.subr.bf16.mxu0 0
        %1875 = vmatpush1.bf16.xpose.msra.mxu0 %v1872
        %1876 = vmatprep.subr.bf16.mxu0 0
        %1877 = vmatpush1.bf16.xpose.msra.mxu0 0
        %1878 = vmatprep.subr.bf16.mxu0 0
        %1879 = vmatpush1.bf16.xpose.msra.mxu0 0
        %1880 = vmatprep.subr.bf16.mxu0 0
        %1881 = vmatpush1.bf16.xpose.msra.mxu0 0
        %1882 = vmatprep.subr.bf16.mxu0 0
        %1883 = vmatpush1.bf16.xpose.msra.mxu0 0
        %1884 = vmatprep.subr.bf16.mxu0 0
        %1885 = vmatpush1.bf16.xpose.msra.mxu0 0
        %1886 = vmatprep.subr.bf16.mxu0 0
        %1887 = vmatpush1.bf16.xpose.msra.mxu0 0
        %1888 = vmatprep.subr.bf16.mxu0 0
        %1889 = vmatpush1.bf16.xpose.msra.mxu0 0
        %1890 = vmatprep.subr.bf16.mxu0 0
        %1891 = vmatpush1.bf16.xpose.msra.mxu0 0
        %1892 = vmatprep.subr.bf16.mxu0 0
        %1893 = vmatpush1.bf16.xpose.msra.mxu0 0
        %1894 = vmatprep.subr.bf16.mxu0 0
        %1895 = vmatpush1.bf16.xpose.msra.mxu0 0
        %1896 = vmatprep.subr.bf16.mxu0 0
        %1897 = vmatpush1.bf16.xpose.msra.mxu0 0
        %1898 = vmatprep.subr.bf16.mxu0 0
        %1899 = vmatpush1.bf16.xpose.msra.mxu0 0
        %1900 = vmatprep.subr.bf16.mxu0 0
        %1901 = vmatpush1.bf16.xpose.msra.mxu0 0
        %1902 = vmatprep.subr.bf16.mxu0 0
        %1903 = vmatpush1.bf16.xpose.msra.mxu0 0
        %1904 = vmatprep.subr.bf16.mxu0 0
        %1905 = vmatpush1.bf16.xpose.msra.mxu0 0
        %1906 = vmatprep.mubr.bf16.mxu0 0
        %1907 = vmatmul.mubr.bf16.gmra.mrb[0].mxu0 %v1869
        %v1908 = vpop.f32.mrb[0].mxu0
        %v1909 = vadd.f32 0.0, %v1908
        %v1910 = vpop.f32.mrb[0].mxu0
        %v1911 = vpop.f32.mrb[0].mxu0
        %v1912 = vpop.f32.mrb[0].mxu0
        %1913 = vdwg.mxu0
        %v1914 = vmul.f32 %v1909, 0.35355338
        %v1915 = vadd.f32 %v1914, %v1616
        %v1916 = vsel %vm1045, %v1915, -inf
        %1917 = vmax.xlane.f32.xlu0 %v1916
        %v1918 = vpop.xlane.xlu0 %1917
        %v1919 = vsub.f32 %v1915, %v1918
        %v1920 = vmul.f32 %v1919, 1.442695
        %v1921 = vpow.pop %v1920
        %v1922 = vsel %vm1045, %v1921, 0.0
        %1923 = vadd.xlane.f32.xlu0 %v1922
        %v1924 = vpop.xlane.xlu0 %1923
        %v1925 = vrcp.pop %v1924
        %v1926 = vmul.f32 %v1921, %v1925
        %v1927 = vpack.c.bf16 %v1926, %v1926
        %1928 = vrot.lane.b32.xlu0 %v1752, 88
        %v1929 = vpop.permute.xlu0 %1928
        %v1931 = vsel %vm1045, %v1927, 0
        %v1934 = vsel %vm1112, %v1929, 0
        %1936 = vmatprep.subr.bf16.mxu0 0
        %1937 = vmatpush1.bf16.msra.mxu0 %v1934
        %1938 = vmatprep.subr.bf16.mxu0 0
        %1939 = vmatpush1.bf16.msra.mxu0 0
        %1940 = vmatprep.subr.bf16.mxu0 0
        %1941 = vmatpush1.bf16.msra.mxu0 0
        %1942 = vmatprep.subr.bf16.mxu0 0
        %1943 = vmatpush1.bf16.msra.mxu0 0
        %1944 = vmatprep.subr.bf16.mxu0 0
        %1945 = vmatpush1.bf16.msra.mxu0 0
        %1946 = vmatprep.subr.bf16.mxu0 0
        %1947 = vmatpush1.bf16.msra.mxu0 0
        %1948 = vmatprep.subr.bf16.mxu0 0
        %1949 = vmatpush1.bf16.msra.mxu0 0
        %1950 = vmatprep.subr.bf16.mxu0 0
        %1951 = vmatpush1.bf16.msra.mxu0 0
        %1952 = vmatprep.subr.bf16.mxu0 0
        %1953 = vmatpush1.bf16.msra.mxu0 0
        %1954 = vmatprep.subr.bf16.mxu0 0
        %1955 = vmatpush1.bf16.msra.mxu0 0
        %1956 = vmatprep.subr.bf16.mxu0 0
        %1957 = vmatpush1.bf16.msra.mxu0 0
        %1958 = vmatprep.subr.bf16.mxu0 0
        %1959 = vmatpush1.bf16.msra.mxu0 0
        %1960 = vmatprep.subr.bf16.mxu0 0
        %1961 = vmatpush1.bf16.msra.mxu0 0
        %1962 = vmatprep.subr.bf16.mxu0 0
        %1963 = vmatpush1.bf16.msra.mxu0 0
        %1964 = vmatprep.subr.bf16.mxu0 0
        %1965 = vmatpush1.bf16.msra.mxu0 0
        %1966 = vmatprep.subr.bf16.mxu0 0
        %1967 = vmatpush1.bf16.msra.mxu0 0
        %1968 = vmatprep.mubr.bf16.mxu0 0
        %1969 = vmatmul.mubr.bf16.gmra.mrb[0].mxu0 %v1931
        %v1970 = vpop.f32.mrb[0].mxu0
        %v1971 = vadd.f32 0.0, %v1970
        %v1972 = vpop.f32.mrb[0].mxu0
        %v1973 = vpop.f32.mrb[0].mxu0
        %v1974 = vpop.f32.mrb[0].mxu0
        %1975 = vdwg.mxu0
        %1977 = vrot.lane.b32.xlu0 %v1971, 8
        %v1978 = vpop.permute.xlu0 %1977
        %1980 = vst.msk [vmem:[#allocation2] sm:$0xff] %vm1274, %v1978
        %1981 = vrot.lane.b32.xlu0 %v1685, 112
        %v1982 = vpop.permute.xlu0 %1981
        %1983 = vrot.lane.b32.xlu0 %v1752, 112
        %v1984 = vpop.permute.xlu0 %1983
        %v1986 = vsel %vm1045, %v1982, 0
        %v1989 = vsel %vm1045, %v1984, 0
        %1991 = vmatprep.subr.bf16.mxu0 0
        %1992 = vmatpush1.bf16.xpose.msra.mxu0 %v1989
        %1993 = vmatprep.subr.bf16.mxu0 0
        %1994 = vmatpush1.bf16.xpose.msra.mxu0 0
        %1995 = vmatprep.subr.bf16.mxu0 0
        %1996 = vmatpush1.bf16.xpose.msra.mxu0 0
        %1997 = vmatprep.subr.bf16.mxu0 0
        %1998 = vmatpush1.bf16.xpose.msra.mxu0 0
        %1999 = vmatprep.subr.bf16.mxu0 0
        %2000 = vmatpush1.bf16.xpose.msra.mxu0 0
        %2001 = vmatprep.subr.bf16.mxu0 0
        %2002 = vmatpush1.bf16.xpose.msra.mxu0 0
        %2003 = vmatprep.subr.bf16.mxu0 0
        %2004 = vmatpush1.bf16.xpose.msra.mxu0 0
        %2005 = vmatprep.subr.bf16.mxu0 0
        %2006 = vmatpush1.bf16.xpose.msra.mxu0 0
        %2007 = vmatprep.subr.bf16.mxu0 0
        %2008 = vmatpush1.bf16.xpose.msra.mxu0 0
        %2009 = vmatprep.subr.bf16.mxu0 0
        %2010 = vmatpush1.bf16.xpose.msra.mxu0 0
        %2011 = vmatprep.subr.bf16.mxu0 0
        %2012 = vmatpush1.bf16.xpose.msra.mxu0 0
        %2013 = vmatprep.subr.bf16.mxu0 0
        %2014 = vmatpush1.bf16.xpose.msra.mxu0 0
        %2015 = vmatprep.subr.bf16.mxu0 0
        %2016 = vmatpush1.bf16.xpose.msra.mxu0 0
        %2017 = vmatprep.subr.bf16.mxu0 0
        %2018 = vmatpush1.bf16.xpose.msra.mxu0 0
        %2019 = vmatprep.subr.bf16.mxu0 0
        %2020 = vmatpush1.bf16.xpose.msra.mxu0 0
        %2021 = vmatprep.subr.bf16.mxu0 0
        %2022 = vmatpush1.bf16.xpose.msra.mxu0 0
        %2023 = vmatprep.mubr.bf16.mxu0 0
        %2024 = vmatmul.mubr.bf16.gmra.mrb[0].mxu0 %v1986
        %v2025 = vpop.f32.mrb[0].mxu0
        %v2026 = vadd.f32 0.0, %v2025
        %v2027 = vpop.f32.mrb[0].mxu0
        %v2028 = vpop.f32.mrb[0].mxu0
        %v2029 = vpop.f32.mrb[0].mxu0
        %2030 = vdwg.mxu0
        %v2031 = vmul.f32 %v2026, 0.35355338
        %v2032 = vadd.f32 %v2031, %v1616
        %v2033 = vsel %vm1045, %v2032, -inf
        %2034 = vmax.xlane.f32.xlu0 %v2033
        %v2035 = vpop.xlane.xlu0 %2034
        %v2036 = vsub.f32 %v2032, %v2035
        %v2037 = vmul.f32 %v2036, 1.442695
        %v2038 = vpow.pop %v2037
        %v2039 = vsel %vm1045, %v2038, 0.0
        %2040 = vadd.xlane.f32.xlu0 %v2039
        %v2041 = vpop.xlane.xlu0 %2040
        %v2042 = vrcp.pop %v2041
        %v2043 = vmul.f32 %v2038, %v2042
        %v2044 = vpack.c.bf16 %v2043, %v2043
        %2045 = vrot.lane.b32.xlu0 %v1752, 80
        %v2046 = vpop.permute.xlu0 %2045
        %v2048 = vsel %vm1045, %v2044, 0
        %v2051 = vsel %vm1112, %v2046, 0
        %2053 = vmatprep.subr.bf16.mxu0 0
        %2054 = vmatpush1.bf16.msra.mxu0 %v2051
        %2055 = vmatprep.subr.bf16.mxu0 0
        %2056 = vmatpush1.bf16.msra.mxu0 0
        %2057 = vmatprep.subr.bf16.mxu0 0
        %2058 = vmatpush1.bf16.msra.mxu0 0
        %2059 = vmatprep.subr.bf16.mxu0 0
        %2060 = vmatpush1.bf16.msra.mxu0 0
        %2061 = vmatprep.subr.bf16.mxu0 0
        %2062 = vmatpush1.bf16.msra.mxu0 0
        %2063 = vmatprep.subr.bf16.mxu0 0
        %2064 = vmatpush1.bf16.msra.mxu0 0
        %2065 = vmatprep.subr.bf16.mxu0 0
        %2066 = vmatpush1.bf16.msra.mxu0 0
        %2067 = vmatprep.subr.bf16.mxu0 0
        %2068 = vmatpush1.bf16.msra.mxu0 0
        %2069 = vmatprep.subr.bf16.mxu0 0
        %2070 = vmatpush1.bf16.msra.mxu0 0
        %2071 = vmatprep.subr.bf16.mxu0 0
        %2072 = vmatpush1.bf16.msra.mxu0 0
        %2073 = vmatprep.subr.bf16.mxu0 0
        %2074 = vmatpush1.bf16.msra.mxu0 0
        %2075 = vmatprep.subr.bf16.mxu0 0
        %2076 = vmatpush1.bf16.msra.mxu0 0
        %2077 = vmatprep.subr.bf16.mxu0 0
        %2078 = vmatpush1.bf16.msra.mxu0 0
        %2079 = vmatprep.subr.bf16.mxu0 0
        %2080 = vmatpush1.bf16.msra.mxu0 0
        %2081 = vmatprep.subr.bf16.mxu0 0
        %2082 = vmatpush1.bf16.msra.mxu0 0
        %2083 = vmatprep.subr.bf16.mxu0 0
        %2084 = vmatpush1.bf16.msra.mxu0 0
        %2085 = vmatprep.mubr.bf16.mxu0 0
        %2086 = vmatmul.mubr.bf16.gmra.mrb[0].mxu0 %v2048
        %v2087 = vpop.f32.mrb[0].mxu0
        %v2088 = vadd.f32 0.0, %v2087
        %v2089 = vpop.f32.mrb[0].mxu0
        %v2090 = vpop.f32.mrb[0].mxu0
        %v2091 = vpop.f32.mrb[0].mxu0
        %2092 = vdwg.mxu0
        %2094 = vrot.lane.b32.xlu0 %v2088, 16
        %v2095 = vpop.permute.xlu0 %2094
        %2097 = vst.msk [vmem:[#allocation2] sm:$0xff] %vm1392, %v2095
        %2098 = vrot.lane.b32.xlu0 %v1685, 104
        %v2099 = vpop.permute.xlu0 %2098
        %2100 = vrot.lane.b32.xlu0 %v1752, 104
        %v2101 = vpop.permute.xlu0 %2100
        %v2103 = vsel %vm1045, %v2099, 0
        %v2106 = vsel %vm1045, %v2101, 0
        %2108 = vmatprep.subr.bf16.mxu0 0
        %2109 = vmatpush1.bf16.xpose.msra.mxu0 %v2106
        %2110 = vmatprep.subr.bf16.mxu0 0
        %2111 = vmatpush1.bf16.xpose.msra.mxu0 0
        %2112 = vmatprep.subr.bf16.mxu0 0
        %2113 = vmatpush1.bf16.xpose.msra.mxu0 0
        %2114 = vmatprep.subr.bf16.mxu0 0
        %2115 = vmatpush1.bf16.xpose.msra.mxu0 0
        %2116 = vmatprep.subr.bf16.mxu0 0
        %2117 = vmatpush1.bf16.xpose.msra.mxu0 0
        %2118 = vmatprep.subr.bf16.mxu0 0
        %2119 = vmatpush1.bf16.xpose.msra.mxu0 0
        %2120 = vmatprep.subr.bf16.mxu0 0
        %2121 = vmatpush1.bf16.xpose.msra.mxu0 0
        %2122 = vmatprep.subr.bf16.mxu0 0
        %2123 = vmatpush1.bf16.xpose.msra.mxu0 0
        %2124 = vmatprep.subr.bf16.mxu0 0
        %2125 = vmatpush1.bf16.xpose.msra.mxu0 0
        %2126 = vmatprep.subr.bf16.mxu0 0
        %2127 = vmatpush1.bf16.xpose.msra.mxu0 0
        %2128 = vmatprep.subr.bf16.mxu0 0
        %2129 = vmatpush1.bf16.xpose.msra.mxu0 0
        %2130 = vmatprep.subr.bf16.mxu0 0
        %2131 = vmatpush1.bf16.xpose.msra.mxu0 0
        %2132 = vmatprep.subr.bf16.mxu0 0
        %2133 = vmatpush1.bf16.xpose.msra.mxu0 0
        %2134 = vmatprep.subr.bf16.mxu0 0
        %2135 = vmatpush1.bf16.xpose.msra.mxu0 0
        %2136 = vmatprep.subr.bf16.mxu0 0
        %2137 = vmatpush1.bf16.xpose.msra.mxu0 0
        %2138 = vmatprep.subr.bf16.mxu0 0
        %2139 = vmatpush1.bf16.xpose.msra.mxu0 0
        %2140 = vmatprep.mubr.bf16.mxu0 0
        %2141 = vmatmul.mubr.bf16.gmra.mrb[0].mxu0 %v2103
        %v2142 = vpop.f32.mrb[0].mxu0
        %v2143 = vadd.f32 0.0, %v2142
        %v2144 = vpop.f32.mrb[0].mxu0
        %v2145 = vpop.f32.mrb[0].mxu0
        %v2146 = vpop.f32.mrb[0].mxu0
        %2147 = vdwg.mxu0
        %v2148 = vmul.f32 %v2143, 0.35355338
        %v2149 = vadd.f32 %v2148, %v1616
        %v2150 = vsel %vm1045, %v2149, -inf
        %2151 = vmax.xlane.f32.xlu0 %v2150
        %v2152 = vpop.xlane.xlu0 %2151
        %v2153 = vsub.f32 %v2149, %v2152
        %v2154 = vmul.f32 %v2153, 1.442695
        %v2155 = vpow.pop %v2154
        %v2156 = vsel %vm1045, %v2155, 0.0
        %2157 = vadd.xlane.f32.xlu0 %v2156
        %v2158 = vpop.xlane.xlu0 %2157
        %v2159 = vrcp.pop %v2158
        %v2160 = vmul.f32 %v2155, %v2159
        %v2161 = vpack.c.bf16 %v2160, %v2160
        %2162 = vrot.lane.b32.xlu0 %v1752, 72
        %v2163 = vpop.permute.xlu0 %2162
        %v2165 = vsel %vm1045, %v2161, 0
        %v2168 = vsel %vm1112, %v2163, 0
        %2170 = vmatprep.subr.bf16.mxu0 0
        %2171 = vmatpush1.bf16.msra.mxu0 %v2168
        %2172 = vmatprep.subr.bf16.mxu0 0
        %2173 = vmatpush1.bf16.msra.mxu0 0
        %2174 = vmatprep.subr.bf16.mxu0 0
        %2175 = vmatpush1.bf16.msra.mxu0 0
        %2176 = vmatprep.subr.bf16.mxu0 0
        %2177 = vmatpush1.bf16.msra.mxu0 0
        %2178 = vmatprep.subr.bf16.mxu0 0
        %2179 = vmatpush1.bf16.msra.mxu0 0
        %2180 = vmatprep.subr.bf16.mxu0 0
        %2181 = vmatpush1.bf16.msra.mxu0 0
        %2182 = vmatprep.subr.bf16.mxu0 0
        %2183 = vmatpush1.bf16.msra.mxu0 0
        %2184 = vmatprep.subr.bf16.mxu0 0
        %2185 = vmatpush1.bf16.msra.mxu0 0
        %2186 = vmatprep.subr.bf16.mxu0 0
        %2187 = vmatpush1.bf16.msra.mxu0 0
        %2188 = vmatprep.subr.bf16.mxu0 0
        %2189 = vmatpush1.bf16.msra.mxu0 0
        %2190 = vmatprep.subr.bf16.mxu0 0
        %2191 = vmatpush1.bf16.msra.mxu0 0
        %2192 = vmatprep.subr.bf16.mxu0 0
        %2193 = vmatpush1.bf16.msra.mxu0 0
        %2194 = vmatprep.subr.bf16.mxu0 0
        %2195 = vmatpush1.bf16.msra.mxu0 0
        %2196 = vmatprep.subr.bf16.mxu0 0
        %2197 = vmatpush1.bf16.msra.mxu0 0
        %2198 = vmatprep.subr.bf16.mxu0 0
        %2199 = vmatpush1.bf16.msra.mxu0 0
        %2200 = vmatprep.subr.bf16.mxu0 0
        %2201 = vmatpush1.bf16.msra.mxu0 0
        %2202 = vmatprep.mubr.bf16.mxu0 0
        %2203 = vmatmul.mubr.bf16.gmra.mrb[0].mxu0 %v2165
        %v2204 = vpop.f32.mrb[0].mxu0
        %v2205 = vadd.f32 0.0, %v2204
        %v2206 = vpop.f32.mrb[0].mxu0
        %v2207 = vpop.f32.mrb[0].mxu0
        %v2208 = vpop.f32.mrb[0].mxu0
        %2209 = vdwg.mxu0
        %2211 = vrot.lane.b32.xlu0 %v2205, 24
        %v2212 = vpop.permute.xlu0 %2211
        %2214 = vst.msk [vmem:[#allocation2] sm:$0xff] %vm1510, %v2212
        %v2215 = vld [vmem:[#allocation2] sm:$0xff]
        %v2216 = vpack.c.bf16 %v2215, %v2215
        %v2217 = vld [vmem:[%s16] sm:$0xf]
        %v2218 = vld [vmem:[%s16 + $0x4] sm:$0xf]
        %v2219 = vld [vmem:[%s16 + $0x8] sm:$0xf]
        %v2220 = vld [vmem:[%s16 + $0xc] sm:$0xf]
        %v2221 = vld [vmem:[%s17] sm:$0x1]
        %v2223 = vlaneseq
        %v2224 = vshrl.u32 %v2223, 7
        %v2225 = vsub.s32 0, %v2224
        %v2226 = vrot.slane %v2221, %v2225
        %v2232 = vunpack.c.l.b16 %v2217
        %v2233 = vunpack.c.l.b16 %v2218
        %v2234 = vunpack.c.l.b16 %v2219
        %v2235 = vunpack.c.l.b16 %v2220
        %v2236 = vpack.c.b16 %v2233, %v2232
        %v2237 = vpack.c.b16 %v2235, %v2234
        %v2241 = vsel %vm936, %v2216, 0
        %2243 = vmatprep.subr.bf16.mxu0 0
        %2244 = vmatpush1.bf16.msra.mxu0 %v2236
        %2245 = vmatprep.subr.bf16.mxu0 0
        %2246 = vmatpush1.bf16.msra.mxu0 %v2237
        %2247 = vmatprep.subr.bf16.mxu0 0
        %2248 = vmatpush1.bf16.msra.mxu0 0
        %2249 = vmatprep.subr.bf16.mxu0 0
        %2250 = vmatpush1.bf16.msra.mxu0 0
        %2251 = vmatprep.subr.bf16.mxu0 0
        %2252 = vmatpush1.bf16.msra.mxu0 0
        %2253 = vmatprep.subr.bf16.mxu0 0
        %2254 = vmatpush1.bf16.msra.mxu0 0
        %2255 = vmatprep.subr.bf16.mxu0 0
        %2256 = vmatpush1.bf16.msra.mxu0 0
        %2257 = vmatprep.subr.bf16.mxu0 0
        %2258 = vmatpush1.bf16.msra.mxu0 0
        %2259 = vmatprep.subr.bf16.mxu0 0
        %2260 = vmatpush1.bf16.msra.mxu0 0
        %2261 = vmatprep.subr.bf16.mxu0 0
        %2262 = vmatpush1.bf16.msra.mxu0 0
        %2263 = vmatprep.subr.bf16.mxu0 0
        %2264 = vmatpush1.bf16.msra.mxu0 0
        %2265 = vmatprep.subr.bf16.mxu0 0
        %2266 = vmatpush1.bf16.msra.mxu0 0
        %2267 = vmatprep.subr.bf16.mxu0 0
        %2268 = vmatpush1.bf16.msra.mxu0 0
        %2269 = vmatprep.subr.bf16.mxu0 0
        %2270 = vmatpush1.bf16.msra.mxu0 0
        %2271 = vmatprep.subr.bf16.mxu0 0
        %2272 = vmatpush1.bf16.msra.mxu0 0
        %2273 = vmatprep.subr.bf16.mxu0 0
        %2274 = vmatpush1.bf16.msra.mxu0 0
        %2275 = vmatprep.mubr.bf16.mxu0 0
        %2276 = vmatmul.mubr.bf16.gmra.mrb[0].mxu0 %v2241
        %v2277 = vpop.f32.mrb[0].mxu0
        %v2278 = vadd.f32 %v2226, %v2277
        %v2279 = vpop.f32.mrb[0].mxu0
        %v2280 = vpop.f32.mrb[0].mxu0
        %v2281 = vpop.f32.mrb[0].mxu0
        %2282 = vdwg.mxu0
        %v2283 = vadd.f32 %v1610, %v2278
        %v2284 = vld [vmem:[%s18] sm:$0x1]
        %v2285 = vld [vmem:[#allocation3] sm:$0x1]
        %v2286 = vsel %vm936, %v2283, 0.0
        %2287 = vadd.xlane.f32.xlu0 %v2286
        %v2288 = vpop.xlane.xlu0 %2287
        %v2289 = vmul.f32 %v2288, %v1586
        %v2290 = vsub.f32 %v2283, %v2289
        %v2291 = vmul.f32 %v2290, %v2290
        %v2292 = vsel %vm936, %v2291, 0.0
        %2293 = vadd.xlane.f32.xlu0 %v2292
        %v2294 = vpop.xlane.xlu0 %2293
        %v2295 = vmul.f32 %v2294, %v1586
        %v2296 = vadd.f32 %v2295, 1e-05
        %v2297 = vrsqrt.pop %v2296
        %v2298 = vmul.f32 %v2290, %v2297
        %v2300 = vlaneseq
        %v2301 = vshrl.u32 %v2300, 7
        %v2302 = vsub.s32 0, %v2301
        %v2303 = vrot.slane %v2284, %v2302
        %v2305 = vmul.f32 %v2298, %v2303
        %v2307 = vlaneseq
        %v2308 = vshrl.u32 %v2307, 7
        %v2309 = vsub.s32 0, %v2308
        %v2310 = vrot.slane %v2285, %v2309
        %v2312 = vadd.f32 %v2305, %v2310
        %v2313 = vpack.c.bf16 %v2312, %v2312
        %v2314 = vld [vmem:[%s20] sm:$0xf]
        %v2315 = vld [vmem:[%s20 + $0x4] sm:$0xf]
        %v2316 = vld [vmem:[%s20 + $0x8] sm:$0xf]
        %v2317 = vld [vmem:[%s20 + $0xc] sm:$0xf]
        %v2318 = vld [vmem:[#allocation5] sm:$0x1]
        %v2320 = vlaneseq
        %v2321 = vshrl.u32 %v2320, 7
        %v2322 = vsub.s32 0, %v2321
        %v2323 = vrot.slane %v2318, %v2322
        %v2329 = vunpack.c.l.b16 %v2314
        %v2330 = vunpack.c.l.b16 %v2315
        %v2331 = vunpack.c.l.b16 %v2316
        %v2332 = vunpack.c.l.b16 %v2317
        %v2333 = vpack.c.b16 %v2330, %v2329
        %v2334 = vpack.c.b16 %v2332, %v2331
        %v2338 = vsel %vm936, %v2313, 0
        %2340 = vmatprep.subr.bf16.mxu0 0
        %2341 = vmatpush1.bf16.msra.mxu0 %v2333
        %2342 = vmatprep.subr.bf16.mxu0 0
        %2343 = vmatpush1.bf16.msra.mxu0 %v2334
        %2344 = vmatprep.subr.bf16.mxu0 0
        %2345 = vmatpush1.bf16.msra.mxu0 0
        %2346 = vmatprep.subr.bf16.mxu0 0
        %2347 = vmatpush1.bf16.msra.mxu0 0
        %2348 = vmatprep.subr.bf16.mxu0 0
        %2349 = vmatpush1.bf16.msra.mxu0 0
        %2350 = vmatprep.subr.bf16.mxu0 0
        %2351 = vmatpush1.bf16.msra.mxu0 0
        %2352 = vmatprep.subr.bf16.mxu0 0
        %2353 = vmatpush1.bf16.msra.mxu0 0
        %2354 = vmatprep.subr.bf16.mxu0 0
        %2355 = vmatpush1.bf16.msra.mxu0 0
        %2356 = vmatprep.subr.bf16.mxu0 0
        %2357 = vmatpush1.bf16.msra.mxu0 0
        %2358 = vmatprep.subr.bf16.mxu0 0
        %2359 = vmatpush1.bf16.msra.mxu0 0
        %2360 = vmatprep.subr.bf16.mxu0 0
        %2361 = vmatpush1.bf16.msra.mxu0 0
        %2362 = vmatprep.subr.bf16.mxu0 0
        %2363 = vmatpush1.bf16.msra.mxu0 0
        %2364 = vmatprep.subr.bf16.mxu0 0
        %2365 = vmatpush1.bf16.msra.mxu0 0
        %2366 = vmatprep.subr.bf16.mxu0 0
        %2367 = vmatpush1.bf16.msra.mxu0 0
        %2368 = vmatprep.subr.bf16.mxu0 0
        %2369 = vmatpush1.bf16.msra.mxu0 0
        %2370 = vmatprep.subr.bf16.mxu0 0
        %2371 = vmatpush1.bf16.msra.mxu0 0
        %2372 = vmatprep.mubr.bf16.mxu0 0
        %2373 = vmatmul.mubr.bf16.gmra.mrb[0].mxu0 %v2338
        %v2374 = vpop.f32.mrb[0].mxu0
        %v2375 = vadd.f32 %v2323, %v2374
        %v2376 = vpop.f32.mrb[0].mxu0
        %v2377 = vpop.f32.mrb[0].mxu0
        %v2378 = vpop.f32.mrb[0].mxu0
        %2379 = vdwg.mxu0
        %v2380 = vmax.f32 %v2375, 0.0
        %v2381 = vpack.c.bf16 %v2380, %v2380
        %v2382 = vld [vmem:[%s22] sm:$0xf]
        %v2383 = vld [vmem:[%s22 + $0x4] sm:$0xf]
        %v2384 = vld [vmem:[%s22 + $0x8] sm:$0xf]
        %v2385 = vld [vmem:[%s22 + $0xc] sm:$0xf]
        %v2386 = vld [vmem:[%s22 + $0x10] sm:$0xf]
        %v2387 = vld [vmem:[%s22 + $0x14] sm:$0xf]
        %v2388 = vld [vmem:[%s22 + $0x18] sm:$0xf]
        %v2389 = vld [vmem:[%s22 + $0x1c] sm:$0xf]
        %v2390 = vld [vmem:[#allocation7] sm:$0x1]
        %v2392 = vlaneseq
        %v2393 = vshrl.u32 %v2392, 7
        %v2394 = vsub.s32 0, %v2393
        %v2395 = vrot.slane %v2390, %v2394
        %v2405 = vunpack.c.l.b16 %v2382
        %v2406 = vunpack.c.l.b16 %v2383
        %v2407 = vunpack.c.l.b16 %v2384
        %v2408 = vunpack.c.l.b16 %v2385
        %v2409 = vunpack.c.l.b16 %v2386
        %v2410 = vunpack.c.l.b16 %v2387
        %v2411 = vunpack.c.l.b16 %v2388
        %v2412 = vunpack.c.l.b16 %v2389
        %v2413 = vpack.c.b16 %v2406, %v2405
        %v2414 = vpack.c.b16 %v2408, %v2407
        %v2415 = vpack.c.b16 %v2410, %v2409
        %v2416 = vpack.c.b16 %v2412, %v2411
        %vm2421 = vcmask 523264
        %v2423 = vsel %vm2421, %v2381, 0
        %2425 = vmatprep.subr.bf16.mxu0 0
        %2426 = vmatpush1.bf16.msra.mxu0 %v2413
        %2427 = vmatprep.subr.bf16.mxu0 0
        %2428 = vmatpush1.bf16.msra.mxu0 %v2414
        %2429 = vmatprep.subr.bf16.mxu0 0
        %2430 = vmatpush1.bf16.msra.mxu0 %v2415
        %2431 = vmatprep.subr.bf16.mxu0 0
        %2432 = vmatpush1.bf16.msra.mxu0 %v2416
        %2433 = vmatprep.subr.bf16.mxu0 0
        %2434 = vmatpush1.bf16.msra.mxu0 0
        %2435 = vmatprep.subr.bf16.mxu0 0
        %2436 = vmatpush1.bf16.msra.mxu0 0
        %2437 = vmatprep.subr.bf16.mxu0 0
        %2438 = vmatpush1.bf16.msra.mxu0 0
        %2439 = vmatprep.subr.bf16.mxu0 0
        %2440 = vmatpush1.bf16.msra.mxu0 0
        %2441 = vmatprep.subr.bf16.mxu0 0
        %2442 = vmatpush1.bf16.msra.mxu0 0
        %2443 = vmatprep.subr.bf16.mxu0 0
        %2444 = vmatpush1.bf16.msra.mxu0 0
        %2445 = vmatprep.subr.bf16.mxu0 0
        %2446 = vmatpush1.bf16.msra.mxu0 0
        %2447 = vmatprep.subr.bf16.mxu0 0
        %2448 = vmatpush1.bf16.msra.mxu0 0
        %2449 = vmatprep.subr.bf16.mxu0 0
        %2450 = vmatpush1.bf16.msra.mxu0 0
        %2451 = vmatprep.subr.bf16.mxu0 0
        %2452 = vmatpush1.bf16.msra.mxu0 0
        %2453 = vmatprep.subr.bf16.mxu0 0
        %2454 = vmatpush1.bf16.msra.mxu0 0
        %2455 = vmatprep.subr.bf16.mxu0 0
        %2456 = vmatpush1.bf16.msra.mxu0 0
        %2457 = vmatprep.mubr.bf16.mxu0 0
        %2458 = vmatmul.mubr.bf16.gmra.mrb[0].mxu0 %v2423
        %v2459 = vpop.f32.mrb[0].mxu0
        %v2460 = vadd.f32 %v2395, %v2459
        %v2461 = vpop.f32.mrb[0].mxu0
        %v2462 = vpop.f32.mrb[0].mxu0
        %v2463 = vpop.f32.mrb[0].mxu0
        %2464 = vdwg.mxu0
        %v2465 = vadd.f32 %v2312, %v2460
        %v2466 = vld [vmem:[#allocation8] sm:$0x1]
        %v2467 = vld [vmem:[#allocation10] sm:$0x1]
        %v2468 = vsel %vm936, %v2465, 0.0
        %2469 = vadd.xlane.f32.xlu0 %v2468
        %v2470 = vpop.xlane.xlu0 %2469
        %v2471 = vmul.f32 %v2470, %v1586
        %v2472 = vsub.f32 %v2465, %v2471
        %v2473 = vmul.f32 %v2472, %v2472
        %v2474 = vsel %vm936, %v2473, 0.0
        %2475 = vadd.xlane.f32.xlu0 %v2474
        %v2476 = vpop.xlane.xlu0 %2475
        %v2477 = vmul.f32 %v2476, %v1586
        %v2478 = vadd.f32 %v2477, 1e-05
        %v2479 = vrsqrt.pop %v2478
        %v2480 = vmul.f32 %v2472, %v2479
        %v2482 = vlaneseq
        %v2483 = vshrl.u32 %v2482, 7
        %v2484 = vsub.s32 0, %v2483
        %v2485 = vrot.slane %v2466, %v2484
        %v2487 = vmul.f32 %v2480, %v2485
        %v2489 = vlaneseq
        %v2490 = vshrl.u32 %v2489, 7
        %v2491 = vsub.s32 0, %v2490
        %v2492 = vrot.slane %v2467, %v2491
        %v2494 = vadd.f32 %v2487, %v2492
        %v2495 = vpack.c.bf16 %v2494, %v2494
        %vm2496 = vcmask 257024
        %2497 = vst.msk [vmem:[%s894] sm:$0xf] %vm2496, %v2495
        %p2498 = scmp.lt.s32.totalorder %s40, 1
        %s2499 = scalar_select %p2498, %s40, 1
        %s2500 = smul.addr %s2499, 4
        %s2501 = scalar_lea.vmem %s26, %s2500
        // Predicated region
        $region145: #{peptide_decoder_forward.4} parent=123 // pred_check
          %p2502 = pneg %p624
        $region146: #{peptide_decoder_forward.4} parent=123 // pred_check_branch
          %2504 = sbr.rel (%p2502) target = $region148
        $region147: #{peptide_decoder_forward.4} parent=123 // pred_region
          _
        $region148: #{peptide_decoder_forward.4} parent=123 // pred_fallthru
          _
      $region124: #{peptide_decoder_forward.4} parent=5 // pred_fallthru
        _
      %p2505 = scmp.le.s32.totalorder 2, %s35
      // Predicated region
      $region149: #{peptide_decoder_forward.4} parent=5 // pred_check
        %p2506 = pneg %p2505
      $region150: #{peptide_decoder_forward.4} parent=5 // pred_check_branch
        %2508 = sbr.rel (%p2506) target = $region152
      $region151: #{peptide_decoder_forward.4} parent=5 // pred_region
        %s2509 = ssub.s32 %s35, 2
        // Predicated region
        $region153: #{peptide_decoder_forward.4} parent=151 // pred_check
          %p2510 = pneg %p630
        $region154: #{peptide_decoder_forward.4} parent=151 // pred_check_branch
          %2512 = sbr.rel (%p2510) target = $region156
        $region155: #{peptide_decoder_forward.4} parent=151 // pred_region
          %p2513 = scmp.lt.s32.totalorder %s41, 1
          %s2514 = scalar_select %p2513, %s41, 1
          %s2515 = smul.addr %s2514, 4
          %s2516 = scalar_lea.vmem %s26, %s2515
        $region156: #{peptide_decoder_forward.4} parent=151 // pred_fallthru
          _
      $region152: #{peptide_decoder_forward.4} parent=5 // pred_fallthru
        _
    $region6: #{peptide_decoder_forward.4} parent=1 // loop_footer
      %s39 = sadd.s32 1, %s35
    $region7: #{peptide_decoder_forward.4} parent=1 // loop_footer_branch
      %34 = sbr.rel target = $region3
    $region8: #{peptide_decoder_forward.4} parent=1 // loop_exit
      _
    %2517 = vsyncpa [#allocation4], 1
    %s2518 = scalar_lea.sflag [#allocation4], 1
    %2519 = vsyncpa %s2518, 1
    %2520 = vsyncpa [#allocation6], 1
    %2521 = vsyncpa [#allocation9], 1

// kernel: peptide_decoder_forward.3
$region0: #{peptide_decoder_forward.3}
  #allocation0 [shape = 'u32[]', space=smem, size = 0x4, offset = 0x4, fixed_abs, tag = 'smem constant byte address 0x4 - core index']
  #allocation1 [shape = 'u32[144,128]{1,0:T(1,128)}', space=vmem, size = 0x12000, scoped, tag = 'internal scratch']
  #allocation2 [shape = 'f32[8,32]{1,0:T(8,128)}', space=vmem, size = 0x1000, scoped, tag = 'scratch operand']
  %s0 = inlined_call_operand.vmem [shape: bf16[2,8,32], index: 0, kind: input, shape index: {}]
  %s1 = inlined_call_operand.vmem [shape: bf16[2,8,32], index: 1, kind: input, shape index: {}]
  %s2 = inlined_call_operand.vmem [shape: f32[2,1,8], index: 2, kind: input, shape index: {}]
  %s3 = inlined_call_operand.vmem [shape: f32[2,1,8], index: 3, kind: input, shape index: {}]
  %s4 = inlined_call_operand.vmem [shape: bf16[32,32], index: 4, kind: input, shape index: {}]
  %s5 = inlined_call_operand.vmem [shape: f32[1,32], index: 5, kind: input, shape index: {}]
  %s6 = inlined_call_operand.vmem [shape: bf16[32,64], index: 6, kind: input, shape index: {}]
  %s7 = inlined_call_operand.vmem [shape: f32[1,64], index: 7, kind: input, shape index: {}]
  %s8 = inlined_call_operand.vmem [shape: bf16[32,32], index: 8, kind: input, shape index: {}]
  %s9 = inlined_call_operand.vmem [shape: f32[1,32], index: 9, kind: input, shape index: {}]
  %s10 = inlined_call_operand.vmem [shape: f32[1,32], index: 10, kind: input, shape index: {}]
  %s11 = inlined_call_operand.vmem [shape: f32[1,32], index: 11, kind: input, shape index: {}]
  %s12 = inlined_call_operand.vmem [shape: bf16[32,32], index: 12, kind: input, shape index: {}]
  %s13 = inlined_call_operand.vmem [shape: f32[1,32], index: 13, kind: input, shape index: {}]
  %s14 = inlined_call_operand.vmem [shape: bf16[32,64], index: 14, kind: input, shape index: {}]
  %s15 = inlined_call_operand.vmem [shape: f32[1,64], index: 15, kind: input, shape index: {}]
  %s16 = inlined_call_operand.vmem [shape: bf16[32,32], index: 16, kind: input, shape index: {}]
  %s17 = inlined_call_operand.vmem [shape: f32[1,32], index: 17, kind: input, shape index: {}]
  %s18 = inlined_call_operand.vmem [shape: f32[1,32], index: 18, kind: input, shape index: {}]
  %s19 = inlined_call_operand.vmem [shape: f32[1,32], index: 19, kind: input, shape index: {}]
  %s20 = inlined_call_operand.vmem [shape: bf16[32,64], index: 20, kind: input, shape index: {}]
  %s21 = inlined_call_operand.vmem [shape: f32[1,64], index: 21, kind: input, shape index: {}]
  %s22 = inlined_call_operand.vmem [shape: bf16[64,32], index: 22, kind: input, shape index: {}]
  %s23 = inlined_call_operand.vmem [shape: f32[1,32], index: 23, kind: input, shape index: {}]
  %s24 = inlined_call_operand.vmem [shape: f32[1,32], index: 24, kind: input, shape index: {}]
  %s25 = inlined_call_operand.vmem [shape: f32[1,32], index: 25, kind: input, shape index: {}]
  %s26 = inlined_call_operand.vmem [shape: bf16[2,8,32], index: 26, kind: output, shape index: {}]
  %s27 = sld [smem:[#allocation0]]
  $region137: #{peptide_decoder_forward.3} parent=0
    _
  %s29 = ssub.s32 1, %s27
  %s30 = scalar_select 0, %s29, %s27
  loop: start=0, step=1, limit=4
  $region2: #{peptide_decoder_forward.3} parent=0 // loop_pre_header
    _
  $region3: #{peptide_decoder_forward.3} parent=0 // loop_header
    %s32 = sphi 0, %s36
    %p33 = scmp.ge.s32.totalorder %s32, 4
    %s42 = sphi 0, %s44
    %s45 = sphi 0, %s42
    %s46 = sphi 0, %s45
    %s62 = sphi 0, %s46
    %s68 = sphi 0, %s70
    %s71 = sphi 0, %s68
    %s72 = sphi 0, %s71
    %s88 = sphi 0, %s72
    %s94 = sphi 0, %s96
    %s97 = sphi 0, %s94
    %s98 = sphi 0, %s97
    %s114 = sphi 0, %s98
    %s120 = sphi 0, %s122
    %s123 = sphi 0, %s120
    %s124 = sphi 0, %s123
    %s140 = sphi 0, %s124
    %s144 = sphi 0, %s144
    %s146 = sphi 0, %s144
    %s147 = sphi 0, %s146
    %s161 = sphi 0, %s147
    %s165 = sphi 0, %s165
    %s167 = sphi 0, %s165
    %s168 = sphi 0, %s167
    %s182 = sphi 0, %s168
    %s186 = sphi 0, %s186
    %s188 = sphi 0, %s186
    %s189 = sphi 0, %s188
    %s203 = sphi 0, %s189
    %s207 = sphi 0, %s207
    %s209 = sphi 0, %s207
    %s210 = sphi 0, %s209
    %s224 = sphi 0, %s210
    %s228 = sphi 0, %s228
    %s230 = sphi 0, %s228
    %s231 = sphi 0, %s230
    %s245 = sphi 0, %s231
    %s249 = sphi 0, %s249
    %s251 = sphi 0, %s249
    %s252 = sphi 0, %s251
    %s266 = sphi 0, %s252
    %s270 = sphi 0, %s270
    %s272 = sphi 0, %s270
    %s273 = sphi 0, %s272
    %s287 = sphi 0, %s273
    %s291 = sphi 0, %s291
    %s293 = sphi 0, %s291
    %s294 = sphi 0, %s293
    %s308 = sphi 0, %s294
    %s312 = sphi 0, %s312
    %s314 = sphi 0, %s312
    %s315 = sphi 0, %s314
    %s329 = sphi 0, %s315
    %s333 = sphi 0, %s333
    %s335 = sphi 0, %s333
    %s336 = sphi 0, %s335
    %s350 = sphi 0, %s336
    %s354 = sphi 0, %s354
    %s356 = sphi 0, %s354
    %s357 = sphi 0, %s356
    %s371 = sphi 0, %s357
    %s375 = sphi 0, %s375
    %s377 = sphi 0, %s375
    %s378 = sphi 0, %s377
    %s392 = sphi 0, %s378
    %s396 = sphi 0, %s396
    %s398 = sphi 0, %s396
    %s399 = sphi 0, %s398
    %s413 = sphi 0, %s399
    %s417 = sphi 0, %s417
    %s419 = sphi 0, %s417
    %s420 = sphi 0, %s419
    %s434 = sphi 0, %s420
    %s438 = sphi 0, %s438
    %s440 = sphi 0, %s438
    %s441 = sphi 0, %s440
    %s455 = sphi 0, %s441
    %s459 = sphi 0, %s459
    %s461 = sphi 0, %s459
    %s462 = sphi 0, %s461
    %s476 = sphi 0, %s462
    %s480 = sphi 0, %s480
    %s482 = sphi 0, %s480
    %s483 = sphi 0, %s482
    %s497 = sphi 0, %s483
    %s501 = sphi 0, %s501
    %s503 = sphi 0, %s501
    %s504 = sphi 0, %s503
    %s518 = sphi 0, %s504
    %s522 = sphi 0, %s522
    %s524 = sphi 0, %s522
    %s525 = sphi 0, %s524
    %s539 = sphi 0, %s525
    %s543 = sphi 0, %s543
    %s545 = sphi 0, %s543
    %s546 = sphi 0, %s545
    %s560 = sphi 0, %s546
    %s564 = sphi 0, %s564
    %s566 = sphi 0, %s564
    %s567 = sphi 0, %s566
    %s581 = sphi 0, %s567
    %s585 = sphi 0, %s585
    %s587 = sphi 0, %s585
    %s588 = sphi 0, %s587
    %s602 = sphi 0, %s588
    %s608 = sphi 0, %s610
    %s611 = sphi 0, %s608
    %s612 = sphi 0, %s611
    %s628 = sphi 0, %s612
  $region4: #{peptide_decoder_forward.3} parent=0 // loop_header_branch
    %35 = sbr.rel (%p33) target = $region8
  $region5: #{peptide_decoder_forward.3} parent=0 // loop_body
    %s37 = ssub.s32 %s32, 1
    %s38 = ssub.s32 %s32, 2
    %s39 = sadd.s32 %s32, 1
    %s40 = ssub.s32 %s32, %s39
    %p41 = scmp.eq.s32.totalorder %s40, 0
    %s43 = sadd.s32 %s42, 1
    %s44 = scalar_select %p41, %s42, %s43
    %p47 = pneg %p41
    %p48 = scmp.eq.s32.totalorder %s32, 1
    %p49 = por %p47, %p48
    %p50 = scmp.ne.s32.totalorder %s42, %s45
    %p51 = scmp.eq.s32.totalorder %s32, 0
    %p52 = por %p50, %p51
    %p53 = scmp.ne.s32.totalorder %s42, %s45
    %p54 = scmp.eq.s32.totalorder %s37, 1
    %p55 = por %p53, %p54
    %p56 = scmp.ne.s32.totalorder %s45, %s46
    %p57 = scmp.eq.s32.totalorder %s37, 0
    %p58 = por %p56, %p57
    %p59 = scmp.ne.s32.totalorder %s45, %s46
    %p60 = scmp.eq.s32.totalorder %s38, 1
    %p61 = por %p59, %p60
    %p63 = scmp.ne.s32.totalorder %s46, %s62
    %p64 = scmp.eq.s32.totalorder %s38, 0
    %p65 = por %p63, %p64
    %s66 = ssub.s32 %s32, %s39
    %p67 = scmp.eq.s32.totalorder %s66, 0
    %s69 = sadd.s32 %s68, 1
    %s70 = scalar_select %p67, %s68, %s69
    %p73 = pneg %p67
    %p74 = scmp.eq.s32.totalorder %s32, 1
    %p75 = por %p73, %p74
    %p76 = scmp.ne.s32.totalorder %s68, %s71
    %p77 = scmp.eq.s32.totalorder %s32, 0
    %p78 = por %p76, %p77
    %p79 = scmp.ne.s32.totalorder %s68, %s71
    %p80 = scmp.eq.s32.totalorder %s37, 1
    %p81 = por %p79, %p80
    %p82 = scmp.ne.s32.totalorder %s71, %s72
    %p83 = scmp.eq.s32.totalorder %s37, 0
    %p84 = por %p82, %p83
    %p85 = scmp.ne.s32.totalorder %s71, %s72
    %p86 = scmp.eq.s32.totalorder %s38, 1
    %p87 = por %p85, %p86
    %p89 = scmp.ne.s32.totalorder %s72, %s88
    %p90 = scmp.eq.s32.totalorder %s38, 0
    %p91 = por %p89, %p90
    %s92 = ssub.s32 %s32, %s39
    %p93 = scmp.eq.s32.totalorder %s92, 0
    %s95 = sadd.s32 %s94, 1
    %s96 = scalar_select %p93, %s94, %s95
    %p99 = pneg %p93
    %p100 = scmp.eq.s32.totalorder %s32, 1
    %p101 = por %p99, %p100
    %p102 = scmp.ne.s32.totalorder %s94, %s97
    %p103 = scmp.eq.s32.totalorder %s32, 0
    %p104 = por %p102, %p103
    %p105 = scmp.ne.s32.totalorder %s94, %s97
    %p106 = scmp.eq.s32.totalorder %s37, 1
    %p107 = por %p105, %p106
    %p108 = scmp.ne.s32.totalorder %s97, %s98
    %p109 = scmp.eq.s32.totalorder %s37, 0
    %p110 = por %p108, %p109
    %p111 = scmp.ne.s32.totalorder %s97, %s98
    %p112 = scmp.eq.s32.totalorder %s38, 1
    %p113 = por %p111, %p112
    %p115 = scmp.ne.s32.totalorder %s98, %s114
    %p116 = scmp.eq.s32.totalorder %s38, 0
    %p117 = por %p115, %p116
    %s118 = ssub.s32 %s32, %s39
    %p119 = scmp.eq.s32.totalorder %s118, 0
    %s121 = sadd.s32 %s120, 1
    %s122 = scalar_select %p119, %s120, %s121
    %p125 = pneg %p119
    %p126 = scmp.eq.s32.totalorder %s32, 1
    %p127 = por %p125, %p126
    %p128 = scmp.ne.s32.totalorder %s120, %s123
    %p129 = scmp.eq.s32.totalorder %s32, 0
    %p130 = por %p128, %p129
    %p131 = scmp.ne.s32.totalorder %s120, %s123
    %p132 = scmp.eq.s32.totalorder %s37, 1
    %p133 = por %p131, %p132
    %p134 = scmp.ne.s32.totalorder %s123, %s124
    %p135 = scmp.eq.s32.totalorder %s37, 0
    %p136 = por %p134, %p135
    %p137 = scmp.ne.s32.totalorder %s123, %s124
    %p138 = scmp.eq.s32.totalorder %s38, 1
    %p139 = por %p137, %p138
    %p141 = scmp.ne.s32.totalorder %s124, %s140
    %p142 = scmp.eq.s32.totalorder %s38, 0
    %p143 = por %p141, %p142
    %s145 = sadd.s32 %s144, 1
    %p148 = scmp.eq.s32.totalorder %s32, 1
    %p149 = scmp.ne.s32.totalorder %s144, %s146
    %p150 = scmp.eq.s32.totalorder %s32, 0
    %p151 = por %p149, %p150
    %p152 = scmp.ne.s32.totalorder %s144, %s146
    %p153 = scmp.eq.s32.totalorder %s37, 1
    %p154 = por %p152, %p153
    %p155 = scmp.ne.s32.totalorder %s146, %s147
    %p156 = scmp.eq.s32.totalorder %s37, 0
    %p157 = por %p155, %p156
    %p158 = scmp.ne.s32.totalorder %s146, %s147
    %p159 = scmp.eq.s32.totalorder %s38, 1
    %p160 = por %p158, %p159
    %p162 = scmp.ne.s32.totalorder %s147, %s161
    %p163 = scmp.eq.s32.totalorder %s38, 0
    %p164 = por %p162, %p163
    %s166 = sadd.s32 %s165, 1
    %p169 = scmp.eq.s32.totalorder %s32, 1
    %p170 = scmp.ne.s32.totalorder %s165, %s167
    %p171 = scmp.eq.s32.totalorder %s32, 0
    %p172 = por %p170, %p171
    %p173 = scmp.ne.s32.totalorder %s165, %s167
    %p174 = scmp.eq.s32.totalorder %s37, 1
    %p175 = por %p173, %p174
    %p176 = scmp.ne.s32.totalorder %s167, %s168
    %p177 = scmp.eq.s32.totalorder %s37, 0
    %p178 = por %p176, %p177
    %p179 = scmp.ne.s32.totalorder %s167, %s168
    %p180 = scmp.eq.s32.totalorder %s38, 1
    %p181 = por %p179, %p180
    %p183 = scmp.ne.s32.totalorder %s168, %s182
    %p184 = scmp.eq.s32.totalorder %s38, 0
    %p185 = por %p183, %p184
    %s187 = sadd.s32 %s186, 1
    %p190 = scmp.eq.s32.totalorder %s32, 1
    %p191 = scmp.ne.s32.totalorder %s186, %s188
    %p192 = scmp.eq.s32.totalorder %s32, 0
    %p193 = por %p191, %p192
    %p194 = scmp.ne.s32.totalorder %s186, %s188
    %p195 = scmp.eq.s32.totalorder %s37, 1
    %p196 = por %p194, %p195
    %p197 = scmp.ne.s32.totalorder %s188, %s189
    %p198 = scmp.eq.s32.totalorder %s37, 0
    %p199 = por %p197, %p198
    %p200 = scmp.ne.s32.totalorder %s188, %s189
    %p201 = scmp.eq.s32.totalorder %s38, 1
    %p202 = por %p200, %p201
    %p204 = scmp.ne.s32.totalorder %s189, %s203
    %p205 = scmp.eq.s32.totalorder %s38, 0
    %p206 = por %p204, %p205
    %s208 = sadd.s32 %s207, 1
    %p211 = scmp.eq.s32.totalorder %s32, 1
    %p212 = scmp.ne.s32.totalorder %s207, %s209
    %p213 = scmp.eq.s32.totalorder %s32, 0
    %p214 = por %p212, %p213
    %p215 = scmp.ne.s32.totalorder %s207, %s209
    %p216 = scmp.eq.s32.totalorder %s37, 1
    %p217 = por %p215, %p216
    %p218 = scmp.ne.s32.totalorder %s209, %s210
    %p219 = scmp.eq.s32.totalorder %s37, 0
    %p220 = por %p218, %p219
    %p221 = scmp.ne.s32.totalorder %s209, %s210
    %p222 = scmp.eq.s32.totalorder %s38, 1
    %p223 = por %p221, %p222
    %p225 = scmp.ne.s32.totalorder %s210, %s224
    %p226 = scmp.eq.s32.totalorder %s38, 0
    %p227 = por %p225, %p226
    %s229 = sadd.s32 %s228, 1
    %p232 = scmp.eq.s32.totalorder %s32, 1
    %p233 = scmp.ne.s32.totalorder %s228, %s230
    %p234 = scmp.eq.s32.totalorder %s32, 0
    %p235 = por %p233, %p234
    %p236 = scmp.ne.s32.totalorder %s228, %s230
    %p237 = scmp.eq.s32.totalorder %s37, 1
    %p238 = por %p236, %p237
    %p239 = scmp.ne.s32.totalorder %s230, %s231
    %p240 = scmp.eq.s32.totalorder %s37, 0
    %p241 = por %p239, %p240
    %p242 = scmp.ne.s32.totalorder %s230, %s231
    %p243 = scmp.eq.s32.totalorder %s38, 1
    %p244 = por %p242, %p243
    %p246 = scmp.ne.s32.totalorder %s231, %s245
    %p247 = scmp.eq.s32.totalorder %s38, 0
    %p248 = por %p246, %p247
    %s250 = sadd.s32 %s249, 1
    %p253 = scmp.eq.s32.totalorder %s32, 1
    %p254 = scmp.ne.s32.totalorder %s249, %s251
    %p255 = scmp.eq.s32.totalorder %s32, 0
    %p256 = por %p254, %p255
    %p257 = scmp.ne.s32.totalorder %s249, %s251
    %p258 = scmp.eq.s32.totalorder %s37, 1
    %p259 = por %p257, %p258
    %p260 = scmp.ne.s32.totalorder %s251, %s252
    %p261 = scmp.eq.s32.totalorder %s37, 0
    %p262 = por %p260, %p261
    %p263 = scmp.ne.s32.totalorder %s251, %s252
    %p264 = scmp.eq.s32.totalorder %s38, 1
    %p265 = por %p263, %p264
    %p267 = scmp.ne.s32.totalorder %s252, %s266
    %p268 = scmp.eq.s32.totalorder %s38, 0
    %p269 = por %p267, %p268
    %s271 = sadd.s32 %s270, 1
    %p274 = scmp.eq.s32.totalorder %s32, 1
    %p275 = scmp.ne.s32.totalorder %s270, %s272
    %p276 = scmp.eq.s32.totalorder %s32, 0
    %p277 = por %p275, %p276
    %p278 = scmp.ne.s32.totalorder %s270, %s272
    %p279 = scmp.eq.s32.totalorder %s37, 1
    %p280 = por %p278, %p279
    %p281 = scmp.ne.s32.totalorder %s272, %s273
    %p282 = scmp.eq.s32.totalorder %s37, 0
    %p283 = por %p281, %p282
    %p284 = scmp.ne.s32.totalorder %s272, %s273
    %p285 = scmp.eq.s32.totalorder %s38, 1
    %p286 = por %p284, %p285
    %p288 = scmp.ne.s32.totalorder %s273, %s287
    %p289 = scmp.eq.s32.totalorder %s38, 0
    %p290 = por %p288, %p289
    %s292 = sadd.s32 %s291, 1
    %p295 = scmp.eq.s32.totalorder %s32, 1
    %p296 = scmp.ne.s32.totalorder %s291, %s293
    %p297 = scmp.eq.s32.totalorder %s32, 0
    %p298 = por %p296, %p297
    %p299 = scmp.ne.s32.totalorder %s291, %s293
    %p300 = scmp.eq.s32.totalorder %s37, 1
    %p301 = por %p299, %p300
    %p302 = scmp.ne.s32.totalorder %s293, %s294
    %p303 = scmp.eq.s32.totalorder %s37, 0
    %p304 = por %p302, %p303
    %p305 = scmp.ne.s32.totalorder %s293, %s294
    %p306 = scmp.eq.s32.totalorder %s38, 1
    %p307 = por %p305, %p306
    %p309 = scmp.ne.s32.totalorder %s294, %s308
    %p310 = scmp.eq.s32.totalorder %s38, 0
    %p311 = por %p309, %p310
    %s313 = sadd.s32 %s312, 1
    %p316 = scmp.eq.s32.totalorder %s32, 1
    %p317 = scmp.ne.s32.totalorder %s312, %s314
    %p318 = scmp.eq.s32.totalorder %s32, 0
    %p319 = por %p317, %p318
    %p320 = scmp.ne.s32.totalorder %s312, %s314
    %p321 = scmp.eq.s32.totalorder %s37, 1
    %p322 = por %p320, %p321
    %p323 = scmp.ne.s32.totalorder %s314, %s315
    %p324 = scmp.eq.s32.totalorder %s37, 0
    %p325 = por %p323, %p324
    %p326 = scmp.ne.s32.totalorder %s314, %s315
    %p327 = scmp.eq.s32.totalorder %s38, 1
    %p328 = por %p326, %p327
    %p330 = scmp.ne.s32.totalorder %s315, %s329
    %p331 = scmp.eq.s32.totalorder %s38, 0
    %p332 = por %p330, %p331
    %s334 = sadd.s32 %s333, 1
    %p337 = scmp.eq.s32.totalorder %s32, 1
    %p338 = scmp.ne.s32.totalorder %s333, %s335
    %p339 = scmp.eq.s32.totalorder %s32, 0
    %p340 = por %p338, %p339
    %p341 = scmp.ne.s32.totalorder %s333, %s335
    %p342 = scmp.eq.s32.totalorder %s37, 1
    %p343 = por %p341, %p342
    %p344 = scmp.ne.s32.totalorder %s335, %s336
    %p345 = scmp.eq.s32.totalorder %s37, 0
    %p346 = por %p344, %p345
    %p347 = scmp.ne.s32.totalorder %s335, %s336
    %p348 = scmp.eq.s32.totalorder %s38, 1
    %p349 = por %p347, %p348
    %p351 = scmp.ne.s32.totalorder %s336, %s350
    %p352 = scmp.eq.s32.totalorder %s38, 0
    %p353 = por %p351, %p352
    %s355 = sadd.s32 %s354, 1
    %p358 = scmp.eq.s32.totalorder %s32, 1
    %p359 = scmp.ne.s32.totalorder %s354, %s356
    %p360 = scmp.eq.s32.totalorder %s32, 0
    %p361 = por %p359, %p360
    %p362 = scmp.ne.s32.totalorder %s354, %s356
    %p363 = scmp.eq.s32.totalorder %s37, 1
    %p364 = por %p362, %p363
    %p365 = scmp.ne.s32.totalorder %s356, %s357
    %p366 = scmp.eq.s32.totalorder %s37, 0
    %p367 = por %p365, %p366
    %p368 = scmp.ne.s32.totalorder %s356, %s357
    %p369 = scmp.eq.s32.totalorder %s38, 1
    %p370 = por %p368, %p369
    %p372 = scmp.ne.s32.totalorder %s357, %s371
    %p373 = scmp.eq.s32.totalorder %s38, 0
    %p374 = por %p372, %p373
    %s376 = sadd.s32 %s375, 1
    %p379 = scmp.eq.s32.totalorder %s32, 1
    %p380 = scmp.ne.s32.totalorder %s375, %s377
    %p381 = scmp.eq.s32.totalorder %s32, 0
    %p382 = por %p380, %p381
    %p383 = scmp.ne.s32.totalorder %s375, %s377
    %p384 = scmp.eq.s32.totalorder %s37, 1
    %p385 = por %p383, %p384
    %p386 = scmp.ne.s32.totalorder %s377, %s378
    %p387 = scmp.eq.s32.totalorder %s37, 0
    %p388 = por %p386, %p387
    %p389 = scmp.ne.s32.totalorder %s377, %s378
    %p390 = scmp.eq.s32.totalorder %s38, 1
    %p391 = por %p389, %p390
    %p393 = scmp.ne.s32.totalorder %s378, %s392
    %p394 = scmp.eq.s32.totalorder %s38, 0
    %p395 = por %p393, %p394
    %s397 = sadd.s32 %s396, 1
    %p400 = scmp.eq.s32.totalorder %s32, 1
    %p401 = scmp.ne.s32.totalorder %s396, %s398
    %p402 = scmp.eq.s32.totalorder %s32, 0
    %p403 = por %p401, %p402
    %p404 = scmp.ne.s32.totalorder %s396, %s398
    %p405 = scmp.eq.s32.totalorder %s37, 1
    %p406 = por %p404, %p405
    %p407 = scmp.ne.s32.totalorder %s398, %s399
    %p408 = scmp.eq.s32.totalorder %s37, 0
    %p409 = por %p407, %p408
    %p410 = scmp.ne.s32.totalorder %s398, %s399
    %p411 = scmp.eq.s32.totalorder %s38, 1
    %p412 = por %p410, %p411
    %p414 = scmp.ne.s32.totalorder %s399, %s413
    %p415 = scmp.eq.s32.totalorder %s38, 0
    %p416 = por %p414, %p415
    %s418 = sadd.s32 %s417, 1
    %p421 = scmp.eq.s32.totalorder %s32, 1
    %p422 = scmp.ne.s32.totalorder %s417, %s419
    %p423 = scmp.eq.s32.totalorder %s32, 0
    %p424 = por %p422, %p423
    %p425 = scmp.ne.s32.totalorder %s417, %s419
    %p426 = scmp.eq.s32.totalorder %s37, 1
    %p427 = por %p425, %p426
    %p428 = scmp.ne.s32.totalorder %s419, %s420
    %p429 = scmp.eq.s32.totalorder %s37, 0
    %p430 = por %p428, %p429
    %p431 = scmp.ne.s32.totalorder %s419, %s420
    %p432 = scmp.eq.s32.totalorder %s38, 1
    %p433 = por %p431, %p432
    %p435 = scmp.ne.s32.totalorder %s420, %s434
    %p436 = scmp.eq.s32.totalorder %s38, 0
    %p437 = por %p435, %p436
    %s439 = sadd.s32 %s438, 1
    %p442 = scmp.eq.s32.totalorder %s32, 1
    %p443 = scmp.ne.s32.totalorder %s438, %s440
    %p444 = scmp.eq.s32.totalorder %s32, 0
    %p445 = por %p443, %p444
    %p446 = scmp.ne.s32.totalorder %s438, %s440
    %p447 = scmp.eq.s32.totalorder %s37, 1
    %p448 = por %p446, %p447
    %p449 = scmp.ne.s32.totalorder %s440, %s441
    %p450 = scmp.eq.s32.totalorder %s37, 0
    %p451 = por %p449, %p450
    %p452 = scmp.ne.s32.totalorder %s440, %s441
    %p453 = scmp.eq.s32.totalorder %s38, 1
    %p454 = por %p452, %p453
    %p456 = scmp.ne.s32.totalorder %s441, %s455
    %p457 = scmp.eq.s32.totalorder %s38, 0
    %p458 = por %p456, %p457
    %s460 = sadd.s32 %s459, 1
    %p463 = scmp.eq.s32.totalorder %s32, 1
    %p464 = scmp.ne.s32.totalorder %s459, %s461
    %p465 = scmp.eq.s32.totalorder %s32, 0
    %p466 = por %p464, %p465
    %p467 = scmp.ne.s32.totalorder %s459, %s461
    %p468 = scmp.eq.s32.totalorder %s37, 1
    %p469 = por %p467, %p468
    %p470 = scmp.ne.s32.totalorder %s461, %s462
    %p471 = scmp.eq.s32.totalorder %s37, 0
    %p472 = por %p470, %p471
    %p473 = scmp.ne.s32.totalorder %s461, %s462
    %p474 = scmp.eq.s32.totalorder %s38, 1
    %p475 = por %p473, %p474
    %p477 = scmp.ne.s32.totalorder %s462, %s476
    %p478 = scmp.eq.s32.totalorder %s38, 0
    %p479 = por %p477, %p478
    %s481 = sadd.s32 %s480, 1
    %p484 = scmp.eq.s32.totalorder %s32, 1
    %p485 = scmp.ne.s32.totalorder %s480, %s482
    %p486 = scmp.eq.s32.totalorder %s32, 0
    %p487 = por %p485, %p486
    %p488 = scmp.ne.s32.totalorder %s480, %s482
    %p489 = scmp.eq.s32.totalorder %s37, 1
    %p490 = por %p488, %p489
    %p491 = scmp.ne.s32.totalorder %s482, %s483
    %p492 = scmp.eq.s32.totalorder %s37, 0
    %p493 = por %p491, %p492
    %p494 = scmp.ne.s32.totalorder %s482, %s483
    %p495 = scmp.eq.s32.totalorder %s38, 1
    %p496 = por %p494, %p495
    %p498 = scmp.ne.s32.totalorder %s483, %s497
    %p499 = scmp.eq.s32.totalorder %s38, 0
    %p500 = por %p498, %p499
    %s502 = sadd.s32 %s501, 1
    %p505 = scmp.eq.s32.totalorder %s32, 1
    %p506 = scmp.ne.s32.totalorder %s501, %s503
    %p507 = scmp.eq.s32.totalorder %s32, 0
    %p508 = por %p506, %p507
    %p509 = scmp.ne.s32.totalorder %s501, %s503
    %p510 = scmp.eq.s32.totalorder %s37, 1
    %p511 = por %p509, %p510
    %p512 = scmp.ne.s32.totalorder %s503, %s504
    %p513 = scmp.eq.s32.totalorder %s37, 0
    %p514 = por %p512, %p513
    %p515 = scmp.ne.s32.totalorder %s503, %s504
    %p516 = scmp.eq.s32.totalorder %s38, 1
    %p517 = por %p515, %p516
    %p519 = scmp.ne.s32.totalorder %s504, %s518
    %p520 = scmp.eq.s32.totalorder %s38, 0
    %p521 = por %p519, %p520
    %s523 = sadd.s32 %s522, 1
    %p526 = scmp.eq.s32.totalorder %s32, 1
    %p527 = scmp.ne.s32.totalorder %s522, %s524
    %p528 = scmp.eq.s32.totalorder %s32, 0
    %p529 = por %p527, %p528
    %p530 = scmp.ne.s32.totalorder %s522, %s524
    %p531 = scmp.eq.s32.totalorder %s37, 1
    %p532 = por %p530, %p531
    %p533 = scmp.ne.s32.totalorder %s524, %s525
    %p534 = scmp.eq.s32.totalorder %s37, 0
    %p535 = por %p533, %p534
    %p536 = scmp.ne.s32.totalorder %s524, %s525
    %p537 = scmp.eq.s32.totalorder %s38, 1
    %p538 = por %p536, %p537
    %p540 = scmp.ne.s32.totalorder %s525, %s539
    %p541 = scmp.eq.s32.totalorder %s38, 0
    %p542 = por %p540, %p541
    %s544 = sadd.s32 %s543, 1
    %p547 = scmp.eq.s32.totalorder %s32, 1
    %p548 = scmp.ne.s32.totalorder %s543, %s545
    %p549 = scmp.eq.s32.totalorder %s32, 0
    %p550 = por %p548, %p549
    %p551 = scmp.ne.s32.totalorder %s543, %s545
    %p552 = scmp.eq.s32.totalorder %s37, 1
    %p553 = por %p551, %p552
    %p554 = scmp.ne.s32.totalorder %s545, %s546
    %p555 = scmp.eq.s32.totalorder %s37, 0
    %p556 = por %p554, %p555
    %p557 = scmp.ne.s32.totalorder %s545, %s546
    %p558 = scmp.eq.s32.totalorder %s38, 1
    %p559 = por %p557, %p558
    %p561 = scmp.ne.s32.totalorder %s546, %s560
    %p562 = scmp.eq.s32.totalorder %s38, 0
    %p563 = por %p561, %p562
    %s565 = sadd.s32 %s564, 1
    %p568 = scmp.eq.s32.totalorder %s32, 1
    %p569 = scmp.ne.s32.totalorder %s564, %s566
    %p570 = scmp.eq.s32.totalorder %s32, 0
    %p571 = por %p569, %p570
    %p572 = scmp.ne.s32.totalorder %s564, %s566
    %p573 = scmp.eq.s32.totalorder %s37, 1
    %p574 = por %p572, %p573
    %p575 = scmp.ne.s32.totalorder %s566, %s567
    %p576 = scmp.eq.s32.totalorder %s37, 0
    %p577 = por %p575, %p576
    %p578 = scmp.ne.s32.totalorder %s566, %s567
    %p579 = scmp.eq.s32.totalorder %s38, 1
    %p580 = por %p578, %p579
    %p582 = scmp.ne.s32.totalorder %s567, %s581
    %p583 = scmp.eq.s32.totalorder %s38, 0
    %p584 = por %p582, %p583
    %s586 = sadd.s32 %s585, 1
    %p589 = scmp.eq.s32.totalorder %s32, 1
    %p590 = scmp.ne.s32.totalorder %s585, %s587
    %p591 = scmp.eq.s32.totalorder %s32, 0
    %p592 = por %p590, %p591
    %p593 = scmp.ne.s32.totalorder %s585, %s587
    %p594 = scmp.eq.s32.totalorder %s37, 1
    %p595 = por %p593, %p594
    %p596 = scmp.ne.s32.totalorder %s587, %s588
    %p597 = scmp.eq.s32.totalorder %s37, 0
    %p598 = por %p596, %p597
    %p599 = scmp.ne.s32.totalorder %s587, %s588
    %p600 = scmp.eq.s32.totalorder %s38, 1
    %p601 = por %p599, %p600
    %p603 = scmp.ne.s32.totalorder %s588, %s602
    %p604 = scmp.eq.s32.totalorder %s38, 0
    %p605 = por %p603, %p604
    %s606 = ssub.s32 %s32, %s39
    %p607 = scmp.eq.s32.totalorder %s606, 0
    %s609 = sadd.s32 %s608, 1
    %s610 = scalar_select %p607, %s608, %s609
    %p613 = pneg %p607
    %p614 = scmp.eq.s32.totalorder %s32, 1
    %p615 = por %p613, %p614
    %p616 = scmp.ne.s32.totalorder %s608, %s611
    %p617 = scmp.eq.s32.totalorder %s32, 0
    %p618 = por %p616, %p617
    %p619 = scmp.ne.s32.totalorder %s608, %s611
    %p620 = scmp.eq.s32.totalorder %s37, 1
    %p621 = por %p619, %p620
    %p622 = scmp.ne.s32.totalorder %s611, %s612
    %p623 = scmp.eq.s32.totalorder %s37, 0
    %p624 = por %p622, %p623
    %p625 = scmp.ne.s32.totalorder %s611, %s612
    %p626 = scmp.eq.s32.totalorder %s38, 1
    %p627 = por %p625, %p626
    %p629 = scmp.ne.s32.totalorder %s612, %s628
    %p630 = scmp.eq.s32.totalorder %s38, 0
    %p631 = por %p629, %p630
    %p632 = scmp.le.s32.totalorder 1, %s32
    %p633 = scmp.lt.s32.totalorder %s32, 3
    %p634 = pnand %p632, %p633
    %p635 = pneg %p634
    // Predicated region
    $region9: #{peptide_decoder_forward.3} parent=5 // pred_check
      _
    $region10: #{peptide_decoder_forward.3} parent=5 // pred_check_branch
      %637 = sbr.rel (%p634) target = $region12
    $region11: #{peptide_decoder_forward.3} parent=5 // pred_region
      %s638 = ssub.s32 %s32, 1
      // Predicated region
      $region13: #{peptide_decoder_forward.3} parent=11 // pred_check
        %p639 = pneg %p157
      $region14: #{peptide_decoder_forward.3} parent=11 // pred_check_branch
        %641 = sbr.rel (%p639) target = $region16
      $region15: #{peptide_decoder_forward.3} parent=11 // pred_region
        _
      $region16: #{peptide_decoder_forward.3} parent=11 // pred_fallthru
        _
      // Predicated region
      $region17: #{peptide_decoder_forward.3} parent=11 // pred_check
        %p642 = pneg %p178
      $region18: #{peptide_decoder_forward.3} parent=11 // pred_check_branch
        %644 = sbr.rel (%p642) target = $region20
      $region19: #{peptide_decoder_forward.3} parent=11 // pred_region
        _
      $region20: #{peptide_decoder_forward.3} parent=11 // pred_fallthru
        _
      // Predicated region
      $region21: #{peptide_decoder_forward.3} parent=11 // pred_check
        %p645 = pneg %p199
      $region22: #{peptide_decoder_forward.3} parent=11 // pred_check_branch
        %647 = sbr.rel (%p645) target = $region24
      $region23: #{peptide_decoder_forward.3} parent=11 // pred_region
        _
      $region24: #{peptide_decoder_forward.3} parent=11 // pred_fallthru
        _
      // Predicated region
      $region25: #{peptide_decoder_forward.3} parent=11 // pred_check
        %p648 = pneg %p220
      $region26: #{peptide_decoder_forward.3} parent=11 // pred_check_branch
        %650 = sbr.rel (%p648) target = $region28
      $region27: #{peptide_decoder_forward.3} parent=11 // pred_region
        _
      $region28: #{peptide_decoder_forward.3} parent=11 // pred_fallthru
        _
      // Predicated region
      $region29: #{peptide_decoder_forward.3} parent=11 // pred_check
        %p651 = pneg %p241
      $region30: #{peptide_decoder_forward.3} parent=11 // pred_check_branch
        %653 = sbr.rel (%p651) target = $region32
      $region31: #{peptide_decoder_forward.3} parent=11 // pred_region
        _
      $region32: #{peptide_decoder_forward.3} parent=11 // pred_fallthru
        _
      // Predicated region
      $region33: #{peptide_decoder_forward.3} parent=11 // pred_check
        %p654 = pneg %p262
      $region34: #{peptide_decoder_forward.3} parent=11 // pred_check_branch
        %656 = sbr.rel (%p654) target = $region36
      $region35: #{peptide_decoder_forward.3} parent=11 // pred_region
        _
      $region36: #{peptide_decoder_forward.3} parent=11 // pred_fallthru
        _
      // Predicated region
      $region37: #{peptide_decoder_forward.3} parent=11 // pred_check
        %p657 = pneg %p283
      $region38: #{peptide_decoder_forward.3} parent=11 // pred_check_branch
        %659 = sbr.rel (%p657) target = $region40
      $region39: #{peptide_decoder_forward.3} parent=11 // pred_region
        _
      $region40: #{peptide_decoder_forward.3} parent=11 // pred_fallthru
        _
      // Predicated region
      $region41: #{peptide_decoder_forward.3} parent=11 // pred_check
        %p660 = pneg %p304
      $region42: #{peptide_decoder_forward.3} parent=11 // pred_check_branch
        %662 = sbr.rel (%p660) target = $region44
      $region43: #{peptide_decoder_forward.3} parent=11 // pred_region
        _
      $region44: #{peptide_decoder_forward.3} parent=11 // pred_fallthru
        _
      // Predicated region
      $region45: #{peptide_decoder_forward.3} parent=11 // pred_check
        %p663 = pneg %p325
      $region46: #{peptide_decoder_forward.3} parent=11 // pred_check_branch
        %665 = sbr.rel (%p663) target = $region48
      $region47: #{peptide_decoder_forward.3} parent=11 // pred_region
        _
      $region48: #{peptide_decoder_forward.3} parent=11 // pred_fallthru
        _
      // Predicated region
      $region49: #{peptide_decoder_forward.3} parent=11 // pred_check
        %p666 = pneg %p346
      $region50: #{peptide_decoder_forward.3} parent=11 // pred_check_branch
        %668 = sbr.rel (%p666) target = $region52
      $region51: #{peptide_decoder_forward.3} parent=11 // pred_region
        _
      $region52: #{peptide_decoder_forward.3} parent=11 // pred_fallthru
        _
      // Predicated region
      $region53: #{peptide_decoder_forward.3} parent=11 // pred_check
        %p669 = pneg %p367
      $region54: #{peptide_decoder_forward.3} parent=11 // pred_check_branch
        %671 = sbr.rel (%p669) target = $region56
      $region55: #{peptide_decoder_forward.3} parent=11 // pred_region
        _
      $region56: #{peptide_decoder_forward.3} parent=11 // pred_fallthru
        _
      // Predicated region
      $region57: #{peptide_decoder_forward.3} parent=11 // pred_check
        %p672 = pneg %p388
      $region58: #{peptide_decoder_forward.3} parent=11 // pred_check_branch
        %674 = sbr.rel (%p672) target = $region60
      $region59: #{peptide_decoder_forward.3} parent=11 // pred_region
        _
      $region60: #{peptide_decoder_forward.3} parent=11 // pred_fallthru
        _
      // Predicated region
      $region61: #{peptide_decoder_forward.3} parent=11 // pred_check
        %p675 = pneg %p409
      $region62: #{peptide_decoder_forward.3} parent=11 // pred_check_branch
        %677 = sbr.rel (%p675) target = $region64
      $region63: #{peptide_decoder_forward.3} parent=11 // pred_region
        _
      $region64: #{peptide_decoder_forward.3} parent=11 // pred_fallthru
        _
      // Predicated region
      $region65: #{peptide_decoder_forward.3} parent=11 // pred_check
        %p678 = pneg %p430
      $region66: #{peptide_decoder_forward.3} parent=11 // pred_check_branch
        %680 = sbr.rel (%p678) target = $region68
      $region67: #{peptide_decoder_forward.3} parent=11 // pred_region
        _
      $region68: #{peptide_decoder_forward.3} parent=11 // pred_fallthru
        _
      // Predicated region
      $region69: #{peptide_decoder_forward.3} parent=11 // pred_check
        %p681 = pneg %p451
      $region70: #{peptide_decoder_forward.3} parent=11 // pred_check_branch
        %683 = sbr.rel (%p681) target = $region72
      $region71: #{peptide_decoder_forward.3} parent=11 // pred_region
        _
      $region72: #{peptide_decoder_forward.3} parent=11 // pred_fallthru
        _
      // Predicated region
      $region73: #{peptide_decoder_forward.3} parent=11 // pred_check
        %p684 = pneg %p472
      $region74: #{peptide_decoder_forward.3} parent=11 // pred_check_branch
        %686 = sbr.rel (%p684) target = $region76
      $region75: #{peptide_decoder_forward.3} parent=11 // pred_region
        _
      $region76: #{peptide_decoder_forward.3} parent=11 // pred_fallthru
        _
      // Predicated region
      $region77: #{peptide_decoder_forward.3} parent=11 // pred_check
        %p687 = pneg %p493
      $region78: #{peptide_decoder_forward.3} parent=11 // pred_check_branch
        %689 = sbr.rel (%p687) target = $region80
      $region79: #{peptide_decoder_forward.3} parent=11 // pred_region
        _
      $region80: #{peptide_decoder_forward.3} parent=11 // pred_fallthru
        _
      // Predicated region
      $region81: #{peptide_decoder_forward.3} parent=11 // pred_check
        %p690 = pneg %p514
      $region82: #{peptide_decoder_forward.3} parent=11 // pred_check_branch
        %692 = sbr.rel (%p690) target = $region84
      $region83: #{peptide_decoder_forward.3} parent=11 // pred_region
        _
      $region84: #{peptide_decoder_forward.3} parent=11 // pred_fallthru
        _
      // Predicated region
      $region85: #{peptide_decoder_forward.3} parent=11 // pred_check
        %p693 = pneg %p535
      $region86: #{peptide_decoder_forward.3} parent=11 // pred_check_branch
        %695 = sbr.rel (%p693) target = $region88
      $region87: #{peptide_decoder_forward.3} parent=11 // pred_region
        _
      $region88: #{peptide_decoder_forward.3} parent=11 // pred_fallthru
        _
      // Predicated region
      $region89: #{peptide_decoder_forward.3} parent=11 // pred_check
        %p696 = pneg %p556
      $region90: #{peptide_decoder_forward.3} parent=11 // pred_check_branch
        %698 = sbr.rel (%p696) target = $region92
      $region91: #{peptide_decoder_forward.3} parent=11 // pred_region
        _
      $region92: #{peptide_decoder_forward.3} parent=11 // pred_fallthru
        _
      // Predicated region
      $region93: #{peptide_decoder_forward.3} parent=11 // pred_check
        %p699 = pneg %p577
      $region94: #{peptide_decoder_forward.3} parent=11 // pred_check_branch
        %701 = sbr.rel (%p699) target = $region96
      $region95: #{peptide_decoder_forward.3} parent=11 // pred_region
        _
      $region96: #{peptide_decoder_forward.3} parent=11 // pred_fallthru
        _
      // Predicated region
      $region97: #{peptide_decoder_forward.3} parent=11 // pred_check
        %p702 = pneg %p598
      $region98: #{peptide_decoder_forward.3} parent=11 // pred_check_branch
        %704 = sbr.rel (%p702) target = $region100
      $region99: #{peptide_decoder_forward.3} parent=11 // pred_region
        _
      $region100: #{peptide_decoder_forward.3} parent=11 // pred_fallthru
        _
    $region12: #{peptide_decoder_forward.3} parent=5 // pred_fallthru
      _
    %p705 = scmp.lt.s32.totalorder %s32, 2
    // Predicated region
    $region101: #{peptide_decoder_forward.3} parent=5 // pred_check
      %p706 = pneg %p705
    $region102: #{peptide_decoder_forward.3} parent=5 // pred_check_branch
      %708 = sbr.rel (%p706) target = $region104
    $region103: #{peptide_decoder_forward.3} parent=5 // pred_region
      // Predicated region
      $region105: #{peptide_decoder_forward.3} parent=103 // pred_check
        %p709 = pneg %p52
      $region106: #{peptide_decoder_forward.3} parent=103 // pred_check_branch
        %711 = sbr.rel (%p709) target = $region108
      $region107: #{peptide_decoder_forward.3} parent=103 // pred_region
        %p712 = scmp.lt.s32.totalorder %s32, 1
        %s713 = scalar_select %p712, %s32, 1
        %s714 = smul.addr %s713, 4
        %s715 = scalar_lea.vmem %s0, %s714
      $region108: #{peptide_decoder_forward.3} parent=103 // pred_fallthru
        _
      // Predicated region
      $region109: #{peptide_decoder_forward.3} parent=103 // pred_check
        %p716 = pneg %p78
      $region110: #{peptide_decoder_forward.3} parent=103 // pred_check_branch
        %718 = sbr.rel (%p716) target = $region112
      $region111: #{peptide_decoder_forward.3} parent=103 // pred_region
        %p719 = scmp.lt.s32.totalorder %s32, 1
        %s720 = scalar_select %p719, %s32, 1
        %s721 = smul.addr %s720, 4
        %s722 = scalar_lea.vmem %s1, %s721
      $region112: #{peptide_decoder_forward.3} parent=103 // pred_fallthru
        _
      // Predicated region
      $region113: #{peptide_decoder_forward.3} parent=103 // pred_check
        %p723 = pneg %p104
      $region114: #{peptide_decoder_forward.3} parent=103 // pred_check_branch
        %725 = sbr.rel (%p723) target = $region116
      $region115: #{peptide_decoder_forward.3} parent=103 // pred_region
        %p726 = scmp.lt.s32.totalorder %s32, 1
        %s727 = scalar_select %p726, %s32, 1
        %s728 = scalar_lea.vmem %s2, %s727
      $region116: #{peptide_decoder_forward.3} parent=103 // pred_fallthru
        _
      // Predicated region
      $region117: #{peptide_decoder_forward.3} parent=103 // pred_check
        %p729 = pneg %p130
      $region118: #{peptide_decoder_forward.3} parent=103 // pred_check_branch
        %731 = sbr.rel (%p729) target = $region120
      $region119: #{peptide_decoder_forward.3} parent=103 // pred_region
        %p732 = scmp.lt.s32.totalorder %s32, 1
        %s733 = scalar_select %p732, %s32, 1
        %s734 = scalar_lea.vmem %s3, %s733
      $region120: #{peptide_decoder_forward.3} parent=103 // pred_fallthru
        _
    $region104: #{peptide_decoder_forward.3} parent=5 // pred_fallthru
      _
    %p735 = scmp.le.s32.totalorder 1, %s32
    %p736 = scmp.lt.s32.totalorder %s32, 3
    %p737 = pnand %p735, %p736
    %p738 = pneg %p737
    // Predicated region
    $region121: #{peptide_decoder_forward.3} parent=5 // pred_check
      _
    $region122: #{peptide_decoder_forward.3} parent=5 // pred_check_branch
      %740 = sbr.rel (%p737) target = $region124
    $region123: #{peptide_decoder_forward.3} parent=5 // pred_region
      %s741 = ssub.s32 %s32, 1
      %p742 = scmp.lt.s32.totalorder %s37, 1
      %s743 = scalar_select %p742, %s37, 1
      %s744 = smul.addr %s743, 4
      %s745 = scalar_lea.vmem %s0, %s744
      %p746 = pneg %p58
      %p747 = pneg %p55
      %p748 = scmp.lt.s32.totalorder %s37, 1
      %s749 = scalar_select %p748, %s37, 1
      %s750 = smul.addr %s749, 4
      %s751 = scalar_lea.vmem %s1, %s750
      %p752 = pneg %p84
      %p753 = pneg %p81
      %p754 = scmp.lt.s32.totalorder %s37, 1
      %s755 = scalar_select %p754, %s37, 1
      %s756 = scalar_lea.vmem %s2, %s755
      %p757 = pneg %p110
      %p758 = pneg %p107
      %p759 = scmp.lt.s32.totalorder %s37, 1
      %s760 = scalar_select %p759, %s37, 1
      %s761 = scalar_lea.vmem %s3, %s760
      %p762 = pneg %p136
      %p763 = pneg %p133
      %p764 = pneg %p157
      %p765 = pneg %p154
      %p766 = pneg %p178
      %p767 = pneg %p175
      %p768 = pneg %p199
      %p769 = pneg %p196
      %p770 = pneg %p220
      %p771 = pneg %p217
      %p772 = pneg %p241
      %p773 = pneg %p238
      %p774 = pneg %p262
      %p775 = pneg %p259
      %p776 = pneg %p283
      %p777 = pneg %p280
      %p778 = pneg %p304
      %p779 = pneg %p301
      %p780 = pneg %p325
      %p781 = pneg %p322
      %p782 = pneg %p346
      %p783 = pneg %p343
      %p784 = pneg %p367
      %p785 = pneg %p364
      %p786 = pneg %p388
      %p787 = pneg %p385
      %p788 = pneg %p409
      %p789 = pneg %p406
      %p790 = pneg %p430
      %p791 = pneg %p427
      %p792 = pneg %p451
      %p793 = pneg %p448
      %p794 = pneg %p472
      %p795 = pneg %p469
      %p796 = pneg %p493
      %p797 = pneg %p490
      %p798 = pneg %p514
      %p799 = pneg %p511
      %p800 = pneg %p535
      %p801 = pneg %p532
      %p802 = pneg %p556
      %p803 = pneg %p553
      %p804 = pneg %p577
      %p805 = pneg %p574
      %p806 = pneg %p598
      %p807 = pneg %p595
      %p808 = pneg %p624
      %p809 = pneg %p621
      %p810 = scmp.lt.s32.totalorder %s37, 1
      %s811 = scalar_select %p810, %s37, 1
      %s812 = smul.addr %s811, 4
      %s813 = scalar_lea.vmem %s26, %s812
      %p814 = scmp.lt.s32.totalorder %s37, 1
      %s815 = scalar_select %p814, %s37, 1
      %s816 = smul.addr %s815, 4
      %s817 = scalar_lea.vmem %s0, %s816
      %p818 = scmp.lt.s32.totalorder %s37, 1
      %s819 = scalar_select %p818, %s37, 1
      %s820 = smul.addr %s819, 4
      %s821 = scalar_lea.vmem %s1, %s820
      %p822 = scmp.lt.s32.totalorder %s37, 1
      %s823 = scalar_select %p822, %s37, 1
      %s824 = scalar_lea.vmem %s2, %s823
      %p825 = scmp.lt.s32.totalorder %s37, 1
      %s826 = scalar_select %p825, %s37, 1
      %s827 = scalar_lea.vmem %s3, %s826
      %p828 = scmp.lt.s32.totalorder %s37, 1
      %s829 = scalar_select %p828, %s37, 1
      %s830 = smul.addr %s829, 4
      %s831 = scalar_lea.vmem %s26, %s830
      %v833 = vld [vmem:[%s817] sm:$0xf]
      %v834 = vunpack.c.l.bf16 %v833
      %v835 = vld [vmem:[%s821] sm:$0xf]
      %v836 = vld [vmem:[%s824] sm:$0x1]
      %v838 = vlaneseq
      %v839 = vshrl.u32 %v838, 7
      %v840 = vsub.s32 0, %v839
      %v841 = vrot.slane %v836, %v840
      %v843 = vlaneseq
      %v844 = vshrl.u32 %v843, 7
      %v845 = vlaneseq
      %v846 = vand.u32 %v845, 127
      %vm847 = vcmp.gt.s32.totalorder %v846, %v844
      %v848 = vsel %vm847, -1e+30, 0.0
      %v849 = vadd.f32 %v841, %v848
      %v850 = vld [vmem:[%s4] sm:$0xf]
      %v851 = vld [vmem:[%s4 + $0x4] sm:$0xf]
      %v852 = vld [vmem:[%s4 + $0x8] sm:$0xf]
      %v853 = vld [vmem:[%s4 + $0xc] sm:$0xf]
      %v854 = vld [vmem:[%s5] sm:$0x1]
      %v856 = vlaneseq
      %v857 = vshrl.u32 %v856, 7
      %v858 = vsub.s32 0, %v857
      %v859 = vrot.slane %v854, %v858
      %v865 = vunpack.c.l.b16 %v850
      %v866 = vunpack.c.l.b16 %v851
      %v867 = vunpack.c.l.b16 %v852
      %v868 = vunpack.c.l.b16 %v853
      %v869 = vpack.c.b16 %v866, %v865
      %v870 = vpack.c.b16 %v868, %v867
      %vm873 = vcmask 261120
      %v875 = vsel %vm873, %v833, 0
      %877 = vmatprep.subr.bf16.mxu0 0
      %878 = vmatpush1.bf16.msra.mxu0 %v869
      %879 = vmatprep.subr.bf16.mxu0 0
      %880 = vmatpush1.bf16.msra.mxu0 %v870
      %881 = vmatprep.subr.bf16.mxu0 0
      %882 = vmatpush1.bf16.msra.mxu0 0
      %883 = vmatprep.subr.bf16.mxu0 0
      %884 = vmatpush1.bf16.msra.mxu0 0
      %885 = vmatprep.subr.bf16.mxu0 0
      %886 = vmatpush1.bf16.msra.mxu0 0
      %887 = vmatprep.subr.bf16.mxu0 0
      %888 = vmatpush1.bf16.msra.mxu0 0
      %889 = vmatprep.subr.bf16.mxu0 0
      %890 = vmatpush1.bf16.msra.mxu0 0
      %891 = vmatprep.subr.bf16.mxu0 0
      %892 = vmatpush1.bf16.msra.mxu0 0
      %893 = vmatprep.subr.bf16.mxu0 0
      %894 = vmatpush1.bf16.msra.mxu0 0
      %895 = vmatprep.subr.bf16.mxu0 0
      %896 = vmatpush1.bf16.msra.mxu0 0
      %897 = vmatprep.subr.bf16.mxu0 0
      %898 = vmatpush1.bf16.msra.mxu0 0
      %899 = vmatprep.subr.bf16.mxu0 0
      %900 = vmatpush1.bf16.msra.mxu0 0
      %901 = vmatprep.subr.bf16.mxu0 0
      %902 = vmatpush1.bf16.msra.mxu0 0
      %903 = vmatprep.subr.bf16.mxu0 0
      %904 = vmatpush1.bf16.msra.mxu0 0
      %905 = vmatprep.subr.bf16.mxu0 0
      %906 = vmatpush1.bf16.msra.mxu0 0
      %907 = vmatprep.subr.bf16.mxu0 0
      %908 = vmatpush1.bf16.msra.mxu0 0
      %909 = vmatprep.mubr.bf16.mxu0 0
      %910 = vmatmul.mubr.bf16.gmra.mrb[0].mxu0 %v875
      %v911 = vpop.f32.mrb[0].mxu0
      %v912 = vadd.f32 %v859, %v911
      %v913 = vpop.f32.mrb[0].mxu0
      %v914 = vpop.f32.mrb[0].mxu0
      %v915 = vpop.f32.mrb[0].mxu0
      %916 = vdwg.mxu0
      %v917 = vpack.c.bf16 %v912, %v912
      %v918 = vld [vmem:[%s6] sm:$0xf]
      %v919 = vld [vmem:[%s6 + $0x4] sm:$0xf]
      %v920 = vld [vmem:[%s6 + $0x8] sm:$0xf]
      %v921 = vld [vmem:[%s6 + $0xc] sm:$0xf]
      %v922 = vld [vmem:[%s7] sm:$0x1]
      %v924 = vlaneseq
      %v925 = vshrl.u32 %v924, 7
      %v926 = vsub.s32 0, %v925
      %v927 = vrot.slane %v922, %v926
      %v933 = vunpack.c.l.b16 %v918
      %v934 = vunpack.c.l.b16 %v919
      %v935 = vunpack.c.l.b16 %v920
      %v936 = vunpack.c.l.b16 %v921
      %v937 = vpack.c.b16 %v934, %v933
      %v938 = vpack.c.b16 %v936, %v935
      %941 = vmatprep.subr.bf16.mxu0 0
      %942 = vmatpush1.bf16.msra.mxu0 %v937
      %943 = vmatprep.subr.bf16.mxu0 0
      %944 = vmatpush1.bf16.msra.mxu0 %v938
      %945 = vmatprep.subr.bf16.mxu0 0
      %946 = vmatpush1.bf16.msra.mxu0 0
      %947 = vmatprep.subr.bf16.mxu0 0
      %948 = vmatpush1.bf16.msra.mxu0 0
      %949 = vmatprep.subr.bf16.mxu0 0
      %950 = vmatpush1.bf16.msra.mxu0 0
      %951 = vmatprep.subr.bf16.mxu0 0
      %952 = vmatpush1.bf16.msra.mxu0 0
      %953 = vmatprep.subr.bf16.mxu0 0
      %954 = vmatpush1.bf16.msra.mxu0 0
      %955 = vmatprep.subr.bf16.mxu0 0
      %956 = vmatpush1.bf16.msra.mxu0 0
      %957 = vmatprep.subr.bf16.mxu0 0
      %958 = vmatpush1.bf16.msra.mxu0 0
      %959 = vmatprep.subr.bf16.mxu0 0
      %960 = vmatpush1.bf16.msra.mxu0 0
      %961 = vmatprep.subr.bf16.mxu0 0
      %962 = vmatpush1.bf16.msra.mxu0 0
      %963 = vmatprep.subr.bf16.mxu0 0
      %964 = vmatpush1.bf16.msra.mxu0 0
      %965 = vmatprep.subr.bf16.mxu0 0
      %966 = vmatpush1.bf16.msra.mxu0 0
      %967 = vmatprep.subr.bf16.mxu0 0
      %968 = vmatpush1.bf16.msra.mxu0 0
      %969 = vmatprep.subr.bf16.mxu0 0
      %970 = vmatpush1.bf16.msra.mxu0 0
      %971 = vmatprep.subr.bf16.mxu0 0
      %972 = vmatpush1.bf16.msra.mxu0 0
      %973 = vmatprep.mubr.bf16.mxu0 0
      %974 = vmatmul.mubr.bf16.gmra.mrb[0].mxu0 %v875
      %v975 = vpop.f32.mrb[0].mxu0
      %v976 = vadd.f32 %v927, %v975
      %v977 = vpop.f32.mrb[0].mxu0
      %v978 = vpop.f32.mrb[0].mxu0
      %v979 = vpop.f32.mrb[0].mxu0
      %980 = vdwg.mxu0
      %v981 = vpack.c.bf16 %v976, %v976
      %vm982 = vcmask 64512
      %v984 = vsel %vm982, %v917, 0
      %v987 = vsel %vm982, %v981, 0
      %989 = vmatprep.subr.bf16.mxu0 0
      %990 = vmatpush1.bf16.xpose.msra.mxu0 %v987
      %991 = vmatprep.subr.bf16.mxu0 0
      %992 = vmatpush1.bf16.xpose.msra.mxu0 0
      %993 = vmatprep.subr.bf16.mxu0 0
      %994 = vmatpush1.bf16.xpose.msra.mxu0 0
      %995 = vmatprep.subr.bf16.mxu0 0
      %996 = vmatpush1.bf16.xpose.msra.mxu0 0
      %997 = vmatprep.subr.bf16.mxu0 0
      %998 = vmatpush1.bf16.xpose.msra.mxu0 0
      %999 = vmatprep.subr.bf16.mxu0 0
      %1000 = vmatpush1.bf16.xpose.msra.mxu0 0
      %1001 = vmatprep.subr.bf16.mxu0 0
      %1002 = vmatpush1.bf16.xpose.msra.mxu0 0
      %1003 = vmatprep.subr.bf16.mxu0 0
      %1004 = vmatpush1.bf16.xpose.msra.mxu0 0
      %1005 = vmatprep.subr.bf16.mxu0 0
      %1006 = vmatpush1.bf16.xpose.msra.mxu0 0
      %1007 = vmatprep.subr.bf16.mxu0 0
      %1008 = vmatpush1.bf16.xpose.msra.mxu0 0
      %1009 = vmatprep.subr.bf16.mxu0 0
      %1010 = vmatpush1.bf16.xpose.msra.mxu0 0
      %1011 = vmatprep.subr.bf16.mxu0 0
      %1012 = vmatpush1.bf16.xpose.msra.mxu0 0
      %1013 = vmatprep.subr.bf16.mxu0 0
      %1014 = vmatpush1.bf16.xpose.msra.mxu0 0
      %1015 = vmatprep.subr.bf16.mxu0 0
      %1016 = vmatpush1.bf16.xpose.msra.mxu0 0
      %1017 = vmatprep.subr.bf16.mxu0 0
      %1018 = vmatpush1.bf16.xpose.msra.mxu0 0
      %1019 = vmatprep.subr.bf16.mxu0 0
      %1020 = vmatpush1.bf16.xpose.msra.mxu0 0
      %1021 = vmatprep.mubr.bf16.mxu0 0
      %1022 = vmatmul.mubr.bf16.gmra.mrb[0].mxu0 %v984
      %v1023 = vpop.f32.mrb[0].mxu0
      %v1024 = vadd.f32 0.0, %v1023
      %v1025 = vpop.f32.mrb[0].mxu0
      %v1026 = vpop.f32.mrb[0].mxu0
      %v1027 = vpop.f32.mrb[0].mxu0
      %1028 = vdwg.mxu0
      %v1029 = vmul.f32 %v1024, 0.35355338
      %v1030 = vadd.f32 %v1029, %v849
      %v1031 = vsel %vm982, %v1030, -inf
      %1032 = vmax.xlane.f32.xlu0 %v1031
      %v1033 = vpop.xlane.xlu0 %1032
      %v1034 = vsub.f32 %v1030, %v1033
      %v1035 = vmul.f32 %v1034, 1.442695
      %v1036 = vpow.pop %v1035
      %v1037 = vsel %vm982, %v1036, 0.0
      %1038 = vadd.xlane.f32.xlu0 %v1037
      %v1039 = vpop.xlane.xlu0 %1038
      %v1040 = vrcp.pop %v1039
      %v1041 = vmul.f32 %v1036, %v1040
      %v1042 = vpack.c.bf16 %v1041, %v1041
      %1044 = vrot.lane.b32.xlu0 %v981, 96
      %v1045 = vpop.permute.xlu0 %1044
      %v1047 = vsel %vm982, %v1042, 0
      %vm1049 = vcmask 1043456
      %v1051 = vsel %vm1049, %v1045, 0
      %1053 = vmatprep.subr.bf16.mxu0 0
      %1054 = vmatpush1.bf16.msra.mxu0 %v1051
      %1055 = vmatprep.subr.bf16.mxu0 0
      %1056 = vmatpush1.bf16.msra.mxu0 0
      %1057 = vmatprep.subr.bf16.mxu0 0
      %1058 = vmatpush1.bf16.msra.mxu0 0
      %1059 = vmatprep.subr.bf16.mxu0 0
      %1060 = vmatpush1.bf16.msra.mxu0 0
      %1061 = vmatprep.subr.bf16.mxu0 0
      %1062 = vmatpush1.bf16.msra.mxu0 0
      %1063 = vmatprep.subr.bf16.mxu0 0
      %1064 = vmatpush1.bf16.msra.mxu0 0
      %1065 = vmatprep.subr.bf16.mxu0 0
      %1066 = vmatpush1.bf16.msra.mxu0 0
      %1067 = vmatprep.subr.bf16.mxu0 0
      %1068 = vmatpush1.bf16.msra.mxu0 0
      %1069 = vmatprep.subr.bf16.mxu0 0
      %1070 = vmatpush1.bf16.msra.mxu0 0
      %1071 = vmatprep.subr.bf16.mxu0 0
      %1072 = vmatpush1.bf16.msra.mxu0 0
      %1073 = vmatprep.subr.bf16.mxu0 0
      %1074 = vmatpush1.bf16.msra.mxu0 0
      %1075 = vmatprep.subr.bf16.mxu0 0
      %1076 = vmatpush1.bf16.msra.mxu0 0
      %1077 = vmatprep.subr.bf16.mxu0 0
      %1078 = vmatpush1.bf16.msra.mxu0 0
      %1079 = vmatprep.subr.bf16.mxu0 0
      %1080 = vmatpush1.bf16.msra.mxu0 0
      %1081 = vmatprep.subr.bf16.mxu0 0
      %1082 = vmatpush1.bf16.msra.mxu0 0
      %1083 = vmatprep.subr.bf16.mxu0 0
      %1084 = vmatpush1.bf16.msra.mxu0 0
      %1085 = vmatprep.mubr.bf16.mxu0 0
      %1086 = vmatmul.mubr.bf16.gmra.mrb[0].mxu0 %v1047
      %v1087 = vpop.f32.mrb[0].mxu0
      %v1088 = vadd.f32 0.0, %v1087
      %v1089 = vpop.f32.mrb[0].mxu0
      %v1090 = vpop.f32.mrb[0].mxu0
      %v1091 = vpop.f32.mrb[0].mxu0
      %1092 = vdwg.mxu0
      %1093 = vst.msk [vmem:[#allocation2] sm:$0xff] %vm982, %v1088
      %1095 = vrot.lane.b32.xlu0 %v917, 120
      %v1096 = vpop.permute.xlu0 %1095
      %1097 = vrot.lane.b32.xlu0 %v981, 120
      %v1098 = vpop.permute.xlu0 %1097
      %v1100 = vsel %vm982, %v1096, 0
      %v1103 = vsel %vm982, %v1098, 0
      %1105 = vmatprep.subr.bf16.mxu0 0
      %1106 = vmatpush1.bf16.xpose.msra.mxu0 %v1103
      %1107 = vmatprep.subr.bf16.mxu0 0
      %1108 = vmatpush1.bf16.xpose.msra.mxu0 0
      %1109 = vmatprep.subr.bf16.mxu0 0
      %1110 = vmatpush1.bf16.xpose.msra.mxu0 0
      %1111 = vmatprep.subr.bf16.mxu0 0
      %1112 = vmatpush1.bf16.xpose.msra.mxu0 0
      %1113 = vmatprep.subr.bf16.mxu0 0
      %1114 = vmatpush1.bf16.xpose.msra.mxu0 0
      %1115 = vmatprep.subr.bf16.mxu0 0
      %1116 = vmatpush1.bf16.xpose.msra.mxu0 0
      %1117 = vmatprep.subr.bf16.mxu0 0
      %1118 = vmatpush1.bf16.xpose.msra.mxu0 0
      %1119 = vmatprep.subr.bf16.mxu0 0
      %1120 = vmatpush1.bf16.xpose.msra.mxu0 0
      %1121 = vmatprep.subr.bf16.mxu0 0
      %1122 = vmatpush1.bf16.xpose.msra.mxu0 0
      %1123 = vmatprep.subr.bf16.mxu0 0
      %1124 = vmatpush1.bf16.xpose.msra.mxu0 0
      %1125 = vmatprep.subr.bf16.mxu0 0
      %1126 = vmatpush1.bf16.xpose.msra.mxu0 0
      %1127 = vmatprep.subr.bf16.mxu0 0
      %1128 = vmatpush1.bf16.xpose.msra.mxu0 0
      %1129 = vmatprep.subr.bf16.mxu0 0
      %1130 = vmatpush1.bf16.xpose.msra.mxu0 0
      %1131 = vmatprep.subr.bf16.mxu0 0
      %1132 = vmatpush1.bf16.xpose.msra.mxu0 0
      %1133 = vmatprep.subr.bf16.mxu0 0
      %1134 = vmatpush1.bf16.xpose.msra.mxu0 0
      %1135 = vmatprep.subr.bf16.mxu0 0
      %1136 = vmatpush1.bf16.xpose.msra.mxu0 0
      %1137 = vmatprep.mubr.bf16.mxu0 0
      %1138 = vmatmul.mubr.bf16.gmra.mrb[0].mxu0 %v1100
      %v1139 = vpop.f32.mrb[0].mxu0
      %v1140 = vadd.f32 0.0, %v1139
      %v1141 = vpop.f32.mrb[0].mxu0
      %v1142 = vpop.f32.mrb[0].mxu0
      %v1143 = vpop.f32.mrb[0].mxu0
      %1144 = vdwg.mxu0
      %v1145 = vmul.f32 %v1140, 0.35355338
      %v1146 = vadd.f32 %v1145, %v849
      %v1147 = vsel %vm982, %v1146, -inf
      %1148 = vmax.xlane.f32.xlu0 %v1147
      %v1149 = vpop.xlane.xlu0 %1148
      %v1150 = vsub.f32 %v1146, %v1149
      %v1151 = vmul.f32 %v1150, 1.442695
      %v1152 = vpow.pop %v1151
      %v1153 = vsel %vm982, %v1152, 0.0
      %1154 = vadd.xlane.f32.xlu0 %v1153
      %v1155 = vpop.xlane.xlu0 %1154
      %v1156 = vrcp.pop %v1155
      %v1157 = vmul.f32 %v1152, %v1156
      %v1158 = vpack.c.bf16 %v1157, %v1157
      %1159 = vrot.lane.b32.xlu0 %v981, 88
      %v1160 = vpop.permute.xlu0 %1159
      %v1162 = vsel %vm982, %v1158, 0
      %v1165 = vsel %vm1049, %v1160, 0
      %1167 = vmatprep.subr.bf16.mxu0 0
      %1168 = vmatpush1.bf16.msra.mxu0 %v1165
      %1169 = vmatprep.subr.bf16.mxu0 0
      %1170 = vmatpush1.bf16.msra.mxu0 0
      %1171 = vmatprep.subr.bf16.mxu0 0
      %1172 = vmatpush1.bf16.msra.mxu0 0
      %1173 = vmatprep.subr.bf16.mxu0 0
      %1174 = vmatpush1.bf16.msra.mxu0 0
      %1175 = vmatprep.subr.bf16.mxu0 0
      %1176 = vmatpush1.bf16.msra.mxu0 0
      %1177 = vmatprep.subr.bf16.mxu0 0
      %1178 = vmatpush1.bf16.msra.mxu0 0
      %1179 = vmatprep.subr.bf16.mxu0 0
      %1180 = vmatpush1.bf16.msra.mxu0 0
      %1181 = vmatprep.subr.bf16.mxu0 0
      %1182 = vmatpush1.bf16.msra.mxu0 0
      %1183 = vmatprep.subr.bf16.mxu0 0
      %1184 = vmatpush1.bf16.msra.mxu0 0
      %1185 = vmatprep.subr.bf16.mxu0 0
      %1186 = vmatpush1.bf16.msra.mxu0 0
      %1187 = vmatprep.subr.bf16.mxu0 0
      %1188 = vmatpush1.bf16.msra.mxu0 0
      %1189 = vmatprep.subr.bf16.mxu0 0
      %1190 = vmatpush1.bf16.msra.mxu0 0
      %1191 = vmatprep.subr.bf16.mxu0 0
      %1192 = vmatpush1.bf16.msra.mxu0 0
      %1193 = vmatprep.subr.bf16.mxu0 0
      %1194 = vmatpush1.bf16.msra.mxu0 0
      %1195 = vmatprep.subr.bf16.mxu0 0
      %1196 = vmatpush1.bf16.msra.mxu0 0
      %1197 = vmatprep.subr.bf16.mxu0 0
      %1198 = vmatpush1.bf16.msra.mxu0 0
      %1199 = vmatprep.mubr.bf16.mxu0 0
      %1200 = vmatmul.mubr.bf16.gmra.mrb[0].mxu0 %v1162
      %v1201 = vpop.f32.mrb[0].mxu0
      %v1202 = vadd.f32 0.0, %v1201
      %v1203 = vpop.f32.mrb[0].mxu0
      %v1204 = vpop.f32.mrb[0].mxu0
      %v1205 = vpop.f32.mrb[0].mxu0
      %1206 = vdwg.mxu0
      %1208 = vrot.lane.b32.xlu0 %v1202, 8
      %v1209 = vpop.permute.xlu0 %1208
      %vm1211 = vcmask 130112
      %1212 = vst.msk [vmem:[#allocation2] sm:$0xff] %vm1211, %v1209
      %1213 = vrot.lane.b32.xlu0 %v917, 112
      %v1214 = vpop.permute.xlu0 %1213
      %1215 = vrot.lane.b32.xlu0 %v981, 112
      %v1216 = vpop.permute.xlu0 %1215
      %v1218 = vsel %vm982, %v1214, 0
      %v1221 = vsel %vm982, %v1216, 0
      %1223 = vmatprep.subr.bf16.mxu0 0
      %1224 = vmatpush1.bf16.xpose.msra.mxu0 %v1221
      %1225 = vmatprep.subr.bf16.mxu0 0
      %1226 = vmatpush1.bf16.xpose.msra.mxu0 0
      %1227 = vmatprep.subr.bf16.mxu0 0
      %1228 = vmatpush1.bf16.xpose.msra.mxu0 0
      %1229 = vmatprep.subr.bf16.mxu0 0
      %1230 = vmatpush1.bf16.xpose.msra.mxu0 0
      %1231 = vmatprep.subr.bf16.mxu0 0
      %1232 = vmatpush1.bf16.xpose.msra.mxu0 0
      %1233 = vmatprep.subr.bf16.mxu0 0
      %1234 = vmatpush1.bf16.xpose.msra.mxu0 0
      %1235 = vmatprep.subr.bf16.mxu0 0
      %1236 = vmatpush1.bf16.xpose.msra.mxu0 0
      %1237 = vmatprep.subr.bf16.mxu0 0
      %1238 = vmatpush1.bf16.xpose.msra.mxu0 0
      %1239 = vmatprep.subr.bf16.mxu0 0
      %1240 = vmatpush1.bf16.xpose.msra.mxu0 0
      %1241 = vmatprep.subr.bf16.mxu0 0
      %1242 = vmatpush1.bf16.xpose.msra.mxu0 0
      %1243 = vmatprep.subr.bf16.mxu0 0
      %1244 = vmatpush1.bf16.xpose.msra.mxu0 0
      %1245 = vmatprep.subr.bf16.mxu0 0
      %1246 = vmatpush1.bf16.xpose.msra.mxu0 0
      %1247 = vmatprep.subr.bf16.mxu0 0
      %1248 = vmatpush1.bf16.xpose.msra.mxu0 0
      %1249 = vmatprep.subr.bf16.mxu0 0
      %1250 = vmatpush1.bf16.xpose.msra.mxu0 0
      %1251 = vmatprep.subr.bf16.mxu0 0
      %1252 = vmatpush1.bf16.xpose.msra.mxu0 0
      %1253 = vmatprep.subr.bf16.mxu0 0
      %1254 = vmatpush1.bf16.xpose.msra.mxu0 0
      %1255 = vmatprep.mubr.bf16.mxu0 0
      %1256 = vmatmul.mubr.bf16.gmra.mrb[0].mxu0 %v1218
      %v1257 = vpop.f32.mrb[0].mxu0
      %v1258 = vadd.f32 0.0, %v1257
      %v1259 = vpop.f32.mrb[0].mxu0
      %v1260 = vpop.f32.mrb[0].mxu0
      %v1261 = vpop.f32.mrb[0].mxu0
      %1262 = vdwg.mxu0
      %v1263 = vmul.f32 %v1258, 0.35355338
      %v1264 = vadd.f32 %v1263, %v849
      %v1265 = vsel %vm982, %v1264, -inf
      %1266 = vmax.xlane.f32.xlu0 %v1265
      %v1267 = vpop.xlane.xlu0 %1266
      %v1268 = vsub.f32 %v1264, %v1267
      %v1269 = vmul.f32 %v1268, 1.442695
      %v1270 = vpow.pop %v1269
      %v1271 = vsel %vm982, %v1270, 0.0
      %1272 = vadd.xlane.f32.xlu0 %v1271
      %v1273 = vpop.xlane.xlu0 %1272
      %v1274 = vrcp.pop %v1273
      %v1275 = vmul.f32 %v1270, %v1274
      %v1276 = vpack.c.bf16 %v1275, %v1275
      %1277 = vrot.lane.b32.xlu0 %v981, 80
      %v1278 = vpop.permute.xlu0 %1277
      %v1280 = vsel %vm982, %v1276, 0
      %v1283 = vsel %vm1049, %v1278, 0
      %1285 = vmatprep.subr.bf16.mxu0 0
      %1286 = vmatpush1.bf16.msra.mxu0 %v1283
      %1287 = vmatprep.subr.bf16.mxu0 0
      %1288 = vmatpush1.bf16.msra.mxu0 0
      %1289 = vmatprep.subr.bf16.mxu0 0
      %1290 = vmatpush1.bf16.msra.mxu0 0
      %1291 = vmatprep.subr.bf16.mxu0 0
      %1292 = vmatpush1.bf16.msra.mxu0 0
      %1293 = vmatprep.subr.bf16.mxu0 0
      %1294 = vmatpush1.bf16.msra.mxu0 0
      %1295 = vmatprep.subr.bf16.mxu0 0
      %1296 = vmatpush1.bf16.msra.mxu0 0
      %1297 = vmatprep.subr.bf16.mxu0 0
      %1298 = vmatpush1.bf16.msra.mxu0 0
      %1299 = vmatprep.subr.bf16.mxu0 0
      %1300 = vmatpush1.bf16.msra.mxu0 0
      %1301 = vmatprep.subr.bf16.mxu0 0
      %1302 = vmatpush1.bf16.msra.mxu0 0
      %1303 = vmatprep.subr.bf16.mxu0 0
      %1304 = vmatpush1.bf16.msra.mxu0 0
      %1305 = vmatprep.subr.bf16.mxu0 0
      %1306 = vmatpush1.bf16.msra.mxu0 0
      %1307 = vmatprep.subr.bf16.mxu0 0
      %1308 = vmatpush1.bf16.msra.mxu0 0
      %1309 = vmatprep.subr.bf16.mxu0 0
      %1310 = vmatpush1.bf16.msra.mxu0 0
      %1311 = vmatprep.subr.bf16.mxu0 0
      %1312 = vmatpush1.bf16.msra.mxu0 0
      %1313 = vmatprep.subr.bf16.mxu0 0
      %1314 = vmatpush1.bf16.msra.mxu0 0
      %1315 = vmatprep.subr.bf16.mxu0 0
      %1316 = vmatpush1.bf16.msra.mxu0 0
      %1317 = vmatprep.mubr.bf16.mxu0 0
      %1318 = vmatmul.mubr.bf16.gmra.mrb[0].mxu0 %v1280
      %v1319 = vpop.f32.mrb[0].mxu0
      %v1320 = vadd.f32 0.0, %v1319
      %v1321 = vpop.f32.mrb[0].mxu0
      %v1322 = vpop.f32.mrb[0].mxu0
      %v1323 = vpop.f32.mrb[0].mxu0
      %1324 = vdwg.mxu0
      %1326 = vrot.lane.b32.xlu0 %v1320, 16
      %v1327 = vpop.permute.xlu0 %1326
      %vm1329 = vcmask 195712
      %1330 = vst.msk [vmem:[#allocation2] sm:$0xff] %vm1329, %v1327
      %1331 = vrot.lane.b32.xlu0 %v917, 104
      %v1332 = vpop.permute.xlu0 %1331
      %1333 = vrot.lane.b32.xlu0 %v981, 104
      %v1334 = vpop.permute.xlu0 %1333
      %v1336 = vsel %vm982, %v1332, 0
      %v1339 = vsel %vm982, %v1334, 0
      %1341 = vmatprep.subr.bf16.mxu0 0
      %1342 = vmatpush1.bf16.xpose.msra.mxu0 %v1339
      %1343 = vmatprep.subr.bf16.mxu0 0
      %1344 = vmatpush1.bf16.xpose.msra.mxu0 0
      %1345 = vmatprep.subr.bf16.mxu0 0
      %1346 = vmatpush1.bf16.xpose.msra.mxu0 0
      %1347 = vmatprep.subr.bf16.mxu0 0
      %1348 = vmatpush1.bf16.xpose.msra.mxu0 0
      %1349 = vmatprep.subr.bf16.mxu0 0
      %1350 = vmatpush1.bf16.xpose.msra.mxu0 0
      %1351 = vmatprep.subr.bf16.mxu0 0
      %1352 = vmatpush1.bf16.xpose.msra.mxu0 0
      %1353 = vmatprep.subr.bf16.mxu0 0
      %1354 = vmatpush1.bf16.xpose.msra.mxu0 0
      %1355 = vmatprep.subr.bf16.mxu0 0
      %1356 = vmatpush1.bf16.xpose.msra.mxu0 0
      %1357 = vmatprep.subr.bf16.mxu0 0
      %1358 = vmatpush1.bf16.xpose.msra.mxu0 0
      %1359 = vmatprep.subr.bf16.mxu0 0
      %1360 = vmatpush1.bf16.xpose.msra.mxu0 0
      %1361 = vmatprep.subr.bf16.mxu0 0
      %1362 = vmatpush1.bf16.xpose.msra.mxu0 0
      %1363 = vmatprep.subr.bf16.mxu0 0
      %1364 = vmatpush1.bf16.xpose.msra.mxu0 0
      %1365 = vmatprep.subr.bf16.mxu0 0
      %1366 = vmatpush1.bf16.xpose.msra.mxu0 0
      %1367 = vmatprep.subr.bf16.mxu0 0
      %1368 = vmatpush1.bf16.xpose.msra.mxu0 0
      %1369 = vmatprep.subr.bf16.mxu0 0
      %1370 = vmatpush1.bf16.xpose.msra.mxu0 0
      %1371 = vmatprep.subr.bf16.mxu0 0
      %1372 = vmatpush1.bf16.xpose.msra.mxu0 0
      %1373 = vmatprep.mubr.bf16.mxu0 0
      %1374 = vmatmul.mubr.bf16.gmra.mrb[0].mxu0 %v1336
      %v1375 = vpop.f32.mrb[0].mxu0
      %v1376 = vadd.f32 0.0, %v1375
      %v1377 = vpop.f32.mrb[0].mxu0
      %v1378 = vpop.f32.mrb[0].mxu0
      %v1379 = vpop.f32.mrb[0].mxu0
      %1380 = vdwg.mxu0
      %v1381 = vmul.f32 %v1376, 0.35355338
      %v1382 = vadd.f32 %v1381, %v849
      %v1383 = vsel %vm982, %v1382, -inf
      %1384 = vmax.xlane.f32.xlu0 %v1383
      %v1385 = vpop.xlane.xlu0 %1384
      %v1386 = vsub.f32 %v1382, %v1385
      %v1387 = vmul.f32 %v1386, 1.442695
      %v1388 = vpow.pop %v1387
      %v1389 = vsel %vm982, %v1388, 0.0
      %1390 = vadd.xlane.f32.xlu0 %v1389
      %v1391 = vpop.xlane.xlu0 %1390
      %v1392 = vrcp.pop %v1391
      %v1393 = vmul.f32 %v1388, %v1392
      %v1394 = vpack.c.bf16 %v1393, %v1393
      %1395 = vrot.lane.b32.xlu0 %v981, 72
      %v1396 = vpop.permute.xlu0 %1395
      %v1398 = vsel %vm982, %v1394, 0
      %v1401 = vsel %vm1049, %v1396, 0
      %1403 = vmatprep.subr.bf16.mxu0 0
      %1404 = vmatpush1.bf16.msra.mxu0 %v1401
      %1405 = vmatprep.subr.bf16.mxu0 0
      %1406 = vmatpush1.bf16.msra.mxu0 0
      %1407 = vmatprep.subr.bf16.mxu0 0
      %1408 = vmatpush1.bf16.msra.mxu0 0
      %1409 = vmatprep.subr.bf16.mxu0 0
      %1410 = vmatpush1.bf16.msra.mxu0 0
      %1411 = vmatprep.subr.bf16.mxu0 0
      %1412 = vmatpush1.bf16.msra.mxu0 0
      %1413 = vmatprep.subr.bf16.mxu0 0
      %1414 = vmatpush1.bf16.msra.mxu0 0
      %1415 = vmatprep.subr.bf16.mxu0 0
      %1416 = vmatpush1.bf16.msra.mxu0 0
      %1417 = vmatprep.subr.bf16.mxu0 0
      %1418 = vmatpush1.bf16.msra.mxu0 0
      %1419 = vmatprep.subr.bf16.mxu0 0
      %1420 = vmatpush1.bf16.msra.mxu0 0
      %1421 = vmatprep.subr.bf16.mxu0 0
      %1422 = vmatpush1.bf16.msra.mxu0 0
      %1423 = vmatprep.subr.bf16.mxu0 0
      %1424 = vmatpush1.bf16.msra.mxu0 0
      %1425 = vmatprep.subr.bf16.mxu0 0
      %1426 = vmatpush1.bf16.msra.mxu0 0
      %1427 = vmatprep.subr.bf16.mxu0 0
      %1428 = vmatpush1.bf16.msra.mxu0 0
      %1429 = vmatprep.subr.bf16.mxu0 0
      %1430 = vmatpush1.bf16.msra.mxu0 0
      %1431 = vmatprep.subr.bf16.mxu0 0
      %1432 = vmatpush1.bf16.msra.mxu0 0
      %1433 = vmatprep.subr.bf16.mxu0 0
      %1434 = vmatpush1.bf16.msra.mxu0 0
      %1435 = vmatprep.mubr.bf16.mxu0 0
      %1436 = vmatmul.mubr.bf16.gmra.mrb[0].mxu0 %v1398
      %v1437 = vpop.f32.mrb[0].mxu0
      %v1438 = vadd.f32 0.0, %v1437
      %v1439 = vpop.f32.mrb[0].mxu0
      %v1440 = vpop.f32.mrb[0].mxu0
      %v1441 = vpop.f32.mrb[0].mxu0
      %1442 = vdwg.mxu0
      %1444 = vrot.lane.b32.xlu0 %v1438, 24
      %v1445 = vpop.permute.xlu0 %1444
      %vm1447 = vcmask 261312
      %1448 = vst.msk [vmem:[#allocation2] sm:$0xff] %vm1447, %v1445
      %v1449 = vld [vmem:[#allocation2] sm:$0xff]
      %v1450 = vpack.c.bf16 %v1449, %v1449
      %v1451 = vld [vmem:[%s8] sm:$0xf]
      %v1452 = vld [vmem:[%s8 + $0x4] sm:$0xf]
      %v1453 = vld [vmem:[%s8 + $0x8] sm:$0xf]
      %v1454 = vld [vmem:[%s8 + $0xc] sm:$0xf]
      %v1455 = vld [vmem:[%s9] sm:$0x1]
      %v1457 = vlaneseq
      %v1458 = vshrl.u32 %v1457, 7
      %v1459 = vsub.s32 0, %v1458
      %v1460 = vrot.slane %v1455, %v1459
      %v1466 = vunpack.c.l.b16 %v1451
      %v1467 = vunpack.c.l.b16 %v1452
      %v1468 = vunpack.c.l.b16 %v1453
      %v1469 = vunpack.c.l.b16 %v1454
      %v1470 = vpack.c.b16 %v1467, %v1466
      %v1471 = vpack.c.b16 %v1469, %v1468
      %v1475 = vsel %vm873, %v1450, 0
      %1477 = vmatprep.subr.bf16.mxu0 0
      %1478 = vmatpush1.bf16.msra.mxu0 %v1470
      %1479 = vmatprep.subr.bf16.mxu0 0
      %1480 = vmatpush1.bf16.msra.mxu0 %v1471
      %1481 = vmatprep.subr.bf16.mxu0 0
      %1482 = vmatpush1.bf16.msra.mxu0 0
      %1483 = vmatprep.subr.bf16.mxu0 0
      %1484 = vmatpush1.bf16.msra.mxu0 0
      %1485 = vmatprep.subr.bf16.mxu0 0
      %1486 = vmatpush1.bf16.msra.mxu0 0
      %1487 = vmatprep.subr.bf16.mxu0 0
      %1488 = vmatpush1.bf16.msra.mxu0 0
      %1489 = vmatprep.subr.bf16.mxu0 0
      %1490 = vmatpush1.bf16.msra.mxu0 0
      %1491 = vmatprep.subr.bf16.mxu0 0
      %1492 = vmatpush1.bf16.msra.mxu0 0
      %1493 = vmatprep.subr.bf16.mxu0 0
      %1494 = vmatpush1.bf16.msra.mxu0 0
      %1495 = vmatprep.subr.bf16.mxu0 0
      %1496 = vmatpush1.bf16.msra.mxu0 0
      %1497 = vmatprep.subr.bf16.mxu0 0
      %1498 = vmatpush1.bf16.msra.mxu0 0
      %1499 = vmatprep.subr.bf16.mxu0 0
      %1500 = vmatpush1.bf16.msra.mxu0 0
      %1501 = vmatprep.subr.bf16.mxu0 0
      %1502 = vmatpush1.bf16.msra.mxu0 0
      %1503 = vmatprep.subr.bf16.mxu0 0
      %1504 = vmatpush1.bf16.msra.mxu0 0
      %1505 = vmatprep.subr.bf16.mxu0 0
      %1506 = vmatpush1.bf16.msra.mxu0 0
      %1507 = vmatprep.subr.bf16.mxu0 0
      %1508 = vmatpush1.bf16.msra.mxu0 0
      %1509 = vmatprep.mubr.bf16.mxu0 0
      %1510 = vmatmul.mubr.bf16.gmra.mrb[0].mxu0 %v1475
      %v1511 = vpop.f32.mrb[0].mxu0
      %v1512 = vadd.f32 %v1460, %v1511
      %v1513 = vpop.f32.mrb[0].mxu0
      %v1514 = vpop.f32.mrb[0].mxu0
      %v1515 = vpop.f32.mrb[0].mxu0
      %1516 = vdwg.mxu0
      %v1517 = vadd.f32 %v834, %v1512
      %v1518 = vld [vmem:[%s10] sm:$0x1]
      %v1519 = vld [vmem:[%s11] sm:$0x1]
      %v1520 = vsel %vm873, %v1517, 0.0
      %1521 = vadd.xlane.f32.xlu0 %v1520
      %v1522 = vpop.xlane.xlu0 %1521
      %v1523 = vrcp.pop 32.0
      %v1524 = vmul.f32 %v1522, %v1523
      %v1525 = vsub.f32 %v1517, %v1524
      %v1526 = vmul.f32 %v1525, %v1525
      %v1527 = vsel %vm873, %v1526, 0.0
      %1528 = vadd.xlane.f32.xlu0 %v1527
      %v1529 = vpop.xlane.xlu0 %1528
      %v1530 = vmul.f32 %v1529, %v1523
      %v1531 = vadd.f32 %v1530, 1e-05
      %v1532 = vrsqrt.pop %v1531
      %v1533 = vmul.f32 %v1525, %v1532
      %v1535 = vlaneseq
      %v1536 = vshrl.u32 %v1535, 7
      %v1537 = vsub.s32 0, %v1536
      %v1538 = vrot.slane %v1518, %v1537
      %v1540 = vmul.f32 %v1533, %v1538
      %v1542 = vlaneseq
      %v1543 = vshrl.u32 %v1542, 7
      %v1544 = vsub.s32 0, %v1543
      %v1545 = vrot.slane %v1519, %v1544
      %v1547 = vadd.f32 %v1540, %v1545
      %v1548 = vld [vmem:[%s827] sm:$0x1]
      %v1550 = vlaneseq
      %v1551 = vshrl.u32 %v1550, 7
      %v1552 = vsub.s32 0, %v1551
      %v1553 = vrot.slane %v1548, %v1552
      %v1555 = vpack.c.bf16 %v1547, %v1547
      %v1556 = vld [vmem:[%s12] sm:$0xf]
      %v1557 = vld [vmem:[%s12 + $0x4] sm:$0xf]
      %v1558 = vld [vmem:[%s12 + $0x8] sm:$0xf]
      %v1559 = vld [vmem:[%s12 + $0xc] sm:$0xf]
      %v1560 = vld [vmem:[%s13] sm:$0x1]
      %v1562 = vlaneseq
      %v1563 = vshrl.u32 %v1562, 7
      %v1564 = vsub.s32 0, %v1563
      %v1565 = vrot.slane %v1560, %v1564
      %v1571 = vunpack.c.l.b16 %v1556
      %v1572 = vunpack.c.l.b16 %v1557
      %v1573 = vunpack.c.l.b16 %v1558
      %v1574 = vunpack.c.l.b16 %v1559
      %v1575 = vpack.c.b16 %v1572, %v1571
      %v1576 = vpack.c.b16 %v1574, %v1573
      %v1580 = vsel %vm873, %v1555, 0
      %1582 = vmatprep.subr.bf16.mxu0 0
      %1583 = vmatpush1.bf16.msra.mxu0 %v1575
      %1584 = vmatprep.subr.bf16.mxu0 0
      %1585 = vmatpush1.bf16.msra.mxu0 %v1576
      %1586 = vmatprep.subr.bf16.mxu0 0
      %1587 = vmatpush1.bf16.msra.mxu0 0
      %1588 = vmatprep.subr.bf16.mxu0 0
      %1589 = vmatpush1.bf16.msra.mxu0 0
      %1590 = vmatprep.subr.bf16.mxu0 0
      %1591 = vmatpush1.bf16.msra.mxu0 0
      %1592 = vmatprep.subr.bf16.mxu0 0
      %1593 = vmatpush1.bf16.msra.mxu0 0
      %1594 = vmatprep.subr.bf16.mxu0 0
      %1595 = vmatpush1.bf16.msra.mxu0 0
      %1596 = vmatprep.subr.bf16.mxu0 0
      %1597 = vmatpush1.bf16.msra.mxu0 0
      %1598 = vmatprep.subr.bf16.mxu0 0
      %1599 = vmatpush1.bf16.msra.mxu0 0
      %1600 = vmatprep.subr.bf16.mxu0 0
      %1601 = vmatpush1.bf16.msra.mxu0 0
      %1602 = vmatprep.subr.bf16.mxu0 0
      %1603 = vmatpush1.bf16.msra.mxu0 0
      %1604 = vmatprep.subr.bf16.mxu0 0
      %1605 = vmatpush1.bf16.msra.mxu0 0
      %1606 = vmatprep.subr.bf16.mxu0 0
      %1607 = vmatpush1.bf16.msra.mxu0 0
      %1608 = vmatprep.subr.bf16.mxu0 0
      %1609 = vmatpush1.bf16.msra.mxu0 0
      %1610 = vmatprep.subr.bf16.mxu0 0
      %1611 = vmatpush1.bf16.msra.mxu0 0
      %1612 = vmatprep.subr.bf16.mxu0 0
      %1613 = vmatpush1.bf16.msra.mxu0 0
      %1614 = vmatprep.mubr.bf16.mxu0 0
      %1615 = vmatmul.mubr.bf16.gmra.mrb[0].mxu0 %v1580
      %v1616 = vpop.f32.mrb[0].mxu0
      %v1617 = vadd.f32 %v1565, %v1616
      %v1618 = vpop.f32.mrb[0].mxu0
      %v1619 = vpop.f32.mrb[0].mxu0
      %v1620 = vpop.f32.mrb[0].mxu0
      %1621 = vdwg.mxu0
      %v1622 = vpack.c.bf16 %v1617, %v1617
      %v1623 = vld [vmem:[%s14] sm:$0xf]
      %v1624 = vld [vmem:[%s14 + $0x4] sm:$0xf]
      %v1625 = vld [vmem:[%s14 + $0x8] sm:$0xf]
      %v1626 = vld [vmem:[%s14 + $0xc] sm:$0xf]
      %v1627 = vld [vmem:[%s15] sm:$0x1]
      %v1629 = vlaneseq
      %v1630 = vshrl.u32 %v1629, 7
      %v1631 = vsub.s32 0, %v1630
      %v1632 = vrot.slane %v1627, %v1631
      %v1638 = vunpack.c.l.b16 %v1623
      %v1639 = vunpack.c.l.b16 %v1624
      %v1640 = vunpack.c.l.b16 %v1625
      %v1641 = vunpack.c.l.b16 %v1626
      %v1642 = vpack.c.b16 %v1639, %v1638
      %v1643 = vpack.c.b16 %v1641, %v1640
      %v1647 = vsel %vm873, %v835, 0
      %1649 = vmatprep.subr.bf16.mxu0 0
      %1650 = vmatpush1.bf16.msra.mxu0 %v1642
      %1651 = vmatprep.subr.bf16.mxu0 0
      %1652 = vmatpush1.bf16.msra.mxu0 %v1643
      %1653 = vmatprep.subr.bf16.mxu0 0
      %1654 = vmatpush1.bf16.msra.mxu0 0
      %1655 = vmatprep.subr.bf16.mxu0 0
      %1656 = vmatpush1.bf16.msra.mxu0 0
      %1657 = vmatprep.subr.bf16.mxu0 0
      %1658 = vmatpush1.bf16.msra.mxu0 0
      %1659 = vmatprep.subr.bf16.mxu0 0
      %1660 = vmatpush1.bf16.msra.mxu0 0
      %1661 = vmatprep.subr.bf16.mxu0 0
      %1662 = vmatpush1.bf16.msra.mxu0 0
      %1663 = vmatprep.subr.bf16.mxu0 0
      %1664 = vmatpush1.bf16.msra.mxu0 0
      %1665 = vmatprep.subr.bf16.mxu0 0
      %1666 = vmatpush1.bf16.msra.mxu0 0
      %1667 = vmatprep.subr.bf16.mxu0 0
      %1668 = vmatpush1.bf16.msra.mxu0 0
      %1669 = vmatprep.subr.bf16.mxu0 0
      %1670 = vmatpush1.bf16.msra.mxu0 0
      %1671 = vmatprep.subr.bf16.mxu0 0
      %1672 = vmatpush1.bf16.msra.mxu0 0
      %1673 = vmatprep.subr.bf16.mxu0 0
      %1674 = vmatpush1.bf16.msra.mxu0 0
      %1675 = vmatprep.subr.bf16.mxu0 0
      %1676 = vmatpush1.bf16.msra.mxu0 0
      %1677 = vmatprep.subr.bf16.mxu0 0
      %1678 = vmatpush1.bf16.msra.mxu0 0
      %1679 = vmatprep.subr.bf16.mxu0 0
      %1680 = vmatpush1.bf16.msra.mxu0 0
      %1681 = vmatprep.mubr.bf16.mxu0 0
      %1682 = vmatmul.mubr.bf16.gmra.mrb[0].mxu0 %v1647
      %v1683 = vpop.f32.mrb[0].mxu0
      %v1684 = vadd.f32 %v1632, %v1683
      %v1685 = vpop.f32.mrb[0].mxu0
      %v1686 = vpop.f32.mrb[0].mxu0
      %v1687 = vpop.f32.mrb[0].mxu0
      %1688 = vdwg.mxu0
      %v1689 = vpack.c.bf16 %v1684, %v1684
      %v1691 = vsel %vm982, %v1622, 0
      %v1694 = vsel %vm982, %v1689, 0
      %1696 = vmatprep.subr.bf16.mxu0 0
      %1697 = vmatpush1.bf16.xpose.msra.mxu0 %v1694
      %1698 = vmatprep.subr.bf16.mxu0 0
      %1699 = vmatpush1.bf16.xpose.msra.mxu0 0
      %1700 = vmatprep.subr.bf16.mxu0 0
      %1701 = vmatpush1.bf16.xpose.msra.mxu0 0
      %1702 = vmatprep.subr.bf16.mxu0 0
      %1703 = vmatpush1.bf16.xpose.msra.mxu0 0
      %1704 = vmatprep.subr.bf16.mxu0 0
      %1705 = vmatpush1.bf16.xpose.msra.mxu0 0
      %1706 = vmatprep.subr.bf16.mxu0 0
      %1707 = vmatpush1.bf16.xpose.msra.mxu0 0
      %1708 = vmatprep.subr.bf16.mxu0 0
      %1709 = vmatpush1.bf16.xpose.msra.mxu0 0
      %1710 = vmatprep.subr.bf16.mxu0 0
      %1711 = vmatpush1.bf16.xpose.msra.mxu0 0
      %1712 = vmatprep.subr.bf16.mxu0 0
      %1713 = vmatpush1.bf16.xpose.msra.mxu0 0
      %1714 = vmatprep.subr.bf16.mxu0 0
      %1715 = vmatpush1.bf16.xpose.msra.mxu0 0
      %1716 = vmatprep.subr.bf16.mxu0 0
      %1717 = vmatpush1.bf16.xpose.msra.mxu0 0
      %1718 = vmatprep.subr.bf16.mxu0 0
      %1719 = vmatpush1.bf16.xpose.msra.mxu0 0
      %1720 = vmatprep.subr.bf16.mxu0 0
      %1721 = vmatpush1.bf16.xpose.msra.mxu0 0
      %1722 = vmatprep.subr.bf16.mxu0 0
      %1723 = vmatpush1.bf16.xpose.msra.mxu0 0
      %1724 = vmatprep.subr.bf16.mxu0 0
      %1725 = vmatpush1.bf16.xpose.msra.mxu0 0
      %1726 = vmatprep.subr.bf16.mxu0 0
      %1727 = vmatpush1.bf16.xpose.msra.mxu0 0
      %1728 = vmatprep.mubr.bf16.mxu0 0
      %1729 = vmatmul.mubr.bf16.gmra.mrb[0].mxu0 %v1691
      %v1730 = vpop.f32.mrb[0].mxu0
      %v1731 = vadd.f32 0.0, %v1730
      %v1732 = vpop.f32.mrb[0].mxu0
      %v1733 = vpop.f32.mrb[0].mxu0
      %v1734 = vpop.f32.mrb[0].mxu0
      %1735 = vdwg.mxu0
      %v1736 = vmul.f32 %v1731, 0.35355338
      %v1737 = vadd.f32 %v1736, %v1553
      %v1738 = vsel %vm982, %v1737, -inf
      %1739 = vmax.xlane.f32.xlu0 %v1738
      %v1740 = vpop.xlane.xlu0 %1739
      %v1741 = vsub.f32 %v1737, %v1740
      %v1742 = vmul.f32 %v1741, 1.442695
      %v1743 = vpow.pop %v1742
      %v1744 = vsel %vm982, %v1743, 0.0
      %1745 = vadd.xlane.f32.xlu0 %v1744
      %v1746 = vpop.xlane.xlu0 %1745
      %v1747 = vrcp.pop %v1746
      %v1748 = vmul.f32 %v1743, %v1747
      %v1749 = vpack.c.bf16 %v1748, %v1748
      %1751 = vrot.lane.b32.xlu0 %v1689, 96
      %v1752 = vpop.permute.xlu0 %1751
      %v1754 = vsel %vm982, %v1749, 0
      %v1757 = vsel %vm1049, %v1752, 0
      %1759 = vmatprep.subr.bf16.mxu0 0
      %1760 = vmatpush1.bf16.msra.mxu0 %v1757
      %1761 = vmatprep.subr.bf16.mxu0 0
      %1762 = vmatpush1.bf16.msra.mxu0 0
      %1763 = vmatprep.subr.bf16.mxu0 0
      %1764 = vmatpush1.bf16.msra.mxu0 0
      %1765 = vmatprep.subr.bf16.mxu0 0
      %1766 = vmatpush1.bf16.msra.mxu0 0
      %1767 = vmatprep.subr.bf16.mxu0 0
      %1768 = vmatpush1.bf16.msra.mxu0 0
      %1769 = vmatprep.subr.bf16.mxu0 0
      %1770 = vmatpush1.bf16.msra.mxu0 0
      %1771 = vmatprep.subr.bf16.mxu0 0
      %1772 = vmatpush1.bf16.msra.mxu0 0
      %1773 = vmatprep.subr.bf16.mxu0 0
      %1774 = vmatpush1.bf16.msra.mxu0 0
      %1775 = vmatprep.subr.bf16.mxu0 0
      %1776 = vmatpush1.bf16.msra.mxu0 0
      %1777 = vmatprep.subr.bf16.mxu0 0
      %1778 = vmatpush1.bf16.msra.mxu0 0
      %1779 = vmatprep.subr.bf16.mxu0 0
      %1780 = vmatpush1.bf16.msra.mxu0 0
      %1781 = vmatprep.subr.bf16.mxu0 0
      %1782 = vmatpush1.bf16.msra.mxu0 0
      %1783 = vmatprep.subr.bf16.mxu0 0
      %1784 = vmatpush1.bf16.msra.mxu0 0
      %1785 = vmatprep.subr.bf16.mxu0 0
      %1786 = vmatpush1.bf16.msra.mxu0 0
      %1787 = vmatprep.subr.bf16.mxu0 0
      %1788 = vmatpush1.bf16.msra.mxu0 0
      %1789 = vmatprep.subr.bf16.mxu0 0
      %1790 = vmatpush1.bf16.msra.mxu0 0
      %1791 = vmatprep.mubr.bf16.mxu0 0
      %1792 = vmatmul.mubr.bf16.gmra.mrb[0].mxu0 %v1754
      %v1793 = vpop.f32.mrb[0].mxu0
      %v1794 = vadd.f32 0.0, %v1793
      %v1795 = vpop.f32.mrb[0].mxu0
      %v1796 = vpop.f32.mrb[0].mxu0
      %v1797 = vpop.f32.mrb[0].mxu0
      %1798 = vdwg.mxu0
      %1799 = vst.msk [vmem:[#allocation2] sm:$0xff] %vm982, %v1794
      %1801 = vrot.lane.b32.xlu0 %v1622, 120
      %v1802 = vpop.permute.xlu0 %1801
      %1803 = vrot.lane.b32.xlu0 %v1689, 120
      %v1804 = vpop.permute.xlu0 %1803
      %v1806 = vsel %vm982, %v1802, 0
      %v1809 = vsel %vm982, %v1804, 0
      %1811 = vmatprep.subr.bf16.mxu0 0
      %1812 = vmatpush1.bf16.xpose.msra.mxu0 %v1809
      %1813 = vmatprep.subr.bf16.mxu0 0
      %1814 = vmatpush1.bf16.xpose.msra.mxu0 0
      %1815 = vmatprep.subr.bf16.mxu0 0
      %1816 = vmatpush1.bf16.xpose.msra.mxu0 0
      %1817 = vmatprep.subr.bf16.mxu0 0
      %1818 = vmatpush1.bf16.xpose.msra.mxu0 0
      %1819 = vmatprep.subr.bf16.mxu0 0
      %1820 = vmatpush1.bf16.xpose.msra.mxu0 0
      %1821 = vmatprep.subr.bf16.mxu0 0
      %1822 = vmatpush1.bf16.xpose.msra.mxu0 0
      %1823 = vmatprep.subr.bf16.mxu0 0
      %1824 = vmatpush1.bf16.xpose.msra.mxu0 0
      %1825 = vmatprep.subr.bf16.mxu0 0
      %1826 = vmatpush1.bf16.xpose.msra.mxu0 0
      %1827 = vmatprep.subr.bf16.mxu0 0
      %1828 = vmatpush1.bf16.xpose.msra.mxu0 0
      %1829 = vmatprep.subr.bf16.mxu0 0
      %1830 = vmatpush1.bf16.xpose.msra.mxu0 0
      %1831 = vmatprep.subr.bf16.mxu0 0
      %1832 = vmatpush1.bf16.xpose.msra.mxu0 0
      %1833 = vmatprep.subr.bf16.mxu0 0
      %1834 = vmatpush1.bf16.xpose.msra.mxu0 0
      %1835 = vmatprep.subr.bf16.mxu0 0
      %1836 = vmatpush1.bf16.xpose.msra.mxu0 0
      %1837 = vmatprep.subr.bf16.mxu0 0
      %1838 = vmatpush1.bf16.xpose.msra.mxu0 0
      %1839 = vmatprep.subr.bf16.mxu0 0
      %1840 = vmatpush1.bf16.xpose.msra.mxu0 0
      %1841 = vmatprep.subr.bf16.mxu0 0
      %1842 = vmatpush1.bf16.xpose.msra.mxu0 0
      %1843 = vmatprep.mubr.bf16.mxu0 0
      %1844 = vmatmul.mubr.bf16.gmra.mrb[0].mxu0 %v1806
      %v1845 = vpop.f32.mrb[0].mxu0
      %v1846 = vadd.f32 0.0, %v1845
      %v1847 = vpop.f32.mrb[0].mxu0
      %v1848 = vpop.f32.mrb[0].mxu0
      %v1849 = vpop.f32.mrb[0].mxu0
      %1850 = vdwg.mxu0
      %v1851 = vmul.f32 %v1846, 0.35355338
      %v1852 = vadd.f32 %v1851, %v1553
      %v1853 = vsel %vm982, %v1852, -inf
      %1854 = vmax.xlane.f32.xlu0 %v1853
      %v1855 = vpop.xlane.xlu0 %1854
      %v1856 = vsub.f32 %v1852, %v1855
      %v1857 = vmul.f32 %v1856, 1.442695
      %v1858 = vpow.pop %v1857
      %v1859 = vsel %vm982, %v1858, 0.0
      %1860 = vadd.xlane.f32.xlu0 %v1859
      %v1861 = vpop.xlane.xlu0 %1860
      %v1862 = vrcp.pop %v1861
      %v1863 = vmul.f32 %v1858, %v1862
      %v1864 = vpack.c.bf16 %v1863, %v1863
      %1865 = vrot.lane.b32.xlu0 %v1689, 88
      %v1866 = vpop.permute.xlu0 %1865
      %v1868 = vsel %vm982, %v1864, 0
      %v1871 = vsel %vm1049, %v1866, 0
      %1873 = vmatprep.subr.bf16.mxu0 0
      %1874 = vmatpush1.bf16.msra.mxu0 %v1871
      %1875 = vmatprep.subr.bf16.mxu0 0
      %1876 = vmatpush1.bf16.msra.mxu0 0
      %1877 = vmatprep.subr.bf16.mxu0 0
      %1878 = vmatpush1.bf16.msra.mxu0 0
      %1879 = vmatprep.subr.bf16.mxu0 0
      %1880 = vmatpush1.bf16.msra.mxu0 0
      %1881 = vmatprep.subr.bf16.mxu0 0
      %1882 = vmatpush1.bf16.msra.mxu0 0
      %1883 = vmatprep.subr.bf16.mxu0 0
      %1884 = vmatpush1.bf16.msra.mxu0 0
      %1885 = vmatprep.subr.bf16.mxu0 0
      %1886 = vmatpush1.bf16.msra.mxu0 0
      %1887 = vmatprep.subr.bf16.mxu0 0
      %1888 = vmatpush1.bf16.msra.mxu0 0
      %1889 = vmatprep.subr.bf16.mxu0 0
      %1890 = vmatpush1.bf16.msra.mxu0 0
      %1891 = vmatprep.subr.bf16.mxu0 0
      %1892 = vmatpush1.bf16.msra.mxu0 0
      %1893 = vmatprep.subr.bf16.mxu0 0
      %1894 = vmatpush1.bf16.msra.mxu0 0
      %1895 = vmatprep.subr.bf16.mxu0 0
      %1896 = vmatpush1.bf16.msra.mxu0 0
      %1897 = vmatprep.subr.bf16.mxu0 0
      %1898 = vmatpush1.bf16.msra.mxu0 0
      %1899 = vmatprep.subr.bf16.mxu0 0
      %1900 = vmatpush1.bf16.msra.mxu0 0
      %1901 = vmatprep.subr.bf16.mxu0 0
      %1902 = vmatpush1.bf16.msra.mxu0 0
      %1903 = vmatprep.subr.bf16.mxu0 0
      %1904 = vmatpush1.bf16.msra.mxu0 0
      %1905 = vmatprep.mubr.bf16.mxu0 0
      %1906 = vmatmul.mubr.bf16.gmra.mrb[0].mxu0 %v1868
      %v1907 = vpop.f32.mrb[0].mxu0
      %v1908 = vadd.f32 0.0, %v1907
      %v1909 = vpop.f32.mrb[0].mxu0
      %v1910 = vpop.f32.mrb[0].mxu0
      %v1911 = vpop.f32.mrb[0].mxu0
      %1912 = vdwg.mxu0
      %1914 = vrot.lane.b32.xlu0 %v1908, 8
      %v1915 = vpop.permute.xlu0 %1914
      %1917 = vst.msk [vmem:[#allocation2] sm:$0xff] %vm1211, %v1915
      %1918 = vrot.lane.b32.xlu0 %v1622, 112
      %v1919 = vpop.permute.xlu0 %1918
      %1920 = vrot.lane.b32.xlu0 %v1689, 112
      %v1921 = vpop.permute.xlu0 %1920
      %v1923 = vsel %vm982, %v1919, 0
      %v1926 = vsel %vm982, %v1921, 0
      %1928 = vmatprep.subr.bf16.mxu0 0
      %1929 = vmatpush1.bf16.xpose.msra.mxu0 %v1926
      %1930 = vmatprep.subr.bf16.mxu0 0
      %1931 = vmatpush1.bf16.xpose.msra.mxu0 0
      %1932 = vmatprep.subr.bf16.mxu0 0
      %1933 = vmatpush1.bf16.xpose.msra.mxu0 0
      %1934 = vmatprep.subr.bf16.mxu0 0
      %1935 = vmatpush1.bf16.xpose.msra.mxu0 0
      %1936 = vmatprep.subr.bf16.mxu0 0
      %1937 = vmatpush1.bf16.xpose.msra.mxu0 0
      %1938 = vmatprep.subr.bf16.mxu0 0
      %1939 = vmatpush1.bf16.xpose.msra.mxu0 0
      %1940 = vmatprep.subr.bf16.mxu0 0
      %1941 = vmatpush1.bf16.xpose.msra.mxu0 0
      %1942 = vmatprep.subr.bf16.mxu0 0
      %1943 = vmatpush1.bf16.xpose.msra.mxu0 0
      %1944 = vmatprep.subr.bf16.mxu0 0
      %1945 = vmatpush1.bf16.xpose.msra.mxu0 0
      %1946 = vmatprep.subr.bf16.mxu0 0
      %1947 = vmatpush1.bf16.xpose.msra.mxu0 0
      %1948 = vmatprep.subr.bf16.mxu0 0
      %1949 = vmatpush1.bf16.xpose.msra.mxu0 0
      %1950 = vmatprep.subr.bf16.mxu0 0
      %1951 = vmatpush1.bf16.xpose.msra.mxu0 0
      %1952 = vmatprep.subr.bf16.mxu0 0
      %1953 = vmatpush1.bf16.xpose.msra.mxu0 0
      %1954 = vmatprep.subr.bf16.mxu0 0
      %1955 = vmatpush1.bf16.xpose.msra.mxu0 0
      %1956 = vmatprep.subr.bf16.mxu0 0
      %1957 = vmatpush1.bf16.xpose.msra.mxu0 0
      %1958 = vmatprep.subr.bf16.mxu0 0
      %1959 = vmatpush1.bf16.xpose.msra.mxu0 0
      %1960 = vmatprep.mubr.bf16.mxu0 0
      %1961 = vmatmul.mubr.bf16.gmra.mrb[0].mxu0 %v1923
      %v1962 = vpop.f32.mrb[0].mxu0
      %v1963 = vadd.f32 0.0, %v1962
      %v1964 = vpop.f32.mrb[0].mxu0
      %v1965 = vpop.f32.mrb[0].mxu0
      %v1966 = vpop.f32.mrb[0].mxu0
      %1967 = vdwg.mxu0
      %v1968 = vmul.f32 %v1963, 0.35355338
      %v1969 = vadd.f32 %v1968, %v1553
      %v1970 = vsel %vm982, %v1969, -inf
      %1971 = vmax.xlane.f32.xlu0 %v1970
      %v1972 = vpop.xlane.xlu0 %1971
      %v1973 = vsub.f32 %v1969, %v1972
      %v1974 = vmul.f32 %v1973, 1.442695
      %v1975 = vpow.pop %v1974
      %v1976 = vsel %vm982, %v1975, 0.0
      %1977 = vadd.xlane.f32.xlu0 %v1976
      %v1978 = vpop.xlane.xlu0 %1977
      %v1979 = vrcp.pop %v1978
      %v1980 = vmul.f32 %v1975, %v1979
      %v1981 = vpack.c.bf16 %v1980, %v1980
      %1982 = vrot.lane.b32.xlu0 %v1689, 80
      %v1983 = vpop.permute.xlu0 %1982
      %v1985 = vsel %vm982, %v1981, 0
      %v1988 = vsel %vm1049, %v1983, 0
      %1990 = vmatprep.subr.bf16.mxu0 0
      %1991 = vmatpush1.bf16.msra.mxu0 %v1988
      %1992 = vmatprep.subr.bf16.mxu0 0
      %1993 = vmatpush1.bf16.msra.mxu0 0
      %1994 = vmatprep.subr.bf16.mxu0 0
      %1995 = vmatpush1.bf16.msra.mxu0 0
      %1996 = vmatprep.subr.bf16.mxu0 0
      %1997 = vmatpush1.bf16.msra.mxu0 0
      %1998 = vmatprep.subr.bf16.mxu0 0
      %1999 = vmatpush1.bf16.msra.mxu0 0
      %2000 = vmatprep.subr.bf16.mxu0 0
      %2001 = vmatpush1.bf16.msra.mxu0 0
      %2002 = vmatprep.subr.bf16.mxu0 0
      %2003 = vmatpush1.bf16.msra.mxu0 0
      %2004 = vmatprep.subr.bf16.mxu0 0
      %2005 = vmatpush1.bf16.msra.mxu0 0
      %2006 = vmatprep.subr.bf16.mxu0 0
      %2007 = vmatpush1.bf16.msra.mxu0 0
      %2008 = vmatprep.subr.bf16.mxu0 0
      %2009 = vmatpush1.bf16.msra.mxu0 0
      %2010 = vmatprep.subr.bf16.mxu0 0
      %2011 = vmatpush1.bf16.msra.mxu0 0
      %2012 = vmatprep.subr.bf16.mxu0 0
      %2013 = vmatpush1.bf16.msra.mxu0 0
      %2014 = vmatprep.subr.bf16.mxu0 0
      %2015 = vmatpush1.bf16.msra.mxu0 0
      %2016 = vmatprep.subr.bf16.mxu0 0
      %2017 = vmatpush1.bf16.msra.mxu0 0
      %2018 = vmatprep.subr.bf16.mxu0 0
      %2019 = vmatpush1.bf16.msra.mxu0 0
      %2020 = vmatprep.subr.bf16.mxu0 0
      %2021 = vmatpush1.bf16.msra.mxu0 0
      %2022 = vmatprep.mubr.bf16.mxu0 0
      %2023 = vmatmul.mubr.bf16.gmra.mrb[0].mxu0 %v1985
      %v2024 = vpop.f32.mrb[0].mxu0
      %v2025 = vadd.f32 0.0, %v2024
      %v2026 = vpop.f32.mrb[0].mxu0
      %v2027 = vpop.f32.mrb[0].mxu0
      %v2028 = vpop.f32.mrb[0].mxu0
      %2029 = vdwg.mxu0
      %2031 = vrot.lane.b32.xlu0 %v2025, 16
      %v2032 = vpop.permute.xlu0 %2031
      %2034 = vst.msk [vmem:[#allocation2] sm:$0xff] %vm1329, %v2032
      %2035 = vrot.lane.b32.xlu0 %v1622, 104
      %v2036 = vpop.permute.xlu0 %2035
      %2037 = vrot.lane.b32.xlu0 %v1689, 104
      %v2038 = vpop.permute.xlu0 %2037
      %v2040 = vsel %vm982, %v2036, 0
      %v2043 = vsel %vm982, %v2038, 0
      %2045 = vmatprep.subr.bf16.mxu0 0
      %2046 = vmatpush1.bf16.xpose.msra.mxu0 %v2043
      %2047 = vmatprep.subr.bf16.mxu0 0
      %2048 = vmatpush1.bf16.xpose.msra.mxu0 0
      %2049 = vmatprep.subr.bf16.mxu0 0
      %2050 = vmatpush1.bf16.xpose.msra.mxu0 0
      %2051 = vmatprep.subr.bf16.mxu0 0
      %2052 = vmatpush1.bf16.xpose.msra.mxu0 0
      %2053 = vmatprep.subr.bf16.mxu0 0
      %2054 = vmatpush1.bf16.xpose.msra.mxu0 0
      %2055 = vmatprep.subr.bf16.mxu0 0
      %2056 = vmatpush1.bf16.xpose.msra.mxu0 0
      %2057 = vmatprep.subr.bf16.mxu0 0
      %2058 = vmatpush1.bf16.xpose.msra.mxu0 0
      %2059 = vmatprep.subr.bf16.mxu0 0
      %2060 = vmatpush1.bf16.xpose.msra.mxu0 0
      %2061 = vmatprep.subr.bf16.mxu0 0
      %2062 = vmatpush1.bf16.xpose.msra.mxu0 0
      %2063 = vmatprep.subr.bf16.mxu0 0
      %2064 = vmatpush1.bf16.xpose.msra.mxu0 0
      %2065 = vmatprep.subr.bf16.mxu0 0
      %2066 = vmatpush1.bf16.xpose.msra.mxu0 0
      %2067 = vmatprep.subr.bf16.mxu0 0
      %2068 = vmatpush1.bf16.xpose.msra.mxu0 0
      %2069 = vmatprep.subr.bf16.mxu0 0
      %2070 = vmatpush1.bf16.xpose.msra.mxu0 0
      %2071 = vmatprep.subr.bf16.mxu0 0
      %2072 = vmatpush1.bf16.xpose.msra.mxu0 0
      %2073 = vmatprep.subr.bf16.mxu0 0
      %2074 = vmatpush1.bf16.xpose.msra.mxu0 0
      %2075 = vmatprep.subr.bf16.mxu0 0
      %2076 = vmatpush1.bf16.xpose.msra.mxu0 0
      %2077 = vmatprep.mubr.bf16.mxu0 0
      %2078 = vmatmul.mubr.bf16.gmra.mrb[0].mxu0 %v2040
      %v2079 = vpop.f32.mrb[0].mxu0
      %v2080 = vadd.f32 0.0, %v2079
      %v2081 = vpop.f32.mrb[0].mxu0
      %v2082 = vpop.f32.mrb[0].mxu0
      %v2083 = vpop.f32.mrb[0].mxu0
      %2084 = vdwg.mxu0
      %v2085 = vmul.f32 %v2080, 0.35355338
      %v2086 = vadd.f32 %v2085, %v1553
      %v2087 = vsel %vm982, %v2086, -inf
      %2088 = vmax.xlane.f32.xlu0 %v2087
      %v2089 = vpop.xlane.xlu0 %2088
      %v2090 = vsub.f32 %v2086, %v2089
      %v2091 = vmul.f32 %v2090, 1.442695
      %v2092 = vpow.pop %v2091
      %v2093 = vsel %vm982, %v2092, 0.0
      %2094 = vadd.xlane.f32.xlu0 %v2093
      %v2095 = vpop.xlane.xlu0 %2094
      %v2096 = vrcp.pop %v2095
      %v2097 = vmul.f32 %v2092, %v2096
      %v2098 = vpack.c.bf16 %v2097, %v2097
      %2099 = vrot.lane.b32.xlu0 %v1689, 72
      %v2100 = vpop.permute.xlu0 %2099
      %v2102 = vsel %vm982, %v2098, 0
      %v2105 = vsel %vm1049, %v2100, 0
      %2107 = vmatprep.subr.bf16.mxu0 0
      %2108 = vmatpush1.bf16.msra.mxu0 %v2105
      %2109 = vmatprep.subr.bf16.mxu0 0
      %2110 = vmatpush1.bf16.msra.mxu0 0
      %2111 = vmatprep.subr.bf16.mxu0 0
      %2112 = vmatpush1.bf16.msra.mxu0 0
      %2113 = vmatprep.subr.bf16.mxu0 0
      %2114 = vmatpush1.bf16.msra.mxu0 0
      %2115 = vmatprep.subr.bf16.mxu0 0
      %2116 = vmatpush1.bf16.msra.mxu0 0
      %2117 = vmatprep.subr.bf16.mxu0 0
      %2118 = vmatpush1.bf16.msra.mxu0 0
      %2119 = vmatprep.subr.bf16.mxu0 0
      %2120 = vmatpush1.bf16.msra.mxu0 0
      %2121 = vmatprep.subr.bf16.mxu0 0
      %2122 = vmatpush1.bf16.msra.mxu0 0
      %2123 = vmatprep.subr.bf16.mxu0 0
      %2124 = vmatpush1.bf16.msra.mxu0 0
      %2125 = vmatprep.subr.bf16.mxu0 0
      %2126 = vmatpush1.bf16.msra.mxu0 0
      %2127 = vmatprep.subr.bf16.mxu0 0
      %2128 = vmatpush1.bf16.msra.mxu0 0
      %2129 = vmatprep.subr.bf16.mxu0 0
      %2130 = vmatpush1.bf16.msra.mxu0 0
      %2131 = vmatprep.subr.bf16.mxu0 0
      %2132 = vmatpush1.bf16.msra.mxu0 0
      %2133 = vmatprep.subr.bf16.mxu0 0
      %2134 = vmatpush1.bf16.msra.mxu0 0
      %2135 = vmatprep.subr.bf16.mxu0 0
      %2136 = vmatpush1.bf16.msra.mxu0 0
      %2137 = vmatprep.subr.bf16.mxu0 0
      %2138 = vmatpush1.bf16.msra.mxu0 0
      %2139 = vmatprep.mubr.bf16.mxu0 0
      %2140 = vmatmul.mubr.bf16.gmra.mrb[0].mxu0 %v2102
      %v2141 = vpop.f32.mrb[0].mxu0
      %v2142 = vadd.f32 0.0, %v2141
      %v2143 = vpop.f32.mrb[0].mxu0
      %v2144 = vpop.f32.mrb[0].mxu0
      %v2145 = vpop.f32.mrb[0].mxu0
      %2146 = vdwg.mxu0
      %2148 = vrot.lane.b32.xlu0 %v2142, 24
      %v2149 = vpop.permute.xlu0 %2148
      %2151 = vst.msk [vmem:[#allocation2] sm:$0xff] %vm1447, %v2149
      %v2152 = vld [vmem:[#allocation2] sm:$0xff]
      %v2153 = vpack.c.bf16 %v2152, %v2152
      %v2154 = vld [vmem:[%s16] sm:$0xf]
      %v2155 = vld [vmem:[%s16 + $0x4] sm:$0xf]
      %v2156 = vld [vmem:[%s16 + $0x8] sm:$0xf]
      %v2157 = vld [vmem:[%s16 + $0xc] sm:$0xf]
      %v2158 = vld [vmem:[%s17] sm:$0x1]
      %v2160 = vlaneseq
      %v2161 = vshrl.u32 %v2160, 7
      %v2162 = vsub.s32 0, %v2161
      %v2163 = vrot.slane %v2158, %v2162
      %v2169 = vunpack.c.l.b16 %v2154
      %v2170 = vunpack.c.l.b16 %v2155
      %v2171 = vunpack.c.l.b16 %v2156
      %v2172 = vunpack.c.l.b16 %v2157
      %v2173 = vpack.c.b16 %v2170, %v2169
      %v2174 = vpack.c.b16 %v2172, %v2171
      %v2178 = vsel %vm873, %v2153, 0
      %2180 = vmatprep.subr.bf16.mxu0 0
      %2181 = vmatpush1.bf16.msra.mxu0 %v2173
      %2182 = vmatprep.subr.bf16.mxu0 0
      %2183 = vmatpush1.bf16.msra.mxu0 %v2174
      %2184 = vmatprep.subr.bf16.mxu0 0
      %2185 = vmatpush1.bf16.msra.mxu0 0
      %2186 = vmatprep.subr.bf16.mxu0 0
      %2187 = vmatpush1.bf16.msra.mxu0 0
      %2188 = vmatprep.subr.bf16.mxu0 0
      %2189 = vmatpush1.bf16.msra.mxu0 0
      %2190 = vmatprep.subr.bf16.mxu0 0
      %2191 = vmatpush1.bf16.msra.mxu0 0
      %2192 = vmatprep.subr.bf16.mxu0 0
      %2193 = vmatpush1.bf16.msra.mxu0 0
      %2194 = vmatprep.subr.bf16.mxu0 0
      %2195 = vmatpush1.bf16.msra.mxu0 0
      %2196 = vmatprep.subr.bf16.mxu0 0
      %2197 = vmatpush1.bf16.msra.mxu0 0
      %2198 = vmatprep.subr.bf16.mxu0 0
      %2199 = vmatpush1.bf16.msra.mxu0 0
      %2200 = vmatprep.subr.bf16.mxu0 0
      %2201 = vmatpush1.bf16.msra.mxu0 0
      %2202 = vmatprep.subr.bf16.mxu0 0
      %2203 = vmatpush1.bf16.msra.mxu0 0
      %2204 = vmatprep.subr.bf16.mxu0 0
      %2205 = vmatpush1.bf16.msra.mxu0 0
      %2206 = vmatprep.subr.bf16.mxu0 0
      %2207 = vmatpush1.bf16.msra.mxu0 0
      %2208 = vmatprep.subr.bf16.mxu0 0
      %2209 = vmatpush1.bf16.msra.mxu0 0
      %2210 = vmatprep.subr.bf16.mxu0 0
      %2211 = vmatpush1.bf16.msra.mxu0 0
      %2212 = vmatprep.mubr.bf16.mxu0 0
      %2213 = vmatmul.mubr.bf16.gmra.mrb[0].mxu0 %v2178
      %v2214 = vpop.f32.mrb[0].mxu0
      %v2215 = vadd.f32 %v2163, %v2214
      %v2216 = vpop.f32.mrb[0].mxu0
      %v2217 = vpop.f32.mrb[0].mxu0
      %v2218 = vpop.f32.mrb[0].mxu0
      %2219 = vdwg.mxu0
      %v2220 = vadd.f32 %v1547, %v2215
      %v2221 = vld [vmem:[%s18] sm:$0x1]
      %v2222 = vld [vmem:[%s19] sm:$0x1]
      %v2223 = vsel %vm873, %v2220, 0.0
      %2224 = vadd.xlane.f32.xlu0 %v2223
      %v2225 = vpop.xlane.xlu0 %2224
      %v2226 = vmul.f32 %v2225, %v1523
      %v2227 = vsub.f32 %v2220, %v2226
      %v2228 = vmul.f32 %v2227, %v2227
      %v2229 = vsel %vm873, %v2228, 0.0
      %2230 = vadd.xlane.f32.xlu0 %v2229
      %v2231 = vpop.xlane.xlu0 %2230
      %v2232 = vmul.f32 %v2231, %v1523
      %v2233 = vadd.f32 %v2232, 1e-05
      %v2234 = vrsqrt.pop %v2233
      %v2235 = vmul.f32 %v2227, %v2234
      %v2237 = vlaneseq
      %v2238 = vshrl.u32 %v2237, 7
      %v2239 = vsub.s32 0, %v2238
      %v2240 = vrot.slane %v2221, %v2239
      %v2242 = vmul.f32 %v2235, %v2240
      %v2244 = vlaneseq
      %v2245 = vshrl.u32 %v2244, 7
      %v2246 = vsub.s32 0, %v2245
      %v2247 = vrot.slane %v2222, %v2246
      %v2249 = vadd.f32 %v2242, %v2247
      %v2250 = vpack.c.bf16 %v2249, %v2249
      %v2251 = vld [vmem:[%s20] sm:$0xf]
      %v2252 = vld [vmem:[%s20 + $0x4] sm:$0xf]
      %v2253 = vld [vmem:[%s20 + $0x8] sm:$0xf]
      %v2254 = vld [vmem:[%s20 + $0xc] sm:$0xf]
      %v2255 = vld [vmem:[%s21] sm:$0x1]
      %v2257 = vlaneseq
      %v2258 = vshrl.u32 %v2257, 7
      %v2259 = vsub.s32 0, %v2258
      %v2260 = vrot.slane %v2255, %v2259
      %v2266 = vunpack.c.l.b16 %v2251
      %v2267 = vunpack.c.l.b16 %v2252
      %v2268 = vunpack.c.l.b16 %v2253
      %v2269 = vunpack.c.l.b16 %v2254
      %v2270 = vpack.c.b16 %v2267, %v2266
      %v2271 = vpack.c.b16 %v2269, %v2268
      %v2275 = vsel %vm873, %v2250, 0
      %2277 = vmatprep.subr.bf16.mxu0 0
      %2278 = vmatpush1.bf16.msra.mxu0 %v2270
      %2279 = vmatprep.subr.bf16.mxu0 0
      %2280 = vmatpush1.bf16.msra.mxu0 %v2271
      %2281 = vmatprep.subr.bf16.mxu0 0
      %2282 = vmatpush1.bf16.msra.mxu0 0
      %2283 = vmatprep.subr.bf16.mxu0 0
      %2284 = vmatpush1.bf16.msra.mxu0 0
      %2285 = vmatprep.subr.bf16.mxu0 0
      %2286 = vmatpush1.bf16.msra.mxu0 0
      %2287 = vmatprep.subr.bf16.mxu0 0
      %2288 = vmatpush1.bf16.msra.mxu0 0
      %2289 = vmatprep.subr.bf16.mxu0 0
      %2290 = vmatpush1.bf16.msra.mxu0 0
      %2291 = vmatprep.subr.bf16.mxu0 0
      %2292 = vmatpush1.bf16.msra.mxu0 0
      %2293 = vmatprep.subr.bf16.mxu0 0
      %2294 = vmatpush1.bf16.msra.mxu0 0
      %2295 = vmatprep.subr.bf16.mxu0 0
      %2296 = vmatpush1.bf16.msra.mxu0 0
      %2297 = vmatprep.subr.bf16.mxu0 0
      %2298 = vmatpush1.bf16.msra.mxu0 0
      %2299 = vmatprep.subr.bf16.mxu0 0
      %2300 = vmatpush1.bf16.msra.mxu0 0
      %2301 = vmatprep.subr.bf16.mxu0 0
      %2302 = vmatpush1.bf16.msra.mxu0 0
      %2303 = vmatprep.subr.bf16.mxu0 0
      %2304 = vmatpush1.bf16.msra.mxu0 0
      %2305 = vmatprep.subr.bf16.mxu0 0
      %2306 = vmatpush1.bf16.msra.mxu0 0
      %2307 = vmatprep.subr.bf16.mxu0 0
      %2308 = vmatpush1.bf16.msra.mxu0 0
      %2309 = vmatprep.mubr.bf16.mxu0 0
      %2310 = vmatmul.mubr.bf16.gmra.mrb[0].mxu0 %v2275
      %v2311 = vpop.f32.mrb[0].mxu0
      %v2312 = vadd.f32 %v2260, %v2311
      %v2313 = vpop.f32.mrb[0].mxu0
      %v2314 = vpop.f32.mrb[0].mxu0
      %v2315 = vpop.f32.mrb[0].mxu0
      %2316 = vdwg.mxu0
      %v2317 = vmax.f32 %v2312, 0.0
      %v2318 = vpack.c.bf16 %v2317, %v2317
      %v2319 = vld [vmem:[%s22] sm:$0xf]
      %v2320 = vld [vmem:[%s22 + $0x4] sm:$0xf]
      %v2321 = vld [vmem:[%s22 + $0x8] sm:$0xf]
      %v2322 = vld [vmem:[%s22 + $0xc] sm:$0xf]
      %v2323 = vld [vmem:[%s22 + $0x10] sm:$0xf]
      %v2324 = vld [vmem:[%s22 + $0x14] sm:$0xf]
      %v2325 = vld [vmem:[%s22 + $0x18] sm:$0xf]
      %v2326 = vld [vmem:[%s22 + $0x1c] sm:$0xf]
      %v2327 = vld [vmem:[%s23] sm:$0x1]
      %v2329 = vlaneseq
      %v2330 = vshrl.u32 %v2329, 7
      %v2331 = vsub.s32 0, %v2330
      %v2332 = vrot.slane %v2327, %v2331
      %v2342 = vunpack.c.l.b16 %v2319
      %v2343 = vunpack.c.l.b16 %v2320
      %v2344 = vunpack.c.l.b16 %v2321
      %v2345 = vunpack.c.l.b16 %v2322
      %v2346 = vunpack.c.l.b16 %v2323
      %v2347 = vunpack.c.l.b16 %v2324
      %v2348 = vunpack.c.l.b16 %v2325
      %v2349 = vunpack.c.l.b16 %v2326
      %v2350 = vpack.c.b16 %v2343, %v2342
      %v2351 = vpack.c.b16 %v2345, %v2344
      %v2352 = vpack.c.b16 %v2347, %v2346
      %v2353 = vpack.c.b16 %v2349, %v2348
      %vm2358 = vcmask 523264
      %v2360 = vsel %vm2358, %v2318, 0
      %2362 = vmatprep.subr.bf16.mxu0 0
      %2363 = vmatpush1.bf16.msra.mxu0 %v2350
      %2364 = vmatprep.subr.bf16.mxu0 0
      %2365 = vmatpush1.bf16.msra.mxu0 %v2351
      %2366 = vmatprep.subr.bf16.mxu0 0
      %2367 = vmatpush1.bf16.msra.mxu0 %v2352
      %2368 = vmatprep.subr.bf16.mxu0 0
      %2369 = vmatpush1.bf16.msra.mxu0 %v2353
      %2370 = vmatprep.subr.bf16.mxu0 0
      %2371 = vmatpush1.bf16.msra.mxu0 0
      %2372 = vmatprep.subr.bf16.mxu0 0
      %2373 = vmatpush1.bf16.msra.mxu0 0
      %2374 = vmatprep.subr.bf16.mxu0 0
      %2375 = vmatpush1.bf16.msra.mxu0 0
      %2376 = vmatprep.subr.bf16.mxu0 0
      %2377 = vmatpush1.bf16.msra.mxu0 0
      %2378 = vmatprep.subr.bf16.mxu0 0
      %2379 = vmatpush1.bf16.msra.mxu0 0
      %2380 = vmatprep.subr.bf16.mxu0 0
      %2381 = vmatpush1.bf16.msra.mxu0 0
      %2382 = vmatprep.subr.bf16.mxu0 0
      %2383 = vmatpush1.bf16.msra.mxu0 0
      %2384 = vmatprep.subr.bf16.mxu0 0
      %2385 = vmatpush1.bf16.msra.mxu0 0
      %2386 = vmatprep.subr.bf16.mxu0 0
      %2387 = vmatpush1.bf16.msra.mxu0 0
      %2388 = vmatprep.subr.bf16.mxu0 0
      %2389 = vmatpush1.bf16.msra.mxu0 0
      %2390 = vmatprep.subr.bf16.mxu0 0
      %2391 = vmatpush1.bf16.msra.mxu0 0
      %2392 = vmatprep.subr.bf16.mxu0 0
      %2393 = vmatpush1.bf16.msra.mxu0 0
      %2394 = vmatprep.mubr.bf16.mxu0 0
      %2395 = vmatmul.mubr.bf16.gmra.mrb[0].mxu0 %v2360
      %v2396 = vpop.f32.mrb[0].mxu0
      %v2397 = vadd.f32 %v2332, %v2396
      %v2398 = vpop.f32.mrb[0].mxu0
      %v2399 = vpop.f32.mrb[0].mxu0
      %v2400 = vpop.f32.mrb[0].mxu0
      %2401 = vdwg.mxu0
      %v2402 = vadd.f32 %v2249, %v2397
      %v2403 = vld [vmem:[%s24] sm:$0x1]
      %v2404 = vld [vmem:[%s25] sm:$0x1]
      %v2405 = vsel %vm873, %v2402, 0.0
      %2406 = vadd.xlane.f32.xlu0 %v2405
      %v2407 = vpop.xlane.xlu0 %2406
      %v2408 = vmul.f32 %v2407, %v1523
      %v2409 = vsub.f32 %v2402, %v2408
      %v2410 = vmul.f32 %v2409, %v2409
      %v2411 = vsel %vm873, %v2410, 0.0
      %2412 = vadd.xlane.f32.xlu0 %v2411
      %v2413 = vpop.xlane.xlu0 %2412
      %v2414 = vmul.f32 %v2413, %v1523
      %v2415 = vadd.f32 %v2414, 1e-05
      %v2416 = vrsqrt.pop %v2415
      %v2417 = vmul.f32 %v2409, %v2416
      %v2419 = vlaneseq
      %v2420 = vshrl.u32 %v2419, 7
      %v2421 = vsub.s32 0, %v2420
      %v2422 = vrot.slane %v2403, %v2421
      %v2424 = vmul.f32 %v2417, %v2422
      %v2426 = vlaneseq
      %v2427 = vshrl.u32 %v2426, 7
      %v2428 = vsub.s32 0, %v2427
      %v2429 = vrot.slane %v2404, %v2428
      %v2431 = vadd.f32 %v2424, %v2429
      %v2432 = vpack.c.bf16 %v2431, %v2431
      %vm2433 = vcmask 257024
      %2434 = vst.msk [vmem:[%s831] sm:$0xf] %vm2433, %v2432
      %p2435 = scmp.lt.s32.totalorder %s37, 1
      %s2436 = scalar_select %p2435, %s37, 1
      %s2437 = smul.addr %s2436, 4
      %s2438 = scalar_lea.vmem %s26, %s2437
      // Predicated region
      $region125: #{peptide_decoder_forward.3} parent=123 // pred_check
        %p2439 = pneg %p621
      $region126: #{peptide_decoder_forward.3} parent=123 // pred_check_branch
        %2441 = sbr.rel (%p2439) target = $region128
      $region127: #{peptide_decoder_forward.3} parent=123 // pred_region
        _
      $region128: #{peptide_decoder_forward.3} parent=123 // pred_fallthru
        _
    $region124: #{peptide_decoder_forward.3} parent=5 // pred_fallthru
      _
    %p2442 = scmp.le.s32.totalorder 2, %s32
    // Predicated region
    $region129: #{peptide_decoder_forward.3} parent=5 // pred_check
      %p2443 = pneg %p2442
    $region130: #{peptide_decoder_forward.3} parent=5 // pred_check_branch
      %2445 = sbr.rel (%p2443) target = $region132
    $region131: #{peptide_decoder_forward.3} parent=5 // pred_region
      %s2446 = ssub.s32 %s32, 2
      // Predicated region
      $region133: #{peptide_decoder_forward.3} parent=131 // pred_check
        %p2447 = pneg %p627
      $region134: #{peptide_decoder_forward.3} parent=131 // pred_check_branch
        %2449 = sbr.rel (%p2447) target = $region136
      $region135: #{peptide_decoder_forward.3} parent=131 // pred_region
        %p2450 = scmp.lt.s32.totalorder %s38, 1
        %s2451 = scalar_select %p2450, %s38, 1
        %s2452 = smul.addr %s2451, 4
        %s2453 = scalar_lea.vmem %s26, %s2452
      $region136: #{peptide_decoder_forward.3} parent=131 // pred_fallthru
        _
    $region132: #{peptide_decoder_forward.3} parent=5 // pred_fallthru
      _
  $region6: #{peptide_decoder_forward.3} parent=0 // loop_footer
    %s36 = sadd.s32 1, %s32
  $region7: #{peptide_decoder_forward.3} parent=0 // loop_footer_branch
    %31 = sbr.rel target = $region3
  $region8: #{peptide_decoder_forward.3} parent=0 // loop_exit
    _

</llo_original>
